<compile_context>
chip_gen: v5e
topology: v5e:2x2
jax: 0.10.0
libtpu: 0.0.40
codegen_flags: <defaults>
</compile_context>

<pallas_src>
import functools

import jax
import jax.numpy as jnp
from jax.experimental import pallas as pl
from jax.experimental.pallas import tpu as pltpu


# ----------------------------------------------------------------------------
# build_grid: not defined in the provided spec; standard uORF/uOCF version
# ( (1, h, w, 2), coords in [-1 + 1/W, 1 - 1/W] ).
# ----------------------------------------------------------------------------
def build_grid(h, w):
    xs = jnp.linspace(-1.0 + 1.0 / w, 1.0 - 1.0 / w, w, dtype=jnp.float32)
    ys = jnp.linspace(-1.0 + 1.0 / h, 1.0 - 1.0 / h, h, dtype=jnp.float32)
    yy, xx = jnp.meshgrid(ys, xs, indexing="ij")
    return jnp.stack([xx, yy], axis=-1)[None]          # (1, h, w, 2)


def _grid_embed_terms(wg, bg, batch, h, w, position_latent):
    """Separable grid embedding.

    cat([rel, -rel], -1) @ Wg  ==  rel @ (Wg[:2] - Wg[2:4])  with rel = grid - pos.
      base = grid2 @ Wd + bg          (h*w, dim)   -- shared across batch/slots
      off  = -pos @ Wd                (B, n, dim)  -- zero when position is None
    """
    wd = wg[:2] - wg[2:4]                               # (2, dim)
    grid2 = build_grid(h, w).reshape(h * w, 2)          # (h*w, 2)
    base = jnp.dot(grid2, wd) + bg                      # (h*w, dim)
    if position_latent is None:
        off = jnp.zeros((batch, 1, wd.shape[1]), jnp.float32)
    else:
        off = -jnp.einsum("bns,sd->bnd", position_latent, wd)   # (B, n, dim)
    return base, off


# ----------------------------------------------------------------------------
# Fused Pallas kernel: per (batch, row-tile) step, all n slots + both k/v branches.
# ----------------------------------------------------------------------------
def _pos_embed_kv_kernel(x_ref, base_ref, off_ref, wkv_ref, gamma_ref, beta_ref,
                         wm_ref, bm_ref, k_out_ref, v_out_ref, *, n, tile_m, dim):
    xb = x_ref[0]                                                       # (tile_m, dim)
    # Fused k/v projection: one MXU pass with N = 2*dim.
    kv0 = jnp.dot(xb, wkv_ref[...], preferred_element_type=jnp.float32)  # (tile_m, 2*dim)
    k0 = kv0[:, :dim]
    v0 = kv0[:, dim:]

    # Grid embedding per slot = base row-tile + per-slot offset (VPU broadcast add).
    ge = base_ref[...][None, :, :] + off_ref[0][:, None, :]             # (n, tile_m, dim)
    k_in = (k0[None, :, :] + ge).reshape(n * tile_m, dim)
    v_in = (v0[None, :, :] + ge).reshape(n * tile_m, dim)
    t = jnp.concatenate([k_in, v_in], axis=0)                           # (2*n*tile_m, dim)

    # One LayerNorm + one big-M matmul for both branches and all slots.
    mu = jnp.mean(t, axis=-1, keepdims=True)
    var = jnp.mean(jnp.square(t - mu), axis=-1, keepdims=True)
    tn = (t - mu) * jax.lax.rsqrt(var + 1e-5) * gamma_ref[...] + beta_ref[...]
    out = jnp.dot(tn, wm_ref[...], preferred_element_type=jnp.float32) + bm_ref[...]

    m = n * tile_m
    slot_dim = out.shape[-1]
    k_out_ref[0] = out[:m].reshape(n, tile_m, slot_dim).astype(k_out_ref.dtype)
    v_out_ref[0] = out[m:].reshape(n, tile_m, slot_dim).astype(v_out_ref.dtype)


def _pos_embed_kv(x, base, off, wkv, gamma, beta, wm, bm, *, tile_m=256):
    B, HW, dim = x.shape
    n = off.shape[1]
    slot_dim = wm.shape[1]
    tile_m = min(tile_m, HW)
    assert HW % tile_m == 0, "h*w must be a multiple of tile_m"
    mt = HW // tile_m

    g2 = gamma.reshape(1, dim)
    bt2 = beta.reshape(1, dim)
    bm2 = bm.reshape(1, slot_dim)

    kernel = functools.partial(_pos_embed_kv_kernel, n=n, tile_m=tile_m, dim=dim)

    grid_spec = pltpu.PrefetchScalarGridSpec(
        num_scalar_prefetch=0,
        grid=(B, mt),
        in_specs=[
            pl.BlockSpec((1, tile_m, dim), lambda b, m: (b, m, 0)),   # x row tile
            pl.BlockSpec((tile_m, dim), lambda b, m: (m, 0)),         # base (grid@Wd+bg)
            pl.BlockSpec((1, n, dim), lambda b, m: (b, 0, 0)),        # per-slot offsets
            pl.BlockSpec((dim, 2 * dim), lambda b, m: (0, 0)),        # Wk | Wv fused
            pl.BlockSpec((1, dim), lambda b, m: (0, 0)),              # LN gamma
            pl.BlockSpec((1, dim), lambda b, m: (0, 0)),              # LN beta
            pl.BlockSpec((dim, slot_dim), lambda b, m: (0, 0)),       # Wm
            pl.BlockSpec((1, slot_dim), lambda b, m: (0, 0)),         # bm
        ],
        out_specs=[
            pl.BlockSpec((1, n, tile_m, slot_dim), lambda b, m: (b, 0, m, 0)),
            pl.BlockSpec((1, n, tile_m, slot_dim), lambda b, m: (b, 0, m, 0)),
        ],
    )

    return pl.pallas_call(
        kernel,
        out_shape=(jax.ShapeDtypeStruct((B, n, HW, slot_dim), jnp.float32),
                   jax.ShapeDtypeStruct((B, n, HW, slot_dim), jnp.float32)),
        grid_spec=grid_spec,
        compiler_params=pltpu.CompilerParams(
            dimension_semantics=("parallel", "parallel")),
    )(x, base, off, wkv, g2, bt2, wm, bm2)


# ----------------------------------------------------------------------------
# Module wrappers (forward / forward_bg)
# ----------------------------------------------------------------------------
def encoder_pos_embedding_forward(params, x, h, w, position_latent=None,
                                  dropout_shape_dim=48,
                                  dropout_shape_rate=None, dropout_all_rate=None):
    # TODO(synk): training-time dropout branch (dropout_shape_rate / dropout_all_rate,
    # torch.rand stochastic channel masking) not implemented; default (None) path only.
    assert dropout_shape_rate is None and dropout_all_rate is None
    base, off = _grid_embed_terms(params["grid_embed_w"], params["grid_embed_b"],
                                  x.shape[0], h, w, position_latent)
    wkv = jnp.concatenate([params["k_fg_w"], params["v_fg_w"]], axis=1)
    return _pos_embed_kv(x, base, off, wkv,
                         params["mlp_fg_gamma"], params["mlp_fg_beta"],
                         params["mlp_fg_w"], params["mlp_fg_b"])


def encoder_pos_embedding_forward_bg(params, x, h, w):
    base, off = _grid_embed_terms(params["grid_embed_w"], params["grid_embed_b"],
                                  x.shape[0], h, w, None)
    wkv = jnp.concatenate([params["k_bg_w"], params["v_bg_w"]], axis=1)
    return _pos_embed_kv(x, base, off, wkv,
                         params["mlp_bg_gamma"], params["mlp_bg_beta"],
                         params["mlp_bg_w"], params["mlp_bg_b"])


# ----------------------------------------------------------------------------
# Deterministic synthetic parameters (weights stored (in, out)).
# ----------------------------------------------------------------------------
def init_params(key, dim, slot_dim):
    ks = jax.random.split(key, 16)

    def lin(k, fin, fout, scale=0.05):
        return jax.random.normal(k, (fin, fout), jnp.float32) * scale

    return {
        "grid_embed_w": lin(ks[0], 4, dim),
        "grid_embed_b": jax.random.normal(ks[1], (dim,), jnp.float32) * 0.05,
        "k_fg_w": lin(ks[2], dim, dim),
        "v_fg_w": lin(ks[3], dim, dim),
        "k_bg_w": lin(ks[4], dim, dim),
        "v_bg_w": lin(ks[5], dim, dim),
        "mlp_fg_gamma": 1.0 + 0.1 * jax.random.normal(ks[6], (dim,), jnp.float32),
        "mlp_fg_beta": 0.05 * jax.random.normal(ks[7], (dim,), jnp.float32),
        "mlp_fg_w": lin(ks[8], dim, slot_dim),
        "mlp_fg_b": jax.random.normal(ks[9], (slot_dim,), jnp.float32) * 0.05,
        "mlp_bg_gamma": 1.0 + 0.1 * jax.random.normal(ks[10], (dim,), jnp.float32),
        "mlp_bg_beta": 0.05 * jax.random.normal(ks[11], (dim,), jnp.float32),
        "mlp_bg_w": lin(ks[12], dim, slot_dim),
        "mlp_bg_b": jax.random.normal(ks[13], (slot_dim,), jnp.float32) * 0.05,
    }


# ----------------------------------------------------------------------------
# Pure-JAX reference (high precision, explicit rel-grid path — i.e. the
# original module's formulation) for correctness checking of the decomposed kernel.
# ----------------------------------------------------------------------------
def reference_forward(params, x, h, w, position_latent, which):
    hp = jax.lax.Precision.HIGHEST
    B = x.shape[0]
    grid = build_grid(h, w)                               # (1, h, w, 2)
    if position_latent is not None:
        rel = grid[:, None] - position_latent[:, :, None, None, :]   # (B, n, h, w, 2)
    else:
        rel = jnp.broadcast_to(grid[:, None], (B, 1, h, w, 2))
    n = rel.shape[1]
    rel4 = jnp.concatenate([rel, -rel], axis=-1).reshape(B, n, h * w, 4)
    ge = jnp.dot(rel4, params["grid_embed_w"], precision=hp) + params["grid_embed_b"]

    if which == "fg":
        wk, wv = params["k_fg_w"], params["v_fg_w"]
        gamma, beta = params["mlp_fg_gamma"], params["mlp_fg_beta"]
        wm, bm = params["mlp_fg_w"], params["mlp_fg_b"]
    else:
        wk, wv = params["k_bg_w"], params["v_bg_w"]
        gamma, beta = params["mlp_bg_gamma"], params["mlp_bg_beta"]
        wm, bm = params["mlp_bg_w"], params["mlp_bg_b"]

    k0 = jnp.dot(x, wk, precision=hp)[:, None]
    v0 = jnp.dot(x, wv, precision=hp)[:, None]

    def ln_mlp(t):
        mu = jnp.mean(t, axis=-1, keepdims=True)
        var = jnp.mean(jnp.square(t - mu), axis=-1, keepdims=True)
        tn = (t - mu) / jnp.sqrt(var + 1e-5) * gamma + beta
        return jnp.dot(tn, wm, precision=hp) + bm

    return ln_mlp(k0 + ge), ln_mlp(v0 + ge)


if __name__ == "__main__":
    B, H, W = 2, 16, 16                 # h*w = 256 tokens
    dim, slot_dim, n_slots = 128, 128, 4

    root = jax.random.PRNGKey(0)
    kp, kx, kpos = jax.random.split(root, 3)

    params = init_params(kp, dim, slot_dim)
    x = jax.random.normal(kx, (B, H * W, dim), jnp.float32)
    pos = jax.random.uniform(kpos, (B, n_slots, 2), jnp.float32, minval=-1.0, maxval=1.0)

    fwd_fg = jax.jit(lambda p, xx, pp: encoder_pos_embedding_forward(p, xx, H, W, pp))
    fwd_bg = jax.jit(lambda p, xx: encoder_pos_embedding_forward_bg(p, xx, H, W))

    k, v = fwd_fg(params, x, pos)
    k_bg, v_bg = fwd_bg(params, x)
    jax.block_until_ready((k, v, k_bg, v_bg))

    assert k.shape == (B, n_slots, H * W, slot_dim), k.shape
    assert v.shape == (B, n_slots, H * W, slot_dim), v.shape
    assert k_bg.shape == (B, 1, H * W, slot_dim), k_bg.shape
    assert v_bg.shape == (B, 1, H * W, slot_dim), v_bg.shape

    k_ref, v_ref = reference_forward(params, x, H, W, pos, "fg")
    kb_ref, vb_ref = reference_forward(params, x, H, W, None, "bg")
    for got, ref in ((k, k_ref), (v, v_ref), (k_bg, kb_ref), (v_bg, vb_ref)):
        err = float(jnp.max(jnp.abs(got - ref)))
        assert jnp.all(jnp.isfinite(got)) and err < 1e-2, err

    print("KERNEL_OK")
</pallas_src>

<mosaic_0001>
module attributes {stable_mosaic.version = 11 : i64} {
  func.func @_pos_embed_kv_kernel(%arg0: i32, %arg1: i32, %arg2: memref<1x256x128xf32, #tpu.memory_space<vmem>>, %arg3: memref<256x128xf32, #tpu.memory_space<vmem>>, %arg4: memref<1x4x128xf32, #tpu.memory_space<vmem>>, %arg5: memref<128x256xf32, #tpu.memory_space<vmem>>, %arg6: memref<1x128xf32, #tpu.memory_space<vmem>>, %arg7: memref<1x128xf32, #tpu.memory_space<vmem>>, %arg8: memref<128x128xf32, #tpu.memory_space<vmem>>, %arg9: memref<1x128xf32, #tpu.memory_space<vmem>>, %arg10: memref<1x4x256x128xf32, #tpu.memory_space<vmem>>, %arg11: memref<1x4x256x128xf32, #tpu.memory_space<vmem>>) attributes {dimension_semantics = [#tpu.dimension_semantics<parallel>, #tpu.dimension_semantics<parallel>], iteration_bounds = array<i64: 2, 1>, scalar_prefetch = 0 : i64, scratch_operands = 0 : i64, tpu.core_type = #tpu.core_type<tc>, window_params = [{transform_indices = @transform_0, window_bounds = array<i64: 1, 256, 128>}, {transform_indices = @transform_1, window_bounds = array<i64: 256, 128>}, {transform_indices = @transform_2, window_bounds = array<i64: 1, 4, 128>}, {pipeline_mode = #tpu.pipeline_mode<synchronous>, transform_indices = @transform_3, window_bounds = array<i64: 128, 256>}, {pipeline_mode = #tpu.pipeline_mode<synchronous>, transform_indices = @transform_4, window_bounds = array<i64: 1, 128>}, {pipeline_mode = #tpu.pipeline_mode<synchronous>, transform_indices = @transform_5, window_bounds = array<i64: 1, 128>}, {pipeline_mode = #tpu.pipeline_mode<synchronous>, transform_indices = @transform_6, window_bounds = array<i64: 128, 128>}, {pipeline_mode = #tpu.pipeline_mode<synchronous>, transform_indices = @transform_7, window_bounds = array<i64: 1, 128>}, {transform_indices = @transform_8, window_bounds = array<i64: 1, 4, 256, 128>}, {transform_indices = @transform_9, window_bounds = array<i64: 1, 4, 256, 128>}]} {
    %c0 = arith.constant 0 : index
    %c0_0 = arith.constant 0 : index
    %c0_1 = arith.constant 0 : index
    %0 = vector.load %arg2[%c0, %c0_0, %c0_1] : memref<1x256x128xf32, #tpu.memory_space<vmem>>, vector<1x256x128xf32>
    %1 = vector.shape_cast %0 : vector<1x256x128xf32> to vector<256x128xf32>
    %c0_2 = arith.constant 0 : index
    %c0_3 = arith.constant 0 : index
    %2 = vector.load %arg5[%c0_2, %c0_3] : memref<128x256xf32, #tpu.memory_space<vmem>>, vector<128x256xf32>
    %cst = arith.constant dense<0.000000e+00> : vector<256x256xf32>
    %3 = tpu.matmul %1, %2, %cst {dimension_numbers = #tpu.dot_dimension_numbers<[1], [0], [0], [1], [0, 0, 1, 1], [], []>} : vector<256x128xf32>, vector<128x256xf32>, vector<256x256xf32> -> vector<256x256xf32>
    %4 = vector.extract_strided_slice %3 {offsets = [0, 0], sizes = [256, 128], strides = [1, 1]} : vector<256x256xf32> to vector<256x128xf32>
    %5 = vector.extract_strided_slice %3 {offsets = [0, 128], sizes = [256, 128], strides = [1, 1]} : vector<256x256xf32> to vector<256x128xf32>
    %c0_4 = arith.constant 0 : index
    %c0_5 = arith.constant 0 : index
    %6 = vector.load %arg3[%c0_4, %c0_5] : memref<256x128xf32, #tpu.memory_space<vmem>>, vector<256x128xf32>
    %7 = vector.shape_cast %6 : vector<256x128xf32> to vector<1x256x128xf32>
    %c0_6 = arith.constant 0 : index
    %c0_7 = arith.constant 0 : index
    %c0_8 = arith.constant 0 : index
    %8 = vector.load %arg4[%c0_6, %c0_7, %c0_8] : memref<1x4x128xf32, #tpu.memory_space<vmem>>, vector<1x4x128xf32>
    %9 = vector.shape_cast %8 : vector<1x4x128xf32> to vector<4x128xf32>
    %10 = vector.shape_cast %9 : vector<4x128xf32> to vector<4x1x128xf32>
    %11 = vector.broadcast %7 : vector<1x256x128xf32> to vector<4x256x128xf32>
    %12 = vector.broadcast %10 : vector<4x1x128xf32> to vector<4x256x128xf32>
    %13 = arith.addf %11, %12 : vector<4x256x128xf32>
    %14 = vector.shape_cast %4 : vector<256x128xf32> to vector<1x256x128xf32>
    %15 = vector.broadcast %14 : vector<1x256x128xf32> to vector<4x256x128xf32>
    %16 = arith.addf %15, %13 : vector<4x256x128xf32>
    %17 = vector.shape_cast %16 : vector<4x256x128xf32> to vector<1024x128xf32>
    %18 = vector.shape_cast %5 : vector<256x128xf32> to vector<1x256x128xf32>
    %19 = vector.broadcast %18 : vector<1x256x128xf32> to vector<4x256x128xf32>
    %20 = arith.addf %19, %13 : vector<4x256x128xf32>
    %21 = vector.shape_cast %20 : vector<4x256x128xf32> to vector<1024x128xf32>
    %22 = tpu.concatenate %17, %21 in 0 : vector<1024x128xf32>, vector<1024x128xf32> -> vector<2048x128xf32>
    %cst_9 = arith.constant dense<0.000000e+00> : vector<2048xf32>
    %23 = vector.multi_reduction <add>, %22, %cst_9 [1] : vector<2048x128xf32> to vector<2048xf32>
    %24 = vector.shape_cast %23 : vector<2048xf32> to vector<2048x1xf32>
    %cst_10 = arith.constant 1.280000e+02 : f32
    %25 = vector.broadcast %cst_10 : f32 to vector<2048x1xf32>
    %26 = arith.divf %24, %25 : vector<2048x1xf32>
    %27 = vector.broadcast %26 : vector<2048x1xf32> to vector<2048x128xf32>
    %28 = arith.subf %22, %27 : vector<2048x128xf32>
    %29 = arith.mulf %28, %28 : vector<2048x128xf32>
    %cst_11 = arith.constant dense<0.000000e+00> : vector<2048xf32>
    %30 = vector.multi_reduction <add>, %29, %cst_11 [1] : vector<2048x128xf32> to vector<2048xf32>
    %31 = vector.shape_cast %30 : vector<2048xf32> to vector<2048x1xf32>
    %cst_12 = arith.constant 1.280000e+02 : f32
    %32 = vector.broadcast %cst_12 : f32 to vector<2048x1xf32>
    %33 = arith.divf %31, %32 : vector<2048x1xf32>
    %34 = vector.broadcast %26 : vector<2048x1xf32> to vector<2048x128xf32>
    %35 = arith.subf %22, %34 : vector<2048x128xf32>
    %cst_13 = arith.constant 9.99999974E-6 : f32
    %36 = vector.broadcast %cst_13 : f32 to vector<2048x1xf32>
    %37 = arith.addf %33, %36 : vector<2048x1xf32>
    %38 = math.rsqrt %37 : vector<2048x1xf32>
    %39 = vector.broadcast %38 : vector<2048x1xf32> to vector<2048x128xf32>
    %40 = arith.mulf %35, %39 : vector<2048x128xf32>
    %c0_14 = arith.constant 0 : index
    %c0_15 = arith.constant 0 : index
    %41 = vector.load %arg6[%c0_14, %c0_15] : memref<1x128xf32, #tpu.memory_space<vmem>>, vector<1x128xf32>
    %42 = vector.broadcast %41 : vector<1x128xf32> to vector<2048x128xf32>
    %43 = arith.mulf %40, %42 : vector<2048x128xf32>
    %c0_16 = arith.constant 0 : index
    %c0_17 = arith.constant 0 : index
    %44 = vector.load %arg7[%c0_16, %c0_17] : memref<1x128xf32, #tpu.memory_space<vmem>>, vector<1x128xf32>
    %45 = vector.broadcast %44 : vector<1x128xf32> to vector<2048x128xf32>
    %46 = arith.addf %43, %45 : vector<2048x128xf32>
    %c0_18 = arith.constant 0 : index
    %c0_19 = arith.constant 0 : index
    %47 = vector.load %arg8[%c0_18, %c0_19] : memref<128x128xf32, #tpu.memory_space<vmem>>, vector<128x128xf32>
    %cst_20 = arith.constant dense<0.000000e+00> : vector<2048x128xf32>
    %48 = tpu.matmul %46, %47, %cst_20 {dimension_numbers = #tpu.dot_dimension_numbers<[1], [0], [0], [1], [0, 0, 1, 1], [], []>} : vector<2048x128xf32>, vector<128x128xf32>, vector<2048x128xf32> -> vector<2048x128xf32>
    %c0_21 = arith.constant 0 : index
    %c0_22 = arith.constant 0 : index
    %49 = vector.load %arg9[%c0_21, %c0_22] : memref<1x128xf32, #tpu.memory_space<vmem>>, vector<1x128xf32>
    %50 = vector.broadcast %49 : vector<1x128xf32> to vector<2048x128xf32>
    %51 = arith.addf %48, %50 : vector<2048x128xf32>
    %52 = vector.extract_strided_slice %51 {offsets = [0, 0], sizes = [1024, 128], strides = [1, 1]} : vector<2048x128xf32> to vector<1024x128xf32>
    %53 = vector.shape_cast %52 : vector<1024x128xf32> to vector<4x256x128xf32>
    %c0_23 = arith.constant 0 : index
    %c0_24 = arith.constant 0 : index
    %c0_25 = arith.constant 0 : index
    %c0_26 = arith.constant 0 : index
    %54 = vector.load %arg10[%c0_23, %c0_24, %c0_25, %c0_26] : memref<1x4x256x128xf32, #tpu.memory_space<vmem>>, vector<1x4x256x128xf32>
    %55 = vector.shape_cast %54 : vector<1x4x256x128xf32> to vector<4x256x128xf32>
    %56 = vector.shape_cast %53 : vector<4x256x128xf32> to vector<1x4x256x128xf32>
    tpu.vector_store %arg10[%c0_23, %c0_24, %c0_25, %c0_26], %56 {strides = array<i32>} : memref<1x4x256x128xf32, #tpu.memory_space<vmem>>, vector<1x4x256x128xf32>,
    %57 = vector.extract_strided_slice %51 {offsets = [1024, 0], sizes = [1024, 128], strides = [1, 1]} : vector<2048x128xf32> to vector<1024x128xf32>
    %58 = vector.shape_cast %57 : vector<1024x128xf32> to vector<4x256x128xf32>
    %c0_27 = arith.constant 0 : index
    %c0_28 = arith.constant 0 : index
    %c0_29 = arith.constant 0 : index
    %c0_30 = arith.constant 0 : index
    %59 = vector.load %arg11[%c0_27, %c0_28, %c0_29, %c0_30] : memref<1x4x256x128xf32, #tpu.memory_space<vmem>>, vector<1x4x256x128xf32>
    %60 = vector.shape_cast %59 : vector<1x4x256x128xf32> to vector<4x256x128xf32>
    %61 = vector.shape_cast %58 : vector<4x256x128xf32> to vector<1x4x256x128xf32>
    tpu.vector_store %arg11[%c0_27, %c0_28, %c0_29, %c0_30], %61 {strides = array<i32>} : memref<1x4x256x128xf32, #tpu.memory_space<vmem>>, vector<1x4x256x128xf32>,
    return
  }
  func.func @transform_0(%arg0: i32, %arg1: i32) -> (i32, i32, i32) {
    %c0_i32 = arith.constant 0 : i32
    %c0_i32_0 = arith.constant 0 : i32
    return %arg0, %arg1, %c0_i32 : i32, i32, i32
  }
  func.func @transform_1(%arg0: i32, %arg1: i32) -> (i32, i32) {
    %c0_i32 = arith.constant 0 : i32
    %c0_i32_0 = arith.constant 0 : i32
    return %arg1, %c0_i32 : i32, i32
  }
  func.func @transform_2(%arg0: i32, %arg1: i32) -> (i32, i32, i32) {
    %c0_i32 = arith.constant 0 : i32
    %c0_i32_0 = arith.constant 0 : i32
    %c0_i32_1 = arith.constant 0 : i32
    return %arg0, %c0_i32, %c0_i32_0 : i32, i32, i32
  }
  func.func @transform_3(%arg0: i32, %arg1: i32) -> (i32, i32) {
    %c0_i32 = arith.constant 0 : i32
    %c0_i32_0 = arith.constant 0 : i32
    %c0_i32_1 = arith.constant 0 : i32
    return %c0_i32, %c0_i32_0 : i32, i32
  }
  func.func @transform_4(%arg0: i32, %arg1: i32) -> (i32, i32) {
    %c0_i32 = arith.constant 0 : i32
    %c0_i32_0 = arith.constant 0 : i32
    %c0_i32_1 = arith.constant 0 : i32
    return %c0_i32, %c0_i32_0 : i32, i32
  }
  func.func @transform_5(%arg0: i32, %arg1: i32) -> (i32, i32) {
    %c0_i32 = arith.constant 0 : i32
    %c0_i32_0 = arith.constant 0 : i32
    %c0_i32_1 = arith.constant 0 : i32
    return %c0_i32, %c0_i32_0 : i32, i32
  }
  func.func @transform_6(%arg0: i32, %arg1: i32) -> (i32, i32) {
    %c0_i32 = arith.constant 0 : i32
    %c0_i32_0 = arith.constant 0 : i32
    %c0_i32_1 = arith.constant 0 : i32
    return %c0_i32, %c0_i32_0 : i32, i32
  }
  func.func @transform_7(%arg0: i32, %arg1: i32) -> (i32, i32) {
    %c0_i32 = arith.constant 0 : i32
    %c0_i32_0 = arith.constant 0 : i32
    %c0_i32_1 = arith.constant 0 : i32
    return %c0_i32, %c0_i32_0 : i32, i32
  }
  func.func @transform_8(%arg0: i32, %arg1: i32) -> (i32, i32, i32, i32) {
    %c0_i32 = arith.constant 0 : i32
    %c0_i32_0 = arith.constant 0 : i32
    %c0_i32_1 = arith.constant 0 : i32
    return %arg0, %c0_i32, %arg1, %c0_i32_0 : i32, i32, i32, i32
  }
  func.func @transform_9(%arg0: i32, %arg1: i32) -> (i32, i32, i32, i32) {
    %c0_i32 = arith.constant 0 : i32
    %c0_i32_0 = arith.constant 0 : i32
    %c0_i32_1 = arith.constant 0 : i32
    return %arg0, %c0_i32, %arg1, %c0_i32_0 : i32, i32, i32, i32
  }
}

</mosaic_0001>

<llo_original>
// kernel: _lambda_.1
$region0: #{_lambda_.1}
  #allocation0 [shape = 'u32[]', space=smem, size = 0x4, offset = 0x4, fixed_abs, tag = 'smem constant byte address 0x4 - core index']
  #allocation1 [shape = 'u32[72,128]{1,0:T(1,128)}', space=vmem, size = 0x9000, scoped, tag = 'internal scratch']
  %s0 = inlined_call_operand.vmem [shape: f32[2,256,128], index: 0, kind: input, shape index: {}]
  %s1 = inlined_call_operand.vmem [shape: f32[256,128], index: 1, kind: input, shape index: {}]
  %s2 = inlined_call_operand.vmem [shape: f32[2,4,128], index: 2, kind: input, shape index: {}]
  %s3 = inlined_call_operand.vmem [shape: f32[128,256], index: 3, kind: input, shape index: {}]
  %s4 = inlined_call_operand.vmem [shape: f32[1,128], index: 4, kind: input, shape index: {}]
  %s5 = inlined_call_operand.vmem [shape: f32[1,128], index: 5, kind: input, shape index: {}]
  %s6 = inlined_call_operand.hbm [shape: f32[128,128], index: 6, kind: input, shape index: {}]
  %s7 = inlined_call_operand.vmem [shape: f32[1,128], index: 7, kind: input, shape index: {}]
  %s8 = inlined_call_operand.hbm [shape: f32[2,4,256,128], index: 8, kind: output, shape index: {0}]
  %s9 = inlined_call_operand.hbm [shape: f32[2,4,256,128], index: 9, kind: output, shape index: {1}]
  %10 = xla_tuple %s8, %s9
  %s11 = sld [smem:[#allocation0]]
  $region77: #{_lambda_.1} parent=0
    _
  %s13 = ssub.s32 1, %s11
  %s14 = scalar_select 0, %s13, %s11
  $region1: #{_lambda_.1} parent=0
    #allocation2 [shape = 'u8[65536]{0}', space=vmem, size = 0x10000, scoped, tag = 'input window, operand 6, single buffered']
    #allocation3 [shape = 's32[2]{0}', space=sflag, size = 0x8, scoped, tag = 'scoped memory for _lambda_.1']
    #allocation4 [shape = 's32[2]{0}', space=sflag, size = 0x8, scoped, tag = 'scoped memory for _lambda_.1']
    #allocation5 [shape = 'u8[1048576]{0}', space=vmem, size = 0x100000, scoped, tag = 'output window, operand 0']
    #allocation6 [shape = 'u8[1048576]{0}', space=vmem, size = 0x100000, scoped, tag = 'output window, operand 1']
    #allocation7 [shape = 's32[2]{0}', space=sflag, size = 0x8, scoped, tag = 'scoped memory for _lambda_.1']
    %15 = vsyncpa [#allocation3], 0
    %16 = vsyncpa [#allocation4], 0
    %s17 = scalar_lea.sflag [#allocation4], 1
    %18 = vsyncpa %s17, 0
    %19 = vsyncpa [#allocation7], 0
    %s20 = scalar_lea.sflag [#allocation7], 1
    %21 = vsyncpa %s20, 0
    loop: start=0, step=1, limit=4
    $region2: #{_lambda_.1} parent=1 // loop_pre_header
      _
    $region3: #{_lambda_.1} parent=1 // loop_header
      %s23 = sphi 0, %s27
      %p24 = scmp.ge.s32.totalorder %s23, 4
      %s30 = sphi 0, %s42
      %s31 = sphi 0, %s38
      %s32 = sphi 0, %s30
      %s33 = sphi 0, %s31
      %s34 = sphi 0, %s32
      %s35 = sphi 0, %s33
      %s47 = sphi 0, %s49
      %s50 = sphi 0, %s47
      %s51 = sphi 0, %s50
      %s67 = sphi 0, %s51
      %s73 = sphi 0, %s75
      %s76 = sphi 0, %s73
      %s77 = sphi 0, %s76
      %s93 = sphi 0, %s77
      %s99 = sphi 0, %s101
      %s102 = sphi 0, %s99
      %s103 = sphi 0, %s102
      %s119 = sphi 0, %s103
      %s123 = sphi 0, %s123
      %s125 = sphi 0, %s123
      %s126 = sphi 0, %s125
      %s140 = sphi 0, %s126
      %s144 = sphi 0, %s144
      %s146 = sphi 0, %s144
      %s147 = sphi 0, %s146
      %s161 = sphi 0, %s147
      %s165 = sphi 0, %s165
      %s167 = sphi 0, %s165
      %s168 = sphi 0, %s167
      %s182 = sphi 0, %s168
      %s186 = sphi 0, %s186
      %s188 = sphi 0, %s186
      %s189 = sphi 0, %s188
      %s203 = sphi 0, %s189
      %s207 = sphi 0, %s207
      %s209 = sphi 0, %s207
      %s210 = sphi 0, %s209
      %s224 = sphi 0, %s210
      %s232 = sphi 0, %s234
      %s235 = sphi 0, %s232
      %s236 = sphi 0, %s235
      %s252 = sphi 0, %s236
      %s260 = sphi 0, %s262
      %s263 = sphi 0, %s260
      %s264 = sphi 0, %s263
      %s280 = sphi 0, %s264
    $region4: #{_lambda_.1} parent=1 // loop_header_branch
      %26 = sbr.rel (%p24) target = $region8
    $region5: #{_lambda_.1} parent=1 // loop_body
      %s28 = ssub.s32 %s23, 1
      %s29 = ssub.s32 %s23, 2
      %s36 = sadd.s32 1, %s31
      %p37 = scmp.ge.s32.totalorder %s36, 1
      %s38 = scalar_select %p37, 0, %s36
      %s39 = sadd.s32 1, %s30
      %s40 = scalar_select %p37, %s39, %s30
      %p41 = scmp.ge.s32.totalorder %s40, 2
      %s42 = scalar_select %p41, 0, %s40
      %s43 = ssub.s32 %s30, %s42
      %s44 = ssub.s32 %s31, %s38
      %s45 = sor.u32 %s43, %s44
      %p46 = scmp.eq.s32.totalorder %s45, 0
      %s48 = sadd.s32 %s47, 1
      %s49 = scalar_select %p46, %s47, %s48
      %p52 = pneg %p46
      %p53 = scmp.eq.s32.totalorder %s23, 1
      %p54 = por %p52, %p53
      %p55 = scmp.ne.s32.totalorder %s47, %s50
      %p56 = scmp.eq.s32.totalorder %s23, 0
      %p57 = por %p55, %p56
      %p58 = scmp.ne.s32.totalorder %s47, %s50
      %p59 = scmp.eq.s32.totalorder %s28, 1
      %p60 = por %p58, %p59
      %p61 = scmp.ne.s32.totalorder %s50, %s51
      %p62 = scmp.eq.s32.totalorder %s28, 0
      %p63 = por %p61, %p62
      %p64 = scmp.ne.s32.totalorder %s50, %s51
      %p65 = scmp.eq.s32.totalorder %s29, 1
      %p66 = por %p64, %p65
      %p68 = scmp.ne.s32.totalorder %s51, %s67
      %p69 = scmp.eq.s32.totalorder %s29, 0
      %p70 = por %p68, %p69
      %s71 = ssub.s32 %s31, %s38
      %p72 = scmp.eq.s32.totalorder %s71, 0
      %s74 = sadd.s32 %s73, 1
      %s75 = scalar_select %p72, %s73, %s74
      %p78 = pneg %p72
      %p79 = scmp.eq.s32.totalorder %s23, 1
      %p80 = por %p78, %p79
      %p81 = scmp.ne.s32.totalorder %s73, %s76
      %p82 = scmp.eq.s32.totalorder %s23, 0
      %p83 = por %p81, %p82
      %p84 = scmp.ne.s32.totalorder %s73, %s76
      %p85 = scmp.eq.s32.totalorder %s28, 1
      %p86 = por %p84, %p85
      %p87 = scmp.ne.s32.totalorder %s76, %s77
      %p88 = scmp.eq.s32.totalorder %s28, 0
      %p89 = por %p87, %p88
      %p90 = scmp.ne.s32.totalorder %s76, %s77
      %p91 = scmp.eq.s32.totalorder %s29, 1
      %p92 = por %p90, %p91
      %p94 = scmp.ne.s32.totalorder %s77, %s93
      %p95 = scmp.eq.s32.totalorder %s29, 0
      %p96 = por %p94, %p95
      %s97 = ssub.s32 %s30, %s42
      %p98 = scmp.eq.s32.totalorder %s97, 0
      %s100 = sadd.s32 %s99, 1
      %s101 = scalar_select %p98, %s99, %s100
      %p104 = pneg %p98
      %p105 = scmp.eq.s32.totalorder %s23, 1
      %p106 = por %p104, %p105
      %p107 = scmp.ne.s32.totalorder %s99, %s102
      %p108 = scmp.eq.s32.totalorder %s23, 0
      %p109 = por %p107, %p108
      %p110 = scmp.ne.s32.totalorder %s99, %s102
      %p111 = scmp.eq.s32.totalorder %s28, 1
      %p112 = por %p110, %p111
      %p113 = scmp.ne.s32.totalorder %s102, %s103
      %p114 = scmp.eq.s32.totalorder %s28, 0
      %p115 = por %p113, %p114
      %p116 = scmp.ne.s32.totalorder %s102, %s103
      %p117 = scmp.eq.s32.totalorder %s29, 1
      %p118 = por %p116, %p117
      %p120 = scmp.ne.s32.totalorder %s103, %s119
      %p121 = scmp.eq.s32.totalorder %s29, 0
      %p122 = por %p120, %p121
      %s124 = sadd.s32 %s123, 1
      %p127 = scmp.eq.s32.totalorder %s23, 1
      %p128 = scmp.ne.s32.totalorder %s123, %s125
      %p129 = scmp.eq.s32.totalorder %s23, 0
      %p130 = por %p128, %p129
      %p131 = scmp.ne.s32.totalorder %s123, %s125
      %p132 = scmp.eq.s32.totalorder %s28, 1
      %p133 = por %p131, %p132
      %p134 = scmp.ne.s32.totalorder %s125, %s126
      %p135 = scmp.eq.s32.totalorder %s28, 0
      %p136 = por %p134, %p135
      %p137 = scmp.ne.s32.totalorder %s125, %s126
      %p138 = scmp.eq.s32.totalorder %s29, 1
      %p139 = por %p137, %p138
      %p141 = scmp.ne.s32.totalorder %s126, %s140
      %p142 = scmp.eq.s32.totalorder %s29, 0
      %p143 = por %p141, %p142
      %s145 = sadd.s32 %s144, 1
      %p148 = scmp.eq.s32.totalorder %s23, 1
      %p149 = scmp.ne.s32.totalorder %s144, %s146
      %p150 = scmp.eq.s32.totalorder %s23, 0
      %p151 = por %p149, %p150
      %p152 = scmp.ne.s32.totalorder %s144, %s146
      %p153 = scmp.eq.s32.totalorder %s28, 1
      %p154 = por %p152, %p153
      %p155 = scmp.ne.s32.totalorder %s146, %s147
      %p156 = scmp.eq.s32.totalorder %s28, 0
      %p157 = por %p155, %p156
      %p158 = scmp.ne.s32.totalorder %s146, %s147
      %p159 = scmp.eq.s32.totalorder %s29, 1
      %p160 = por %p158, %p159
      %p162 = scmp.ne.s32.totalorder %s147, %s161
      %p163 = scmp.eq.s32.totalorder %s29, 0
      %p164 = por %p162, %p163
      %s166 = sadd.s32 %s165, 1
      %p169 = scmp.eq.s32.totalorder %s23, 1
      %p170 = scmp.ne.s32.totalorder %s165, %s167
      %p171 = scmp.eq.s32.totalorder %s23, 0
      %p172 = por %p170, %p171
      %p173 = scmp.ne.s32.totalorder %s165, %s167
      %p174 = scmp.eq.s32.totalorder %s28, 1
      %p175 = por %p173, %p174
      %p176 = scmp.ne.s32.totalorder %s167, %s168
      %p177 = scmp.eq.s32.totalorder %s28, 0
      %p178 = por %p176, %p177
      %p179 = scmp.ne.s32.totalorder %s167, %s168
      %p180 = scmp.eq.s32.totalorder %s29, 1
      %p181 = por %p179, %p180
      %p183 = scmp.ne.s32.totalorder %s168, %s182
      %p184 = scmp.eq.s32.totalorder %s29, 0
      %p185 = por %p183, %p184
      %s187 = sadd.s32 %s186, 1
      %p190 = scmp.eq.s32.totalorder %s23, 1
      %p191 = scmp.ne.s32.totalorder %s186, %s188
      %p192 = scmp.eq.s32.totalorder %s23, 0
      %p193 = por %p191, %p192
      %p194 = scmp.ne.s32.totalorder %s186, %s188
      %p195 = scmp.eq.s32.totalorder %s28, 1
      %p196 = por %p194, %p195
      %p197 = scmp.ne.s32.totalorder %s188, %s189
      %p198 = scmp.eq.s32.totalorder %s28, 0
      %p199 = por %p197, %p198
      %p200 = scmp.ne.s32.totalorder %s188, %s189
      %p201 = scmp.eq.s32.totalorder %s29, 1
      %p202 = por %p200, %p201
      %p204 = scmp.ne.s32.totalorder %s189, %s203
      %p205 = scmp.eq.s32.totalorder %s29, 0
      %p206 = por %p204, %p205
      %s208 = sadd.s32 %s207, 1
      %p211 = scmp.eq.s32.totalorder %s23, 1
      %p212 = scmp.ne.s32.totalorder %s207, %s209
      %p213 = scmp.eq.s32.totalorder %s23, 0
      %p214 = por %p212, %p213
      %p215 = scmp.ne.s32.totalorder %s207, %s209
      %p216 = scmp.eq.s32.totalorder %s28, 1
      %p217 = por %p215, %p216
      %p218 = scmp.ne.s32.totalorder %s209, %s210
      %p219 = scmp.eq.s32.totalorder %s28, 0
      %p220 = por %p218, %p219
      %p221 = scmp.ne.s32.totalorder %s209, %s210
      %p222 = scmp.eq.s32.totalorder %s29, 1
      %p223 = por %p221, %p222
      %p225 = scmp.ne.s32.totalorder %s210, %s224
      %p226 = scmp.eq.s32.totalorder %s29, 0
      %p227 = por %p225, %p226
      %s228 = ssub.s32 %s30, %s42
      %s229 = ssub.s32 %s31, %s38
      %s230 = sor.u32 %s228, %s229
      %p231 = scmp.eq.s32.totalorder %s230, 0
      %s233 = sadd.s32 %s232, 1
      %s234 = scalar_select %p231, %s232, %s233
      %p237 = pneg %p231
      %p238 = scmp.eq.s32.totalorder %s23, 1
      %p239 = por %p237, %p238
      %p240 = scmp.ne.s32.totalorder %s232, %s235
      %p241 = scmp.eq.s32.totalorder %s23, 0
      %p242 = por %p240, %p241
      %p243 = scmp.ne.s32.totalorder %s232, %s235
      %p244 = scmp.eq.s32.totalorder %s28, 1
      %p245 = por %p243, %p244
      %p246 = scmp.ne.s32.totalorder %s235, %s236
      %p247 = scmp.eq.s32.totalorder %s28, 0
      %p248 = por %p246, %p247
      %p249 = scmp.ne.s32.totalorder %s235, %s236
      %p250 = scmp.eq.s32.totalorder %s29, 1
      %p251 = por %p249, %p250
      %p253 = scmp.ne.s32.totalorder %s236, %s252
      %p254 = scmp.eq.s32.totalorder %s29, 0
      %p255 = por %p253, %p254
      %s256 = ssub.s32 %s30, %s42
      %s257 = ssub.s32 %s31, %s38
      %s258 = sor.u32 %s256, %s257
      %p259 = scmp.eq.s32.totalorder %s258, 0
      %s261 = sadd.s32 %s260, 1
      %s262 = scalar_select %p259, %s260, %s261
      %p265 = pneg %p259
      %p266 = scmp.eq.s32.totalorder %s23, 1
      %p267 = por %p265, %p266
      %p268 = scmp.ne.s32.totalorder %s260, %s263
      %p269 = scmp.eq.s32.totalorder %s23, 0
      %p270 = por %p268, %p269
      %p271 = scmp.ne.s32.totalorder %s260, %s263
      %p272 = scmp.eq.s32.totalorder %s28, 1
      %p273 = por %p271, %p272
      %p274 = scmp.ne.s32.totalorder %s263, %s264
      %p275 = scmp.eq.s32.totalorder %s28, 0
      %p276 = por %p274, %p275
      %p277 = scmp.ne.s32.totalorder %s263, %s264
      %p278 = scmp.eq.s32.totalorder %s29, 1
      %p279 = por %p277, %p278
      %p281 = scmp.ne.s32.totalorder %s264, %s280
      %p282 = scmp.eq.s32.totalorder %s29, 0
      %p283 = por %p281, %p282
      %p284 = scmp.le.s32.totalorder 1, %s23
      %p285 = scmp.lt.s32.totalorder %s23, 3
      %p286 = pnand %p284, %p285
      %p287 = pneg %p286
      // Predicated region
      $region9: #{_lambda_.1} parent=5 // pred_check
        _
      $region10: #{_lambda_.1} parent=5 // pred_check_branch
        %289 = sbr.rel (%p286) target = $region12
      $region11: #{_lambda_.1} parent=5 // pred_region
        %s290 = ssub.s32 %s23, 1
        // Predicated region
        $region13: #{_lambda_.1} parent=11 // pred_check
          %p291 = pneg %p89
        $region14: #{_lambda_.1} parent=11 // pred_check_branch
          %293 = sbr.rel (%p291) target = $region16
        $region15: #{_lambda_.1} parent=11 // pred_region
          %s294 = smul.u32 32, %s33
          %p295 = scmp.lt.s32.totalorder %s294, 31
          %s296 = scalar_select %p295, %s294, 31
          %s297 = smul.addr %s296, 8
          %s298 = scalar_lea.vmem %s1, %s297
          %s299 = smul.u32 32, %s33
        $region16: #{_lambda_.1} parent=11 // pred_fallthru
          _
        // Predicated region
        $region17: #{_lambda_.1} parent=11 // pred_check
          %p300 = pneg %p136
        $region18: #{_lambda_.1} parent=11 // pred_check_branch
          %302 = sbr.rel (%p300) target = $region20
        $region19: #{_lambda_.1} parent=11 // pred_region
          _
        $region20: #{_lambda_.1} parent=11 // pred_fallthru
          _
        // Predicated region
        $region21: #{_lambda_.1} parent=11 // pred_check
          %p303 = pneg %p157
        $region22: #{_lambda_.1} parent=11 // pred_check_branch
          %305 = sbr.rel (%p303) target = $region24
        $region23: #{_lambda_.1} parent=11 // pred_region
          _
        $region24: #{_lambda_.1} parent=11 // pred_fallthru
          _
        // Predicated region
        $region25: #{_lambda_.1} parent=11 // pred_check
          %p306 = pneg %p178
        $region26: #{_lambda_.1} parent=11 // pred_check_branch
          %308 = sbr.rel (%p306) target = $region28
        $region27: #{_lambda_.1} parent=11 // pred_region
          _
        $region28: #{_lambda_.1} parent=11 // pred_fallthru
          _
        // Predicated region
        $region29: #{_lambda_.1} parent=11 // pred_check
          %p309 = pneg %p199
        $region30: #{_lambda_.1} parent=11 // pred_check_branch
          %311 = sbr.rel (%p309) target = $region32
        $region31: #{_lambda_.1} parent=11 // pred_region
          %313 = vsyncadd [#allocation3], 0
          %s314 = sshll.u32 %s6, 4
          %s315 = int_to_ptr.hbm [resolvable:$true] %s314
          %s316 = sshll.u32 [#allocation2], 4
          %s317 = int_to_ptr.vmem [resolvable:$true] %s316
          %322 = dma.hbm_to_vmem [thread:$0]  %s315, 2048, %s317, [#allocation3], 128, 128, 8
        $region32: #{_lambda_.1} parent=11 // pred_fallthru
          _
        // Predicated region
        $region33: #{_lambda_.1} parent=11 // pred_check
          %p323 = pneg %p220
        $region34: #{_lambda_.1} parent=11 // pred_check_branch
          %325 = sbr.rel (%p323) target = $region36
        $region35: #{_lambda_.1} parent=11 // pred_region
          _
        $region36: #{_lambda_.1} parent=11 // pred_fallthru
          _
      $region12: #{_lambda_.1} parent=5 // pred_fallthru
        _
      %p326 = scmp.lt.s32.totalorder %s23, 2
      // Predicated region
      $region37: #{_lambda_.1} parent=5 // pred_check
        %p327 = pneg %p326
      $region38: #{_lambda_.1} parent=5 // pred_check_branch
        %329 = sbr.rel (%p327) target = $region40
      $region39: #{_lambda_.1} parent=5 // pred_region
        // Predicated region
        $region41: #{_lambda_.1} parent=39 // pred_check
          %p330 = pneg %p57
        $region42: #{_lambda_.1} parent=39 // pred_check_branch
          %332 = sbr.rel (%p330) target = $region44
        $region43: #{_lambda_.1} parent=39 // pred_region
          %s333 = smul.u32 32, %s31
          %p334 = scmp.lt.s32.totalorder %s30, 1
          %s335 = scalar_select %p334, %s30, 1
          %p336 = scmp.lt.s32.totalorder %s333, 31
          %s337 = scalar_select %p336, %s333, 31
          %s338 = smul.addr %s335, 32
          %s339 = sadd.s32 %s337, %s338
          %s340 = smul.addr %s339, 8
          %s341 = scalar_lea.vmem %s0, %s340
          %s342 = smul.u32 32, %s31
        $region44: #{_lambda_.1} parent=39 // pred_fallthru
          _
        // Predicated region
        $region45: #{_lambda_.1} parent=39 // pred_check
          %p343 = pneg %p109
        $region46: #{_lambda_.1} parent=39 // pred_check_branch
          %345 = sbr.rel (%p343) target = $region48
        $region47: #{_lambda_.1} parent=39 // pred_region
          %p346 = scmp.lt.s32.totalorder %s30, 1
          %s347 = scalar_select %p346, %s30, 1
          %s348 = smul.addr %s347, 4
          %s349 = scalar_lea.vmem %s2, %s348
        $region48: #{_lambda_.1} parent=39 // pred_fallthru
          _
      $region40: #{_lambda_.1} parent=5 // pred_fallthru
        _
      %p350 = scmp.le.s32.totalorder 1, %s23
      %p351 = scmp.lt.s32.totalorder %s23, 3
      %p352 = pnand %p350, %p351
      %p353 = pneg %p352
      // Predicated region
      $region49: #{_lambda_.1} parent=5 // pred_check
        _
      $region50: #{_lambda_.1} parent=5 // pred_check_branch
        %355 = sbr.rel (%p352) target = $region52
      $region51: #{_lambda_.1} parent=5 // pred_region
        %s356 = ssub.s32 %s23, 1
        // Predicated region
        $region53: #{_lambda_.1} parent=51 // pred_check
          %p357 = pneg %p199
        $region54: #{_lambda_.1} parent=51 // pred_check_branch
          %359 = sbr.rel (%p357) target = $region56
        $region55: #{_lambda_.1} parent=51 // pred_region
          %361 = dma.done [#allocation3], 2048
        $region56: #{_lambda_.1} parent=51 // pred_fallthru
          _
        %s362 = smul.u32 32, %s33
        %p363 = scmp.lt.s32.totalorder %s32, 1
        %s364 = scalar_select %p363, %s32, 1
        %p365 = scmp.lt.s32.totalorder %s362, 31
        %s366 = scalar_select %p365, %s362, 31
        %s367 = smul.addr %s364, 32
        %s368 = sadd.s32 %s366, %s367
        %s369 = smul.addr %s368, 8
        %s370 = scalar_lea.vmem %s0, %s369
        %p371 = pneg %p63
        %p372 = pneg %p60
        %s373 = smul.u32 32, %s33
        %p374 = scmp.lt.s32.totalorder %s373, 31
        %s375 = scalar_select %p374, %s373, 31
        %s376 = smul.addr %s375, 8
        %s377 = scalar_lea.vmem %s1, %s376
        %p378 = pneg %p89
        %p379 = pneg %p86
        %p380 = scmp.lt.s32.totalorder %s32, 1
        %s381 = scalar_select %p380, %s32, 1
        %s382 = smul.addr %s381, 4
        %s383 = scalar_lea.vmem %s2, %s382
        %p384 = pneg %p115
        %p385 = pneg %p112
        %p386 = pneg %p136
        %p387 = pneg %p133
        %p388 = pneg %p157
        %p389 = pneg %p154
        %p390 = pneg %p178
        %p391 = pneg %p175
        %p392 = pneg %p199
        %p393 = pneg %p196
        %p394 = pneg %p220
        %p395 = pneg %p217
        %p396 = pneg %p248
        %p397 = pneg %p245
        %s398 = sand.u32 %s235, 1
        %s399 = scalar_lea.sflag [#allocation4], %s398
        %s400 = sand.u32 %s235, 1
        %s401 = smul.addr %s400, 1024
        %s402 = scalar_lea.vmem [#allocation5], %s401
        %p403 = pneg %p276
        %p404 = pneg %p273
        %s405 = sand.u32 %s263, 1
        %s406 = scalar_lea.sflag [#allocation7], %s405
        %s407 = sand.u32 %s263, 1
        %s408 = smul.addr %s407, 1024
        %s409 = scalar_lea.vmem [#allocation6], %s408
        %s410 = smul.u32 32, %s33
        %p411 = scmp.lt.s32.totalorder %s32, 1
        %s412 = scalar_select %p411, %s32, 1
        %p413 = scmp.lt.s32.totalorder %s410, 31
        %s414 = scalar_select %p413, %s410, 31
        %s415 = smul.addr %s412, 32
        %s416 = sadd.s32 %s414, %s415
        %s417 = smul.addr %s416, 8
        %s418 = scalar_lea.vmem %s0, %s417
        %s419 = smul.u32 32, %s33
        %s420 = smul.u32 32, %s33
        %p421 = scmp.lt.s32.totalorder %s420, 31
        %s422 = scalar_select %p421, %s420, 31
        %s423 = smul.addr %s422, 8
        %s424 = scalar_lea.vmem %s1, %s423
        %s425 = smul.u32 32, %s33
        %p426 = scmp.lt.s32.totalorder %s32, 1
        %s427 = scalar_select %p426, %s32, 1
        %s428 = smul.addr %s427, 4
        %s429 = scalar_lea.vmem %s2, %s428
        %s430 = smul.u32 32, %s33
        %s431 = smul.u32 32, %s33
        %v432 = vld [vmem:[%s418] sm:$0xff]
        %v433 = vld [vmem:[%s418 + $0x8] sm:$0xff]
        %v434 = vld [vmem:[%s418 + $0x10] sm:$0xff]
        %v435 = vld [vmem:[%s418 + $0x18] sm:$0xff]
        %v436 = vld [vmem:[%s418 + $0x20] sm:$0xff]
        %v437 = vld [vmem:[%s418 + $0x28] sm:$0xff]
        %v438 = vld [vmem:[%s418 + $0x30] sm:$0xff]
        %v439 = vld [vmem:[%s418 + $0x38] sm:$0xff]
        %v440 = vld [vmem:[%s418 + $0x40] sm:$0xff]
        %v441 = vld [vmem:[%s418 + $0x48] sm:$0xff]
        %v442 = vld [vmem:[%s418 + $0x50] sm:$0xff]
        %v443 = vld [vmem:[%s418 + $0x58] sm:$0xff]
        %v444 = vld [vmem:[%s418 + $0x60] sm:$0xff]
        %v445 = vld [vmem:[%s418 + $0x68] sm:$0xff]
        %v446 = vld [vmem:[%s418 + $0x70] sm:$0xff]
        %v447 = vld [vmem:[%s418 + $0x78] sm:$0xff]
        %v448 = vld [vmem:[%s418 + $0x80] sm:$0xff]
        %v449 = vld [vmem:[%s418 + $0x88] sm:$0xff]
        %v450 = vld [vmem:[%s418 + $0x90] sm:$0xff]
        %v451 = vld [vmem:[%s418 + $0x98] sm:$0xff]
        %v452 = vld [vmem:[%s418 + $0xa0] sm:$0xff]
        %v453 = vld [vmem:[%s418 + $0xa8] sm:$0xff]
        %v454 = vld [vmem:[%s418 + $0xb0] sm:$0xff]
        %v455 = vld [vmem:[%s418 + $0xb8] sm:$0xff]
        %v456 = vld [vmem:[%s418 + $0xc0] sm:$0xff]
        %v457 = vld [vmem:[%s418 + $0xc8] sm:$0xff]
        %v458 = vld [vmem:[%s418 + $0xd0] sm:$0xff]
        %v459 = vld [vmem:[%s418 + $0xd8] sm:$0xff]
        %v460 = vld [vmem:[%s418 + $0xe0] sm:$0xff]
        %v461 = vld [vmem:[%s418 + $0xe8] sm:$0xff]
        %v462 = vld [vmem:[%s418 + $0xf0] sm:$0xff]
        %v463 = vld [vmem:[%s418 + $0xf8] sm:$0xff]
        %v464 = vld [vmem:[%s3] sm:$0xff]
        %v465 = vld [vmem:[%s3 + $0x8] sm:$0xff]
        %v466 = vld [vmem:[%s3 + $0x10] sm:$0xff]
        %v467 = vld [vmem:[%s3 + $0x18] sm:$0xff]
        %v468 = vld [vmem:[%s3 + $0x20] sm:$0xff]
        %v469 = vld [vmem:[%s3 + $0x28] sm:$0xff]
        %v470 = vld [vmem:[%s3 + $0x30] sm:$0xff]
        %v471 = vld [vmem:[%s3 + $0x38] sm:$0xff]
        %v472 = vld [vmem:[%s3 + $0x40] sm:$0xff]
        %v473 = vld [vmem:[%s3 + $0x48] sm:$0xff]
        %v474 = vld [vmem:[%s3 + $0x50] sm:$0xff]
        %v475 = vld [vmem:[%s3 + $0x58] sm:$0xff]
        %v476 = vld [vmem:[%s3 + $0x60] sm:$0xff]
        %v477 = vld [vmem:[%s3 + $0x68] sm:$0xff]
        %v478 = vld [vmem:[%s3 + $0x70] sm:$0xff]
        %v479 = vld [vmem:[%s3 + $0x78] sm:$0xff]
        %v480 = vld [vmem:[%s3 + $0x80] sm:$0xff]
        %v481 = vld [vmem:[%s3 + $0x88] sm:$0xff]
        %v482 = vld [vmem:[%s3 + $0x90] sm:$0xff]
        %v483 = vld [vmem:[%s3 + $0x98] sm:$0xff]
        %v484 = vld [vmem:[%s3 + $0xa0] sm:$0xff]
        %v485 = vld [vmem:[%s3 + $0xa8] sm:$0xff]
        %v486 = vld [vmem:[%s3 + $0xb0] sm:$0xff]
        %v487 = vld [vmem:[%s3 + $0xb8] sm:$0xff]
        %v488 = vld [vmem:[%s3 + $0xc0] sm:$0xff]
        %v489 = vld [vmem:[%s3 + $0xc8] sm:$0xff]
        %v490 = vld [vmem:[%s3 + $0xd0] sm:$0xff]
        %v491 = vld [vmem:[%s3 + $0xd8] sm:$0xff]
        %v492 = vld [vmem:[%s3 + $0xe0] sm:$0xff]
        %v493 = vld [vmem:[%s3 + $0xe8] sm:$0xff]
        %v494 = vld [vmem:[%s3 + $0xf0] sm:$0xff]
        %v495 = vld [vmem:[%s3 + $0xf8] sm:$0xff]
        %496 = vmatpush.msra.mxu0 %v494
        %497 = vmatpush.msra.mxu0 %v492
        %498 = vmatpush.msra.mxu0 %v490
        %499 = vmatpush.msra.mxu0 %v488
        %500 = vmatpush.msra.mxu0 %v486
        %501 = vmatpush.msra.mxu0 %v484
        %502 = vmatpush.msra.mxu0 %v482
        %503 = vmatpush.msra.mxu0 %v480
        %504 = vmatpush.msra.mxu0 %v478
        %505 = vmatpush.msra.mxu0 %v476
        %506 = vmatpush.msra.mxu0 %v474
        %507 = vmatpush.msra.mxu0 %v472
        %508 = vmatpush.msra.mxu0 %v470
        %509 = vmatpush.msra.mxu0 %v468
        %510 = vmatpush.msra.mxu0 %v466
        %511 = vmatpush.msra.mxu0 %v464
        %512 = vmatmul.f32.gmra.mxu0 %v432
        %v513 = vpop.f32.mrf.mxu0
        %v514 = vadd.f32 0.0, %v513
        %515 = vmatmul.f32.gmra.mxu0 %v433
        %v516 = vpop.f32.mrf.mxu0
        %v517 = vadd.f32 0.0, %v516
        %518 = vmatmul.f32.gmra.mxu0 %v434
        %v519 = vpop.f32.mrf.mxu0
        %v520 = vadd.f32 0.0, %v519
        %521 = vmatmul.f32.gmra.mxu0 %v435
        %v522 = vpop.f32.mrf.mxu0
        %v523 = vadd.f32 0.0, %v522
        %524 = vmatmul.f32.gmra.mxu0 %v436
        %v525 = vpop.f32.mrf.mxu0
        %v526 = vadd.f32 0.0, %v525
        %527 = vmatmul.f32.gmra.mxu0 %v437
        %v528 = vpop.f32.mrf.mxu0
        %v529 = vadd.f32 0.0, %v528
        %530 = vmatmul.f32.gmra.mxu0 %v438
        %v531 = vpop.f32.mrf.mxu0
        %v532 = vadd.f32 0.0, %v531
        %533 = vmatmul.f32.gmra.mxu0 %v439
        %v534 = vpop.f32.mrf.mxu0
        %v535 = vadd.f32 0.0, %v534
        %536 = vmatmul.f32.gmra.mxu0 %v440
        %v537 = vpop.f32.mrf.mxu0
        %v538 = vadd.f32 0.0, %v537
        %539 = vmatmul.f32.gmra.mxu0 %v441
        %v540 = vpop.f32.mrf.mxu0
        %v541 = vadd.f32 0.0, %v540
        %542 = vmatmul.f32.gmra.mxu0 %v442
        %v543 = vpop.f32.mrf.mxu0
        %v544 = vadd.f32 0.0, %v543
        %545 = vmatmul.f32.gmra.mxu0 %v443
        %v546 = vpop.f32.mrf.mxu0
        %v547 = vadd.f32 0.0, %v546
        %548 = vmatmul.f32.gmra.mxu0 %v444
        %v549 = vpop.f32.mrf.mxu0
        %v550 = vadd.f32 0.0, %v549
        %551 = vmatmul.f32.gmra.mxu0 %v445
        %v552 = vpop.f32.mrf.mxu0
        %v553 = vadd.f32 0.0, %v552
        %554 = vmatmul.f32.gmra.mxu0 %v446
        %v555 = vpop.f32.mrf.mxu0
        %v556 = vadd.f32 0.0, %v555
        %557 = vmatmul.f32.gmra.mxu0 %v447
        %v558 = vpop.f32.mrf.mxu0
        %v559 = vadd.f32 0.0, %v558
        %560 = vmatmul.f32.gmra.mxu0 %v448
        %v561 = vpop.f32.mrf.mxu0
        %v562 = vadd.f32 0.0, %v561
        %563 = vmatmul.f32.gmra.mxu0 %v449
        %v564 = vpop.f32.mrf.mxu0
        %v565 = vadd.f32 0.0, %v564
        %566 = vmatmul.f32.gmra.mxu0 %v450
        %v567 = vpop.f32.mrf.mxu0
        %v568 = vadd.f32 0.0, %v567
        %569 = vmatmul.f32.gmra.mxu0 %v451
        %v570 = vpop.f32.mrf.mxu0
        %v571 = vadd.f32 0.0, %v570
        %572 = vmatmul.f32.gmra.mxu0 %v452
        %v573 = vpop.f32.mrf.mxu0
        %v574 = vadd.f32 0.0, %v573
        %575 = vmatmul.f32.gmra.mxu0 %v453
        %v576 = vpop.f32.mrf.mxu0
        %v577 = vadd.f32 0.0, %v576
        %578 = vmatmul.f32.gmra.mxu0 %v454
        %v579 = vpop.f32.mrf.mxu0
        %v580 = vadd.f32 0.0, %v579
        %581 = vmatmul.f32.gmra.mxu0 %v455
        %v582 = vpop.f32.mrf.mxu0
        %v583 = vadd.f32 0.0, %v582
        %584 = vmatmul.f32.gmra.mxu0 %v456
        %v585 = vpop.f32.mrf.mxu0
        %v586 = vadd.f32 0.0, %v585
        %587 = vmatmul.f32.gmra.mxu0 %v457
        %v588 = vpop.f32.mrf.mxu0
        %v589 = vadd.f32 0.0, %v588
        %590 = vmatmul.f32.gmra.mxu0 %v458
        %v591 = vpop.f32.mrf.mxu0
        %v592 = vadd.f32 0.0, %v591
        %593 = vmatmul.f32.gmra.mxu0 %v459
        %v594 = vpop.f32.mrf.mxu0
        %v595 = vadd.f32 0.0, %v594
        %596 = vmatmul.f32.gmra.mxu0 %v460
        %v597 = vpop.f32.mrf.mxu0
        %v598 = vadd.f32 0.0, %v597
        %599 = vmatmul.f32.gmra.mxu0 %v461
        %v600 = vpop.f32.mrf.mxu0
        %v601 = vadd.f32 0.0, %v600
        %602 = vmatmul.f32.gmra.mxu0 %v462
        %v603 = vpop.f32.mrf.mxu0
        %v604 = vadd.f32 0.0, %v603
        %605 = vmatmul.f32.gmra.mxu0 %v463
        %v606 = vpop.f32.mrf.mxu0
        %v607 = vadd.f32 0.0, %v606
        %608 = vdwg.mxu0
        %609 = vmatpush.msra.mxu0 %v495
        %610 = vmatpush.msra.mxu0 %v493
        %611 = vmatpush.msra.mxu0 %v491
        %612 = vmatpush.msra.mxu0 %v489
        %613 = vmatpush.msra.mxu0 %v487
        %614 = vmatpush.msra.mxu0 %v485
        %615 = vmatpush.msra.mxu0 %v483
        %616 = vmatpush.msra.mxu0 %v481
        %617 = vmatpush.msra.mxu0 %v479
        %618 = vmatpush.msra.mxu0 %v477
        %619 = vmatpush.msra.mxu0 %v475
        %620 = vmatpush.msra.mxu0 %v473
        %621 = vmatpush.msra.mxu0 %v471
        %622 = vmatpush.msra.mxu0 %v469
        %623 = vmatpush.msra.mxu0 %v467
        %624 = vmatpush.msra.mxu0 %v465
        %625 = vmatmul.f32.gmra.mxu0 %v432
        %v626 = vpop.f32.mrf.mxu0
        %v627 = vadd.f32 0.0, %v626
        %628 = vmatmul.f32.gmra.mxu0 %v433
        %v629 = vpop.f32.mrf.mxu0
        %v630 = vadd.f32 0.0, %v629
        %631 = vmatmul.f32.gmra.mxu0 %v434
        %v632 = vpop.f32.mrf.mxu0
        %v633 = vadd.f32 0.0, %v632
        %634 = vmatmul.f32.gmra.mxu0 %v435
        %v635 = vpop.f32.mrf.mxu0
        %v636 = vadd.f32 0.0, %v635
        %637 = vmatmul.f32.gmra.mxu0 %v436
        %v638 = vpop.f32.mrf.mxu0
        %v639 = vadd.f32 0.0, %v638
        %640 = vmatmul.f32.gmra.mxu0 %v437
        %v641 = vpop.f32.mrf.mxu0
        %v642 = vadd.f32 0.0, %v641
        %643 = vmatmul.f32.gmra.mxu0 %v438
        %v644 = vpop.f32.mrf.mxu0
        %v645 = vadd.f32 0.0, %v644
        %646 = vmatmul.f32.gmra.mxu0 %v439
        %v647 = vpop.f32.mrf.mxu0
        %v648 = vadd.f32 0.0, %v647
        %649 = vmatmul.f32.gmra.mxu0 %v440
        %v650 = vpop.f32.mrf.mxu0
        %v651 = vadd.f32 0.0, %v650
        %652 = vmatmul.f32.gmra.mxu0 %v441
        %v653 = vpop.f32.mrf.mxu0
        %v654 = vadd.f32 0.0, %v653
        %655 = vmatmul.f32.gmra.mxu0 %v442
        %v656 = vpop.f32.mrf.mxu0
        %v657 = vadd.f32 0.0, %v656
        %658 = vmatmul.f32.gmra.mxu0 %v443
        %v659 = vpop.f32.mrf.mxu0
        %v660 = vadd.f32 0.0, %v659
        %661 = vmatmul.f32.gmra.mxu0 %v444
        %v662 = vpop.f32.mrf.mxu0
        %v663 = vadd.f32 0.0, %v662
        %664 = vmatmul.f32.gmra.mxu0 %v445
        %v665 = vpop.f32.mrf.mxu0
        %v666 = vadd.f32 0.0, %v665
        %667 = vmatmul.f32.gmra.mxu0 %v446
        %v668 = vpop.f32.mrf.mxu0
        %v669 = vadd.f32 0.0, %v668
        %670 = vmatmul.f32.gmra.mxu0 %v447
        %v671 = vpop.f32.mrf.mxu0
        %v672 = vadd.f32 0.0, %v671
        %673 = vmatmul.f32.gmra.mxu0 %v448
        %v674 = vpop.f32.mrf.mxu0
        %v675 = vadd.f32 0.0, %v674
        %676 = vmatmul.f32.gmra.mxu0 %v449
        %v677 = vpop.f32.mrf.mxu0
        %v678 = vadd.f32 0.0, %v677
        %679 = vmatmul.f32.gmra.mxu0 %v450
        %v680 = vpop.f32.mrf.mxu0
        %v681 = vadd.f32 0.0, %v680
        %682 = vmatmul.f32.gmra.mxu0 %v451
        %v683 = vpop.f32.mrf.mxu0
        %v684 = vadd.f32 0.0, %v683
        %685 = vmatmul.f32.gmra.mxu0 %v452
        %v686 = vpop.f32.mrf.mxu0
        %v687 = vadd.f32 0.0, %v686
        %688 = vmatmul.f32.gmra.mxu0 %v453
        %v689 = vpop.f32.mrf.mxu0
        %v690 = vadd.f32 0.0, %v689
        %691 = vmatmul.f32.gmra.mxu0 %v454
        %v692 = vpop.f32.mrf.mxu0
        %v693 = vadd.f32 0.0, %v692
        %694 = vmatmul.f32.gmra.mxu0 %v455
        %v695 = vpop.f32.mrf.mxu0
        %v696 = vadd.f32 0.0, %v695
        %697 = vmatmul.f32.gmra.mxu0 %v456
        %v698 = vpop.f32.mrf.mxu0
        %v699 = vadd.f32 0.0, %v698
        %700 = vmatmul.f32.gmra.mxu0 %v457
        %v701 = vpop.f32.mrf.mxu0
        %v702 = vadd.f32 0.0, %v701
        %703 = vmatmul.f32.gmra.mxu0 %v458
        %v704 = vpop.f32.mrf.mxu0
        %v705 = vadd.f32 0.0, %v704
        %706 = vmatmul.f32.gmra.mxu0 %v459
        %v707 = vpop.f32.mrf.mxu0
        %v708 = vadd.f32 0.0, %v707
        %709 = vmatmul.f32.gmra.mxu0 %v460
        %v710 = vpop.f32.mrf.mxu0
        %v711 = vadd.f32 0.0, %v710
        %712 = vmatmul.f32.gmra.mxu0 %v461
        %v713 = vpop.f32.mrf.mxu0
        %v714 = vadd.f32 0.0, %v713
        %715 = vmatmul.f32.gmra.mxu0 %v462
        %v716 = vpop.f32.mrf.mxu0
        %v717 = vadd.f32 0.0, %v716
        %718 = vmatmul.f32.gmra.mxu0 %v463
        %v719 = vpop.f32.mrf.mxu0
        %v720 = vadd.f32 0.0, %v719
        %721 = vdwg.mxu0
        %v722 = vld [vmem:[%s424] sm:$0xff]
        %v723 = vld [vmem:[%s424 + $0x8] sm:$0xff]
        %v724 = vld [vmem:[%s424 + $0x10] sm:$0xff]
        %v725 = vld [vmem:[%s424 + $0x18] sm:$0xff]
        %v726 = vld [vmem:[%s424 + $0x20] sm:$0xff]
        %v727 = vld [vmem:[%s424 + $0x28] sm:$0xff]
        %v728 = vld [vmem:[%s424 + $0x30] sm:$0xff]
        %v729 = vld [vmem:[%s424 + $0x38] sm:$0xff]
        %v730 = vld [vmem:[%s424 + $0x40] sm:$0xff]
        %v731 = vld [vmem:[%s424 + $0x48] sm:$0xff]
        %v732 = vld [vmem:[%s424 + $0x50] sm:$0xff]
        %v733 = vld [vmem:[%s424 + $0x58] sm:$0xff]
        %v734 = vld [vmem:[%s424 + $0x60] sm:$0xff]
        %v735 = vld [vmem:[%s424 + $0x68] sm:$0xff]
        %v736 = vld [vmem:[%s424 + $0x70] sm:$0xff]
        %v737 = vld [vmem:[%s424 + $0x78] sm:$0xff]
        %v738 = vld [vmem:[%s424 + $0x80] sm:$0xff]
        %v739 = vld [vmem:[%s424 + $0x88] sm:$0xff]
        %v740 = vld [vmem:[%s424 + $0x90] sm:$0xff]
        %v741 = vld [vmem:[%s424 + $0x98] sm:$0xff]
        %v742 = vld [vmem:[%s424 + $0xa0] sm:$0xff]
        %v743 = vld [vmem:[%s424 + $0xa8] sm:$0xff]
        %v744 = vld [vmem:[%s424 + $0xb0] sm:$0xff]
        %v745 = vld [vmem:[%s424 + $0xb8] sm:$0xff]
        %v746 = vld [vmem:[%s424 + $0xc0] sm:$0xff]
        %v747 = vld [vmem:[%s424 + $0xc8] sm:$0xff]
        %v748 = vld [vmem:[%s424 + $0xd0] sm:$0xff]
        %v749 = vld [vmem:[%s424 + $0xd8] sm:$0xff]
        %v750 = vld [vmem:[%s424 + $0xe0] sm:$0xff]
        %v751 = vld [vmem:[%s424 + $0xe8] sm:$0xff]
        %v752 = vld [vmem:[%s424 + $0xf0] sm:$0xff]
        %v753 = vld [vmem:[%s424 + $0xf8] sm:$0xff]
        %v754 = vld [vmem:[%s429] sm:$0xf]
        %v756 = vrot.slane %v754, 1
        %v757 = vrot.slane %v754, 2
        %v758 = vrot.slane %v754, 3
        %v759 = vperm.slane %v754, 0
        %v760 = vperm.slane %v756, 0
        %v761 = vperm.slane %v757, 0
        %v762 = vperm.slane %v758, 0
        %v767 = vadd.f32 %v722, %v759
        %v768 = vadd.f32 %v723, %v759
        %v769 = vadd.f32 %v724, %v759
        %v770 = vadd.f32 %v725, %v759
        %v771 = vadd.f32 %v726, %v759
        %v772 = vadd.f32 %v727, %v759
        %v773 = vadd.f32 %v728, %v759
        %v774 = vadd.f32 %v729, %v759
        %v775 = vadd.f32 %v730, %v759
        %v776 = vadd.f32 %v731, %v759
        %v777 = vadd.f32 %v732, %v759
        %v778 = vadd.f32 %v733, %v759
        %v779 = vadd.f32 %v734, %v759
        %v780 = vadd.f32 %v735, %v759
        %v781 = vadd.f32 %v736, %v759
        %v782 = vadd.f32 %v737, %v759
        %v783 = vadd.f32 %v738, %v759
        %v784 = vadd.f32 %v739, %v759
        %v785 = vadd.f32 %v740, %v759
        %v786 = vadd.f32 %v741, %v759
        %v787 = vadd.f32 %v742, %v759
        %v788 = vadd.f32 %v743, %v759
        %v789 = vadd.f32 %v744, %v759
        %v790 = vadd.f32 %v745, %v759
        %v791 = vadd.f32 %v746, %v759
        %v792 = vadd.f32 %v747, %v759
        %v793 = vadd.f32 %v748, %v759
        %v794 = vadd.f32 %v749, %v759
        %v795 = vadd.f32 %v750, %v759
        %v796 = vadd.f32 %v751, %v759
        %v797 = vadd.f32 %v752, %v759
        %v798 = vadd.f32 %v753, %v759
        %v799 = vadd.f32 %v722, %v760
        %v800 = vadd.f32 %v723, %v760
        %v801 = vadd.f32 %v724, %v760
        %v802 = vadd.f32 %v725, %v760
        %v803 = vadd.f32 %v726, %v760
        %v804 = vadd.f32 %v727, %v760
        %v805 = vadd.f32 %v728, %v760
        %v806 = vadd.f32 %v729, %v760
        %v807 = vadd.f32 %v730, %v760
        %v808 = vadd.f32 %v731, %v760
        %v809 = vadd.f32 %v732, %v760
        %v810 = vadd.f32 %v733, %v760
        %v811 = vadd.f32 %v734, %v760
        %v812 = vadd.f32 %v735, %v760
        %v813 = vadd.f32 %v736, %v760
        %v814 = vadd.f32 %v737, %v760
        %v815 = vadd.f32 %v738, %v760
        %v816 = vadd.f32 %v739, %v760
        %v817 = vadd.f32 %v740, %v760
        %v818 = vadd.f32 %v741, %v760
        %v819 = vadd.f32 %v742, %v760
        %v820 = vadd.f32 %v743, %v760
        %v821 = vadd.f32 %v744, %v760
        %v822 = vadd.f32 %v745, %v760
        %v823 = vadd.f32 %v746, %v760
        %v824 = vadd.f32 %v747, %v760
        %v825 = vadd.f32 %v748, %v760
        %v826 = vadd.f32 %v749, %v760
        %v827 = vadd.f32 %v750, %v760
        %v828 = vadd.f32 %v751, %v760
        %v829 = vadd.f32 %v752, %v760
        %v830 = vadd.f32 %v753, %v760
        %v831 = vadd.f32 %v722, %v761
        %v832 = vadd.f32 %v723, %v761
        %v833 = vadd.f32 %v724, %v761
        %v834 = vadd.f32 %v725, %v761
        %v835 = vadd.f32 %v726, %v761
        %v836 = vadd.f32 %v727, %v761
        %v837 = vadd.f32 %v728, %v761
        %v838 = vadd.f32 %v729, %v761
        %v839 = vadd.f32 %v730, %v761
        %v840 = vadd.f32 %v731, %v761
        %v841 = vadd.f32 %v732, %v761
        %v842 = vadd.f32 %v733, %v761
        %v843 = vadd.f32 %v734, %v761
        %v844 = vadd.f32 %v735, %v761
        %v845 = vadd.f32 %v736, %v761
        %v846 = vadd.f32 %v737, %v761
        %v847 = vadd.f32 %v738, %v761
        %v848 = vadd.f32 %v739, %v761
        %v849 = vadd.f32 %v740, %v761
        %v850 = vadd.f32 %v741, %v761
        %v851 = vadd.f32 %v742, %v761
        %v852 = vadd.f32 %v743, %v761
        %v853 = vadd.f32 %v744, %v761
        %v854 = vadd.f32 %v745, %v761
        %v855 = vadd.f32 %v746, %v761
        %v856 = vadd.f32 %v747, %v761
        %v857 = vadd.f32 %v748, %v761
        %v858 = vadd.f32 %v749, %v761
        %v859 = vadd.f32 %v750, %v761
        %v860 = vadd.f32 %v751, %v761
        %v861 = vadd.f32 %v752, %v761
        %v862 = vadd.f32 %v753, %v761
        %v863 = vadd.f32 %v722, %v762
        %v864 = vadd.f32 %v723, %v762
        %v865 = vadd.f32 %v724, %v762
        %v866 = vadd.f32 %v725, %v762
        %v867 = vadd.f32 %v726, %v762
        %v868 = vadd.f32 %v727, %v762
        %v869 = vadd.f32 %v728, %v762
        %v870 = vadd.f32 %v729, %v762
        %v871 = vadd.f32 %v730, %v762
        %v872 = vadd.f32 %v731, %v762
        %v873 = vadd.f32 %v732, %v762
        %v874 = vadd.f32 %v733, %v762
        %v875 = vadd.f32 %v734, %v762
        %v876 = vadd.f32 %v735, %v762
        %v877 = vadd.f32 %v736, %v762
        %v878 = vadd.f32 %v737, %v762
        %v879 = vadd.f32 %v738, %v762
        %v880 = vadd.f32 %v739, %v762
        %v881 = vadd.f32 %v740, %v762
        %v882 = vadd.f32 %v741, %v762
        %v883 = vadd.f32 %v742, %v762
        %v884 = vadd.f32 %v743, %v762
        %v885 = vadd.f32 %v744, %v762
        %v886 = vadd.f32 %v745, %v762
        %v887 = vadd.f32 %v746, %v762
        %v888 = vadd.f32 %v747, %v762
        %v889 = vadd.f32 %v748, %v762
        %v890 = vadd.f32 %v749, %v762
        %v891 = vadd.f32 %v750, %v762
        %v892 = vadd.f32 %v751, %v762
        %v893 = vadd.f32 %v752, %v762
        %v894 = vadd.f32 %v753, %v762
        %v895 = vadd.f32 %v514, %v767
        %v896 = vadd.f32 %v517, %v768
        %v897 = vadd.f32 %v520, %v769
        %v898 = vadd.f32 %v523, %v770
        %v899 = vadd.f32 %v526, %v771
        %v900 = vadd.f32 %v529, %v772
        %v901 = vadd.f32 %v532, %v773
        %v902 = vadd.f32 %v535, %v774
        %v903 = vadd.f32 %v538, %v775
        %v904 = vadd.f32 %v541, %v776
        %v905 = vadd.f32 %v544, %v777
        %v906 = vadd.f32 %v547, %v778
        %v907 = vadd.f32 %v550, %v779
        %v908 = vadd.f32 %v553, %v780
        %v909 = vadd.f32 %v556, %v781
        %v910 = vadd.f32 %v559, %v782
        %v911 = vadd.f32 %v562, %v783
        %v912 = vadd.f32 %v565, %v784
        %v913 = vadd.f32 %v568, %v785
        %v914 = vadd.f32 %v571, %v786
        %v915 = vadd.f32 %v574, %v787
        %v916 = vadd.f32 %v577, %v788
        %v917 = vadd.f32 %v580, %v789
        %v918 = vadd.f32 %v583, %v790
        %v919 = vadd.f32 %v586, %v791
        %v920 = vadd.f32 %v589, %v792
        %v921 = vadd.f32 %v592, %v793
        %v922 = vadd.f32 %v595, %v794
        %v923 = vadd.f32 %v598, %v795
        %v924 = vadd.f32 %v601, %v796
        %v925 = vadd.f32 %v604, %v797
        %v926 = vadd.f32 %v607, %v798
        %v927 = vadd.f32 %v514, %v799
        %v928 = vadd.f32 %v517, %v800
        %v929 = vadd.f32 %v520, %v801
        %v930 = vadd.f32 %v523, %v802
        %v931 = vadd.f32 %v526, %v803
        %v932 = vadd.f32 %v529, %v804
        %v933 = vadd.f32 %v532, %v805
        %v934 = vadd.f32 %v535, %v806
        %v935 = vadd.f32 %v538, %v807
        %v936 = vadd.f32 %v541, %v808
        %v937 = vadd.f32 %v544, %v809
        %v938 = vadd.f32 %v547, %v810
        %v939 = vadd.f32 %v550, %v811
        %v940 = vadd.f32 %v553, %v812
        %v941 = vadd.f32 %v556, %v813
        %v942 = vadd.f32 %v559, %v814
        %v943 = vadd.f32 %v562, %v815
        %v944 = vadd.f32 %v565, %v816
        %v945 = vadd.f32 %v568, %v817
        %v946 = vadd.f32 %v571, %v818
        %v947 = vadd.f32 %v574, %v819
        %v948 = vadd.f32 %v577, %v820
        %v949 = vadd.f32 %v580, %v821
        %v950 = vadd.f32 %v583, %v822
        %v951 = vadd.f32 %v586, %v823
        %v952 = vadd.f32 %v589, %v824
        %v953 = vadd.f32 %v592, %v825
        %v954 = vadd.f32 %v595, %v826
        %v955 = vadd.f32 %v598, %v827
        %v956 = vadd.f32 %v601, %v828
        %v957 = vadd.f32 %v604, %v829
        %v958 = vadd.f32 %v607, %v830
        %v959 = vadd.f32 %v514, %v831
        %v960 = vadd.f32 %v517, %v832
        %v961 = vadd.f32 %v520, %v833
        %v962 = vadd.f32 %v523, %v834
        %v963 = vadd.f32 %v526, %v835
        %v964 = vadd.f32 %v529, %v836
        %v965 = vadd.f32 %v532, %v837
        %v966 = vadd.f32 %v535, %v838
        %v967 = vadd.f32 %v538, %v839
        %v968 = vadd.f32 %v541, %v840
        %v969 = vadd.f32 %v544, %v841
        %v970 = vadd.f32 %v547, %v842
        %v971 = vadd.f32 %v550, %v843
        %v972 = vadd.f32 %v553, %v844
        %v973 = vadd.f32 %v556, %v845
        %v974 = vadd.f32 %v559, %v846
        %v975 = vadd.f32 %v562, %v847
        %v976 = vadd.f32 %v565, %v848
        %v977 = vadd.f32 %v568, %v849
        %v978 = vadd.f32 %v571, %v850
        %v979 = vadd.f32 %v574, %v851
        %v980 = vadd.f32 %v577, %v852
        %v981 = vadd.f32 %v580, %v853
        %v982 = vadd.f32 %v583, %v854
        %v983 = vadd.f32 %v586, %v855
        %v984 = vadd.f32 %v589, %v856
        %v985 = vadd.f32 %v592, %v857
        %v986 = vadd.f32 %v595, %v858
        %v987 = vadd.f32 %v598, %v859
        %v988 = vadd.f32 %v601, %v860
        %v989 = vadd.f32 %v604, %v861
        %v990 = vadd.f32 %v607, %v862
        %v991 = vadd.f32 %v514, %v863
        %v992 = vadd.f32 %v517, %v864
        %v993 = vadd.f32 %v520, %v865
        %v994 = vadd.f32 %v523, %v866
        %v995 = vadd.f32 %v526, %v867
        %v996 = vadd.f32 %v529, %v868
        %v997 = vadd.f32 %v532, %v869
        %v998 = vadd.f32 %v535, %v870
        %v999 = vadd.f32 %v538, %v871
        %v1000 = vadd.f32 %v541, %v872
        %v1001 = vadd.f32 %v544, %v873
        %v1002 = vadd.f32 %v547, %v874
        %v1003 = vadd.f32 %v550, %v875
        %v1004 = vadd.f32 %v553, %v876
        %v1005 = vadd.f32 %v556, %v877
        %v1006 = vadd.f32 %v559, %v878
        %v1007 = vadd.f32 %v562, %v879
        %v1008 = vadd.f32 %v565, %v880
        %v1009 = vadd.f32 %v568, %v881
        %v1010 = vadd.f32 %v571, %v882
        %v1011 = vadd.f32 %v574, %v883
        %v1012 = vadd.f32 %v577, %v884
        %v1013 = vadd.f32 %v580, %v885
        %v1014 = vadd.f32 %v583, %v886
        %v1015 = vadd.f32 %v586, %v887
        %v1016 = vadd.f32 %v589, %v888
        %v1017 = vadd.f32 %v592, %v889
        %v1018 = vadd.f32 %v595, %v890
        %v1019 = vadd.f32 %v598, %v891
        %v1020 = vadd.f32 %v601, %v892
        %v1021 = vadd.f32 %v604, %v893
        %v1022 = vadd.f32 %v607, %v894
        %v1023 = vadd.f32 %v627, %v767
        %v1024 = vadd.f32 %v630, %v768
        %v1025 = vadd.f32 %v633, %v769
        %v1026 = vadd.f32 %v636, %v770
        %v1027 = vadd.f32 %v639, %v771
        %v1028 = vadd.f32 %v642, %v772
        %v1029 = vadd.f32 %v645, %v773
        %v1030 = vadd.f32 %v648, %v774
        %v1031 = vadd.f32 %v651, %v775
        %v1032 = vadd.f32 %v654, %v776
        %v1033 = vadd.f32 %v657, %v777
        %v1034 = vadd.f32 %v660, %v778
        %v1035 = vadd.f32 %v663, %v779
        %v1036 = vadd.f32 %v666, %v780
        %v1037 = vadd.f32 %v669, %v781
        %v1038 = vadd.f32 %v672, %v782
        %v1039 = vadd.f32 %v675, %v783
        %v1040 = vadd.f32 %v678, %v784
        %v1041 = vadd.f32 %v681, %v785
        %v1042 = vadd.f32 %v684, %v786
        %v1043 = vadd.f32 %v687, %v787
        %v1044 = vadd.f32 %v690, %v788
        %v1045 = vadd.f32 %v693, %v789
        %v1046 = vadd.f32 %v696, %v790
        %v1047 = vadd.f32 %v699, %v791
        %v1048 = vadd.f32 %v702, %v792
        %v1049 = vadd.f32 %v705, %v793
        %v1050 = vadd.f32 %v708, %v794
        %v1051 = vadd.f32 %v711, %v795
        %v1052 = vadd.f32 %v714, %v796
        %v1053 = vadd.f32 %v717, %v797
        %v1054 = vadd.f32 %v720, %v798
        %v1055 = vadd.f32 %v627, %v799
        %v1056 = vadd.f32 %v630, %v800
        %v1057 = vadd.f32 %v633, %v801
        %v1058 = vadd.f32 %v636, %v802
        %v1059 = vadd.f32 %v639, %v803
        %v1060 = vadd.f32 %v642, %v804
        %v1061 = vadd.f32 %v645, %v805
        %v1062 = vadd.f32 %v648, %v806
        %v1063 = vadd.f32 %v651, %v807
        %v1064 = vadd.f32 %v654, %v808
        %v1065 = vadd.f32 %v657, %v809
        %v1066 = vadd.f32 %v660, %v810
        %v1067 = vadd.f32 %v663, %v811
        %v1068 = vadd.f32 %v666, %v812
        %v1069 = vadd.f32 %v669, %v813
        %v1070 = vadd.f32 %v672, %v814
        %v1071 = vadd.f32 %v675, %v815
        %v1072 = vadd.f32 %v678, %v816
        %v1073 = vadd.f32 %v681, %v817
        %v1074 = vadd.f32 %v684, %v818
        %v1075 = vadd.f32 %v687, %v819
        %v1076 = vadd.f32 %v690, %v820
        %v1077 = vadd.f32 %v693, %v821
        %v1078 = vadd.f32 %v696, %v822
        %v1079 = vadd.f32 %v699, %v823
        %v1080 = vadd.f32 %v702, %v824
        %v1081 = vadd.f32 %v705, %v825
        %v1082 = vadd.f32 %v708, %v826
        %v1083 = vadd.f32 %v711, %v827
        %v1084 = vadd.f32 %v714, %v828
        %v1085 = vadd.f32 %v717, %v829
        %v1086 = vadd.f32 %v720, %v830
        %v1087 = vadd.f32 %v627, %v831
        %v1088 = vadd.f32 %v630, %v832
        %v1089 = vadd.f32 %v633, %v833
        %v1090 = vadd.f32 %v636, %v834
        %v1091 = vadd.f32 %v639, %v835
        %v1092 = vadd.f32 %v642, %v836
        %v1093 = vadd.f32 %v645, %v837
        %v1094 = vadd.f32 %v648, %v838
        %v1095 = vadd.f32 %v651, %v839
        %v1096 = vadd.f32 %v654, %v840
        %v1097 = vadd.f32 %v657, %v841
        %v1098 = vadd.f32 %v660, %v842
        %v1099 = vadd.f32 %v663, %v843
        %v1100 = vadd.f32 %v666, %v844
        %v1101 = vadd.f32 %v669, %v845
        %v1102 = vadd.f32 %v672, %v846
        %v1103 = vadd.f32 %v675, %v847
        %v1104 = vadd.f32 %v678, %v848
        %v1105 = vadd.f32 %v681, %v849
        %v1106 = vadd.f32 %v684, %v850
        %v1107 = vadd.f32 %v687, %v851
        %v1108 = vadd.f32 %v690, %v852
        %v1109 = vadd.f32 %v693, %v853
        %v1110 = vadd.f32 %v696, %v854
        %v1111 = vadd.f32 %v699, %v855
        %v1112 = vadd.f32 %v702, %v856
        %v1113 = vadd.f32 %v705, %v857
        %v1114 = vadd.f32 %v708, %v858
        %v1115 = vadd.f32 %v711, %v859
        %v1116 = vadd.f32 %v714, %v860
        %v1117 = vadd.f32 %v717, %v861
        %v1118 = vadd.f32 %v720, %v862
        %v1119 = vadd.f32 %v627, %v863
        %v1120 = vadd.f32 %v630, %v864
        %v1121 = vadd.f32 %v633, %v865
        %v1122 = vadd.f32 %v636, %v866
        %v1123 = vadd.f32 %v639, %v867
        %v1124 = vadd.f32 %v642, %v868
        %v1125 = vadd.f32 %v645, %v869
        %v1126 = vadd.f32 %v648, %v870
        %v1127 = vadd.f32 %v651, %v871
        %v1128 = vadd.f32 %v654, %v872
        %v1129 = vadd.f32 %v657, %v873
        %v1130 = vadd.f32 %v660, %v874
        %v1131 = vadd.f32 %v663, %v875
        %v1132 = vadd.f32 %v666, %v876
        %v1133 = vadd.f32 %v669, %v877
        %v1134 = vadd.f32 %v672, %v878
        %v1135 = vadd.f32 %v675, %v879
        %v1136 = vadd.f32 %v678, %v880
        %v1137 = vadd.f32 %v681, %v881
        %v1138 = vadd.f32 %v684, %v882
        %v1139 = vadd.f32 %v687, %v883
        %v1140 = vadd.f32 %v690, %v884
        %v1141 = vadd.f32 %v693, %v885
        %v1142 = vadd.f32 %v696, %v886
        %v1143 = vadd.f32 %v699, %v887
        %v1144 = vadd.f32 %v702, %v888
        %v1145 = vadd.f32 %v705, %v889
        %v1146 = vadd.f32 %v708, %v890
        %v1147 = vadd.f32 %v711, %v891
        %v1148 = vadd.f32 %v714, %v892
        %v1149 = vadd.f32 %v717, %v893
        %v1150 = vadd.f32 %v720, %v894
        %1151 = vadd.xlane.f32.xlu0 %v895
        %v1152 = vpop.xlane.xlu0 %1151
        %1153 = vadd.xlane.f32.xlu0 %v896
        %v1154 = vpop.xlane.xlu0 %1153
        %1155 = vadd.xlane.f32.xlu0 %v897
        %v1156 = vpop.xlane.xlu0 %1155
        %1157 = vadd.xlane.f32.xlu0 %v898
        %v1158 = vpop.xlane.xlu0 %1157
        %1159 = vadd.xlane.f32.xlu0 %v899
        %v1160 = vpop.xlane.xlu0 %1159
        %1161 = vadd.xlane.f32.xlu0 %v900
        %v1162 = vpop.xlane.xlu0 %1161
        %1163 = vadd.xlane.f32.xlu0 %v901
        %v1164 = vpop.xlane.xlu0 %1163
        %1165 = vadd.xlane.f32.xlu0 %v902
        %v1166 = vpop.xlane.xlu0 %1165
        %1167 = vadd.xlane.f32.xlu0 %v903
        %v1168 = vpop.xlane.xlu0 %1167
        %1169 = vadd.xlane.f32.xlu0 %v904
        %v1170 = vpop.xlane.xlu0 %1169
        %1171 = vadd.xlane.f32.xlu0 %v905
        %v1172 = vpop.xlane.xlu0 %1171
        %1173 = vadd.xlane.f32.xlu0 %v906
        %v1174 = vpop.xlane.xlu0 %1173
        %1175 = vadd.xlane.f32.xlu0 %v907
        %v1176 = vpop.xlane.xlu0 %1175
        %1177 = vadd.xlane.f32.xlu0 %v908
        %v1178 = vpop.xlane.xlu0 %1177
        %1179 = vadd.xlane.f32.xlu0 %v909
        %v1180 = vpop.xlane.xlu0 %1179
        %1181 = vadd.xlane.f32.xlu0 %v910
        %v1182 = vpop.xlane.xlu0 %1181
        %1183 = vadd.xlane.f32.xlu0 %v911
        %v1184 = vpop.xlane.xlu0 %1183
        %1185 = vadd.xlane.f32.xlu0 %v912
        %v1186 = vpop.xlane.xlu0 %1185
        %1187 = vadd.xlane.f32.xlu0 %v913
        %v1188 = vpop.xlane.xlu0 %1187
        %1189 = vadd.xlane.f32.xlu0 %v914
        %v1190 = vpop.xlane.xlu0 %1189
        %1191 = vadd.xlane.f32.xlu0 %v915
        %v1192 = vpop.xlane.xlu0 %1191
        %1193 = vadd.xlane.f32.xlu0 %v916
        %v1194 = vpop.xlane.xlu0 %1193
        %1195 = vadd.xlane.f32.xlu0 %v917
        %v1196 = vpop.xlane.xlu0 %1195
        %1197 = vadd.xlane.f32.xlu0 %v918
        %v1198 = vpop.xlane.xlu0 %1197
        %1199 = vadd.xlane.f32.xlu0 %v919
        %v1200 = vpop.xlane.xlu0 %1199
        %1201 = vadd.xlane.f32.xlu0 %v920
        %v1202 = vpop.xlane.xlu0 %1201
        %1203 = vadd.xlane.f32.xlu0 %v921
        %v1204 = vpop.xlane.xlu0 %1203
        %1205 = vadd.xlane.f32.xlu0 %v922
        %v1206 = vpop.xlane.xlu0 %1205
        %1207 = vadd.xlane.f32.xlu0 %v923
        %v1208 = vpop.xlane.xlu0 %1207
        %1209 = vadd.xlane.f32.xlu0 %v924
        %v1210 = vpop.xlane.xlu0 %1209
        %1211 = vadd.xlane.f32.xlu0 %v925
        %v1212 = vpop.xlane.xlu0 %1211
        %1213 = vadd.xlane.f32.xlu0 %v926
        %v1214 = vpop.xlane.xlu0 %1213
        %1215 = vadd.xlane.f32.xlu0 %v927
        %v1216 = vpop.xlane.xlu0 %1215
        %1217 = vadd.xlane.f32.xlu0 %v928
        %v1218 = vpop.xlane.xlu0 %1217
        %1219 = vadd.xlane.f32.xlu0 %v929
        %v1220 = vpop.xlane.xlu0 %1219
        %1221 = vadd.xlane.f32.xlu0 %v930
        %v1222 = vpop.xlane.xlu0 %1221
        %1223 = vadd.xlane.f32.xlu0 %v931
        %v1224 = vpop.xlane.xlu0 %1223
        %1225 = vadd.xlane.f32.xlu0 %v932
        %v1226 = vpop.xlane.xlu0 %1225
        %1227 = vadd.xlane.f32.xlu0 %v933
        %v1228 = vpop.xlane.xlu0 %1227
        %1229 = vadd.xlane.f32.xlu0 %v934
        %v1230 = vpop.xlane.xlu0 %1229
        %1231 = vadd.xlane.f32.xlu0 %v935
        %v1232 = vpop.xlane.xlu0 %1231
        %1233 = vadd.xlane.f32.xlu0 %v936
        %v1234 = vpop.xlane.xlu0 %1233
        %1235 = vadd.xlane.f32.xlu0 %v937
        %v1236 = vpop.xlane.xlu0 %1235
        %1237 = vadd.xlane.f32.xlu0 %v938
        %v1238 = vpop.xlane.xlu0 %1237
        %1239 = vadd.xlane.f32.xlu0 %v939
        %v1240 = vpop.xlane.xlu0 %1239
        %1241 = vadd.xlane.f32.xlu0 %v940
        %v1242 = vpop.xlane.xlu0 %1241
        %1243 = vadd.xlane.f32.xlu0 %v941
        %v1244 = vpop.xlane.xlu0 %1243
        %1245 = vadd.xlane.f32.xlu0 %v942
        %v1246 = vpop.xlane.xlu0 %1245
        %1247 = vadd.xlane.f32.xlu0 %v943
        %v1248 = vpop.xlane.xlu0 %1247
        %1249 = vadd.xlane.f32.xlu0 %v944
        %v1250 = vpop.xlane.xlu0 %1249
        %1251 = vadd.xlane.f32.xlu0 %v945
        %v1252 = vpop.xlane.xlu0 %1251
        %1253 = vadd.xlane.f32.xlu0 %v946
        %v1254 = vpop.xlane.xlu0 %1253
        %1255 = vadd.xlane.f32.xlu0 %v947
        %v1256 = vpop.xlane.xlu0 %1255
        %1257 = vadd.xlane.f32.xlu0 %v948
        %v1258 = vpop.xlane.xlu0 %1257
        %1259 = vadd.xlane.f32.xlu0 %v949
        %v1260 = vpop.xlane.xlu0 %1259
        %1261 = vadd.xlane.f32.xlu0 %v950
        %v1262 = vpop.xlane.xlu0 %1261
        %1263 = vadd.xlane.f32.xlu0 %v951
        %v1264 = vpop.xlane.xlu0 %1263
        %1265 = vadd.xlane.f32.xlu0 %v952
        %v1266 = vpop.xlane.xlu0 %1265
        %1267 = vadd.xlane.f32.xlu0 %v953
        %v1268 = vpop.xlane.xlu0 %1267
        %1269 = vadd.xlane.f32.xlu0 %v954
        %v1270 = vpop.xlane.xlu0 %1269
        %1271 = vadd.xlane.f32.xlu0 %v955
        %v1272 = vpop.xlane.xlu0 %1271
        %1273 = vadd.xlane.f32.xlu0 %v956
        %v1274 = vpop.xlane.xlu0 %1273
        %1275 = vadd.xlane.f32.xlu0 %v957
        %v1276 = vpop.xlane.xlu0 %1275
        %1277 = vadd.xlane.f32.xlu0 %v958
        %v1278 = vpop.xlane.xlu0 %1277
        %1279 = vadd.xlane.f32.xlu0 %v959
        %v1280 = vpop.xlane.xlu0 %1279
        %1281 = vadd.xlane.f32.xlu0 %v960
        %v1282 = vpop.xlane.xlu0 %1281
        %1283 = vadd.xlane.f32.xlu0 %v961
        %v1284 = vpop.xlane.xlu0 %1283
        %1285 = vadd.xlane.f32.xlu0 %v962
        %v1286 = vpop.xlane.xlu0 %1285
        %1287 = vadd.xlane.f32.xlu0 %v963
        %v1288 = vpop.xlane.xlu0 %1287
        %1289 = vadd.xlane.f32.xlu0 %v964
        %v1290 = vpop.xlane.xlu0 %1289
        %1291 = vadd.xlane.f32.xlu0 %v965
        %v1292 = vpop.xlane.xlu0 %1291
        %1293 = vadd.xlane.f32.xlu0 %v966
        %v1294 = vpop.xlane.xlu0 %1293
        %1295 = vadd.xlane.f32.xlu0 %v967
        %v1296 = vpop.xlane.xlu0 %1295
        %1297 = vadd.xlane.f32.xlu0 %v968
        %v1298 = vpop.xlane.xlu0 %1297
        %1299 = vadd.xlane.f32.xlu0 %v969
        %v1300 = vpop.xlane.xlu0 %1299
        %1301 = vadd.xlane.f32.xlu0 %v970
        %v1302 = vpop.xlane.xlu0 %1301
        %1303 = vadd.xlane.f32.xlu0 %v971
        %v1304 = vpop.xlane.xlu0 %1303
        %1305 = vadd.xlane.f32.xlu0 %v972
        %v1306 = vpop.xlane.xlu0 %1305
        %1307 = vadd.xlane.f32.xlu0 %v973
        %v1308 = vpop.xlane.xlu0 %1307
        %1309 = vadd.xlane.f32.xlu0 %v974
        %v1310 = vpop.xlane.xlu0 %1309
        %1311 = vadd.xlane.f32.xlu0 %v975
        %v1312 = vpop.xlane.xlu0 %1311
        %1313 = vadd.xlane.f32.xlu0 %v976
        %v1314 = vpop.xlane.xlu0 %1313
        %1315 = vadd.xlane.f32.xlu0 %v977
        %v1316 = vpop.xlane.xlu0 %1315
        %1317 = vadd.xlane.f32.xlu0 %v978
        %v1318 = vpop.xlane.xlu0 %1317
        %1319 = vadd.xlane.f32.xlu0 %v979
        %v1320 = vpop.xlane.xlu0 %1319
        %1321 = vadd.xlane.f32.xlu0 %v980
        %v1322 = vpop.xlane.xlu0 %1321
        %1323 = vadd.xlane.f32.xlu0 %v981
        %v1324 = vpop.xlane.xlu0 %1323
        %1325 = vadd.xlane.f32.xlu0 %v982
        %v1326 = vpop.xlane.xlu0 %1325
        %1327 = vadd.xlane.f32.xlu0 %v983
        %v1328 = vpop.xlane.xlu0 %1327
        %1329 = vadd.xlane.f32.xlu0 %v984
        %v1330 = vpop.xlane.xlu0 %1329
        %1331 = vadd.xlane.f32.xlu0 %v985
        %v1332 = vpop.xlane.xlu0 %1331
        %1333 = vadd.xlane.f32.xlu0 %v986
        %v1334 = vpop.xlane.xlu0 %1333
        %1335 = vadd.xlane.f32.xlu0 %v987
        %v1336 = vpop.xlane.xlu0 %1335
        %1337 = vadd.xlane.f32.xlu0 %v988
        %v1338 = vpop.xlane.xlu0 %1337
        %1339 = vadd.xlane.f32.xlu0 %v989
        %v1340 = vpop.xlane.xlu0 %1339
        %1341 = vadd.xlane.f32.xlu0 %v990
        %v1342 = vpop.xlane.xlu0 %1341
        %1343 = vadd.xlane.f32.xlu0 %v991
        %v1344 = vpop.xlane.xlu0 %1343
        %1345 = vadd.xlane.f32.xlu0 %v992
        %v1346 = vpop.xlane.xlu0 %1345
        %1347 = vadd.xlane.f32.xlu0 %v993
        %v1348 = vpop.xlane.xlu0 %1347
        %1349 = vadd.xlane.f32.xlu0 %v994
        %v1350 = vpop.xlane.xlu0 %1349
        %1351 = vadd.xlane.f32.xlu0 %v995
        %v1352 = vpop.xlane.xlu0 %1351
        %1353 = vadd.xlane.f32.xlu0 %v996
        %v1354 = vpop.xlane.xlu0 %1353
        %1355 = vadd.xlane.f32.xlu0 %v997
        %v1356 = vpop.xlane.xlu0 %1355
        %1357 = vadd.xlane.f32.xlu0 %v998
        %v1358 = vpop.xlane.xlu0 %1357
        %1359 = vadd.xlane.f32.xlu0 %v999
        %v1360 = vpop.xlane.xlu0 %1359
        %1361 = vadd.xlane.f32.xlu0 %v1000
        %v1362 = vpop.xlane.xlu0 %1361
        %1363 = vadd.xlane.f32.xlu0 %v1001
        %v1364 = vpop.xlane.xlu0 %1363
        %1365 = vadd.xlane.f32.xlu0 %v1002
        %v1366 = vpop.xlane.xlu0 %1365
        %1367 = vadd.xlane.f32.xlu0 %v1003
        %v1368 = vpop.xlane.xlu0 %1367
        %1369 = vadd.xlane.f32.xlu0 %v1004
        %v1370 = vpop.xlane.xlu0 %1369
        %1371 = vadd.xlane.f32.xlu0 %v1005
        %v1372 = vpop.xlane.xlu0 %1371
        %1373 = vadd.xlane.f32.xlu0 %v1006
        %v1374 = vpop.xlane.xlu0 %1373
        %1375 = vadd.xlane.f32.xlu0 %v1007
        %v1376 = vpop.xlane.xlu0 %1375
        %1377 = vadd.xlane.f32.xlu0 %v1008
        %v1378 = vpop.xlane.xlu0 %1377
        %1379 = vadd.xlane.f32.xlu0 %v1009
        %v1380 = vpop.xlane.xlu0 %1379
        %1381 = vadd.xlane.f32.xlu0 %v1010
        %v1382 = vpop.xlane.xlu0 %1381
        %1383 = vadd.xlane.f32.xlu0 %v1011
        %v1384 = vpop.xlane.xlu0 %1383
        %1385 = vadd.xlane.f32.xlu0 %v1012
        %v1386 = vpop.xlane.xlu0 %1385
        %1387 = vadd.xlane.f32.xlu0 %v1013
        %v1388 = vpop.xlane.xlu0 %1387
        %1389 = vadd.xlane.f32.xlu0 %v1014
        %v1390 = vpop.xlane.xlu0 %1389
        %1391 = vadd.xlane.f32.xlu0 %v1015
        %v1392 = vpop.xlane.xlu0 %1391
        %1393 = vadd.xlane.f32.xlu0 %v1016
        %v1394 = vpop.xlane.xlu0 %1393
        %1395 = vadd.xlane.f32.xlu0 %v1017
        %v1396 = vpop.xlane.xlu0 %1395
        %1397 = vadd.xlane.f32.xlu0 %v1018
        %v1398 = vpop.xlane.xlu0 %1397
        %1399 = vadd.xlane.f32.xlu0 %v1019
        %v1400 = vpop.xlane.xlu0 %1399
        %1401 = vadd.xlane.f32.xlu0 %v1020
        %v1402 = vpop.xlane.xlu0 %1401
        %1403 = vadd.xlane.f32.xlu0 %v1021
        %v1404 = vpop.xlane.xlu0 %1403
        %1405 = vadd.xlane.f32.xlu0 %v1022
        %v1406 = vpop.xlane.xlu0 %1405
        %1407 = vadd.xlane.f32.xlu0 %v1023
        %v1408 = vpop.xlane.xlu0 %1407
        %1409 = vadd.xlane.f32.xlu0 %v1024
        %v1410 = vpop.xlane.xlu0 %1409
        %1411 = vadd.xlane.f32.xlu0 %v1025
        %v1412 = vpop.xlane.xlu0 %1411
        %1413 = vadd.xlane.f32.xlu0 %v1026
        %v1414 = vpop.xlane.xlu0 %1413
        %1415 = vadd.xlane.f32.xlu0 %v1027
        %v1416 = vpop.xlane.xlu0 %1415
        %1417 = vadd.xlane.f32.xlu0 %v1028
        %v1418 = vpop.xlane.xlu0 %1417
        %1419 = vadd.xlane.f32.xlu0 %v1029
        %v1420 = vpop.xlane.xlu0 %1419
        %1421 = vadd.xlane.f32.xlu0 %v1030
        %v1422 = vpop.xlane.xlu0 %1421
        %1423 = vadd.xlane.f32.xlu0 %v1031
        %v1424 = vpop.xlane.xlu0 %1423
        %1425 = vadd.xlane.f32.xlu0 %v1032
        %v1426 = vpop.xlane.xlu0 %1425
        %1427 = vadd.xlane.f32.xlu0 %v1033
        %v1428 = vpop.xlane.xlu0 %1427
        %1429 = vadd.xlane.f32.xlu0 %v1034
        %v1430 = vpop.xlane.xlu0 %1429
        %1431 = vadd.xlane.f32.xlu0 %v1035
        %v1432 = vpop.xlane.xlu0 %1431
        %1433 = vadd.xlane.f32.xlu0 %v1036
        %v1434 = vpop.xlane.xlu0 %1433
        %1435 = vadd.xlane.f32.xlu0 %v1037
        %v1436 = vpop.xlane.xlu0 %1435
        %1437 = vadd.xlane.f32.xlu0 %v1038
        %v1438 = vpop.xlane.xlu0 %1437
        %1439 = vadd.xlane.f32.xlu0 %v1039
        %v1440 = vpop.xlane.xlu0 %1439
        %1441 = vadd.xlane.f32.xlu0 %v1040
        %v1442 = vpop.xlane.xlu0 %1441
        %1443 = vadd.xlane.f32.xlu0 %v1041
        %v1444 = vpop.xlane.xlu0 %1443
        %1445 = vadd.xlane.f32.xlu0 %v1042
        %v1446 = vpop.xlane.xlu0 %1445
        %1447 = vadd.xlane.f32.xlu0 %v1043
        %v1448 = vpop.xlane.xlu0 %1447
        %1449 = vadd.xlane.f32.xlu0 %v1044
        %v1450 = vpop.xlane.xlu0 %1449
        %1451 = vadd.xlane.f32.xlu0 %v1045
        %v1452 = vpop.xlane.xlu0 %1451
        %1453 = vadd.xlane.f32.xlu0 %v1046
        %v1454 = vpop.xlane.xlu0 %1453
        %1455 = vadd.xlane.f32.xlu0 %v1047
        %v1456 = vpop.xlane.xlu0 %1455
        %1457 = vadd.xlane.f32.xlu0 %v1048
        %v1458 = vpop.xlane.xlu0 %1457
        %1459 = vadd.xlane.f32.xlu0 %v1049
        %v1460 = vpop.xlane.xlu0 %1459
        %1461 = vadd.xlane.f32.xlu0 %v1050
        %v1462 = vpop.xlane.xlu0 %1461
        %1463 = vadd.xlane.f32.xlu0 %v1051
        %v1464 = vpop.xlane.xlu0 %1463
        %1465 = vadd.xlane.f32.xlu0 %v1052
        %v1466 = vpop.xlane.xlu0 %1465
        %1467 = vadd.xlane.f32.xlu0 %v1053
        %v1468 = vpop.xlane.xlu0 %1467
        %1469 = vadd.xlane.f32.xlu0 %v1054
        %v1470 = vpop.xlane.xlu0 %1469
        %1471 = vadd.xlane.f32.xlu0 %v1055
        %v1472 = vpop.xlane.xlu0 %1471
        %1473 = vadd.xlane.f32.xlu0 %v1056
        %v1474 = vpop.xlane.xlu0 %1473
        %1475 = vadd.xlane.f32.xlu0 %v1057
        %v1476 = vpop.xlane.xlu0 %1475
        %1477 = vadd.xlane.f32.xlu0 %v1058
        %v1478 = vpop.xlane.xlu0 %1477
        %1479 = vadd.xlane.f32.xlu0 %v1059
        %v1480 = vpop.xlane.xlu0 %1479
        %1481 = vadd.xlane.f32.xlu0 %v1060
        %v1482 = vpop.xlane.xlu0 %1481
        %1483 = vadd.xlane.f32.xlu0 %v1061
        %v1484 = vpop.xlane.xlu0 %1483
        %1485 = vadd.xlane.f32.xlu0 %v1062
        %v1486 = vpop.xlane.xlu0 %1485
        %1487 = vadd.xlane.f32.xlu0 %v1063
        %v1488 = vpop.xlane.xlu0 %1487
        %1489 = vadd.xlane.f32.xlu0 %v1064
        %v1490 = vpop.xlane.xlu0 %1489
        %1491 = vadd.xlane.f32.xlu0 %v1065
        %v1492 = vpop.xlane.xlu0 %1491
        %1493 = vadd.xlane.f32.xlu0 %v1066
        %v1494 = vpop.xlane.xlu0 %1493
        %1495 = vadd.xlane.f32.xlu0 %v1067
        %v1496 = vpop.xlane.xlu0 %1495
        %1497 = vadd.xlane.f32.xlu0 %v1068
        %v1498 = vpop.xlane.xlu0 %1497
        %1499 = vadd.xlane.f32.xlu0 %v1069
        %v1500 = vpop.xlane.xlu0 %1499
        %1501 = vadd.xlane.f32.xlu0 %v1070
        %v1502 = vpop.xlane.xlu0 %1501
        %1503 = vadd.xlane.f32.xlu0 %v1071
        %v1504 = vpop.xlane.xlu0 %1503
        %1505 = vadd.xlane.f32.xlu0 %v1072
        %v1506 = vpop.xlane.xlu0 %1505
        %1507 = vadd.xlane.f32.xlu0 %v1073
        %v1508 = vpop.xlane.xlu0 %1507
        %1509 = vadd.xlane.f32.xlu0 %v1074
        %v1510 = vpop.xlane.xlu0 %1509
        %1511 = vadd.xlane.f32.xlu0 %v1075
        %v1512 = vpop.xlane.xlu0 %1511
        %1513 = vadd.xlane.f32.xlu0 %v1076
        %v1514 = vpop.xlane.xlu0 %1513
        %1515 = vadd.xlane.f32.xlu0 %v1077
        %v1516 = vpop.xlane.xlu0 %1515
        %1517 = vadd.xlane.f32.xlu0 %v1078
        %v1518 = vpop.xlane.xlu0 %1517
        %1519 = vadd.xlane.f32.xlu0 %v1079
        %v1520 = vpop.xlane.xlu0 %1519
        %1521 = vadd.xlane.f32.xlu0 %v1080
        %v1522 = vpop.xlane.xlu0 %1521
        %1523 = vadd.xlane.f32.xlu0 %v1081
        %v1524 = vpop.xlane.xlu0 %1523
        %1525 = vadd.xlane.f32.xlu0 %v1082
        %v1526 = vpop.xlane.xlu0 %1525
        %1527 = vadd.xlane.f32.xlu0 %v1083
        %v1528 = vpop.xlane.xlu0 %1527
        %1529 = vadd.xlane.f32.xlu0 %v1084
        %v1530 = vpop.xlane.xlu0 %1529
        %1531 = vadd.xlane.f32.xlu0 %v1085
        %v1532 = vpop.xlane.xlu0 %1531
        %1533 = vadd.xlane.f32.xlu0 %v1086
        %v1534 = vpop.xlane.xlu0 %1533
        %1535 = vadd.xlane.f32.xlu0 %v1087
        %v1536 = vpop.xlane.xlu0 %1535
        %1537 = vadd.xlane.f32.xlu0 %v1088
        %v1538 = vpop.xlane.xlu0 %1537
        %1539 = vadd.xlane.f32.xlu0 %v1089
        %v1540 = vpop.xlane.xlu0 %1539
        %1541 = vadd.xlane.f32.xlu0 %v1090
        %v1542 = vpop.xlane.xlu0 %1541
        %1543 = vadd.xlane.f32.xlu0 %v1091
        %v1544 = vpop.xlane.xlu0 %1543
        %1545 = vadd.xlane.f32.xlu0 %v1092
        %v1546 = vpop.xlane.xlu0 %1545
        %1547 = vadd.xlane.f32.xlu0 %v1093
        %v1548 = vpop.xlane.xlu0 %1547
        %1549 = vadd.xlane.f32.xlu0 %v1094
        %v1550 = vpop.xlane.xlu0 %1549
        %1551 = vadd.xlane.f32.xlu0 %v1095
        %v1552 = vpop.xlane.xlu0 %1551
        %1553 = vadd.xlane.f32.xlu0 %v1096
        %v1554 = vpop.xlane.xlu0 %1553
        %1555 = vadd.xlane.f32.xlu0 %v1097
        %v1556 = vpop.xlane.xlu0 %1555
        %1557 = vadd.xlane.f32.xlu0 %v1098
        %v1558 = vpop.xlane.xlu0 %1557
        %1559 = vadd.xlane.f32.xlu0 %v1099
        %v1560 = vpop.xlane.xlu0 %1559
        %1561 = vadd.xlane.f32.xlu0 %v1100
        %v1562 = vpop.xlane.xlu0 %1561
        %1563 = vadd.xlane.f32.xlu0 %v1101
        %v1564 = vpop.xlane.xlu0 %1563
        %1565 = vadd.xlane.f32.xlu0 %v1102
        %v1566 = vpop.xlane.xlu0 %1565
        %1567 = vadd.xlane.f32.xlu0 %v1103
        %v1568 = vpop.xlane.xlu0 %1567
        %1569 = vadd.xlane.f32.xlu0 %v1104
        %v1570 = vpop.xlane.xlu0 %1569
        %1571 = vadd.xlane.f32.xlu0 %v1105
        %v1572 = vpop.xlane.xlu0 %1571
        %1573 = vadd.xlane.f32.xlu0 %v1106
        %v1574 = vpop.xlane.xlu0 %1573
        %1575 = vadd.xlane.f32.xlu0 %v1107
        %v1576 = vpop.xlane.xlu0 %1575
        %1577 = vadd.xlane.f32.xlu0 %v1108
        %v1578 = vpop.xlane.xlu0 %1577
        %1579 = vadd.xlane.f32.xlu0 %v1109
        %v1580 = vpop.xlane.xlu0 %1579
        %1581 = vadd.xlane.f32.xlu0 %v1110
        %v1582 = vpop.xlane.xlu0 %1581
        %1583 = vadd.xlane.f32.xlu0 %v1111
        %v1584 = vpop.xlane.xlu0 %1583
        %1585 = vadd.xlane.f32.xlu0 %v1112
        %v1586 = vpop.xlane.xlu0 %1585
        %1587 = vadd.xlane.f32.xlu0 %v1113
        %v1588 = vpop.xlane.xlu0 %1587
        %1589 = vadd.xlane.f32.xlu0 %v1114
        %v1590 = vpop.xlane.xlu0 %1589
        %1591 = vadd.xlane.f32.xlu0 %v1115
        %v1592 = vpop.xlane.xlu0 %1591
        %1593 = vadd.xlane.f32.xlu0 %v1116
        %v1594 = vpop.xlane.xlu0 %1593
        %1595 = vadd.xlane.f32.xlu0 %v1117
        %v1596 = vpop.xlane.xlu0 %1595
        %1597 = vadd.xlane.f32.xlu0 %v1118
        %v1598 = vpop.xlane.xlu0 %1597
        %1599 = vadd.xlane.f32.xlu0 %v1119
        %v1600 = vpop.xlane.xlu0 %1599
        %1601 = vadd.xlane.f32.xlu0 %v1120
        %v1602 = vpop.xlane.xlu0 %1601
        %1603 = vadd.xlane.f32.xlu0 %v1121
        %v1604 = vpop.xlane.xlu0 %1603
        %1605 = vadd.xlane.f32.xlu0 %v1122
        %v1606 = vpop.xlane.xlu0 %1605
        %1607 = vadd.xlane.f32.xlu0 %v1123
        %v1608 = vpop.xlane.xlu0 %1607
        %1609 = vadd.xlane.f32.xlu0 %v1124
        %v1610 = vpop.xlane.xlu0 %1609
        %1611 = vadd.xlane.f32.xlu0 %v1125
        %v1612 = vpop.xlane.xlu0 %1611
        %1613 = vadd.xlane.f32.xlu0 %v1126
        %v1614 = vpop.xlane.xlu0 %1613
        %1615 = vadd.xlane.f32.xlu0 %v1127
        %v1616 = vpop.xlane.xlu0 %1615
        %1617 = vadd.xlane.f32.xlu0 %v1128
        %v1618 = vpop.xlane.xlu0 %1617
        %1619 = vadd.xlane.f32.xlu0 %v1129
        %v1620 = vpop.xlane.xlu0 %1619
        %1621 = vadd.xlane.f32.xlu0 %v1130
        %v1622 = vpop.xlane.xlu0 %1621
        %1623 = vadd.xlane.f32.xlu0 %v1131
        %v1624 = vpop.xlane.xlu0 %1623
        %1625 = vadd.xlane.f32.xlu0 %v1132
        %v1626 = vpop.xlane.xlu0 %1625
        %1627 = vadd.xlane.f32.xlu0 %v1133
        %v1628 = vpop.xlane.xlu0 %1627
        %1629 = vadd.xlane.f32.xlu0 %v1134
        %v1630 = vpop.xlane.xlu0 %1629
        %1631 = vadd.xlane.f32.xlu0 %v1135
        %v1632 = vpop.xlane.xlu0 %1631
        %1633 = vadd.xlane.f32.xlu0 %v1136
        %v1634 = vpop.xlane.xlu0 %1633
        %1635 = vadd.xlane.f32.xlu0 %v1137
        %v1636 = vpop.xlane.xlu0 %1635
        %1637 = vadd.xlane.f32.xlu0 %v1138
        %v1638 = vpop.xlane.xlu0 %1637
        %1639 = vadd.xlane.f32.xlu0 %v1139
        %v1640 = vpop.xlane.xlu0 %1639
        %1641 = vadd.xlane.f32.xlu0 %v1140
        %v1642 = vpop.xlane.xlu0 %1641
        %1643 = vadd.xlane.f32.xlu0 %v1141
        %v1644 = vpop.xlane.xlu0 %1643
        %1645 = vadd.xlane.f32.xlu0 %v1142
        %v1646 = vpop.xlane.xlu0 %1645
        %1647 = vadd.xlane.f32.xlu0 %v1143
        %v1648 = vpop.xlane.xlu0 %1647
        %1649 = vadd.xlane.f32.xlu0 %v1144
        %v1650 = vpop.xlane.xlu0 %1649
        %1651 = vadd.xlane.f32.xlu0 %v1145
        %v1652 = vpop.xlane.xlu0 %1651
        %1653 = vadd.xlane.f32.xlu0 %v1146
        %v1654 = vpop.xlane.xlu0 %1653
        %1655 = vadd.xlane.f32.xlu0 %v1147
        %v1656 = vpop.xlane.xlu0 %1655
        %1657 = vadd.xlane.f32.xlu0 %v1148
        %v1658 = vpop.xlane.xlu0 %1657
        %1659 = vadd.xlane.f32.xlu0 %v1149
        %v1660 = vpop.xlane.xlu0 %1659
        %1661 = vadd.xlane.f32.xlu0 %v1150
        %v1662 = vpop.xlane.xlu0 %1661
        %v1663 = vrcp.pop 128.0
        %v1664 = vmul.f32 128.0, %v1663
        %v1665 = vsub.f32 1.0, %v1664
        %v1666 = vmul.f32 %v1663, %v1665
        %v1667 = vadd.f32 %v1663, %v1666
        %vm1668 = vweird.f32 %v1663
        %v1669 = vsel %vm1668, %v1663, %v1667
        %v1670 = vmul.f32 %v1152, %v1669
        %v1671 = vmul.f32 %v1154, %v1669
        %v1672 = vmul.f32 %v1156, %v1669
        %v1673 = vmul.f32 %v1158, %v1669
        %v1674 = vmul.f32 %v1160, %v1669
        %v1675 = vmul.f32 %v1162, %v1669
        %v1676 = vmul.f32 %v1164, %v1669
        %v1677 = vmul.f32 %v1166, %v1669
        %v1678 = vmul.f32 %v1168, %v1669
        %v1679 = vmul.f32 %v1170, %v1669
        %v1680 = vmul.f32 %v1172, %v1669
        %v1681 = vmul.f32 %v1174, %v1669
        %v1682 = vmul.f32 %v1176, %v1669
        %v1683 = vmul.f32 %v1178, %v1669
        %v1684 = vmul.f32 %v1180, %v1669
        %v1685 = vmul.f32 %v1182, %v1669
        %v1686 = vmul.f32 %v1184, %v1669
        %v1687 = vmul.f32 %v1186, %v1669
        %v1688 = vmul.f32 %v1188, %v1669
        %v1689 = vmul.f32 %v1190, %v1669
        %v1690 = vmul.f32 %v1192, %v1669
        %v1691 = vmul.f32 %v1194, %v1669
        %v1692 = vmul.f32 %v1196, %v1669
        %v1693 = vmul.f32 %v1198, %v1669
        %v1694 = vmul.f32 %v1200, %v1669
        %v1695 = vmul.f32 %v1202, %v1669
        %v1696 = vmul.f32 %v1204, %v1669
        %v1697 = vmul.f32 %v1206, %v1669
        %v1698 = vmul.f32 %v1208, %v1669
        %v1699 = vmul.f32 %v1210, %v1669
        %v1700 = vmul.f32 %v1212, %v1669
        %v1701 = vmul.f32 %v1214, %v1669
        %v1702 = vmul.f32 %v1216, %v1669
        %v1703 = vmul.f32 %v1218, %v1669
        %v1704 = vmul.f32 %v1220, %v1669
        %v1705 = vmul.f32 %v1222, %v1669
        %v1706 = vmul.f32 %v1224, %v1669
        %v1707 = vmul.f32 %v1226, %v1669
        %v1708 = vmul.f32 %v1228, %v1669
        %v1709 = vmul.f32 %v1230, %v1669
        %v1710 = vmul.f32 %v1232, %v1669
        %v1711 = vmul.f32 %v1234, %v1669
        %v1712 = vmul.f32 %v1236, %v1669
        %v1713 = vmul.f32 %v1238, %v1669
        %v1714 = vmul.f32 %v1240, %v1669
        %v1715 = vmul.f32 %v1242, %v1669
        %v1716 = vmul.f32 %v1244, %v1669
        %v1717 = vmul.f32 %v1246, %v1669
        %v1718 = vmul.f32 %v1248, %v1669
        %v1719 = vmul.f32 %v1250, %v1669
        %v1720 = vmul.f32 %v1252, %v1669
        %v1721 = vmul.f32 %v1254, %v1669
        %v1722 = vmul.f32 %v1256, %v1669
        %v1723 = vmul.f32 %v1258, %v1669
        %v1724 = vmul.f32 %v1260, %v1669
        %v1725 = vmul.f32 %v1262, %v1669
        %v1726 = vmul.f32 %v1264, %v1669
        %v1727 = vmul.f32 %v1266, %v1669
        %v1728 = vmul.f32 %v1268, %v1669
        %v1729 = vmul.f32 %v1270, %v1669
        %v1730 = vmul.f32 %v1272, %v1669
        %v1731 = vmul.f32 %v1274, %v1669
        %v1732 = vmul.f32 %v1276, %v1669
        %v1733 = vmul.f32 %v1278, %v1669
        %v1734 = vmul.f32 %v1280, %v1669
        %v1735 = vmul.f32 %v1282, %v1669
        %v1736 = vmul.f32 %v1284, %v1669
        %v1737 = vmul.f32 %v1286, %v1669
        %v1738 = vmul.f32 %v1288, %v1669
        %v1739 = vmul.f32 %v1290, %v1669
        %v1740 = vmul.f32 %v1292, %v1669
        %v1741 = vmul.f32 %v1294, %v1669
        %v1742 = vmul.f32 %v1296, %v1669
        %v1743 = vmul.f32 %v1298, %v1669
        %v1744 = vmul.f32 %v1300, %v1669
        %v1745 = vmul.f32 %v1302, %v1669
        %v1746 = vmul.f32 %v1304, %v1669
        %v1747 = vmul.f32 %v1306, %v1669
        %v1748 = vmul.f32 %v1308, %v1669
        %v1749 = vmul.f32 %v1310, %v1669
        %v1750 = vmul.f32 %v1312, %v1669
        %v1751 = vmul.f32 %v1314, %v1669
        %v1752 = vmul.f32 %v1316, %v1669
        %v1753 = vmul.f32 %v1318, %v1669
        %v1754 = vmul.f32 %v1320, %v1669
        %v1755 = vmul.f32 %v1322, %v1669
        %v1756 = vmul.f32 %v1324, %v1669
        %v1757 = vmul.f32 %v1326, %v1669
        %v1758 = vmul.f32 %v1328, %v1669
        %v1759 = vmul.f32 %v1330, %v1669
        %v1760 = vmul.f32 %v1332, %v1669
        %v1761 = vmul.f32 %v1334, %v1669
        %v1762 = vmul.f32 %v1336, %v1669
        %v1763 = vmul.f32 %v1338, %v1669
        %v1764 = vmul.f32 %v1340, %v1669
        %v1765 = vmul.f32 %v1342, %v1669
        %v1766 = vmul.f32 %v1344, %v1669
        %v1767 = vmul.f32 %v1346, %v1669
        %v1768 = vmul.f32 %v1348, %v1669
        %v1769 = vmul.f32 %v1350, %v1669
        %v1770 = vmul.f32 %v1352, %v1669
        %v1771 = vmul.f32 %v1354, %v1669
        %v1772 = vmul.f32 %v1356, %v1669
        %v1773 = vmul.f32 %v1358, %v1669
        %v1774 = vmul.f32 %v1360, %v1669
        %v1775 = vmul.f32 %v1362, %v1669
        %v1776 = vmul.f32 %v1364, %v1669
        %v1777 = vmul.f32 %v1366, %v1669
        %v1778 = vmul.f32 %v1368, %v1669
        %v1779 = vmul.f32 %v1370, %v1669
        %v1780 = vmul.f32 %v1372, %v1669
        %v1781 = vmul.f32 %v1374, %v1669
        %v1782 = vmul.f32 %v1376, %v1669
        %v1783 = vmul.f32 %v1378, %v1669
        %v1784 = vmul.f32 %v1380, %v1669
        %v1785 = vmul.f32 %v1382, %v1669
        %v1786 = vmul.f32 %v1384, %v1669
        %v1787 = vmul.f32 %v1386, %v1669
        %v1788 = vmul.f32 %v1388, %v1669
        %v1789 = vmul.f32 %v1390, %v1669
        %v1790 = vmul.f32 %v1392, %v1669
        %v1791 = vmul.f32 %v1394, %v1669
        %v1792 = vmul.f32 %v1396, %v1669
        %v1793 = vmul.f32 %v1398, %v1669
        %v1794 = vmul.f32 %v1400, %v1669
        %v1795 = vmul.f32 %v1402, %v1669
        %v1796 = vmul.f32 %v1404, %v1669
        %v1797 = vmul.f32 %v1406, %v1669
        %v1798 = vmul.f32 %v1408, %v1669
        %v1799 = vmul.f32 %v1410, %v1669
        %v1800 = vmul.f32 %v1412, %v1669
        %v1801 = vmul.f32 %v1414, %v1669
        %v1802 = vmul.f32 %v1416, %v1669
        %v1803 = vmul.f32 %v1418, %v1669
        %v1804 = vmul.f32 %v1420, %v1669
        %v1805 = vmul.f32 %v1422, %v1669
        %v1806 = vmul.f32 %v1424, %v1669
        %v1807 = vmul.f32 %v1426, %v1669
        %v1808 = vmul.f32 %v1428, %v1669
        %v1809 = vmul.f32 %v1430, %v1669
        %v1810 = vmul.f32 %v1432, %v1669
        %v1811 = vmul.f32 %v1434, %v1669
        %v1812 = vmul.f32 %v1436, %v1669
        %v1813 = vmul.f32 %v1438, %v1669
        %v1814 = vmul.f32 %v1440, %v1669
        %v1815 = vmul.f32 %v1442, %v1669
        %v1816 = vmul.f32 %v1444, %v1669
        %v1817 = vmul.f32 %v1446, %v1669
        %v1818 = vmul.f32 %v1448, %v1669
        %v1819 = vmul.f32 %v1450, %v1669
        %v1820 = vmul.f32 %v1452, %v1669
        %v1821 = vmul.f32 %v1454, %v1669
        %v1822 = vmul.f32 %v1456, %v1669
        %v1823 = vmul.f32 %v1458, %v1669
        %v1824 = vmul.f32 %v1460, %v1669
        %v1825 = vmul.f32 %v1462, %v1669
        %v1826 = vmul.f32 %v1464, %v1669
        %v1827 = vmul.f32 %v1466, %v1669
        %v1828 = vmul.f32 %v1468, %v1669
        %v1829 = vmul.f32 %v1470, %v1669
        %v1830 = vmul.f32 %v1472, %v1669
        %v1831 = vmul.f32 %v1474, %v1669
        %v1832 = vmul.f32 %v1476, %v1669
        %v1833 = vmul.f32 %v1478, %v1669
        %v1834 = vmul.f32 %v1480, %v1669
        %v1835 = vmul.f32 %v1482, %v1669
        %v1836 = vmul.f32 %v1484, %v1669
        %v1837 = vmul.f32 %v1486, %v1669
        %v1838 = vmul.f32 %v1488, %v1669
        %v1839 = vmul.f32 %v1490, %v1669
        %v1840 = vmul.f32 %v1492, %v1669
        %v1841 = vmul.f32 %v1494, %v1669
        %v1842 = vmul.f32 %v1496, %v1669
        %v1843 = vmul.f32 %v1498, %v1669
        %v1844 = vmul.f32 %v1500, %v1669
        %v1845 = vmul.f32 %v1502, %v1669
        %v1846 = vmul.f32 %v1504, %v1669
        %v1847 = vmul.f32 %v1506, %v1669
        %v1848 = vmul.f32 %v1508, %v1669
        %v1849 = vmul.f32 %v1510, %v1669
        %v1850 = vmul.f32 %v1512, %v1669
        %v1851 = vmul.f32 %v1514, %v1669
        %v1852 = vmul.f32 %v1516, %v1669
        %v1853 = vmul.f32 %v1518, %v1669
        %v1854 = vmul.f32 %v1520, %v1669
        %v1855 = vmul.f32 %v1522, %v1669
        %v1856 = vmul.f32 %v1524, %v1669
        %v1857 = vmul.f32 %v1526, %v1669
        %v1858 = vmul.f32 %v1528, %v1669
        %v1859 = vmul.f32 %v1530, %v1669
        %v1860 = vmul.f32 %v1532, %v1669
        %v1861 = vmul.f32 %v1534, %v1669
        %v1862 = vmul.f32 %v1536, %v1669
        %v1863 = vmul.f32 %v1538, %v1669
        %v1864 = vmul.f32 %v1540, %v1669
        %v1865 = vmul.f32 %v1542, %v1669
        %v1866 = vmul.f32 %v1544, %v1669
        %v1867 = vmul.f32 %v1546, %v1669
        %v1868 = vmul.f32 %v1548, %v1669
        %v1869 = vmul.f32 %v1550, %v1669
        %v1870 = vmul.f32 %v1552, %v1669
        %v1871 = vmul.f32 %v1554, %v1669
        %v1872 = vmul.f32 %v1556, %v1669
        %v1873 = vmul.f32 %v1558, %v1669
        %v1874 = vmul.f32 %v1560, %v1669
        %v1875 = vmul.f32 %v1562, %v1669
        %v1876 = vmul.f32 %v1564, %v1669
        %v1877 = vmul.f32 %v1566, %v1669
        %v1878 = vmul.f32 %v1568, %v1669
        %v1879 = vmul.f32 %v1570, %v1669
        %v1880 = vmul.f32 %v1572, %v1669
        %v1881 = vmul.f32 %v1574, %v1669
        %v1882 = vmul.f32 %v1576, %v1669
        %v1883 = vmul.f32 %v1578, %v1669
        %v1884 = vmul.f32 %v1580, %v1669
        %v1885 = vmul.f32 %v1582, %v1669
        %v1886 = vmul.f32 %v1584, %v1669
        %v1887 = vmul.f32 %v1586, %v1669
        %v1888 = vmul.f32 %v1588, %v1669
        %v1889 = vmul.f32 %v1590, %v1669
        %v1890 = vmul.f32 %v1592, %v1669
        %v1891 = vmul.f32 %v1594, %v1669
        %v1892 = vmul.f32 %v1596, %v1669
        %v1893 = vmul.f32 %v1598, %v1669
        %v1894 = vmul.f32 %v1600, %v1669
        %v1895 = vmul.f32 %v1602, %v1669
        %v1896 = vmul.f32 %v1604, %v1669
        %v1897 = vmul.f32 %v1606, %v1669
        %v1898 = vmul.f32 %v1608, %v1669
        %v1899 = vmul.f32 %v1610, %v1669
        %v1900 = vmul.f32 %v1612, %v1669
        %v1901 = vmul.f32 %v1614, %v1669
        %v1902 = vmul.f32 %v1616, %v1669
        %v1903 = vmul.f32 %v1618, %v1669
        %v1904 = vmul.f32 %v1620, %v1669
        %v1905 = vmul.f32 %v1622, %v1669
        %v1906 = vmul.f32 %v1624, %v1669
        %v1907 = vmul.f32 %v1626, %v1669
        %v1908 = vmul.f32 %v1628, %v1669
        %v1909 = vmul.f32 %v1630, %v1669
        %v1910 = vmul.f32 %v1632, %v1669
        %v1911 = vmul.f32 %v1634, %v1669
        %v1912 = vmul.f32 %v1636, %v1669
        %v1913 = vmul.f32 %v1638, %v1669
        %v1914 = vmul.f32 %v1640, %v1669
        %v1915 = vmul.f32 %v1642, %v1669
        %v1916 = vmul.f32 %v1644, %v1669
        %v1917 = vmul.f32 %v1646, %v1669
        %v1918 = vmul.f32 %v1648, %v1669
        %v1919 = vmul.f32 %v1650, %v1669
        %v1920 = vmul.f32 %v1652, %v1669
        %v1921 = vmul.f32 %v1654, %v1669
        %v1922 = vmul.f32 %v1656, %v1669
        %v1923 = vmul.f32 %v1658, %v1669
        %v1924 = vmul.f32 %v1660, %v1669
        %v1925 = vmul.f32 %v1662, %v1669
        %v1926 = vsub.f32 %v895, %v1670
        %v1927 = vsub.f32 %v896, %v1671
        %v1928 = vsub.f32 %v897, %v1672
        %v1929 = vsub.f32 %v898, %v1673
        %v1930 = vsub.f32 %v899, %v1674
        %v1931 = vsub.f32 %v900, %v1675
        %v1932 = vsub.f32 %v901, %v1676
        %v1933 = vsub.f32 %v902, %v1677
        %v1934 = vsub.f32 %v903, %v1678
        %v1935 = vsub.f32 %v904, %v1679
        %v1936 = vsub.f32 %v905, %v1680
        %v1937 = vsub.f32 %v906, %v1681
        %v1938 = vsub.f32 %v907, %v1682
        %v1939 = vsub.f32 %v908, %v1683
        %v1940 = vsub.f32 %v909, %v1684
        %v1941 = vsub.f32 %v910, %v1685
        %v1942 = vsub.f32 %v911, %v1686
        %v1943 = vsub.f32 %v912, %v1687
        %v1944 = vsub.f32 %v913, %v1688
        %v1945 = vsub.f32 %v914, %v1689
        %v1946 = vsub.f32 %v915, %v1690
        %v1947 = vsub.f32 %v916, %v1691
        %v1948 = vsub.f32 %v917, %v1692
        %v1949 = vsub.f32 %v918, %v1693
        %v1950 = vsub.f32 %v919, %v1694
        %v1951 = vsub.f32 %v920, %v1695
        %v1952 = vsub.f32 %v921, %v1696
        %v1953 = vsub.f32 %v922, %v1697
        %v1954 = vsub.f32 %v923, %v1698
        %v1955 = vsub.f32 %v924, %v1699
        %v1956 = vsub.f32 %v925, %v1700
        %v1957 = vsub.f32 %v926, %v1701
        %v1958 = vsub.f32 %v927, %v1702
        %v1959 = vsub.f32 %v928, %v1703
        %v1960 = vsub.f32 %v929, %v1704
        %v1961 = vsub.f32 %v930, %v1705
        %v1962 = vsub.f32 %v931, %v1706
        %v1963 = vsub.f32 %v932, %v1707
        %v1964 = vsub.f32 %v933, %v1708
        %v1965 = vsub.f32 %v934, %v1709
        %v1966 = vsub.f32 %v935, %v1710
        %v1967 = vsub.f32 %v936, %v1711
        %v1968 = vsub.f32 %v937, %v1712
        %v1969 = vsub.f32 %v938, %v1713
        %v1970 = vsub.f32 %v939, %v1714
        %v1971 = vsub.f32 %v940, %v1715
        %v1972 = vsub.f32 %v941, %v1716
        %v1973 = vsub.f32 %v942, %v1717
        %v1974 = vsub.f32 %v943, %v1718
        %v1975 = vsub.f32 %v944, %v1719
        %v1976 = vsub.f32 %v945, %v1720
        %v1977 = vsub.f32 %v946, %v1721
        %v1978 = vsub.f32 %v947, %v1722
        %v1979 = vsub.f32 %v948, %v1723
        %v1980 = vsub.f32 %v949, %v1724
        %v1981 = vsub.f32 %v950, %v1725
        %v1982 = vsub.f32 %v951, %v1726
        %v1983 = vsub.f32 %v952, %v1727
        %v1984 = vsub.f32 %v953, %v1728
        %v1985 = vsub.f32 %v954, %v1729
        %v1986 = vsub.f32 %v955, %v1730
        %v1987 = vsub.f32 %v956, %v1731
        %v1988 = vsub.f32 %v957, %v1732
        %v1989 = vsub.f32 %v958, %v1733
        %v1990 = vsub.f32 %v959, %v1734
        %v1991 = vsub.f32 %v960, %v1735
        %v1992 = vsub.f32 %v961, %v1736
        %v1993 = vsub.f32 %v962, %v1737
        %v1994 = vsub.f32 %v963, %v1738
        %v1995 = vsub.f32 %v964, %v1739
        %v1996 = vsub.f32 %v965, %v1740
        %v1997 = vsub.f32 %v966, %v1741
        %v1998 = vsub.f32 %v967, %v1742
        %v1999 = vsub.f32 %v968, %v1743
        %v2000 = vsub.f32 %v969, %v1744
        %v2001 = vsub.f32 %v970, %v1745
        %v2002 = vsub.f32 %v971, %v1746
        %v2003 = vsub.f32 %v972, %v1747
        %v2004 = vsub.f32 %v973, %v1748
        %v2005 = vsub.f32 %v974, %v1749
        %v2006 = vsub.f32 %v975, %v1750
        %v2007 = vsub.f32 %v976, %v1751
        %v2008 = vsub.f32 %v977, %v1752
        %v2009 = vsub.f32 %v978, %v1753
        %v2010 = vsub.f32 %v979, %v1754
        %v2011 = vsub.f32 %v980, %v1755
        %v2012 = vsub.f32 %v981, %v1756
        %v2013 = vsub.f32 %v982, %v1757
        %v2014 = vsub.f32 %v983, %v1758
        %v2015 = vsub.f32 %v984, %v1759
        %v2016 = vsub.f32 %v985, %v1760
        %v2017 = vsub.f32 %v986, %v1761
        %v2018 = vsub.f32 %v987, %v1762
        %v2019 = vsub.f32 %v988, %v1763
        %v2020 = vsub.f32 %v989, %v1764
        %v2021 = vsub.f32 %v990, %v1765
        %v2022 = vsub.f32 %v991, %v1766
        %v2023 = vsub.f32 %v992, %v1767
        %v2024 = vsub.f32 %v993, %v1768
        %v2025 = vsub.f32 %v994, %v1769
        %v2026 = vsub.f32 %v995, %v1770
        %v2027 = vsub.f32 %v996, %v1771
        %v2028 = vsub.f32 %v997, %v1772
        %v2029 = vsub.f32 %v998, %v1773
        %v2030 = vsub.f32 %v999, %v1774
        %v2031 = vsub.f32 %v1000, %v1775
        %v2032 = vsub.f32 %v1001, %v1776
        %v2033 = vsub.f32 %v1002, %v1777
        %v2034 = vsub.f32 %v1003, %v1778
        %v2035 = vsub.f32 %v1004, %v1779
        %v2036 = vsub.f32 %v1005, %v1780
        %v2037 = vsub.f32 %v1006, %v1781
        %v2038 = vsub.f32 %v1007, %v1782
        %v2039 = vsub.f32 %v1008, %v1783
        %v2040 = vsub.f32 %v1009, %v1784
        %v2041 = vsub.f32 %v1010, %v1785
        %v2042 = vsub.f32 %v1011, %v1786
        %v2043 = vsub.f32 %v1012, %v1787
        %v2044 = vsub.f32 %v1013, %v1788
        %v2045 = vsub.f32 %v1014, %v1789
        %v2046 = vsub.f32 %v1015, %v1790
        %v2047 = vsub.f32 %v1016, %v1791
        %v2048 = vsub.f32 %v1017, %v1792
        %v2049 = vsub.f32 %v1018, %v1793
        %v2050 = vsub.f32 %v1019, %v1794
        %v2051 = vsub.f32 %v1020, %v1795
        %v2052 = vsub.f32 %v1021, %v1796
        %v2053 = vsub.f32 %v1022, %v1797
        %v2054 = vsub.f32 %v1023, %v1798
        %v2055 = vsub.f32 %v1024, %v1799
        %v2056 = vsub.f32 %v1025, %v1800
        %v2057 = vsub.f32 %v1026, %v1801
        %v2058 = vsub.f32 %v1027, %v1802
        %v2059 = vsub.f32 %v1028, %v1803
        %v2060 = vsub.f32 %v1029, %v1804
        %v2061 = vsub.f32 %v1030, %v1805
        %v2062 = vsub.f32 %v1031, %v1806
        %v2063 = vsub.f32 %v1032, %v1807
        %v2064 = vsub.f32 %v1033, %v1808
        %v2065 = vsub.f32 %v1034, %v1809
        %v2066 = vsub.f32 %v1035, %v1810
        %v2067 = vsub.f32 %v1036, %v1811
        %v2068 = vsub.f32 %v1037, %v1812
        %v2069 = vsub.f32 %v1038, %v1813
        %v2070 = vsub.f32 %v1039, %v1814
        %v2071 = vsub.f32 %v1040, %v1815
        %v2072 = vsub.f32 %v1041, %v1816
        %v2073 = vsub.f32 %v1042, %v1817
        %v2074 = vsub.f32 %v1043, %v1818
        %v2075 = vsub.f32 %v1044, %v1819
        %v2076 = vsub.f32 %v1045, %v1820
        %v2077 = vsub.f32 %v1046, %v1821
        %v2078 = vsub.f32 %v1047, %v1822
        %v2079 = vsub.f32 %v1048, %v1823
        %v2080 = vsub.f32 %v1049, %v1824
        %v2081 = vsub.f32 %v1050, %v1825
        %v2082 = vsub.f32 %v1051, %v1826
        %v2083 = vsub.f32 %v1052, %v1827
        %v2084 = vsub.f32 %v1053, %v1828
        %v2085 = vsub.f32 %v1054, %v1829
        %v2086 = vsub.f32 %v1055, %v1830
        %v2087 = vsub.f32 %v1056, %v1831
        %v2088 = vsub.f32 %v1057, %v1832
        %v2089 = vsub.f32 %v1058, %v1833
        %v2090 = vsub.f32 %v1059, %v1834
        %v2091 = vsub.f32 %v1060, %v1835
        %v2092 = vsub.f32 %v1061, %v1836
        %v2093 = vsub.f32 %v1062, %v1837
        %v2094 = vsub.f32 %v1063, %v1838
        %v2095 = vsub.f32 %v1064, %v1839
        %v2096 = vsub.f32 %v1065, %v1840
        %v2097 = vsub.f32 %v1066, %v1841
        %v2098 = vsub.f32 %v1067, %v1842
        %v2099 = vsub.f32 %v1068, %v1843
        %v2100 = vsub.f32 %v1069, %v1844
        %v2101 = vsub.f32 %v1070, %v1845
        %v2102 = vsub.f32 %v1071, %v1846
        %v2103 = vsub.f32 %v1072, %v1847
        %v2104 = vsub.f32 %v1073, %v1848
        %v2105 = vsub.f32 %v1074, %v1849
        %v2106 = vsub.f32 %v1075, %v1850
        %v2107 = vsub.f32 %v1076, %v1851
        %v2108 = vsub.f32 %v1077, %v1852
        %v2109 = vsub.f32 %v1078, %v1853
        %v2110 = vsub.f32 %v1079, %v1854
        %v2111 = vsub.f32 %v1080, %v1855
        %v2112 = vsub.f32 %v1081, %v1856
        %v2113 = vsub.f32 %v1082, %v1857
        %v2114 = vsub.f32 %v1083, %v1858
        %v2115 = vsub.f32 %v1084, %v1859
        %v2116 = vsub.f32 %v1085, %v1860
        %v2117 = vsub.f32 %v1086, %v1861
        %v2118 = vsub.f32 %v1087, %v1862
        %v2119 = vsub.f32 %v1088, %v1863
        %v2120 = vsub.f32 %v1089, %v1864
        %v2121 = vsub.f32 %v1090, %v1865
        %v2122 = vsub.f32 %v1091, %v1866
        %v2123 = vsub.f32 %v1092, %v1867
        %v2124 = vsub.f32 %v1093, %v1868
        %v2125 = vsub.f32 %v1094, %v1869
        %v2126 = vsub.f32 %v1095, %v1870
        %v2127 = vsub.f32 %v1096, %v1871
        %v2128 = vsub.f32 %v1097, %v1872
        %v2129 = vsub.f32 %v1098, %v1873
        %v2130 = vsub.f32 %v1099, %v1874
        %v2131 = vsub.f32 %v1100, %v1875
        %v2132 = vsub.f32 %v1101, %v1876
        %v2133 = vsub.f32 %v1102, %v1877
        %v2134 = vsub.f32 %v1103, %v1878
        %v2135 = vsub.f32 %v1104, %v1879
        %v2136 = vsub.f32 %v1105, %v1880
        %v2137 = vsub.f32 %v1106, %v1881
        %v2138 = vsub.f32 %v1107, %v1882
        %v2139 = vsub.f32 %v1108, %v1883
        %v2140 = vsub.f32 %v1109, %v1884
        %v2141 = vsub.f32 %v1110, %v1885
        %v2142 = vsub.f32 %v1111, %v1886
        %v2143 = vsub.f32 %v1112, %v1887
        %v2144 = vsub.f32 %v1113, %v1888
        %v2145 = vsub.f32 %v1114, %v1889
        %v2146 = vsub.f32 %v1115, %v1890
        %v2147 = vsub.f32 %v1116, %v1891
        %v2148 = vsub.f32 %v1117, %v1892
        %v2149 = vsub.f32 %v1118, %v1893
        %v2150 = vsub.f32 %v1119, %v1894
        %v2151 = vsub.f32 %v1120, %v1895
        %v2152 = vsub.f32 %v1121, %v1896
        %v2153 = vsub.f32 %v1122, %v1897
        %v2154 = vsub.f32 %v1123, %v1898
        %v2155 = vsub.f32 %v1124, %v1899
        %v2156 = vsub.f32 %v1125, %v1900
        %v2157 = vsub.f32 %v1126, %v1901
        %v2158 = vsub.f32 %v1127, %v1902
        %v2159 = vsub.f32 %v1128, %v1903
        %v2160 = vsub.f32 %v1129, %v1904
        %v2161 = vsub.f32 %v1130, %v1905
        %v2162 = vsub.f32 %v1131, %v1906
        %v2163 = vsub.f32 %v1132, %v1907
        %v2164 = vsub.f32 %v1133, %v1908
        %v2165 = vsub.f32 %v1134, %v1909
        %v2166 = vsub.f32 %v1135, %v1910
        %v2167 = vsub.f32 %v1136, %v1911
        %v2168 = vsub.f32 %v1137, %v1912
        %v2169 = vsub.f32 %v1138, %v1913
        %v2170 = vsub.f32 %v1139, %v1914
        %v2171 = vsub.f32 %v1140, %v1915
        %v2172 = vsub.f32 %v1141, %v1916
        %v2173 = vsub.f32 %v1142, %v1917
        %v2174 = vsub.f32 %v1143, %v1918
        %v2175 = vsub.f32 %v1144, %v1919
        %v2176 = vsub.f32 %v1145, %v1920
        %v2177 = vsub.f32 %v1146, %v1921
        %v2178 = vsub.f32 %v1147, %v1922
        %v2179 = vsub.f32 %v1148, %v1923
        %v2180 = vsub.f32 %v1149, %v1924
        %v2181 = vsub.f32 %v1150, %v1925
        %v2182 = vmul.f32 %v1926, %v1926
        %v2183 = vmul.f32 %v1927, %v1927
        %v2184 = vmul.f32 %v1928, %v1928
        %v2185 = vmul.f32 %v1929, %v1929
        %v2186 = vmul.f32 %v1930, %v1930
        %v2187 = vmul.f32 %v1931, %v1931
        %v2188 = vmul.f32 %v1932, %v1932
        %v2189 = vmul.f32 %v1933, %v1933
        %v2190 = vmul.f32 %v1934, %v1934
        %v2191 = vmul.f32 %v1935, %v1935
        %v2192 = vmul.f32 %v1936, %v1936
        %v2193 = vmul.f32 %v1937, %v1937
        %v2194 = vmul.f32 %v1938, %v1938
        %v2195 = vmul.f32 %v1939, %v1939
        %v2196 = vmul.f32 %v1940, %v1940
        %v2197 = vmul.f32 %v1941, %v1941
        %v2198 = vmul.f32 %v1942, %v1942
        %v2199 = vmul.f32 %v1943, %v1943
        %v2200 = vmul.f32 %v1944, %v1944
        %v2201 = vmul.f32 %v1945, %v1945
        %v2202 = vmul.f32 %v1946, %v1946
        %v2203 = vmul.f32 %v1947, %v1947
        %v2204 = vmul.f32 %v1948, %v1948
        %v2205 = vmul.f32 %v1949, %v1949
        %v2206 = vmul.f32 %v1950, %v1950
        %v2207 = vmul.f32 %v1951, %v1951
        %v2208 = vmul.f32 %v1952, %v1952
        %v2209 = vmul.f32 %v1953, %v1953
        %v2210 = vmul.f32 %v1954, %v1954
        %v2211 = vmul.f32 %v1955, %v1955
        %v2212 = vmul.f32 %v1956, %v1956
        %v2213 = vmul.f32 %v1957, %v1957
        %v2214 = vmul.f32 %v1958, %v1958
        %v2215 = vmul.f32 %v1959, %v1959
        %v2216 = vmul.f32 %v1960, %v1960
        %v2217 = vmul.f32 %v1961, %v1961
        %v2218 = vmul.f32 %v1962, %v1962
        %v2219 = vmul.f32 %v1963, %v1963
        %v2220 = vmul.f32 %v1964, %v1964
        %v2221 = vmul.f32 %v1965, %v1965
        %v2222 = vmul.f32 %v1966, %v1966
        %v2223 = vmul.f32 %v1967, %v1967
        %v2224 = vmul.f32 %v1968, %v1968
        %v2225 = vmul.f32 %v1969, %v1969
        %v2226 = vmul.f32 %v1970, %v1970
        %v2227 = vmul.f32 %v1971, %v1971
        %v2228 = vmul.f32 %v1972, %v1972
        %v2229 = vmul.f32 %v1973, %v1973
        %v2230 = vmul.f32 %v1974, %v1974
        %v2231 = vmul.f32 %v1975, %v1975
        %v2232 = vmul.f32 %v1976, %v1976
        %v2233 = vmul.f32 %v1977, %v1977
        %v2234 = vmul.f32 %v1978, %v1978
        %v2235 = vmul.f32 %v1979, %v1979
        %v2236 = vmul.f32 %v1980, %v1980
        %v2237 = vmul.f32 %v1981, %v1981
        %v2238 = vmul.f32 %v1982, %v1982
        %v2239 = vmul.f32 %v1983, %v1983
        %v2240 = vmul.f32 %v1984, %v1984
        %v2241 = vmul.f32 %v1985, %v1985
        %v2242 = vmul.f32 %v1986, %v1986
        %v2243 = vmul.f32 %v1987, %v1987
        %v2244 = vmul.f32 %v1988, %v1988
        %v2245 = vmul.f32 %v1989, %v1989
        %v2246 = vmul.f32 %v1990, %v1990
        %v2247 = vmul.f32 %v1991, %v1991
        %v2248 = vmul.f32 %v1992, %v1992
        %v2249 = vmul.f32 %v1993, %v1993
        %v2250 = vmul.f32 %v1994, %v1994
        %v2251 = vmul.f32 %v1995, %v1995
        %v2252 = vmul.f32 %v1996, %v1996
        %v2253 = vmul.f32 %v1997, %v1997
        %v2254 = vmul.f32 %v1998, %v1998
        %v2255 = vmul.f32 %v1999, %v1999
        %v2256 = vmul.f32 %v2000, %v2000
        %v2257 = vmul.f32 %v2001, %v2001
        %v2258 = vmul.f32 %v2002, %v2002
        %v2259 = vmul.f32 %v2003, %v2003
        %v2260 = vmul.f32 %v2004, %v2004
        %v2261 = vmul.f32 %v2005, %v2005
        %v2262 = vmul.f32 %v2006, %v2006
        %v2263 = vmul.f32 %v2007, %v2007
        %v2264 = vmul.f32 %v2008, %v2008
        %v2265 = vmul.f32 %v2009, %v2009
        %v2266 = vmul.f32 %v2010, %v2010
        %v2267 = vmul.f32 %v2011, %v2011
        %v2268 = vmul.f32 %v2012, %v2012
        %v2269 = vmul.f32 %v2013, %v2013
        %v2270 = vmul.f32 %v2014, %v2014
        %v2271 = vmul.f32 %v2015, %v2015
        %v2272 = vmul.f32 %v2016, %v2016
        %v2273 = vmul.f32 %v2017, %v2017
        %v2274 = vmul.f32 %v2018, %v2018
        %v2275 = vmul.f32 %v2019, %v2019
        %v2276 = vmul.f32 %v2020, %v2020
        %v2277 = vmul.f32 %v2021, %v2021
        %v2278 = vmul.f32 %v2022, %v2022
        %v2279 = vmul.f32 %v2023, %v2023
        %v2280 = vmul.f32 %v2024, %v2024
        %v2281 = vmul.f32 %v2025, %v2025
        %v2282 = vmul.f32 %v2026, %v2026
        %v2283 = vmul.f32 %v2027, %v2027
        %v2284 = vmul.f32 %v2028, %v2028
        %v2285 = vmul.f32 %v2029, %v2029
        %v2286 = vmul.f32 %v2030, %v2030
        %v2287 = vmul.f32 %v2031, %v2031
        %v2288 = vmul.f32 %v2032, %v2032
        %v2289 = vmul.f32 %v2033, %v2033
        %v2290 = vmul.f32 %v2034, %v2034
        %v2291 = vmul.f32 %v2035, %v2035
        %v2292 = vmul.f32 %v2036, %v2036
        %v2293 = vmul.f32 %v2037, %v2037
        %v2294 = vmul.f32 %v2038, %v2038
        %v2295 = vmul.f32 %v2039, %v2039
        %v2296 = vmul.f32 %v2040, %v2040
        %v2297 = vmul.f32 %v2041, %v2041
        %v2298 = vmul.f32 %v2042, %v2042
        %v2299 = vmul.f32 %v2043, %v2043
        %v2300 = vmul.f32 %v2044, %v2044
        %v2301 = vmul.f32 %v2045, %v2045
        %v2302 = vmul.f32 %v2046, %v2046
        %v2303 = vmul.f32 %v2047, %v2047
        %v2304 = vmul.f32 %v2048, %v2048
        %v2305 = vmul.f32 %v2049, %v2049
        %v2306 = vmul.f32 %v2050, %v2050
        %v2307 = vmul.f32 %v2051, %v2051
        %v2308 = vmul.f32 %v2052, %v2052
        %v2309 = vmul.f32 %v2053, %v2053
        %v2310 = vmul.f32 %v2054, %v2054
        %v2311 = vmul.f32 %v2055, %v2055
        %v2312 = vmul.f32 %v2056, %v2056
        %v2313 = vmul.f32 %v2057, %v2057
        %v2314 = vmul.f32 %v2058, %v2058
        %v2315 = vmul.f32 %v2059, %v2059
        %v2316 = vmul.f32 %v2060, %v2060
        %v2317 = vmul.f32 %v2061, %v2061
        %v2318 = vmul.f32 %v2062, %v2062
        %v2319 = vmul.f32 %v2063, %v2063
        %v2320 = vmul.f32 %v2064, %v2064
        %v2321 = vmul.f32 %v2065, %v2065
        %v2322 = vmul.f32 %v2066, %v2066
        %v2323 = vmul.f32 %v2067, %v2067
        %v2324 = vmul.f32 %v2068, %v2068
        %v2325 = vmul.f32 %v2069, %v2069
        %v2326 = vmul.f32 %v2070, %v2070
        %v2327 = vmul.f32 %v2071, %v2071
        %v2328 = vmul.f32 %v2072, %v2072
        %v2329 = vmul.f32 %v2073, %v2073
        %v2330 = vmul.f32 %v2074, %v2074
        %v2331 = vmul.f32 %v2075, %v2075
        %v2332 = vmul.f32 %v2076, %v2076
        %v2333 = vmul.f32 %v2077, %v2077
        %v2334 = vmul.f32 %v2078, %v2078
        %v2335 = vmul.f32 %v2079, %v2079
        %v2336 = vmul.f32 %v2080, %v2080
        %v2337 = vmul.f32 %v2081, %v2081
        %v2338 = vmul.f32 %v2082, %v2082
        %v2339 = vmul.f32 %v2083, %v2083
        %v2340 = vmul.f32 %v2084, %v2084
        %v2341 = vmul.f32 %v2085, %v2085
        %v2342 = vmul.f32 %v2086, %v2086
        %v2343 = vmul.f32 %v2087, %v2087
        %v2344 = vmul.f32 %v2088, %v2088
        %v2345 = vmul.f32 %v2089, %v2089
        %v2346 = vmul.f32 %v2090, %v2090
        %v2347 = vmul.f32 %v2091, %v2091
        %v2348 = vmul.f32 %v2092, %v2092
        %v2349 = vmul.f32 %v2093, %v2093
        %v2350 = vmul.f32 %v2094, %v2094
        %v2351 = vmul.f32 %v2095, %v2095
        %v2352 = vmul.f32 %v2096, %v2096
        %v2353 = vmul.f32 %v2097, %v2097
        %v2354 = vmul.f32 %v2098, %v2098
        %v2355 = vmul.f32 %v2099, %v2099
        %v2356 = vmul.f32 %v2100, %v2100
        %v2357 = vmul.f32 %v2101, %v2101
        %v2358 = vmul.f32 %v2102, %v2102
        %v2359 = vmul.f32 %v2103, %v2103
        %v2360 = vmul.f32 %v2104, %v2104
        %v2361 = vmul.f32 %v2105, %v2105
        %v2362 = vmul.f32 %v2106, %v2106
        %v2363 = vmul.f32 %v2107, %v2107
        %v2364 = vmul.f32 %v2108, %v2108
        %v2365 = vmul.f32 %v2109, %v2109
        %v2366 = vmul.f32 %v2110, %v2110
        %v2367 = vmul.f32 %v2111, %v2111
        %v2368 = vmul.f32 %v2112, %v2112
        %v2369 = vmul.f32 %v2113, %v2113
        %v2370 = vmul.f32 %v2114, %v2114
        %v2371 = vmul.f32 %v2115, %v2115
        %v2372 = vmul.f32 %v2116, %v2116
        %v2373 = vmul.f32 %v2117, %v2117
        %v2374 = vmul.f32 %v2118, %v2118
        %v2375 = vmul.f32 %v2119, %v2119
        %v2376 = vmul.f32 %v2120, %v2120
        %v2377 = vmul.f32 %v2121, %v2121
        %v2378 = vmul.f32 %v2122, %v2122
        %v2379 = vmul.f32 %v2123, %v2123
        %v2380 = vmul.f32 %v2124, %v2124
        %v2381 = vmul.f32 %v2125, %v2125
        %v2382 = vmul.f32 %v2126, %v2126
        %v2383 = vmul.f32 %v2127, %v2127
        %v2384 = vmul.f32 %v2128, %v2128
        %v2385 = vmul.f32 %v2129, %v2129
        %v2386 = vmul.f32 %v2130, %v2130
        %v2387 = vmul.f32 %v2131, %v2131
        %v2388 = vmul.f32 %v2132, %v2132
        %v2389 = vmul.f32 %v2133, %v2133
        %v2390 = vmul.f32 %v2134, %v2134
        %v2391 = vmul.f32 %v2135, %v2135
        %v2392 = vmul.f32 %v2136, %v2136
        %v2393 = vmul.f32 %v2137, %v2137
        %v2394 = vmul.f32 %v2138, %v2138
        %v2395 = vmul.f32 %v2139, %v2139
        %v2396 = vmul.f32 %v2140, %v2140
        %v2397 = vmul.f32 %v2141, %v2141
        %v2398 = vmul.f32 %v2142, %v2142
        %v2399 = vmul.f32 %v2143, %v2143
        %v2400 = vmul.f32 %v2144, %v2144
        %v2401 = vmul.f32 %v2145, %v2145
        %v2402 = vmul.f32 %v2146, %v2146
        %v2403 = vmul.f32 %v2147, %v2147
        %v2404 = vmul.f32 %v2148, %v2148
        %v2405 = vmul.f32 %v2149, %v2149
        %v2406 = vmul.f32 %v2150, %v2150
        %v2407 = vmul.f32 %v2151, %v2151
        %v2408 = vmul.f32 %v2152, %v2152
        %v2409 = vmul.f32 %v2153, %v2153
        %v2410 = vmul.f32 %v2154, %v2154
        %v2411 = vmul.f32 %v2155, %v2155
        %v2412 = vmul.f32 %v2156, %v2156
        %v2413 = vmul.f32 %v2157, %v2157
        %v2414 = vmul.f32 %v2158, %v2158
        %v2415 = vmul.f32 %v2159, %v2159
        %v2416 = vmul.f32 %v2160, %v2160
        %v2417 = vmul.f32 %v2161, %v2161
        %v2418 = vmul.f32 %v2162, %v2162
        %v2419 = vmul.f32 %v2163, %v2163
        %v2420 = vmul.f32 %v2164, %v2164
        %v2421 = vmul.f32 %v2165, %v2165
        %v2422 = vmul.f32 %v2166, %v2166
        %v2423 = vmul.f32 %v2167, %v2167
        %v2424 = vmul.f32 %v2168, %v2168
        %v2425 = vmul.f32 %v2169, %v2169
        %v2426 = vmul.f32 %v2170, %v2170
        %v2427 = vmul.f32 %v2171, %v2171
        %v2428 = vmul.f32 %v2172, %v2172
        %v2429 = vmul.f32 %v2173, %v2173
        %v2430 = vmul.f32 %v2174, %v2174
        %v2431 = vmul.f32 %v2175, %v2175
        %v2432 = vmul.f32 %v2176, %v2176
        %v2433 = vmul.f32 %v2177, %v2177
        %v2434 = vmul.f32 %v2178, %v2178
        %v2435 = vmul.f32 %v2179, %v2179
        %v2436 = vmul.f32 %v2180, %v2180
        %v2437 = vmul.f32 %v2181, %v2181
        %2438 = vadd.xlane.f32.xlu0 %v2182
        %v2439 = vpop.xlane.xlu0 %2438
        %2440 = vadd.xlane.f32.xlu0 %v2183
        %v2441 = vpop.xlane.xlu0 %2440
        %2442 = vadd.xlane.f32.xlu0 %v2184
        %v2443 = vpop.xlane.xlu0 %2442
        %2444 = vadd.xlane.f32.xlu0 %v2185
        %v2445 = vpop.xlane.xlu0 %2444
        %2446 = vadd.xlane.f32.xlu0 %v2186
        %v2447 = vpop.xlane.xlu0 %2446
        %2448 = vadd.xlane.f32.xlu0 %v2187
        %v2449 = vpop.xlane.xlu0 %2448
        %2450 = vadd.xlane.f32.xlu0 %v2188
        %v2451 = vpop.xlane.xlu0 %2450
        %2452 = vadd.xlane.f32.xlu0 %v2189
        %v2453 = vpop.xlane.xlu0 %2452
        %2454 = vadd.xlane.f32.xlu0 %v2190
        %v2455 = vpop.xlane.xlu0 %2454
        %2456 = vadd.xlane.f32.xlu0 %v2191
        %v2457 = vpop.xlane.xlu0 %2456
        %2458 = vadd.xlane.f32.xlu0 %v2192
        %v2459 = vpop.xlane.xlu0 %2458
        %2460 = vadd.xlane.f32.xlu0 %v2193
        %v2461 = vpop.xlane.xlu0 %2460
        %2462 = vadd.xlane.f32.xlu0 %v2194
        %v2463 = vpop.xlane.xlu0 %2462
        %2464 = vadd.xlane.f32.xlu0 %v2195
        %v2465 = vpop.xlane.xlu0 %2464
        %2466 = vadd.xlane.f32.xlu0 %v2196
        %v2467 = vpop.xlane.xlu0 %2466
        %2468 = vadd.xlane.f32.xlu0 %v2197
        %v2469 = vpop.xlane.xlu0 %2468
        %2470 = vadd.xlane.f32.xlu0 %v2198
        %v2471 = vpop.xlane.xlu0 %2470
        %2472 = vadd.xlane.f32.xlu0 %v2199
        %v2473 = vpop.xlane.xlu0 %2472
        %2474 = vadd.xlane.f32.xlu0 %v2200
        %v2475 = vpop.xlane.xlu0 %2474
        %2476 = vadd.xlane.f32.xlu0 %v2201
        %v2477 = vpop.xlane.xlu0 %2476
        %2478 = vadd.xlane.f32.xlu0 %v2202
        %v2479 = vpop.xlane.xlu0 %2478
        %2480 = vadd.xlane.f32.xlu0 %v2203
        %v2481 = vpop.xlane.xlu0 %2480
        %2482 = vadd.xlane.f32.xlu0 %v2204
        %v2483 = vpop.xlane.xlu0 %2482
        %2484 = vadd.xlane.f32.xlu0 %v2205
        %v2485 = vpop.xlane.xlu0 %2484
        %2486 = vadd.xlane.f32.xlu0 %v2206
        %v2487 = vpop.xlane.xlu0 %2486
        %2488 = vadd.xlane.f32.xlu0 %v2207
        %v2489 = vpop.xlane.xlu0 %2488
        %2490 = vadd.xlane.f32.xlu0 %v2208
        %v2491 = vpop.xlane.xlu0 %2490
        %2492 = vadd.xlane.f32.xlu0 %v2209
        %v2493 = vpop.xlane.xlu0 %2492
        %2494 = vadd.xlane.f32.xlu0 %v2210
        %v2495 = vpop.xlane.xlu0 %2494
        %2496 = vadd.xlane.f32.xlu0 %v2211
        %v2497 = vpop.xlane.xlu0 %2496
        %2498 = vadd.xlane.f32.xlu0 %v2212
        %v2499 = vpop.xlane.xlu0 %2498
        %2500 = vadd.xlane.f32.xlu0 %v2213
        %v2501 = vpop.xlane.xlu0 %2500
        %2502 = vadd.xlane.f32.xlu0 %v2214
        %v2503 = vpop.xlane.xlu0 %2502
        %2504 = vadd.xlane.f32.xlu0 %v2215
        %v2505 = vpop.xlane.xlu0 %2504
        %2506 = vadd.xlane.f32.xlu0 %v2216
        %v2507 = vpop.xlane.xlu0 %2506
        %2508 = vadd.xlane.f32.xlu0 %v2217
        %v2509 = vpop.xlane.xlu0 %2508
        %2510 = vadd.xlane.f32.xlu0 %v2218
        %v2511 = vpop.xlane.xlu0 %2510
        %2512 = vadd.xlane.f32.xlu0 %v2219
        %v2513 = vpop.xlane.xlu0 %2512
        %2514 = vadd.xlane.f32.xlu0 %v2220
        %v2515 = vpop.xlane.xlu0 %2514
        %2516 = vadd.xlane.f32.xlu0 %v2221
        %v2517 = vpop.xlane.xlu0 %2516
        %2518 = vadd.xlane.f32.xlu0 %v2222
        %v2519 = vpop.xlane.xlu0 %2518
        %2520 = vadd.xlane.f32.xlu0 %v2223
        %v2521 = vpop.xlane.xlu0 %2520
        %2522 = vadd.xlane.f32.xlu0 %v2224
        %v2523 = vpop.xlane.xlu0 %2522
        %2524 = vadd.xlane.f32.xlu0 %v2225
        %v2525 = vpop.xlane.xlu0 %2524
        %2526 = vadd.xlane.f32.xlu0 %v2226
        %v2527 = vpop.xlane.xlu0 %2526
        %2528 = vadd.xlane.f32.xlu0 %v2227
        %v2529 = vpop.xlane.xlu0 %2528
        %2530 = vadd.xlane.f32.xlu0 %v2228
        %v2531 = vpop.xlane.xlu0 %2530
        %2532 = vadd.xlane.f32.xlu0 %v2229
        %v2533 = vpop.xlane.xlu0 %2532
        %2534 = vadd.xlane.f32.xlu0 %v2230
        %v2535 = vpop.xlane.xlu0 %2534
        %2536 = vadd.xlane.f32.xlu0 %v2231
        %v2537 = vpop.xlane.xlu0 %2536
        %2538 = vadd.xlane.f32.xlu0 %v2232
        %v2539 = vpop.xlane.xlu0 %2538
        %2540 = vadd.xlane.f32.xlu0 %v2233
        %v2541 = vpop.xlane.xlu0 %2540
        %2542 = vadd.xlane.f32.xlu0 %v2234
        %v2543 = vpop.xlane.xlu0 %2542
        %2544 = vadd.xlane.f32.xlu0 %v2235
        %v2545 = vpop.xlane.xlu0 %2544
        %2546 = vadd.xlane.f32.xlu0 %v2236
        %v2547 = vpop.xlane.xlu0 %2546
        %2548 = vadd.xlane.f32.xlu0 %v2237
        %v2549 = vpop.xlane.xlu0 %2548
        %2550 = vadd.xlane.f32.xlu0 %v2238
        %v2551 = vpop.xlane.xlu0 %2550
        %2552 = vadd.xlane.f32.xlu0 %v2239
        %v2553 = vpop.xlane.xlu0 %2552
        %2554 = vadd.xlane.f32.xlu0 %v2240
        %v2555 = vpop.xlane.xlu0 %2554
        %2556 = vadd.xlane.f32.xlu0 %v2241
        %v2557 = vpop.xlane.xlu0 %2556
        %2558 = vadd.xlane.f32.xlu0 %v2242
        %v2559 = vpop.xlane.xlu0 %2558
        %2560 = vadd.xlane.f32.xlu0 %v2243
        %v2561 = vpop.xlane.xlu0 %2560
        %2562 = vadd.xlane.f32.xlu0 %v2244
        %v2563 = vpop.xlane.xlu0 %2562
        %2564 = vadd.xlane.f32.xlu0 %v2245
        %v2565 = vpop.xlane.xlu0 %2564
        %2566 = vadd.xlane.f32.xlu0 %v2246
        %v2567 = vpop.xlane.xlu0 %2566
        %2568 = vadd.xlane.f32.xlu0 %v2247
        %v2569 = vpop.xlane.xlu0 %2568
        %2570 = vadd.xlane.f32.xlu0 %v2248
        %v2571 = vpop.xlane.xlu0 %2570
        %2572 = vadd.xlane.f32.xlu0 %v2249
        %v2573 = vpop.xlane.xlu0 %2572
        %2574 = vadd.xlane.f32.xlu0 %v2250
        %v2575 = vpop.xlane.xlu0 %2574
        %2576 = vadd.xlane.f32.xlu0 %v2251
        %v2577 = vpop.xlane.xlu0 %2576
        %2578 = vadd.xlane.f32.xlu0 %v2252
        %v2579 = vpop.xlane.xlu0 %2578
        %2580 = vadd.xlane.f32.xlu0 %v2253
        %v2581 = vpop.xlane.xlu0 %2580
        %2582 = vadd.xlane.f32.xlu0 %v2254
        %v2583 = vpop.xlane.xlu0 %2582
        %2584 = vadd.xlane.f32.xlu0 %v2255
        %v2585 = vpop.xlane.xlu0 %2584
        %2586 = vadd.xlane.f32.xlu0 %v2256
        %v2587 = vpop.xlane.xlu0 %2586
        %2588 = vadd.xlane.f32.xlu0 %v2257
        %v2589 = vpop.xlane.xlu0 %2588
        %2590 = vadd.xlane.f32.xlu0 %v2258
        %v2591 = vpop.xlane.xlu0 %2590
        %2592 = vadd.xlane.f32.xlu0 %v2259
        %v2593 = vpop.xlane.xlu0 %2592
        %2594 = vadd.xlane.f32.xlu0 %v2260
        %v2595 = vpop.xlane.xlu0 %2594
        %2596 = vadd.xlane.f32.xlu0 %v2261
        %v2597 = vpop.xlane.xlu0 %2596
        %2598 = vadd.xlane.f32.xlu0 %v2262
        %v2599 = vpop.xlane.xlu0 %2598
        %2600 = vadd.xlane.f32.xlu0 %v2263
        %v2601 = vpop.xlane.xlu0 %2600
        %2602 = vadd.xlane.f32.xlu0 %v2264
        %v2603 = vpop.xlane.xlu0 %2602
        %2604 = vadd.xlane.f32.xlu0 %v2265
        %v2605 = vpop.xlane.xlu0 %2604
        %2606 = vadd.xlane.f32.xlu0 %v2266
        %v2607 = vpop.xlane.xlu0 %2606
        %2608 = vadd.xlane.f32.xlu0 %v2267
        %v2609 = vpop.xlane.xlu0 %2608
        %2610 = vadd.xlane.f32.xlu0 %v2268
        %v2611 = vpop.xlane.xlu0 %2610
        %2612 = vadd.xlane.f32.xlu0 %v2269
        %v2613 = vpop.xlane.xlu0 %2612
        %2614 = vadd.xlane.f32.xlu0 %v2270
        %v2615 = vpop.xlane.xlu0 %2614
        %2616 = vadd.xlane.f32.xlu0 %v2271
        %v2617 = vpop.xlane.xlu0 %2616
        %2618 = vadd.xlane.f32.xlu0 %v2272
        %v2619 = vpop.xlane.xlu0 %2618
        %2620 = vadd.xlane.f32.xlu0 %v2273
        %v2621 = vpop.xlane.xlu0 %2620
        %2622 = vadd.xlane.f32.xlu0 %v2274
        %v2623 = vpop.xlane.xlu0 %2622
        %2624 = vadd.xlane.f32.xlu0 %v2275
        %v2625 = vpop.xlane.xlu0 %2624
        %2626 = vadd.xlane.f32.xlu0 %v2276
        %v2627 = vpop.xlane.xlu0 %2626
        %2628 = vadd.xlane.f32.xlu0 %v2277
        %v2629 = vpop.xlane.xlu0 %2628
        %2630 = vadd.xlane.f32.xlu0 %v2278
        %v2631 = vpop.xlane.xlu0 %2630
        %2632 = vadd.xlane.f32.xlu0 %v2279
        %v2633 = vpop.xlane.xlu0 %2632
        %2634 = vadd.xlane.f32.xlu0 %v2280
        %v2635 = vpop.xlane.xlu0 %2634
        %2636 = vadd.xlane.f32.xlu0 %v2281
        %v2637 = vpop.xlane.xlu0 %2636
        %2638 = vadd.xlane.f32.xlu0 %v2282
        %v2639 = vpop.xlane.xlu0 %2638
        %2640 = vadd.xlane.f32.xlu0 %v2283
        %v2641 = vpop.xlane.xlu0 %2640
        %2642 = vadd.xlane.f32.xlu0 %v2284
        %v2643 = vpop.xlane.xlu0 %2642
        %2644 = vadd.xlane.f32.xlu0 %v2285
        %v2645 = vpop.xlane.xlu0 %2644
        %2646 = vadd.xlane.f32.xlu0 %v2286
        %v2647 = vpop.xlane.xlu0 %2646
        %2648 = vadd.xlane.f32.xlu0 %v2287
        %v2649 = vpop.xlane.xlu0 %2648
        %2650 = vadd.xlane.f32.xlu0 %v2288
        %v2651 = vpop.xlane.xlu0 %2650
        %2652 = vadd.xlane.f32.xlu0 %v2289
        %v2653 = vpop.xlane.xlu0 %2652
        %2654 = vadd.xlane.f32.xlu0 %v2290
        %v2655 = vpop.xlane.xlu0 %2654
        %2656 = vadd.xlane.f32.xlu0 %v2291
        %v2657 = vpop.xlane.xlu0 %2656
        %2658 = vadd.xlane.f32.xlu0 %v2292
        %v2659 = vpop.xlane.xlu0 %2658
        %2660 = vadd.xlane.f32.xlu0 %v2293
        %v2661 = vpop.xlane.xlu0 %2660
        %2662 = vadd.xlane.f32.xlu0 %v2294
        %v2663 = vpop.xlane.xlu0 %2662
        %2664 = vadd.xlane.f32.xlu0 %v2295
        %v2665 = vpop.xlane.xlu0 %2664
        %2666 = vadd.xlane.f32.xlu0 %v2296
        %v2667 = vpop.xlane.xlu0 %2666
        %2668 = vadd.xlane.f32.xlu0 %v2297
        %v2669 = vpop.xlane.xlu0 %2668
        %2670 = vadd.xlane.f32.xlu0 %v2298
        %v2671 = vpop.xlane.xlu0 %2670
        %2672 = vadd.xlane.f32.xlu0 %v2299
        %v2673 = vpop.xlane.xlu0 %2672
        %2674 = vadd.xlane.f32.xlu0 %v2300
        %v2675 = vpop.xlane.xlu0 %2674
        %2676 = vadd.xlane.f32.xlu0 %v2301
        %v2677 = vpop.xlane.xlu0 %2676
        %2678 = vadd.xlane.f32.xlu0 %v2302
        %v2679 = vpop.xlane.xlu0 %2678
        %2680 = vadd.xlane.f32.xlu0 %v2303
        %v2681 = vpop.xlane.xlu0 %2680
        %2682 = vadd.xlane.f32.xlu0 %v2304
        %v2683 = vpop.xlane.xlu0 %2682
        %2684 = vadd.xlane.f32.xlu0 %v2305
        %v2685 = vpop.xlane.xlu0 %2684
        %2686 = vadd.xlane.f32.xlu0 %v2306
        %v2687 = vpop.xlane.xlu0 %2686
        %2688 = vadd.xlane.f32.xlu0 %v2307
        %v2689 = vpop.xlane.xlu0 %2688
        %2690 = vadd.xlane.f32.xlu0 %v2308
        %v2691 = vpop.xlane.xlu0 %2690
        %2692 = vadd.xlane.f32.xlu0 %v2309
        %v2693 = vpop.xlane.xlu0 %2692
        %2694 = vadd.xlane.f32.xlu0 %v2310
        %v2695 = vpop.xlane.xlu0 %2694
        %2696 = vadd.xlane.f32.xlu0 %v2311
        %v2697 = vpop.xlane.xlu0 %2696
        %2698 = vadd.xlane.f32.xlu0 %v2312
        %v2699 = vpop.xlane.xlu0 %2698
        %2700 = vadd.xlane.f32.xlu0 %v2313
        %v2701 = vpop.xlane.xlu0 %2700
        %2702 = vadd.xlane.f32.xlu0 %v2314
        %v2703 = vpop.xlane.xlu0 %2702
        %2704 = vadd.xlane.f32.xlu0 %v2315
        %v2705 = vpop.xlane.xlu0 %2704
        %2706 = vadd.xlane.f32.xlu0 %v2316
        %v2707 = vpop.xlane.xlu0 %2706
        %2708 = vadd.xlane.f32.xlu0 %v2317
        %v2709 = vpop.xlane.xlu0 %2708
        %2710 = vadd.xlane.f32.xlu0 %v2318
        %v2711 = vpop.xlane.xlu0 %2710
        %2712 = vadd.xlane.f32.xlu0 %v2319
        %v2713 = vpop.xlane.xlu0 %2712
        %2714 = vadd.xlane.f32.xlu0 %v2320
        %v2715 = vpop.xlane.xlu0 %2714
        %2716 = vadd.xlane.f32.xlu0 %v2321
        %v2717 = vpop.xlane.xlu0 %2716
        %2718 = vadd.xlane.f32.xlu0 %v2322
        %v2719 = vpop.xlane.xlu0 %2718
        %2720 = vadd.xlane.f32.xlu0 %v2323
        %v2721 = vpop.xlane.xlu0 %2720
        %2722 = vadd.xlane.f32.xlu0 %v2324
        %v2723 = vpop.xlane.xlu0 %2722
        %2724 = vadd.xlane.f32.xlu0 %v2325
        %v2725 = vpop.xlane.xlu0 %2724
        %2726 = vadd.xlane.f32.xlu0 %v2326
        %v2727 = vpop.xlane.xlu0 %2726
        %2728 = vadd.xlane.f32.xlu0 %v2327
        %v2729 = vpop.xlane.xlu0 %2728
        %2730 = vadd.xlane.f32.xlu0 %v2328
        %v2731 = vpop.xlane.xlu0 %2730
        %2732 = vadd.xlane.f32.xlu0 %v2329
        %v2733 = vpop.xlane.xlu0 %2732
        %2734 = vadd.xlane.f32.xlu0 %v2330
        %v2735 = vpop.xlane.xlu0 %2734
        %2736 = vadd.xlane.f32.xlu0 %v2331
        %v2737 = vpop.xlane.xlu0 %2736
        %2738 = vadd.xlane.f32.xlu0 %v2332
        %v2739 = vpop.xlane.xlu0 %2738
        %2740 = vadd.xlane.f32.xlu0 %v2333
        %v2741 = vpop.xlane.xlu0 %2740
        %2742 = vadd.xlane.f32.xlu0 %v2334
        %v2743 = vpop.xlane.xlu0 %2742
        %2744 = vadd.xlane.f32.xlu0 %v2335
        %v2745 = vpop.xlane.xlu0 %2744
        %2746 = vadd.xlane.f32.xlu0 %v2336
        %v2747 = vpop.xlane.xlu0 %2746
        %2748 = vadd.xlane.f32.xlu0 %v2337
        %v2749 = vpop.xlane.xlu0 %2748
        %2750 = vadd.xlane.f32.xlu0 %v2338
        %v2751 = vpop.xlane.xlu0 %2750
        %2752 = vadd.xlane.f32.xlu0 %v2339
        %v2753 = vpop.xlane.xlu0 %2752
        %2754 = vadd.xlane.f32.xlu0 %v2340
        %v2755 = vpop.xlane.xlu0 %2754
        %2756 = vadd.xlane.f32.xlu0 %v2341
        %v2757 = vpop.xlane.xlu0 %2756
        %2758 = vadd.xlane.f32.xlu0 %v2342
        %v2759 = vpop.xlane.xlu0 %2758
        %2760 = vadd.xlane.f32.xlu0 %v2343
        %v2761 = vpop.xlane.xlu0 %2760
        %2762 = vadd.xlane.f32.xlu0 %v2344
        %v2763 = vpop.xlane.xlu0 %2762
        %2764 = vadd.xlane.f32.xlu0 %v2345
        %v2765 = vpop.xlane.xlu0 %2764
        %2766 = vadd.xlane.f32.xlu0 %v2346
        %v2767 = vpop.xlane.xlu0 %2766
        %2768 = vadd.xlane.f32.xlu0 %v2347
        %v2769 = vpop.xlane.xlu0 %2768
        %2770 = vadd.xlane.f32.xlu0 %v2348
        %v2771 = vpop.xlane.xlu0 %2770
        %2772 = vadd.xlane.f32.xlu0 %v2349
        %v2773 = vpop.xlane.xlu0 %2772
        %2774 = vadd.xlane.f32.xlu0 %v2350
        %v2775 = vpop.xlane.xlu0 %2774
        %2776 = vadd.xlane.f32.xlu0 %v2351
        %v2777 = vpop.xlane.xlu0 %2776
        %2778 = vadd.xlane.f32.xlu0 %v2352
        %v2779 = vpop.xlane.xlu0 %2778
        %2780 = vadd.xlane.f32.xlu0 %v2353
        %v2781 = vpop.xlane.xlu0 %2780
        %2782 = vadd.xlane.f32.xlu0 %v2354
        %v2783 = vpop.xlane.xlu0 %2782
        %2784 = vadd.xlane.f32.xlu0 %v2355
        %v2785 = vpop.xlane.xlu0 %2784
        %2786 = vadd.xlane.f32.xlu0 %v2356
        %v2787 = vpop.xlane.xlu0 %2786
        %2788 = vadd.xlane.f32.xlu0 %v2357
        %v2789 = vpop.xlane.xlu0 %2788
        %2790 = vadd.xlane.f32.xlu0 %v2358
        %v2791 = vpop.xlane.xlu0 %2790
        %2792 = vadd.xlane.f32.xlu0 %v2359
        %v2793 = vpop.xlane.xlu0 %2792
        %2794 = vadd.xlane.f32.xlu0 %v2360
        %v2795 = vpop.xlane.xlu0 %2794
        %2796 = vadd.xlane.f32.xlu0 %v2361
        %v2797 = vpop.xlane.xlu0 %2796
        %2798 = vadd.xlane.f32.xlu0 %v2362
        %v2799 = vpop.xlane.xlu0 %2798
        %2800 = vadd.xlane.f32.xlu0 %v2363
        %v2801 = vpop.xlane.xlu0 %2800
        %2802 = vadd.xlane.f32.xlu0 %v2364
        %v2803 = vpop.xlane.xlu0 %2802
        %2804 = vadd.xlane.f32.xlu0 %v2365
        %v2805 = vpop.xlane.xlu0 %2804
        %2806 = vadd.xlane.f32.xlu0 %v2366
        %v2807 = vpop.xlane.xlu0 %2806
        %2808 = vadd.xlane.f32.xlu0 %v2367
        %v2809 = vpop.xlane.xlu0 %2808
        %2810 = vadd.xlane.f32.xlu0 %v2368
        %v2811 = vpop.xlane.xlu0 %2810
        %2812 = vadd.xlane.f32.xlu0 %v2369
        %v2813 = vpop.xlane.xlu0 %2812
        %2814 = vadd.xlane.f32.xlu0 %v2370
        %v2815 = vpop.xlane.xlu0 %2814
        %2816 = vadd.xlane.f32.xlu0 %v2371
        %v2817 = vpop.xlane.xlu0 %2816
        %2818 = vadd.xlane.f32.xlu0 %v2372
        %v2819 = vpop.xlane.xlu0 %2818
        %2820 = vadd.xlane.f32.xlu0 %v2373
        %v2821 = vpop.xlane.xlu0 %2820
        %2822 = vadd.xlane.f32.xlu0 %v2374
        %v2823 = vpop.xlane.xlu0 %2822
        %2824 = vadd.xlane.f32.xlu0 %v2375
        %v2825 = vpop.xlane.xlu0 %2824
        %2826 = vadd.xlane.f32.xlu0 %v2376
        %v2827 = vpop.xlane.xlu0 %2826
        %2828 = vadd.xlane.f32.xlu0 %v2377
        %v2829 = vpop.xlane.xlu0 %2828
        %2830 = vadd.xlane.f32.xlu0 %v2378
        %v2831 = vpop.xlane.xlu0 %2830
        %2832 = vadd.xlane.f32.xlu0 %v2379
        %v2833 = vpop.xlane.xlu0 %2832
        %2834 = vadd.xlane.f32.xlu0 %v2380
        %v2835 = vpop.xlane.xlu0 %2834
        %2836 = vadd.xlane.f32.xlu0 %v2381
        %v2837 = vpop.xlane.xlu0 %2836
        %2838 = vadd.xlane.f32.xlu0 %v2382
        %v2839 = vpop.xlane.xlu0 %2838
        %2840 = vadd.xlane.f32.xlu0 %v2383
        %v2841 = vpop.xlane.xlu0 %2840
        %2842 = vadd.xlane.f32.xlu0 %v2384
        %v2843 = vpop.xlane.xlu0 %2842
        %2844 = vadd.xlane.f32.xlu0 %v2385
        %v2845 = vpop.xlane.xlu0 %2844
        %2846 = vadd.xlane.f32.xlu0 %v2386
        %v2847 = vpop.xlane.xlu0 %2846
        %2848 = vadd.xlane.f32.xlu0 %v2387
        %v2849 = vpop.xlane.xlu0 %2848
        %2850 = vadd.xlane.f32.xlu0 %v2388
        %v2851 = vpop.xlane.xlu0 %2850
        %2852 = vadd.xlane.f32.xlu0 %v2389
        %v2853 = vpop.xlane.xlu0 %2852
        %2854 = vadd.xlane.f32.xlu0 %v2390
        %v2855 = vpop.xlane.xlu0 %2854
        %2856 = vadd.xlane.f32.xlu0 %v2391
        %v2857 = vpop.xlane.xlu0 %2856
        %2858 = vadd.xlane.f32.xlu0 %v2392
        %v2859 = vpop.xlane.xlu0 %2858
        %2860 = vadd.xlane.f32.xlu0 %v2393
        %v2861 = vpop.xlane.xlu0 %2860
        %2862 = vadd.xlane.f32.xlu0 %v2394
        %v2863 = vpop.xlane.xlu0 %2862
        %2864 = vadd.xlane.f32.xlu0 %v2395
        %v2865 = vpop.xlane.xlu0 %2864
        %2866 = vadd.xlane.f32.xlu0 %v2396
        %v2867 = vpop.xlane.xlu0 %2866
        %2868 = vadd.xlane.f32.xlu0 %v2397
        %v2869 = vpop.xlane.xlu0 %2868
        %2870 = vadd.xlane.f32.xlu0 %v2398
        %v2871 = vpop.xlane.xlu0 %2870
        %2872 = vadd.xlane.f32.xlu0 %v2399
        %v2873 = vpop.xlane.xlu0 %2872
        %2874 = vadd.xlane.f32.xlu0 %v2400
        %v2875 = vpop.xlane.xlu0 %2874
        %2876 = vadd.xlane.f32.xlu0 %v2401
        %v2877 = vpop.xlane.xlu0 %2876
        %2878 = vadd.xlane.f32.xlu0 %v2402
        %v2879 = vpop.xlane.xlu0 %2878
        %2880 = vadd.xlane.f32.xlu0 %v2403
        %v2881 = vpop.xlane.xlu0 %2880
        %2882 = vadd.xlane.f32.xlu0 %v2404
        %v2883 = vpop.xlane.xlu0 %2882
        %2884 = vadd.xlane.f32.xlu0 %v2405
        %v2885 = vpop.xlane.xlu0 %2884
        %2886 = vadd.xlane.f32.xlu0 %v2406
        %v2887 = vpop.xlane.xlu0 %2886
        %2888 = vadd.xlane.f32.xlu0 %v2407
        %v2889 = vpop.xlane.xlu0 %2888
        %2890 = vadd.xlane.f32.xlu0 %v2408
        %v2891 = vpop.xlane.xlu0 %2890
        %2892 = vadd.xlane.f32.xlu0 %v2409
        %v2893 = vpop.xlane.xlu0 %2892
        %2894 = vadd.xlane.f32.xlu0 %v2410
        %v2895 = vpop.xlane.xlu0 %2894
        %2896 = vadd.xlane.f32.xlu0 %v2411
        %v2897 = vpop.xlane.xlu0 %2896
        %2898 = vadd.xlane.f32.xlu0 %v2412
        %v2899 = vpop.xlane.xlu0 %2898
        %2900 = vadd.xlane.f32.xlu0 %v2413
        %v2901 = vpop.xlane.xlu0 %2900
        %2902 = vadd.xlane.f32.xlu0 %v2414
        %v2903 = vpop.xlane.xlu0 %2902
        %2904 = vadd.xlane.f32.xlu0 %v2415
        %v2905 = vpop.xlane.xlu0 %2904
        %2906 = vadd.xlane.f32.xlu0 %v2416
        %v2907 = vpop.xlane.xlu0 %2906
        %2908 = vadd.xlane.f32.xlu0 %v2417
        %v2909 = vpop.xlane.xlu0 %2908
        %2910 = vadd.xlane.f32.xlu0 %v2418
        %v2911 = vpop.xlane.xlu0 %2910
        %2912 = vadd.xlane.f32.xlu0 %v2419
        %v2913 = vpop.xlane.xlu0 %2912
        %2914 = vadd.xlane.f32.xlu0 %v2420
        %v2915 = vpop.xlane.xlu0 %2914
        %2916 = vadd.xlane.f32.xlu0 %v2421
        %v2917 = vpop.xlane.xlu0 %2916
        %2918 = vadd.xlane.f32.xlu0 %v2422
        %v2919 = vpop.xlane.xlu0 %2918
        %2920 = vadd.xlane.f32.xlu0 %v2423
        %v2921 = vpop.xlane.xlu0 %2920
        %2922 = vadd.xlane.f32.xlu0 %v2424
        %v2923 = vpop.xlane.xlu0 %2922
        %2924 = vadd.xlane.f32.xlu0 %v2425
        %v2925 = vpop.xlane.xlu0 %2924
        %2926 = vadd.xlane.f32.xlu0 %v2426
        %v2927 = vpop.xlane.xlu0 %2926
        %2928 = vadd.xlane.f32.xlu0 %v2427
        %v2929 = vpop.xlane.xlu0 %2928
        %2930 = vadd.xlane.f32.xlu0 %v2428
        %v2931 = vpop.xlane.xlu0 %2930
        %2932 = vadd.xlane.f32.xlu0 %v2429
        %v2933 = vpop.xlane.xlu0 %2932
        %2934 = vadd.xlane.f32.xlu0 %v2430
        %v2935 = vpop.xlane.xlu0 %2934
        %2936 = vadd.xlane.f32.xlu0 %v2431
        %v2937 = vpop.xlane.xlu0 %2936
        %2938 = vadd.xlane.f32.xlu0 %v2432
        %v2939 = vpop.xlane.xlu0 %2938
        %2940 = vadd.xlane.f32.xlu0 %v2433
        %v2941 = vpop.xlane.xlu0 %2940
        %2942 = vadd.xlane.f32.xlu0 %v2434
        %v2943 = vpop.xlane.xlu0 %2942
        %2944 = vadd.xlane.f32.xlu0 %v2435
        %v2945 = vpop.xlane.xlu0 %2944
        %2946 = vadd.xlane.f32.xlu0 %v2436
        %v2947 = vpop.xlane.xlu0 %2946
        %2948 = vadd.xlane.f32.xlu0 %v2437
        %v2949 = vpop.xlane.xlu0 %2948
        %v2950 = vmul.f32 %v2439, %v1669
        %v2951 = vmul.f32 %v2441, %v1669
        %v2952 = vmul.f32 %v2443, %v1669
        %v2953 = vmul.f32 %v2445, %v1669
        %v2954 = vmul.f32 %v2447, %v1669
        %v2955 = vmul.f32 %v2449, %v1669
        %v2956 = vmul.f32 %v2451, %v1669
        %v2957 = vmul.f32 %v2453, %v1669
        %v2958 = vmul.f32 %v2455, %v1669
        %v2959 = vmul.f32 %v2457, %v1669
        %v2960 = vmul.f32 %v2459, %v1669
        %v2961 = vmul.f32 %v2461, %v1669
        %v2962 = vmul.f32 %v2463, %v1669
        %v2963 = vmul.f32 %v2465, %v1669
        %v2964 = vmul.f32 %v2467, %v1669
        %v2965 = vmul.f32 %v2469, %v1669
        %v2966 = vmul.f32 %v2471, %v1669
        %v2967 = vmul.f32 %v2473, %v1669
        %v2968 = vmul.f32 %v2475, %v1669
        %v2969 = vmul.f32 %v2477, %v1669
        %v2970 = vmul.f32 %v2479, %v1669
        %v2971 = vmul.f32 %v2481, %v1669
        %v2972 = vmul.f32 %v2483, %v1669
        %v2973 = vmul.f32 %v2485, %v1669
        %v2974 = vmul.f32 %v2487, %v1669
        %v2975 = vmul.f32 %v2489, %v1669
        %v2976 = vmul.f32 %v2491, %v1669
        %v2977 = vmul.f32 %v2493, %v1669
        %v2978 = vmul.f32 %v2495, %v1669
        %v2979 = vmul.f32 %v2497, %v1669
        %v2980 = vmul.f32 %v2499, %v1669
        %v2981 = vmul.f32 %v2501, %v1669
        %v2982 = vmul.f32 %v2503, %v1669
        %v2983 = vmul.f32 %v2505, %v1669
        %v2984 = vmul.f32 %v2507, %v1669
        %v2985 = vmul.f32 %v2509, %v1669
        %v2986 = vmul.f32 %v2511, %v1669
        %v2987 = vmul.f32 %v2513, %v1669
        %v2988 = vmul.f32 %v2515, %v1669
        %v2989 = vmul.f32 %v2517, %v1669
        %v2990 = vmul.f32 %v2519, %v1669
        %v2991 = vmul.f32 %v2521, %v1669
        %v2992 = vmul.f32 %v2523, %v1669
        %v2993 = vmul.f32 %v2525, %v1669
        %v2994 = vmul.f32 %v2527, %v1669
        %v2995 = vmul.f32 %v2529, %v1669
        %v2996 = vmul.f32 %v2531, %v1669
        %v2997 = vmul.f32 %v2533, %v1669
        %v2998 = vmul.f32 %v2535, %v1669
        %v2999 = vmul.f32 %v2537, %v1669
        %v3000 = vmul.f32 %v2539, %v1669
        %v3001 = vmul.f32 %v2541, %v1669
        %v3002 = vmul.f32 %v2543, %v1669
        %v3003 = vmul.f32 %v2545, %v1669
        %v3004 = vmul.f32 %v2547, %v1669
        %v3005 = vmul.f32 %v2549, %v1669
        %v3006 = vmul.f32 %v2551, %v1669
        %v3007 = vmul.f32 %v2553, %v1669
        %v3008 = vmul.f32 %v2555, %v1669
        %v3009 = vmul.f32 %v2557, %v1669
        %v3010 = vmul.f32 %v2559, %v1669
        %v3011 = vmul.f32 %v2561, %v1669
        %v3012 = vmul.f32 %v2563, %v1669
        %v3013 = vmul.f32 %v2565, %v1669
        %v3014 = vmul.f32 %v2567, %v1669
        %v3015 = vmul.f32 %v2569, %v1669
        %v3016 = vmul.f32 %v2571, %v1669
        %v3017 = vmul.f32 %v2573, %v1669
        %v3018 = vmul.f32 %v2575, %v1669
        %v3019 = vmul.f32 %v2577, %v1669
        %v3020 = vmul.f32 %v2579, %v1669
        %v3021 = vmul.f32 %v2581, %v1669
        %v3022 = vmul.f32 %v2583, %v1669
        %v3023 = vmul.f32 %v2585, %v1669
        %v3024 = vmul.f32 %v2587, %v1669
        %v3025 = vmul.f32 %v2589, %v1669
        %v3026 = vmul.f32 %v2591, %v1669
        %v3027 = vmul.f32 %v2593, %v1669
        %v3028 = vmul.f32 %v2595, %v1669
        %v3029 = vmul.f32 %v2597, %v1669
        %v3030 = vmul.f32 %v2599, %v1669
        %v3031 = vmul.f32 %v2601, %v1669
        %v3032 = vmul.f32 %v2603, %v1669
        %v3033 = vmul.f32 %v2605, %v1669
        %v3034 = vmul.f32 %v2607, %v1669
        %v3035 = vmul.f32 %v2609, %v1669
        %v3036 = vmul.f32 %v2611, %v1669
        %v3037 = vmul.f32 %v2613, %v1669
        %v3038 = vmul.f32 %v2615, %v1669
        %v3039 = vmul.f32 %v2617, %v1669
        %v3040 = vmul.f32 %v2619, %v1669
        %v3041 = vmul.f32 %v2621, %v1669
        %v3042 = vmul.f32 %v2623, %v1669
        %v3043 = vmul.f32 %v2625, %v1669
        %v3044 = vmul.f32 %v2627, %v1669
        %v3045 = vmul.f32 %v2629, %v1669
        %v3046 = vmul.f32 %v2631, %v1669
        %v3047 = vmul.f32 %v2633, %v1669
        %v3048 = vmul.f32 %v2635, %v1669
        %v3049 = vmul.f32 %v2637, %v1669
        %v3050 = vmul.f32 %v2639, %v1669
        %v3051 = vmul.f32 %v2641, %v1669
        %v3052 = vmul.f32 %v2643, %v1669
        %v3053 = vmul.f32 %v2645, %v1669
        %v3054 = vmul.f32 %v2647, %v1669
        %v3055 = vmul.f32 %v2649, %v1669
        %v3056 = vmul.f32 %v2651, %v1669
        %v3057 = vmul.f32 %v2653, %v1669
        %v3058 = vmul.f32 %v2655, %v1669
        %v3059 = vmul.f32 %v2657, %v1669
        %v3060 = vmul.f32 %v2659, %v1669
        %v3061 = vmul.f32 %v2661, %v1669
        %v3062 = vmul.f32 %v2663, %v1669
        %v3063 = vmul.f32 %v2665, %v1669
        %v3064 = vmul.f32 %v2667, %v1669
        %v3065 = vmul.f32 %v2669, %v1669
        %v3066 = vmul.f32 %v2671, %v1669
        %v3067 = vmul.f32 %v2673, %v1669
        %v3068 = vmul.f32 %v2675, %v1669
        %v3069 = vmul.f32 %v2677, %v1669
        %v3070 = vmul.f32 %v2679, %v1669
        %v3071 = vmul.f32 %v2681, %v1669
        %v3072 = vmul.f32 %v2683, %v1669
        %v3073 = vmul.f32 %v2685, %v1669
        %v3074 = vmul.f32 %v2687, %v1669
        %v3075 = vmul.f32 %v2689, %v1669
        %v3076 = vmul.f32 %v2691, %v1669
        %v3077 = vmul.f32 %v2693, %v1669
        %v3078 = vmul.f32 %v2695, %v1669
        %v3079 = vmul.f32 %v2697, %v1669
        %v3080 = vmul.f32 %v2699, %v1669
        %v3081 = vmul.f32 %v2701, %v1669
        %v3082 = vmul.f32 %v2703, %v1669
        %v3083 = vmul.f32 %v2705, %v1669
        %v3084 = vmul.f32 %v2707, %v1669
        %v3085 = vmul.f32 %v2709, %v1669
        %v3086 = vmul.f32 %v2711, %v1669
        %v3087 = vmul.f32 %v2713, %v1669
        %v3088 = vmul.f32 %v2715, %v1669
        %v3089 = vmul.f32 %v2717, %v1669
        %v3090 = vmul.f32 %v2719, %v1669
        %v3091 = vmul.f32 %v2721, %v1669
        %v3092 = vmul.f32 %v2723, %v1669
        %v3093 = vmul.f32 %v2725, %v1669
        %v3094 = vmul.f32 %v2727, %v1669
        %v3095 = vmul.f32 %v2729, %v1669
        %v3096 = vmul.f32 %v2731, %v1669
        %v3097 = vmul.f32 %v2733, %v1669
        %v3098 = vmul.f32 %v2735, %v1669
        %v3099 = vmul.f32 %v2737, %v1669
        %v3100 = vmul.f32 %v2739, %v1669
        %v3101 = vmul.f32 %v2741, %v1669
        %v3102 = vmul.f32 %v2743, %v1669
        %v3103 = vmul.f32 %v2745, %v1669
        %v3104 = vmul.f32 %v2747, %v1669
        %v3105 = vmul.f32 %v2749, %v1669
        %v3106 = vmul.f32 %v2751, %v1669
        %v3107 = vmul.f32 %v2753, %v1669
        %v3108 = vmul.f32 %v2755, %v1669
        %v3109 = vmul.f32 %v2757, %v1669
        %v3110 = vmul.f32 %v2759, %v1669
        %v3111 = vmul.f32 %v2761, %v1669
        %v3112 = vmul.f32 %v2763, %v1669
        %v3113 = vmul.f32 %v2765, %v1669
        %v3114 = vmul.f32 %v2767, %v1669
        %v3115 = vmul.f32 %v2769, %v1669
        %v3116 = vmul.f32 %v2771, %v1669
        %v3117 = vmul.f32 %v2773, %v1669
        %v3118 = vmul.f32 %v2775, %v1669
        %v3119 = vmul.f32 %v2777, %v1669
        %v3120 = vmul.f32 %v2779, %v1669
        %v3121 = vmul.f32 %v2781, %v1669
        %v3122 = vmul.f32 %v2783, %v1669
        %v3123 = vmul.f32 %v2785, %v1669
        %v3124 = vmul.f32 %v2787, %v1669
        %v3125 = vmul.f32 %v2789, %v1669
        %v3126 = vmul.f32 %v2791, %v1669
        %v3127 = vmul.f32 %v2793, %v1669
        %v3128 = vmul.f32 %v2795, %v1669
        %v3129 = vmul.f32 %v2797, %v1669
        %v3130 = vmul.f32 %v2799, %v1669
        %v3131 = vmul.f32 %v2801, %v1669
        %v3132 = vmul.f32 %v2803, %v1669
        %v3133 = vmul.f32 %v2805, %v1669
        %v3134 = vmul.f32 %v2807, %v1669
        %v3135 = vmul.f32 %v2809, %v1669
        %v3136 = vmul.f32 %v2811, %v1669
        %v3137 = vmul.f32 %v2813, %v1669
        %v3138 = vmul.f32 %v2815, %v1669
        %v3139 = vmul.f32 %v2817, %v1669
        %v3140 = vmul.f32 %v2819, %v1669
        %v3141 = vmul.f32 %v2821, %v1669
        %v3142 = vmul.f32 %v2823, %v1669
        %v3143 = vmul.f32 %v2825, %v1669
        %v3144 = vmul.f32 %v2827, %v1669
        %v3145 = vmul.f32 %v2829, %v1669
        %v3146 = vmul.f32 %v2831, %v1669
        %v3147 = vmul.f32 %v2833, %v1669
        %v3148 = vmul.f32 %v2835, %v1669
        %v3149 = vmul.f32 %v2837, %v1669
        %v3150 = vmul.f32 %v2839, %v1669
        %v3151 = vmul.f32 %v2841, %v1669
        %v3152 = vmul.f32 %v2843, %v1669
        %v3153 = vmul.f32 %v2845, %v1669
        %v3154 = vmul.f32 %v2847, %v1669
        %v3155 = vmul.f32 %v2849, %v1669
        %v3156 = vmul.f32 %v2851, %v1669
        %v3157 = vmul.f32 %v2853, %v1669
        %v3158 = vmul.f32 %v2855, %v1669
        %v3159 = vmul.f32 %v2857, %v1669
        %v3160 = vmul.f32 %v2859, %v1669
        %v3161 = vmul.f32 %v2861, %v1669
        %v3162 = vmul.f32 %v2863, %v1669
        %v3163 = vmul.f32 %v2865, %v1669
        %v3164 = vmul.f32 %v2867, %v1669
        %v3165 = vmul.f32 %v2869, %v1669
        %v3166 = vmul.f32 %v2871, %v1669
        %v3167 = vmul.f32 %v2873, %v1669
        %v3168 = vmul.f32 %v2875, %v1669
        %v3169 = vmul.f32 %v2877, %v1669
        %v3170 = vmul.f32 %v2879, %v1669
        %v3171 = vmul.f32 %v2881, %v1669
        %v3172 = vmul.f32 %v2883, %v1669
        %v3173 = vmul.f32 %v2885, %v1669
        %v3174 = vmul.f32 %v2887, %v1669
        %v3175 = vmul.f32 %v2889, %v1669
        %v3176 = vmul.f32 %v2891, %v1669
        %v3177 = vmul.f32 %v2893, %v1669
        %v3178 = vmul.f32 %v2895, %v1669
        %v3179 = vmul.f32 %v2897, %v1669
        %v3180 = vmul.f32 %v2899, %v1669
        %v3181 = vmul.f32 %v2901, %v1669
        %v3182 = vmul.f32 %v2903, %v1669
        %v3183 = vmul.f32 %v2905, %v1669
        %v3184 = vmul.f32 %v2907, %v1669
        %v3185 = vmul.f32 %v2909, %v1669
        %v3186 = vmul.f32 %v2911, %v1669
        %v3187 = vmul.f32 %v2913, %v1669
        %v3188 = vmul.f32 %v2915, %v1669
        %v3189 = vmul.f32 %v2917, %v1669
        %v3190 = vmul.f32 %v2919, %v1669
        %v3191 = vmul.f32 %v2921, %v1669
        %v3192 = vmul.f32 %v2923, %v1669
        %v3193 = vmul.f32 %v2925, %v1669
        %v3194 = vmul.f32 %v2927, %v1669
        %v3195 = vmul.f32 %v2929, %v1669
        %v3196 = vmul.f32 %v2931, %v1669
        %v3197 = vmul.f32 %v2933, %v1669
        %v3198 = vmul.f32 %v2935, %v1669
        %v3199 = vmul.f32 %v2937, %v1669
        %v3200 = vmul.f32 %v2939, %v1669
        %v3201 = vmul.f32 %v2941, %v1669
        %v3202 = vmul.f32 %v2943, %v1669
        %v3203 = vmul.f32 %v2945, %v1669
        %v3204 = vmul.f32 %v2947, %v1669
        %v3205 = vmul.f32 %v2949, %v1669
        %v3206 = vadd.f32 %v2950, 1e-05
        %v3207 = vadd.f32 %v2951, 1e-05
        %v3208 = vadd.f32 %v2952, 1e-05
        %v3209 = vadd.f32 %v2953, 1e-05
        %v3210 = vadd.f32 %v2954, 1e-05
        %v3211 = vadd.f32 %v2955, 1e-05
        %v3212 = vadd.f32 %v2956, 1e-05
        %v3213 = vadd.f32 %v2957, 1e-05
        %v3214 = vadd.f32 %v2958, 1e-05
        %v3215 = vadd.f32 %v2959, 1e-05
        %v3216 = vadd.f32 %v2960, 1e-05
        %v3217 = vadd.f32 %v2961, 1e-05
        %v3218 = vadd.f32 %v2962, 1e-05
        %v3219 = vadd.f32 %v2963, 1e-05
        %v3220 = vadd.f32 %v2964, 1e-05
        %v3221 = vadd.f32 %v2965, 1e-05
        %v3222 = vadd.f32 %v2966, 1e-05
        %v3223 = vadd.f32 %v2967, 1e-05
        %v3224 = vadd.f32 %v2968, 1e-05
        %v3225 = vadd.f32 %v2969, 1e-05
        %v3226 = vadd.f32 %v2970, 1e-05
        %v3227 = vadd.f32 %v2971, 1e-05
        %v3228 = vadd.f32 %v2972, 1e-05
        %v3229 = vadd.f32 %v2973, 1e-05
        %v3230 = vadd.f32 %v2974, 1e-05
        %v3231 = vadd.f32 %v2975, 1e-05
        %v3232 = vadd.f32 %v2976, 1e-05
        %v3233 = vadd.f32 %v2977, 1e-05
        %v3234 = vadd.f32 %v2978, 1e-05
        %v3235 = vadd.f32 %v2979, 1e-05
        %v3236 = vadd.f32 %v2980, 1e-05
        %v3237 = vadd.f32 %v2981, 1e-05
        %v3238 = vadd.f32 %v2982, 1e-05
        %v3239 = vadd.f32 %v2983, 1e-05
        %v3240 = vadd.f32 %v2984, 1e-05
        %v3241 = vadd.f32 %v2985, 1e-05
        %v3242 = vadd.f32 %v2986, 1e-05
        %v3243 = vadd.f32 %v2987, 1e-05
        %v3244 = vadd.f32 %v2988, 1e-05
        %v3245 = vadd.f32 %v2989, 1e-05
        %v3246 = vadd.f32 %v2990, 1e-05
        %v3247 = vadd.f32 %v2991, 1e-05
        %v3248 = vadd.f32 %v2992, 1e-05
        %v3249 = vadd.f32 %v2993, 1e-05
        %v3250 = vadd.f32 %v2994, 1e-05
        %v3251 = vadd.f32 %v2995, 1e-05
        %v3252 = vadd.f32 %v2996, 1e-05
        %v3253 = vadd.f32 %v2997, 1e-05
        %v3254 = vadd.f32 %v2998, 1e-05
        %v3255 = vadd.f32 %v2999, 1e-05
        %v3256 = vadd.f32 %v3000, 1e-05
        %v3257 = vadd.f32 %v3001, 1e-05
        %v3258 = vadd.f32 %v3002, 1e-05
        %v3259 = vadd.f32 %v3003, 1e-05
        %v3260 = vadd.f32 %v3004, 1e-05
        %v3261 = vadd.f32 %v3005, 1e-05
        %v3262 = vadd.f32 %v3006, 1e-05
        %v3263 = vadd.f32 %v3007, 1e-05
        %v3264 = vadd.f32 %v3008, 1e-05
        %v3265 = vadd.f32 %v3009, 1e-05
        %v3266 = vadd.f32 %v3010, 1e-05
        %v3267 = vadd.f32 %v3011, 1e-05
        %v3268 = vadd.f32 %v3012, 1e-05
        %v3269 = vadd.f32 %v3013, 1e-05
        %v3270 = vadd.f32 %v3014, 1e-05
        %v3271 = vadd.f32 %v3015, 1e-05
        %v3272 = vadd.f32 %v3016, 1e-05
        %v3273 = vadd.f32 %v3017, 1e-05
        %v3274 = vadd.f32 %v3018, 1e-05
        %v3275 = vadd.f32 %v3019, 1e-05
        %v3276 = vadd.f32 %v3020, 1e-05
        %v3277 = vadd.f32 %v3021, 1e-05
        %v3278 = vadd.f32 %v3022, 1e-05
        %v3279 = vadd.f32 %v3023, 1e-05
        %v3280 = vadd.f32 %v3024, 1e-05
        %v3281 = vadd.f32 %v3025, 1e-05
        %v3282 = vadd.f32 %v3026, 1e-05
        %v3283 = vadd.f32 %v3027, 1e-05
        %v3284 = vadd.f32 %v3028, 1e-05
        %v3285 = vadd.f32 %v3029, 1e-05
        %v3286 = vadd.f32 %v3030, 1e-05
        %v3287 = vadd.f32 %v3031, 1e-05
        %v3288 = vadd.f32 %v3032, 1e-05
        %v3289 = vadd.f32 %v3033, 1e-05
        %v3290 = vadd.f32 %v3034, 1e-05
        %v3291 = vadd.f32 %v3035, 1e-05
        %v3292 = vadd.f32 %v3036, 1e-05
        %v3293 = vadd.f32 %v3037, 1e-05
        %v3294 = vadd.f32 %v3038, 1e-05
        %v3295 = vadd.f32 %v3039, 1e-05
        %v3296 = vadd.f32 %v3040, 1e-05
        %v3297 = vadd.f32 %v3041, 1e-05
        %v3298 = vadd.f32 %v3042, 1e-05
        %v3299 = vadd.f32 %v3043, 1e-05
        %v3300 = vadd.f32 %v3044, 1e-05
        %v3301 = vadd.f32 %v3045, 1e-05
        %v3302 = vadd.f32 %v3046, 1e-05
        %v3303 = vadd.f32 %v3047, 1e-05
        %v3304 = vadd.f32 %v3048, 1e-05
        %v3305 = vadd.f32 %v3049, 1e-05
        %v3306 = vadd.f32 %v3050, 1e-05
        %v3307 = vadd.f32 %v3051, 1e-05
        %v3308 = vadd.f32 %v3052, 1e-05
        %v3309 = vadd.f32 %v3053, 1e-05
        %v3310 = vadd.f32 %v3054, 1e-05
        %v3311 = vadd.f32 %v3055, 1e-05
        %v3312 = vadd.f32 %v3056, 1e-05
        %v3313 = vadd.f32 %v3057, 1e-05
        %v3314 = vadd.f32 %v3058, 1e-05
        %v3315 = vadd.f32 %v3059, 1e-05
        %v3316 = vadd.f32 %v3060, 1e-05
        %v3317 = vadd.f32 %v3061, 1e-05
        %v3318 = vadd.f32 %v3062, 1e-05
        %v3319 = vadd.f32 %v3063, 1e-05
        %v3320 = vadd.f32 %v3064, 1e-05
        %v3321 = vadd.f32 %v3065, 1e-05
        %v3322 = vadd.f32 %v3066, 1e-05
        %v3323 = vadd.f32 %v3067, 1e-05
        %v3324 = vadd.f32 %v3068, 1e-05
        %v3325 = vadd.f32 %v3069, 1e-05
        %v3326 = vadd.f32 %v3070, 1e-05
        %v3327 = vadd.f32 %v3071, 1e-05
        %v3328 = vadd.f32 %v3072, 1e-05
        %v3329 = vadd.f32 %v3073, 1e-05
        %v3330 = vadd.f32 %v3074, 1e-05
        %v3331 = vadd.f32 %v3075, 1e-05
        %v3332 = vadd.f32 %v3076, 1e-05
        %v3333 = vadd.f32 %v3077, 1e-05
        %v3334 = vadd.f32 %v3078, 1e-05
        %v3335 = vadd.f32 %v3079, 1e-05
        %v3336 = vadd.f32 %v3080, 1e-05
        %v3337 = vadd.f32 %v3081, 1e-05
        %v3338 = vadd.f32 %v3082, 1e-05
        %v3339 = vadd.f32 %v3083, 1e-05
        %v3340 = vadd.f32 %v3084, 1e-05
        %v3341 = vadd.f32 %v3085, 1e-05
        %v3342 = vadd.f32 %v3086, 1e-05
        %v3343 = vadd.f32 %v3087, 1e-05
        %v3344 = vadd.f32 %v3088, 1e-05
        %v3345 = vadd.f32 %v3089, 1e-05
        %v3346 = vadd.f32 %v3090, 1e-05
        %v3347 = vadd.f32 %v3091, 1e-05
        %v3348 = vadd.f32 %v3092, 1e-05
        %v3349 = vadd.f32 %v3093, 1e-05
        %v3350 = vadd.f32 %v3094, 1e-05
        %v3351 = vadd.f32 %v3095, 1e-05
        %v3352 = vadd.f32 %v3096, 1e-05
        %v3353 = vadd.f32 %v3097, 1e-05
        %v3354 = vadd.f32 %v3098, 1e-05
        %v3355 = vadd.f32 %v3099, 1e-05
        %v3356 = vadd.f32 %v3100, 1e-05
        %v3357 = vadd.f32 %v3101, 1e-05
        %v3358 = vadd.f32 %v3102, 1e-05
        %v3359 = vadd.f32 %v3103, 1e-05
        %v3360 = vadd.f32 %v3104, 1e-05
        %v3361 = vadd.f32 %v3105, 1e-05
        %v3362 = vadd.f32 %v3106, 1e-05
        %v3363 = vadd.f32 %v3107, 1e-05
        %v3364 = vadd.f32 %v3108, 1e-05
        %v3365 = vadd.f32 %v3109, 1e-05
        %v3366 = vadd.f32 %v3110, 1e-05
        %v3367 = vadd.f32 %v3111, 1e-05
        %v3368 = vadd.f32 %v3112, 1e-05
        %v3369 = vadd.f32 %v3113, 1e-05
        %v3370 = vadd.f32 %v3114, 1e-05
        %v3371 = vadd.f32 %v3115, 1e-05
        %v3372 = vadd.f32 %v3116, 1e-05
        %v3373 = vadd.f32 %v3117, 1e-05
        %v3374 = vadd.f32 %v3118, 1e-05
        %v3375 = vadd.f32 %v3119, 1e-05
        %v3376 = vadd.f32 %v3120, 1e-05
        %v3377 = vadd.f32 %v3121, 1e-05
        %v3378 = vadd.f32 %v3122, 1e-05
        %v3379 = vadd.f32 %v3123, 1e-05
        %v3380 = vadd.f32 %v3124, 1e-05
        %v3381 = vadd.f32 %v3125, 1e-05
        %v3382 = vadd.f32 %v3126, 1e-05
        %v3383 = vadd.f32 %v3127, 1e-05
        %v3384 = vadd.f32 %v3128, 1e-05
        %v3385 = vadd.f32 %v3129, 1e-05
        %v3386 = vadd.f32 %v3130, 1e-05
        %v3387 = vadd.f32 %v3131, 1e-05
        %v3388 = vadd.f32 %v3132, 1e-05
        %v3389 = vadd.f32 %v3133, 1e-05
        %v3390 = vadd.f32 %v3134, 1e-05
        %v3391 = vadd.f32 %v3135, 1e-05
        %v3392 = vadd.f32 %v3136, 1e-05
        %v3393 = vadd.f32 %v3137, 1e-05
        %v3394 = vadd.f32 %v3138, 1e-05
        %v3395 = vadd.f32 %v3139, 1e-05
        %v3396 = vadd.f32 %v3140, 1e-05
        %v3397 = vadd.f32 %v3141, 1e-05
        %v3398 = vadd.f32 %v3142, 1e-05
        %v3399 = vadd.f32 %v3143, 1e-05
        %v3400 = vadd.f32 %v3144, 1e-05
        %v3401 = vadd.f32 %v3145, 1e-05
        %v3402 = vadd.f32 %v3146, 1e-05
        %v3403 = vadd.f32 %v3147, 1e-05
        %v3404 = vadd.f32 %v3148, 1e-05
        %v3405 = vadd.f32 %v3149, 1e-05
        %v3406 = vadd.f32 %v3150, 1e-05
        %v3407 = vadd.f32 %v3151, 1e-05
        %v3408 = vadd.f32 %v3152, 1e-05
        %v3409 = vadd.f32 %v3153, 1e-05
        %v3410 = vadd.f32 %v3154, 1e-05
        %v3411 = vadd.f32 %v3155, 1e-05
        %v3412 = vadd.f32 %v3156, 1e-05
        %v3413 = vadd.f32 %v3157, 1e-05
        %v3414 = vadd.f32 %v3158, 1e-05
        %v3415 = vadd.f32 %v3159, 1e-05
        %v3416 = vadd.f32 %v3160, 1e-05
        %v3417 = vadd.f32 %v3161, 1e-05
        %v3418 = vadd.f32 %v3162, 1e-05
        %v3419 = vadd.f32 %v3163, 1e-05
        %v3420 = vadd.f32 %v3164, 1e-05
        %v3421 = vadd.f32 %v3165, 1e-05
        %v3422 = vadd.f32 %v3166, 1e-05
        %v3423 = vadd.f32 %v3167, 1e-05
        %v3424 = vadd.f32 %v3168, 1e-05
        %v3425 = vadd.f32 %v3169, 1e-05
        %v3426 = vadd.f32 %v3170, 1e-05
        %v3427 = vadd.f32 %v3171, 1e-05
        %v3428 = vadd.f32 %v3172, 1e-05
        %v3429 = vadd.f32 %v3173, 1e-05
        %v3430 = vadd.f32 %v3174, 1e-05
        %v3431 = vadd.f32 %v3175, 1e-05
        %v3432 = vadd.f32 %v3176, 1e-05
        %v3433 = vadd.f32 %v3177, 1e-05
        %v3434 = vadd.f32 %v3178, 1e-05
        %v3435 = vadd.f32 %v3179, 1e-05
        %v3436 = vadd.f32 %v3180, 1e-05
        %v3437 = vadd.f32 %v3181, 1e-05
        %v3438 = vadd.f32 %v3182, 1e-05
        %v3439 = vadd.f32 %v3183, 1e-05
        %v3440 = vadd.f32 %v3184, 1e-05
        %v3441 = vadd.f32 %v3185, 1e-05
        %v3442 = vadd.f32 %v3186, 1e-05
        %v3443 = vadd.f32 %v3187, 1e-05
        %v3444 = vadd.f32 %v3188, 1e-05
        %v3445 = vadd.f32 %v3189, 1e-05
        %v3446 = vadd.f32 %v3190, 1e-05
        %v3447 = vadd.f32 %v3191, 1e-05
        %v3448 = vadd.f32 %v3192, 1e-05
        %v3449 = vadd.f32 %v3193, 1e-05
        %v3450 = vadd.f32 %v3194, 1e-05
        %v3451 = vadd.f32 %v3195, 1e-05
        %v3452 = vadd.f32 %v3196, 1e-05
        %v3453 = vadd.f32 %v3197, 1e-05
        %v3454 = vadd.f32 %v3198, 1e-05
        %v3455 = vadd.f32 %v3199, 1e-05
        %v3456 = vadd.f32 %v3200, 1e-05
        %v3457 = vadd.f32 %v3201, 1e-05
        %v3458 = vadd.f32 %v3202, 1e-05
        %v3459 = vadd.f32 %v3203, 1e-05
        %v3460 = vadd.f32 %v3204, 1e-05
        %v3461 = vadd.f32 %v3205, 1e-05
        %v3462 = vrsqrt.pop %v3206
        %v3463 = vmul.f32 %v3462, %v3206
        %v3464 = vmul.f32 %v3463, %v3462
        %v3465 = vmul.f32 0.5, %v3464
        %v3466 = vsub.f32 1.5, %v3465
        %v3467 = vmul.f32 %v3462, %v3466
        %vm3468 = vweird.f32 %v3206
        %vm3469 = vweird.f32 %v3462
        %vm3470 = vmor %vm3468, %vm3469
        %v3471 = vsel %vm3470, %v3462, %v3467
        %v3472 = vrsqrt.pop %v3207
        %v3473 = vmul.f32 %v3472, %v3207
        %v3474 = vmul.f32 %v3473, %v3472
        %v3475 = vmul.f32 0.5, %v3474
        %v3476 = vsub.f32 1.5, %v3475
        %v3477 = vmul.f32 %v3472, %v3476
        %vm3478 = vweird.f32 %v3207
        %vm3479 = vweird.f32 %v3472
        %vm3480 = vmor %vm3478, %vm3479
        %v3481 = vsel %vm3480, %v3472, %v3477
        %v3482 = vrsqrt.pop %v3208
        %v3483 = vmul.f32 %v3482, %v3208
        %v3484 = vmul.f32 %v3483, %v3482
        %v3485 = vmul.f32 0.5, %v3484
        %v3486 = vsub.f32 1.5, %v3485
        %v3487 = vmul.f32 %v3482, %v3486
        %vm3488 = vweird.f32 %v3208
        %vm3489 = vweird.f32 %v3482
        %vm3490 = vmor %vm3488, %vm3489
        %v3491 = vsel %vm3490, %v3482, %v3487
        %v3492 = vrsqrt.pop %v3209
        %v3493 = vmul.f32 %v3492, %v3209
        %v3494 = vmul.f32 %v3493, %v3492
        %v3495 = vmul.f32 0.5, %v3494
        %v3496 = vsub.f32 1.5, %v3495
        %v3497 = vmul.f32 %v3492, %v3496
        %vm3498 = vweird.f32 %v3209
        %vm3499 = vweird.f32 %v3492
        %vm3500 = vmor %vm3498, %vm3499
        %v3501 = vsel %vm3500, %v3492, %v3497
        %v3502 = vrsqrt.pop %v3210
        %v3503 = vmul.f32 %v3502, %v3210
        %v3504 = vmul.f32 %v3503, %v3502
        %v3505 = vmul.f32 0.5, %v3504
        %v3506 = vsub.f32 1.5, %v3505
        %v3507 = vmul.f32 %v3502, %v3506
        %vm3508 = vweird.f32 %v3210
        %vm3509 = vweird.f32 %v3502
        %vm3510 = vmor %vm3508, %vm3509
        %v3511 = vsel %vm3510, %v3502, %v3507
        %v3512 = vrsqrt.pop %v3211
        %v3513 = vmul.f32 %v3512, %v3211
        %v3514 = vmul.f32 %v3513, %v3512
        %v3515 = vmul.f32 0.5, %v3514
        %v3516 = vsub.f32 1.5, %v3515
        %v3517 = vmul.f32 %v3512, %v3516
        %vm3518 = vweird.f32 %v3211
        %vm3519 = vweird.f32 %v3512
        %vm3520 = vmor %vm3518, %vm3519
        %v3521 = vsel %vm3520, %v3512, %v3517
        %v3522 = vrsqrt.pop %v3212
        %v3523 = vmul.f32 %v3522, %v3212
        %v3524 = vmul.f32 %v3523, %v3522
        %v3525 = vmul.f32 0.5, %v3524
        %v3526 = vsub.f32 1.5, %v3525
        %v3527 = vmul.f32 %v3522, %v3526
        %vm3528 = vweird.f32 %v3212
        %vm3529 = vweird.f32 %v3522
        %vm3530 = vmor %vm3528, %vm3529
        %v3531 = vsel %vm3530, %v3522, %v3527
        %v3532 = vrsqrt.pop %v3213
        %v3533 = vmul.f32 %v3532, %v3213
        %v3534 = vmul.f32 %v3533, %v3532
        %v3535 = vmul.f32 0.5, %v3534
        %v3536 = vsub.f32 1.5, %v3535
        %v3537 = vmul.f32 %v3532, %v3536
        %vm3538 = vweird.f32 %v3213
        %vm3539 = vweird.f32 %v3532
        %vm3540 = vmor %vm3538, %vm3539
        %v3541 = vsel %vm3540, %v3532, %v3537
        %v3542 = vrsqrt.pop %v3214
        %v3543 = vmul.f32 %v3542, %v3214
        %v3544 = vmul.f32 %v3543, %v3542
        %v3545 = vmul.f32 0.5, %v3544
        %v3546 = vsub.f32 1.5, %v3545
        %v3547 = vmul.f32 %v3542, %v3546
        %vm3548 = vweird.f32 %v3214
        %vm3549 = vweird.f32 %v3542
        %vm3550 = vmor %vm3548, %vm3549
        %v3551 = vsel %vm3550, %v3542, %v3547
        %v3552 = vrsqrt.pop %v3215
        %v3553 = vmul.f32 %v3552, %v3215
        %v3554 = vmul.f32 %v3553, %v3552
        %v3555 = vmul.f32 0.5, %v3554
        %v3556 = vsub.f32 1.5, %v3555
        %v3557 = vmul.f32 %v3552, %v3556
        %vm3558 = vweird.f32 %v3215
        %vm3559 = vweird.f32 %v3552
        %vm3560 = vmor %vm3558, %vm3559
        %v3561 = vsel %vm3560, %v3552, %v3557
        %v3562 = vrsqrt.pop %v3216
        %v3563 = vmul.f32 %v3562, %v3216
        %v3564 = vmul.f32 %v3563, %v3562
        %v3565 = vmul.f32 0.5, %v3564
        %v3566 = vsub.f32 1.5, %v3565
        %v3567 = vmul.f32 %v3562, %v3566
        %vm3568 = vweird.f32 %v3216
        %vm3569 = vweird.f32 %v3562
        %vm3570 = vmor %vm3568, %vm3569
        %v3571 = vsel %vm3570, %v3562, %v3567
        %v3572 = vrsqrt.pop %v3217
        %v3573 = vmul.f32 %v3572, %v3217
        %v3574 = vmul.f32 %v3573, %v3572
        %v3575 = vmul.f32 0.5, %v3574
        %v3576 = vsub.f32 1.5, %v3575
        %v3577 = vmul.f32 %v3572, %v3576
        %vm3578 = vweird.f32 %v3217
        %vm3579 = vweird.f32 %v3572
        %vm3580 = vmor %vm3578, %vm3579
        %v3581 = vsel %vm3580, %v3572, %v3577
        %v3582 = vrsqrt.pop %v3218
        %v3583 = vmul.f32 %v3582, %v3218
        %v3584 = vmul.f32 %v3583, %v3582
        %v3585 = vmul.f32 0.5, %v3584
        %v3586 = vsub.f32 1.5, %v3585
        %v3587 = vmul.f32 %v3582, %v3586
        %vm3588 = vweird.f32 %v3218
        %vm3589 = vweird.f32 %v3582
        %vm3590 = vmor %vm3588, %vm3589
        %v3591 = vsel %vm3590, %v3582, %v3587
        %v3592 = vrsqrt.pop %v3219
        %v3593 = vmul.f32 %v3592, %v3219
        %v3594 = vmul.f32 %v3593, %v3592
        %v3595 = vmul.f32 0.5, %v3594
        %v3596 = vsub.f32 1.5, %v3595
        %v3597 = vmul.f32 %v3592, %v3596
        %vm3598 = vweird.f32 %v3219
        %vm3599 = vweird.f32 %v3592
        %vm3600 = vmor %vm3598, %vm3599
        %v3601 = vsel %vm3600, %v3592, %v3597
        %v3602 = vrsqrt.pop %v3220
        %v3603 = vmul.f32 %v3602, %v3220
        %v3604 = vmul.f32 %v3603, %v3602
        %v3605 = vmul.f32 0.5, %v3604
        %v3606 = vsub.f32 1.5, %v3605
        %v3607 = vmul.f32 %v3602, %v3606
        %vm3608 = vweird.f32 %v3220
        %vm3609 = vweird.f32 %v3602
        %vm3610 = vmor %vm3608, %vm3609
        %v3611 = vsel %vm3610, %v3602, %v3607
        %v3612 = vrsqrt.pop %v3221
        %v3613 = vmul.f32 %v3612, %v3221
        %v3614 = vmul.f32 %v3613, %v3612
        %v3615 = vmul.f32 0.5, %v3614
        %v3616 = vsub.f32 1.5, %v3615
        %v3617 = vmul.f32 %v3612, %v3616
        %vm3618 = vweird.f32 %v3221
        %vm3619 = vweird.f32 %v3612
        %vm3620 = vmor %vm3618, %vm3619
        %v3621 = vsel %vm3620, %v3612, %v3617
        %v3622 = vrsqrt.pop %v3222
        %v3623 = vmul.f32 %v3622, %v3222
        %v3624 = vmul.f32 %v3623, %v3622
        %v3625 = vmul.f32 0.5, %v3624
        %v3626 = vsub.f32 1.5, %v3625
        %v3627 = vmul.f32 %v3622, %v3626
        %vm3628 = vweird.f32 %v3222
        %vm3629 = vweird.f32 %v3622
        %vm3630 = vmor %vm3628, %vm3629
        %v3631 = vsel %vm3630, %v3622, %v3627
        %v3632 = vrsqrt.pop %v3223
        %v3633 = vmul.f32 %v3632, %v3223
        %v3634 = vmul.f32 %v3633, %v3632
        %v3635 = vmul.f32 0.5, %v3634
        %v3636 = vsub.f32 1.5, %v3635
        %v3637 = vmul.f32 %v3632, %v3636
        %vm3638 = vweird.f32 %v3223
        %vm3639 = vweird.f32 %v3632
        %vm3640 = vmor %vm3638, %vm3639
        %v3641 = vsel %vm3640, %v3632, %v3637
        %v3642 = vrsqrt.pop %v3224
        %v3643 = vmul.f32 %v3642, %v3224
        %v3644 = vmul.f32 %v3643, %v3642
        %v3645 = vmul.f32 0.5, %v3644
        %v3646 = vsub.f32 1.5, %v3645
        %v3647 = vmul.f32 %v3642, %v3646
        %vm3648 = vweird.f32 %v3224
        %vm3649 = vweird.f32 %v3642
        %vm3650 = vmor %vm3648, %vm3649
        %v3651 = vsel %vm3650, %v3642, %v3647
        %v3652 = vrsqrt.pop %v3225
        %v3653 = vmul.f32 %v3652, %v3225
        %v3654 = vmul.f32 %v3653, %v3652
        %v3655 = vmul.f32 0.5, %v3654
        %v3656 = vsub.f32 1.5, %v3655
        %v3657 = vmul.f32 %v3652, %v3656
        %vm3658 = vweird.f32 %v3225
        %vm3659 = vweird.f32 %v3652
        %vm3660 = vmor %vm3658, %vm3659
        %v3661 = vsel %vm3660, %v3652, %v3657
        %v3662 = vrsqrt.pop %v3226
        %v3663 = vmul.f32 %v3662, %v3226
        %v3664 = vmul.f32 %v3663, %v3662
        %v3665 = vmul.f32 0.5, %v3664
        %v3666 = vsub.f32 1.5, %v3665
        %v3667 = vmul.f32 %v3662, %v3666
        %vm3668 = vweird.f32 %v3226
        %vm3669 = vweird.f32 %v3662
        %vm3670 = vmor %vm3668, %vm3669
        %v3671 = vsel %vm3670, %v3662, %v3667
        %v3672 = vrsqrt.pop %v3227
        %v3673 = vmul.f32 %v3672, %v3227
        %v3674 = vmul.f32 %v3673, %v3672
        %v3675 = vmul.f32 0.5, %v3674
        %v3676 = vsub.f32 1.5, %v3675
        %v3677 = vmul.f32 %v3672, %v3676
        %vm3678 = vweird.f32 %v3227
        %vm3679 = vweird.f32 %v3672
        %vm3680 = vmor %vm3678, %vm3679
        %v3681 = vsel %vm3680, %v3672, %v3677
        %v3682 = vrsqrt.pop %v3228
        %v3683 = vmul.f32 %v3682, %v3228
        %v3684 = vmul.f32 %v3683, %v3682
        %v3685 = vmul.f32 0.5, %v3684
        %v3686 = vsub.f32 1.5, %v3685
        %v3687 = vmul.f32 %v3682, %v3686
        %vm3688 = vweird.f32 %v3228
        %vm3689 = vweird.f32 %v3682
        %vm3690 = vmor %vm3688, %vm3689
        %v3691 = vsel %vm3690, %v3682, %v3687
        %v3692 = vrsqrt.pop %v3229
        %v3693 = vmul.f32 %v3692, %v3229
        %v3694 = vmul.f32 %v3693, %v3692
        %v3695 = vmul.f32 0.5, %v3694
        %v3696 = vsub.f32 1.5, %v3695
        %v3697 = vmul.f32 %v3692, %v3696
        %vm3698 = vweird.f32 %v3229
        %vm3699 = vweird.f32 %v3692
        %vm3700 = vmor %vm3698, %vm3699
        %v3701 = vsel %vm3700, %v3692, %v3697
        %v3702 = vrsqrt.pop %v3230
        %v3703 = vmul.f32 %v3702, %v3230
        %v3704 = vmul.f32 %v3703, %v3702
        %v3705 = vmul.f32 0.5, %v3704
        %v3706 = vsub.f32 1.5, %v3705
        %v3707 = vmul.f32 %v3702, %v3706
        %vm3708 = vweird.f32 %v3230
        %vm3709 = vweird.f32 %v3702
        %vm3710 = vmor %vm3708, %vm3709
        %v3711 = vsel %vm3710, %v3702, %v3707
        %v3712 = vrsqrt.pop %v3231
        %v3713 = vmul.f32 %v3712, %v3231
        %v3714 = vmul.f32 %v3713, %v3712
        %v3715 = vmul.f32 0.5, %v3714
        %v3716 = vsub.f32 1.5, %v3715
        %v3717 = vmul.f32 %v3712, %v3716
        %vm3718 = vweird.f32 %v3231
        %vm3719 = vweird.f32 %v3712
        %vm3720 = vmor %vm3718, %vm3719
        %v3721 = vsel %vm3720, %v3712, %v3717
        %v3722 = vrsqrt.pop %v3232
        %v3723 = vmul.f32 %v3722, %v3232
        %v3724 = vmul.f32 %v3723, %v3722
        %v3725 = vmul.f32 0.5, %v3724
        %v3726 = vsub.f32 1.5, %v3725
        %v3727 = vmul.f32 %v3722, %v3726
        %vm3728 = vweird.f32 %v3232
        %vm3729 = vweird.f32 %v3722
        %vm3730 = vmor %vm3728, %vm3729
        %v3731 = vsel %vm3730, %v3722, %v3727
        %v3732 = vrsqrt.pop %v3233
        %v3733 = vmul.f32 %v3732, %v3233
        %v3734 = vmul.f32 %v3733, %v3732
        %v3735 = vmul.f32 0.5, %v3734
        %v3736 = vsub.f32 1.5, %v3735
        %v3737 = vmul.f32 %v3732, %v3736
        %vm3738 = vweird.f32 %v3233
        %vm3739 = vweird.f32 %v3732
        %vm3740 = vmor %vm3738, %vm3739
        %v3741 = vsel %vm3740, %v3732, %v3737
        %v3742 = vrsqrt.pop %v3234
        %v3743 = vmul.f32 %v3742, %v3234
        %v3744 = vmul.f32 %v3743, %v3742
        %v3745 = vmul.f32 0.5, %v3744
        %v3746 = vsub.f32 1.5, %v3745
        %v3747 = vmul.f32 %v3742, %v3746
        %vm3748 = vweird.f32 %v3234
        %vm3749 = vweird.f32 %v3742
        %vm3750 = vmor %vm3748, %vm3749
        %v3751 = vsel %vm3750, %v3742, %v3747
        %v3752 = vrsqrt.pop %v3235
        %v3753 = vmul.f32 %v3752, %v3235
        %v3754 = vmul.f32 %v3753, %v3752
        %v3755 = vmul.f32 0.5, %v3754
        %v3756 = vsub.f32 1.5, %v3755
        %v3757 = vmul.f32 %v3752, %v3756
        %vm3758 = vweird.f32 %v3235
        %vm3759 = vweird.f32 %v3752
        %vm3760 = vmor %vm3758, %vm3759
        %v3761 = vsel %vm3760, %v3752, %v3757
        %v3762 = vrsqrt.pop %v3236
        %v3763 = vmul.f32 %v3762, %v3236
        %v3764 = vmul.f32 %v3763, %v3762
        %v3765 = vmul.f32 0.5, %v3764
        %v3766 = vsub.f32 1.5, %v3765
        %v3767 = vmul.f32 %v3762, %v3766
        %vm3768 = vweird.f32 %v3236
        %vm3769 = vweird.f32 %v3762
        %vm3770 = vmor %vm3768, %vm3769
        %v3771 = vsel %vm3770, %v3762, %v3767
        %v3772 = vrsqrt.pop %v3237
        %v3773 = vmul.f32 %v3772, %v3237
        %v3774 = vmul.f32 %v3773, %v3772
        %v3775 = vmul.f32 0.5, %v3774
        %v3776 = vsub.f32 1.5, %v3775
        %v3777 = vmul.f32 %v3772, %v3776
        %vm3778 = vweird.f32 %v3237
        %vm3779 = vweird.f32 %v3772
        %vm3780 = vmor %vm3778, %vm3779
        %v3781 = vsel %vm3780, %v3772, %v3777
        %v3782 = vrsqrt.pop %v3238
        %v3783 = vmul.f32 %v3782, %v3238
        %v3784 = vmul.f32 %v3783, %v3782
        %v3785 = vmul.f32 0.5, %v3784
        %v3786 = vsub.f32 1.5, %v3785
        %v3787 = vmul.f32 %v3782, %v3786
        %vm3788 = vweird.f32 %v3238
        %vm3789 = vweird.f32 %v3782
        %vm3790 = vmor %vm3788, %vm3789
        %v3791 = vsel %vm3790, %v3782, %v3787
        %v3792 = vrsqrt.pop %v3239
        %v3793 = vmul.f32 %v3792, %v3239
        %v3794 = vmul.f32 %v3793, %v3792
        %v3795 = vmul.f32 0.5, %v3794
        %v3796 = vsub.f32 1.5, %v3795
        %v3797 = vmul.f32 %v3792, %v3796
        %vm3798 = vweird.f32 %v3239
        %vm3799 = vweird.f32 %v3792
        %vm3800 = vmor %vm3798, %vm3799
        %v3801 = vsel %vm3800, %v3792, %v3797
        %v3802 = vrsqrt.pop %v3240
        %v3803 = vmul.f32 %v3802, %v3240
        %v3804 = vmul.f32 %v3803, %v3802
        %v3805 = vmul.f32 0.5, %v3804
        %v3806 = vsub.f32 1.5, %v3805
        %v3807 = vmul.f32 %v3802, %v3806
        %vm3808 = vweird.f32 %v3240
        %vm3809 = vweird.f32 %v3802
        %vm3810 = vmor %vm3808, %vm3809
        %v3811 = vsel %vm3810, %v3802, %v3807
        %v3812 = vrsqrt.pop %v3241
        %v3813 = vmul.f32 %v3812, %v3241
        %v3814 = vmul.f32 %v3813, %v3812
        %v3815 = vmul.f32 0.5, %v3814
        %v3816 = vsub.f32 1.5, %v3815
        %v3817 = vmul.f32 %v3812, %v3816
        %vm3818 = vweird.f32 %v3241
        %vm3819 = vweird.f32 %v3812
        %vm3820 = vmor %vm3818, %vm3819
        %v3821 = vsel %vm3820, %v3812, %v3817
        %v3822 = vrsqrt.pop %v3242
        %v3823 = vmul.f32 %v3822, %v3242
        %v3824 = vmul.f32 %v3823, %v3822
        %v3825 = vmul.f32 0.5, %v3824
        %v3826 = vsub.f32 1.5, %v3825
        %v3827 = vmul.f32 %v3822, %v3826
        %vm3828 = vweird.f32 %v3242
        %vm3829 = vweird.f32 %v3822
        %vm3830 = vmor %vm3828, %vm3829
        %v3831 = vsel %vm3830, %v3822, %v3827
        %v3832 = vrsqrt.pop %v3243
        %v3833 = vmul.f32 %v3832, %v3243
        %v3834 = vmul.f32 %v3833, %v3832
        %v3835 = vmul.f32 0.5, %v3834
        %v3836 = vsub.f32 1.5, %v3835
        %v3837 = vmul.f32 %v3832, %v3836
        %vm3838 = vweird.f32 %v3243
        %vm3839 = vweird.f32 %v3832
        %vm3840 = vmor %vm3838, %vm3839
        %v3841 = vsel %vm3840, %v3832, %v3837
        %v3842 = vrsqrt.pop %v3244
        %v3843 = vmul.f32 %v3842, %v3244
        %v3844 = vmul.f32 %v3843, %v3842
        %v3845 = vmul.f32 0.5, %v3844
        %v3846 = vsub.f32 1.5, %v3845
        %v3847 = vmul.f32 %v3842, %v3846
        %vm3848 = vweird.f32 %v3244
        %vm3849 = vweird.f32 %v3842
        %vm3850 = vmor %vm3848, %vm3849
        %v3851 = vsel %vm3850, %v3842, %v3847
        %v3852 = vrsqrt.pop %v3245
        %v3853 = vmul.f32 %v3852, %v3245
        %v3854 = vmul.f32 %v3853, %v3852
        %v3855 = vmul.f32 0.5, %v3854
        %v3856 = vsub.f32 1.5, %v3855
        %v3857 = vmul.f32 %v3852, %v3856
        %vm3858 = vweird.f32 %v3245
        %vm3859 = vweird.f32 %v3852
        %vm3860 = vmor %vm3858, %vm3859
        %v3861 = vsel %vm3860, %v3852, %v3857
        %v3862 = vrsqrt.pop %v3246
        %v3863 = vmul.f32 %v3862, %v3246
        %v3864 = vmul.f32 %v3863, %v3862
        %v3865 = vmul.f32 0.5, %v3864
        %v3866 = vsub.f32 1.5, %v3865
        %v3867 = vmul.f32 %v3862, %v3866
        %vm3868 = vweird.f32 %v3246
        %vm3869 = vweird.f32 %v3862
        %vm3870 = vmor %vm3868, %vm3869
        %v3871 = vsel %vm3870, %v3862, %v3867
        %v3872 = vrsqrt.pop %v3247
        %v3873 = vmul.f32 %v3872, %v3247
        %v3874 = vmul.f32 %v3873, %v3872
        %v3875 = vmul.f32 0.5, %v3874
        %v3876 = vsub.f32 1.5, %v3875
        %v3877 = vmul.f32 %v3872, %v3876
        %vm3878 = vweird.f32 %v3247
        %vm3879 = vweird.f32 %v3872
        %vm3880 = vmor %vm3878, %vm3879
        %v3881 = vsel %vm3880, %v3872, %v3877
        %v3882 = vrsqrt.pop %v3248
        %v3883 = vmul.f32 %v3882, %v3248
        %v3884 = vmul.f32 %v3883, %v3882
        %v3885 = vmul.f32 0.5, %v3884
        %v3886 = vsub.f32 1.5, %v3885
        %v3887 = vmul.f32 %v3882, %v3886
        %vm3888 = vweird.f32 %v3248
        %vm3889 = vweird.f32 %v3882
        %vm3890 = vmor %vm3888, %vm3889
        %v3891 = vsel %vm3890, %v3882, %v3887
        %v3892 = vrsqrt.pop %v3249
        %v3893 = vmul.f32 %v3892, %v3249
        %v3894 = vmul.f32 %v3893, %v3892
        %v3895 = vmul.f32 0.5, %v3894
        %v3896 = vsub.f32 1.5, %v3895
        %v3897 = vmul.f32 %v3892, %v3896
        %vm3898 = vweird.f32 %v3249
        %vm3899 = vweird.f32 %v3892
        %vm3900 = vmor %vm3898, %vm3899
        %v3901 = vsel %vm3900, %v3892, %v3897
        %v3902 = vrsqrt.pop %v3250
        %v3903 = vmul.f32 %v3902, %v3250
        %v3904 = vmul.f32 %v3903, %v3902
        %v3905 = vmul.f32 0.5, %v3904
        %v3906 = vsub.f32 1.5, %v3905
        %v3907 = vmul.f32 %v3902, %v3906
        %vm3908 = vweird.f32 %v3250
        %vm3909 = vweird.f32 %v3902
        %vm3910 = vmor %vm3908, %vm3909
        %v3911 = vsel %vm3910, %v3902, %v3907
        %v3912 = vrsqrt.pop %v3251
        %v3913 = vmul.f32 %v3912, %v3251
        %v3914 = vmul.f32 %v3913, %v3912
        %v3915 = vmul.f32 0.5, %v3914
        %v3916 = vsub.f32 1.5, %v3915
        %v3917 = vmul.f32 %v3912, %v3916
        %vm3918 = vweird.f32 %v3251
        %vm3919 = vweird.f32 %v3912
        %vm3920 = vmor %vm3918, %vm3919
        %v3921 = vsel %vm3920, %v3912, %v3917
        %v3922 = vrsqrt.pop %v3252
        %v3923 = vmul.f32 %v3922, %v3252
        %v3924 = vmul.f32 %v3923, %v3922
        %v3925 = vmul.f32 0.5, %v3924
        %v3926 = vsub.f32 1.5, %v3925
        %v3927 = vmul.f32 %v3922, %v3926
        %vm3928 = vweird.f32 %v3252
        %vm3929 = vweird.f32 %v3922
        %vm3930 = vmor %vm3928, %vm3929
        %v3931 = vsel %vm3930, %v3922, %v3927
        %v3932 = vrsqrt.pop %v3253
        %v3933 = vmul.f32 %v3932, %v3253
        %v3934 = vmul.f32 %v3933, %v3932
        %v3935 = vmul.f32 0.5, %v3934
        %v3936 = vsub.f32 1.5, %v3935
        %v3937 = vmul.f32 %v3932, %v3936
        %vm3938 = vweird.f32 %v3253
        %vm3939 = vweird.f32 %v3932
        %vm3940 = vmor %vm3938, %vm3939
        %v3941 = vsel %vm3940, %v3932, %v3937
        %v3942 = vrsqrt.pop %v3254
        %v3943 = vmul.f32 %v3942, %v3254
        %v3944 = vmul.f32 %v3943, %v3942
        %v3945 = vmul.f32 0.5, %v3944
        %v3946 = vsub.f32 1.5, %v3945
        %v3947 = vmul.f32 %v3942, %v3946
        %vm3948 = vweird.f32 %v3254
        %vm3949 = vweird.f32 %v3942
        %vm3950 = vmor %vm3948, %vm3949
        %v3951 = vsel %vm3950, %v3942, %v3947
        %v3952 = vrsqrt.pop %v3255
        %v3953 = vmul.f32 %v3952, %v3255
        %v3954 = vmul.f32 %v3953, %v3952
        %v3955 = vmul.f32 0.5, %v3954
        %v3956 = vsub.f32 1.5, %v3955
        %v3957 = vmul.f32 %v3952, %v3956
        %vm3958 = vweird.f32 %v3255
        %vm3959 = vweird.f32 %v3952
        %vm3960 = vmor %vm3958, %vm3959
        %v3961 = vsel %vm3960, %v3952, %v3957
        %v3962 = vrsqrt.pop %v3256
        %v3963 = vmul.f32 %v3962, %v3256
        %v3964 = vmul.f32 %v3963, %v3962
        %v3965 = vmul.f32 0.5, %v3964
        %v3966 = vsub.f32 1.5, %v3965
        %v3967 = vmul.f32 %v3962, %v3966
        %vm3968 = vweird.f32 %v3256
        %vm3969 = vweird.f32 %v3962
        %vm3970 = vmor %vm3968, %vm3969
        %v3971 = vsel %vm3970, %v3962, %v3967
        %v3972 = vrsqrt.pop %v3257
        %v3973 = vmul.f32 %v3972, %v3257
        %v3974 = vmul.f32 %v3973, %v3972
        %v3975 = vmul.f32 0.5, %v3974
        %v3976 = vsub.f32 1.5, %v3975
        %v3977 = vmul.f32 %v3972, %v3976
        %vm3978 = vweird.f32 %v3257
        %vm3979 = vweird.f32 %v3972
        %vm3980 = vmor %vm3978, %vm3979
        %v3981 = vsel %vm3980, %v3972, %v3977
        %v3982 = vrsqrt.pop %v3258
        %v3983 = vmul.f32 %v3982, %v3258
        %v3984 = vmul.f32 %v3983, %v3982
        %v3985 = vmul.f32 0.5, %v3984
        %v3986 = vsub.f32 1.5, %v3985
        %v3987 = vmul.f32 %v3982, %v3986
        %vm3988 = vweird.f32 %v3258
        %vm3989 = vweird.f32 %v3982
        %vm3990 = vmor %vm3988, %vm3989
        %v3991 = vsel %vm3990, %v3982, %v3987
        %v3992 = vrsqrt.pop %v3259
        %v3993 = vmul.f32 %v3992, %v3259
        %v3994 = vmul.f32 %v3993, %v3992
        %v3995 = vmul.f32 0.5, %v3994
        %v3996 = vsub.f32 1.5, %v3995
        %v3997 = vmul.f32 %v3992, %v3996
        %vm3998 = vweird.f32 %v3259
        %vm3999 = vweird.f32 %v3992
        %vm4000 = vmor %vm3998, %vm3999
        %v4001 = vsel %vm4000, %v3992, %v3997
        %v4002 = vrsqrt.pop %v3260
        %v4003 = vmul.f32 %v4002, %v3260
        %v4004 = vmul.f32 %v4003, %v4002
        %v4005 = vmul.f32 0.5, %v4004
        %v4006 = vsub.f32 1.5, %v4005
        %v4007 = vmul.f32 %v4002, %v4006
        %vm4008 = vweird.f32 %v3260
        %vm4009 = vweird.f32 %v4002
        %vm4010 = vmor %vm4008, %vm4009
        %v4011 = vsel %vm4010, %v4002, %v4007
        %v4012 = vrsqrt.pop %v3261
        %v4013 = vmul.f32 %v4012, %v3261
        %v4014 = vmul.f32 %v4013, %v4012
        %v4015 = vmul.f32 0.5, %v4014
        %v4016 = vsub.f32 1.5, %v4015
        %v4017 = vmul.f32 %v4012, %v4016
        %vm4018 = vweird.f32 %v3261
        %vm4019 = vweird.f32 %v4012
        %vm4020 = vmor %vm4018, %vm4019
        %v4021 = vsel %vm4020, %v4012, %v4017
        %v4022 = vrsqrt.pop %v3262
        %v4023 = vmul.f32 %v4022, %v3262
        %v4024 = vmul.f32 %v4023, %v4022
        %v4025 = vmul.f32 0.5, %v4024
        %v4026 = vsub.f32 1.5, %v4025
        %v4027 = vmul.f32 %v4022, %v4026
        %vm4028 = vweird.f32 %v3262
        %vm4029 = vweird.f32 %v4022
        %vm4030 = vmor %vm4028, %vm4029
        %v4031 = vsel %vm4030, %v4022, %v4027
        %v4032 = vrsqrt.pop %v3263
        %v4033 = vmul.f32 %v4032, %v3263
        %v4034 = vmul.f32 %v4033, %v4032
        %v4035 = vmul.f32 0.5, %v4034
        %v4036 = vsub.f32 1.5, %v4035
        %v4037 = vmul.f32 %v4032, %v4036
        %vm4038 = vweird.f32 %v3263
        %vm4039 = vweird.f32 %v4032
        %vm4040 = vmor %vm4038, %vm4039
        %v4041 = vsel %vm4040, %v4032, %v4037
        %v4042 = vrsqrt.pop %v3264
        %v4043 = vmul.f32 %v4042, %v3264
        %v4044 = vmul.f32 %v4043, %v4042
        %v4045 = vmul.f32 0.5, %v4044
        %v4046 = vsub.f32 1.5, %v4045
        %v4047 = vmul.f32 %v4042, %v4046
        %vm4048 = vweird.f32 %v3264
        %vm4049 = vweird.f32 %v4042
        %vm4050 = vmor %vm4048, %vm4049
        %v4051 = vsel %vm4050, %v4042, %v4047
        %v4052 = vrsqrt.pop %v3265
        %v4053 = vmul.f32 %v4052, %v3265
        %v4054 = vmul.f32 %v4053, %v4052
        %v4055 = vmul.f32 0.5, %v4054
        %v4056 = vsub.f32 1.5, %v4055
        %v4057 = vmul.f32 %v4052, %v4056
        %vm4058 = vweird.f32 %v3265
        %vm4059 = vweird.f32 %v4052
        %vm4060 = vmor %vm4058, %vm4059
        %v4061 = vsel %vm4060, %v4052, %v4057
        %v4062 = vrsqrt.pop %v3266
        %v4063 = vmul.f32 %v4062, %v3266
        %v4064 = vmul.f32 %v4063, %v4062
        %v4065 = vmul.f32 0.5, %v4064
        %v4066 = vsub.f32 1.5, %v4065
        %v4067 = vmul.f32 %v4062, %v4066
        %vm4068 = vweird.f32 %v3266
        %vm4069 = vweird.f32 %v4062
        %vm4070 = vmor %vm4068, %vm4069
        %v4071 = vsel %vm4070, %v4062, %v4067
        %v4072 = vrsqrt.pop %v3267
        %v4073 = vmul.f32 %v4072, %v3267
        %v4074 = vmul.f32 %v4073, %v4072
        %v4075 = vmul.f32 0.5, %v4074
        %v4076 = vsub.f32 1.5, %v4075
        %v4077 = vmul.f32 %v4072, %v4076
        %vm4078 = vweird.f32 %v3267
        %vm4079 = vweird.f32 %v4072
        %vm4080 = vmor %vm4078, %vm4079
        %v4081 = vsel %vm4080, %v4072, %v4077
        %v4082 = vrsqrt.pop %v3268
        %v4083 = vmul.f32 %v4082, %v3268
        %v4084 = vmul.f32 %v4083, %v4082
        %v4085 = vmul.f32 0.5, %v4084
        %v4086 = vsub.f32 1.5, %v4085
        %v4087 = vmul.f32 %v4082, %v4086
        %vm4088 = vweird.f32 %v3268
        %vm4089 = vweird.f32 %v4082
        %vm4090 = vmor %vm4088, %vm4089
        %v4091 = vsel %vm4090, %v4082, %v4087
        %v4092 = vrsqrt.pop %v3269
        %v4093 = vmul.f32 %v4092, %v3269
        %v4094 = vmul.f32 %v4093, %v4092
        %v4095 = vmul.f32 0.5, %v4094
        %v4096 = vsub.f32 1.5, %v4095
        %v4097 = vmul.f32 %v4092, %v4096
        %vm4098 = vweird.f32 %v3269
        %vm4099 = vweird.f32 %v4092
        %vm4100 = vmor %vm4098, %vm4099
        %v4101 = vsel %vm4100, %v4092, %v4097
        %v4102 = vrsqrt.pop %v3270
        %v4103 = vmul.f32 %v4102, %v3270
        %v4104 = vmul.f32 %v4103, %v4102
        %v4105 = vmul.f32 0.5, %v4104
        %v4106 = vsub.f32 1.5, %v4105
        %v4107 = vmul.f32 %v4102, %v4106
        %vm4108 = vweird.f32 %v3270
        %vm4109 = vweird.f32 %v4102
        %vm4110 = vmor %vm4108, %vm4109
        %v4111 = vsel %vm4110, %v4102, %v4107
        %v4112 = vrsqrt.pop %v3271
        %v4113 = vmul.f32 %v4112, %v3271
        %v4114 = vmul.f32 %v4113, %v4112
        %v4115 = vmul.f32 0.5, %v4114
        %v4116 = vsub.f32 1.5, %v4115
        %v4117 = vmul.f32 %v4112, %v4116
        %vm4118 = vweird.f32 %v3271
        %vm4119 = vweird.f32 %v4112
        %vm4120 = vmor %vm4118, %vm4119
        %v4121 = vsel %vm4120, %v4112, %v4117
        %v4122 = vrsqrt.pop %v3272
        %v4123 = vmul.f32 %v4122, %v3272
        %v4124 = vmul.f32 %v4123, %v4122
        %v4125 = vmul.f32 0.5, %v4124
        %v4126 = vsub.f32 1.5, %v4125
        %v4127 = vmul.f32 %v4122, %v4126
        %vm4128 = vweird.f32 %v3272
        %vm4129 = vweird.f32 %v4122
        %vm4130 = vmor %vm4128, %vm4129
        %v4131 = vsel %vm4130, %v4122, %v4127
        %v4132 = vrsqrt.pop %v3273
        %v4133 = vmul.f32 %v4132, %v3273
        %v4134 = vmul.f32 %v4133, %v4132
        %v4135 = vmul.f32 0.5, %v4134
        %v4136 = vsub.f32 1.5, %v4135
        %v4137 = vmul.f32 %v4132, %v4136
        %vm4138 = vweird.f32 %v3273
        %vm4139 = vweird.f32 %v4132
        %vm4140 = vmor %vm4138, %vm4139
        %v4141 = vsel %vm4140, %v4132, %v4137
        %v4142 = vrsqrt.pop %v3274
        %v4143 = vmul.f32 %v4142, %v3274
        %v4144 = vmul.f32 %v4143, %v4142
        %v4145 = vmul.f32 0.5, %v4144
        %v4146 = vsub.f32 1.5, %v4145
        %v4147 = vmul.f32 %v4142, %v4146
        %vm4148 = vweird.f32 %v3274
        %vm4149 = vweird.f32 %v4142
        %vm4150 = vmor %vm4148, %vm4149
        %v4151 = vsel %vm4150, %v4142, %v4147
        %v4152 = vrsqrt.pop %v3275
        %v4153 = vmul.f32 %v4152, %v3275
        %v4154 = vmul.f32 %v4153, %v4152
        %v4155 = vmul.f32 0.5, %v4154
        %v4156 = vsub.f32 1.5, %v4155
        %v4157 = vmul.f32 %v4152, %v4156
        %vm4158 = vweird.f32 %v3275
        %vm4159 = vweird.f32 %v4152
        %vm4160 = vmor %vm4158, %vm4159
        %v4161 = vsel %vm4160, %v4152, %v4157
        %v4162 = vrsqrt.pop %v3276
        %v4163 = vmul.f32 %v4162, %v3276
        %v4164 = vmul.f32 %v4163, %v4162
        %v4165 = vmul.f32 0.5, %v4164
        %v4166 = vsub.f32 1.5, %v4165
        %v4167 = vmul.f32 %v4162, %v4166
        %vm4168 = vweird.f32 %v3276
        %vm4169 = vweird.f32 %v4162
        %vm4170 = vmor %vm4168, %vm4169
        %v4171 = vsel %vm4170, %v4162, %v4167
        %v4172 = vrsqrt.pop %v3277
        %v4173 = vmul.f32 %v4172, %v3277
        %v4174 = vmul.f32 %v4173, %v4172
        %v4175 = vmul.f32 0.5, %v4174
        %v4176 = vsub.f32 1.5, %v4175
        %v4177 = vmul.f32 %v4172, %v4176
        %vm4178 = vweird.f32 %v3277
        %vm4179 = vweird.f32 %v4172
        %vm4180 = vmor %vm4178, %vm4179
        %v4181 = vsel %vm4180, %v4172, %v4177
        %v4182 = vrsqrt.pop %v3278
        %v4183 = vmul.f32 %v4182, %v3278
        %v4184 = vmul.f32 %v4183, %v4182
        %v4185 = vmul.f32 0.5, %v4184
        %v4186 = vsub.f32 1.5, %v4185
        %v4187 = vmul.f32 %v4182, %v4186
        %vm4188 = vweird.f32 %v3278
        %vm4189 = vweird.f32 %v4182
        %vm4190 = vmor %vm4188, %vm4189
        %v4191 = vsel %vm4190, %v4182, %v4187
        %v4192 = vrsqrt.pop %v3279
        %v4193 = vmul.f32 %v4192, %v3279
        %v4194 = vmul.f32 %v4193, %v4192
        %v4195 = vmul.f32 0.5, %v4194
        %v4196 = vsub.f32 1.5, %v4195
        %v4197 = vmul.f32 %v4192, %v4196
        %vm4198 = vweird.f32 %v3279
        %vm4199 = vweird.f32 %v4192
        %vm4200 = vmor %vm4198, %vm4199
        %v4201 = vsel %vm4200, %v4192, %v4197
        %v4202 = vrsqrt.pop %v3280
        %v4203 = vmul.f32 %v4202, %v3280
        %v4204 = vmul.f32 %v4203, %v4202
        %v4205 = vmul.f32 0.5, %v4204
        %v4206 = vsub.f32 1.5, %v4205
        %v4207 = vmul.f32 %v4202, %v4206
        %vm4208 = vweird.f32 %v3280
        %vm4209 = vweird.f32 %v4202
        %vm4210 = vmor %vm4208, %vm4209
        %v4211 = vsel %vm4210, %v4202, %v4207
        %v4212 = vrsqrt.pop %v3281
        %v4213 = vmul.f32 %v4212, %v3281
        %v4214 = vmul.f32 %v4213, %v4212
        %v4215 = vmul.f32 0.5, %v4214
        %v4216 = vsub.f32 1.5, %v4215
        %v4217 = vmul.f32 %v4212, %v4216
        %vm4218 = vweird.f32 %v3281
        %vm4219 = vweird.f32 %v4212
        %vm4220 = vmor %vm4218, %vm4219
        %v4221 = vsel %vm4220, %v4212, %v4217
        %v4222 = vrsqrt.pop %v3282
        %v4223 = vmul.f32 %v4222, %v3282
        %v4224 = vmul.f32 %v4223, %v4222
        %v4225 = vmul.f32 0.5, %v4224
        %v4226 = vsub.f32 1.5, %v4225
        %v4227 = vmul.f32 %v4222, %v4226
        %vm4228 = vweird.f32 %v3282
        %vm4229 = vweird.f32 %v4222
        %vm4230 = vmor %vm4228, %vm4229
        %v4231 = vsel %vm4230, %v4222, %v4227
        %v4232 = vrsqrt.pop %v3283
        %v4233 = vmul.f32 %v4232, %v3283
        %v4234 = vmul.f32 %v4233, %v4232
        %v4235 = vmul.f32 0.5, %v4234
        %v4236 = vsub.f32 1.5, %v4235
        %v4237 = vmul.f32 %v4232, %v4236
        %vm4238 = vweird.f32 %v3283
        %vm4239 = vweird.f32 %v4232
        %vm4240 = vmor %vm4238, %vm4239
        %v4241 = vsel %vm4240, %v4232, %v4237
        %v4242 = vrsqrt.pop %v3284
        %v4243 = vmul.f32 %v4242, %v3284
        %v4244 = vmul.f32 %v4243, %v4242
        %v4245 = vmul.f32 0.5, %v4244
        %v4246 = vsub.f32 1.5, %v4245
        %v4247 = vmul.f32 %v4242, %v4246
        %vm4248 = vweird.f32 %v3284
        %vm4249 = vweird.f32 %v4242
        %vm4250 = vmor %vm4248, %vm4249
        %v4251 = vsel %vm4250, %v4242, %v4247
        %v4252 = vrsqrt.pop %v3285
        %v4253 = vmul.f32 %v4252, %v3285
        %v4254 = vmul.f32 %v4253, %v4252
        %v4255 = vmul.f32 0.5, %v4254
        %v4256 = vsub.f32 1.5, %v4255
        %v4257 = vmul.f32 %v4252, %v4256
        %vm4258 = vweird.f32 %v3285
        %vm4259 = vweird.f32 %v4252
        %vm4260 = vmor %vm4258, %vm4259
        %v4261 = vsel %vm4260, %v4252, %v4257
        %v4262 = vrsqrt.pop %v3286
        %v4263 = vmul.f32 %v4262, %v3286
        %v4264 = vmul.f32 %v4263, %v4262
        %v4265 = vmul.f32 0.5, %v4264
        %v4266 = vsub.f32 1.5, %v4265
        %v4267 = vmul.f32 %v4262, %v4266
        %vm4268 = vweird.f32 %v3286
        %vm4269 = vweird.f32 %v4262
        %vm4270 = vmor %vm4268, %vm4269
        %v4271 = vsel %vm4270, %v4262, %v4267
        %v4272 = vrsqrt.pop %v3287
        %v4273 = vmul.f32 %v4272, %v3287
        %v4274 = vmul.f32 %v4273, %v4272
        %v4275 = vmul.f32 0.5, %v4274
        %v4276 = vsub.f32 1.5, %v4275
        %v4277 = vmul.f32 %v4272, %v4276
        %vm4278 = vweird.f32 %v3287
        %vm4279 = vweird.f32 %v4272
        %vm4280 = vmor %vm4278, %vm4279
        %v4281 = vsel %vm4280, %v4272, %v4277
        %v4282 = vrsqrt.pop %v3288
        %v4283 = vmul.f32 %v4282, %v3288
        %v4284 = vmul.f32 %v4283, %v4282
        %v4285 = vmul.f32 0.5, %v4284
        %v4286 = vsub.f32 1.5, %v4285
        %v4287 = vmul.f32 %v4282, %v4286
        %vm4288 = vweird.f32 %v3288
        %vm4289 = vweird.f32 %v4282
        %vm4290 = vmor %vm4288, %vm4289
        %v4291 = vsel %vm4290, %v4282, %v4287
        %v4292 = vrsqrt.pop %v3289
        %v4293 = vmul.f32 %v4292, %v3289
        %v4294 = vmul.f32 %v4293, %v4292
        %v4295 = vmul.f32 0.5, %v4294
        %v4296 = vsub.f32 1.5, %v4295
        %v4297 = vmul.f32 %v4292, %v4296
        %vm4298 = vweird.f32 %v3289
        %vm4299 = vweird.f32 %v4292
        %vm4300 = vmor %vm4298, %vm4299
        %v4301 = vsel %vm4300, %v4292, %v4297
        %v4302 = vrsqrt.pop %v3290
        %v4303 = vmul.f32 %v4302, %v3290
        %v4304 = vmul.f32 %v4303, %v4302
        %v4305 = vmul.f32 0.5, %v4304
        %v4306 = vsub.f32 1.5, %v4305
        %v4307 = vmul.f32 %v4302, %v4306
        %vm4308 = vweird.f32 %v3290
        %vm4309 = vweird.f32 %v4302
        %vm4310 = vmor %vm4308, %vm4309
        %v4311 = vsel %vm4310, %v4302, %v4307
        %v4312 = vrsqrt.pop %v3291
        %v4313 = vmul.f32 %v4312, %v3291
        %v4314 = vmul.f32 %v4313, %v4312
        %v4315 = vmul.f32 0.5, %v4314
        %v4316 = vsub.f32 1.5, %v4315
        %v4317 = vmul.f32 %v4312, %v4316
        %vm4318 = vweird.f32 %v3291
        %vm4319 = vweird.f32 %v4312
        %vm4320 = vmor %vm4318, %vm4319
        %v4321 = vsel %vm4320, %v4312, %v4317
        %v4322 = vrsqrt.pop %v3292
        %v4323 = vmul.f32 %v4322, %v3292
        %v4324 = vmul.f32 %v4323, %v4322
        %v4325 = vmul.f32 0.5, %v4324
        %v4326 = vsub.f32 1.5, %v4325
        %v4327 = vmul.f32 %v4322, %v4326
        %vm4328 = vweird.f32 %v3292
        %vm4329 = vweird.f32 %v4322
        %vm4330 = vmor %vm4328, %vm4329
        %v4331 = vsel %vm4330, %v4322, %v4327
        %v4332 = vrsqrt.pop %v3293
        %v4333 = vmul.f32 %v4332, %v3293
        %v4334 = vmul.f32 %v4333, %v4332
        %v4335 = vmul.f32 0.5, %v4334
        %v4336 = vsub.f32 1.5, %v4335
        %v4337 = vmul.f32 %v4332, %v4336
        %vm4338 = vweird.f32 %v3293
        %vm4339 = vweird.f32 %v4332
        %vm4340 = vmor %vm4338, %vm4339
        %v4341 = vsel %vm4340, %v4332, %v4337
        %v4342 = vrsqrt.pop %v3294
        %v4343 = vmul.f32 %v4342, %v3294
        %v4344 = vmul.f32 %v4343, %v4342
        %v4345 = vmul.f32 0.5, %v4344
        %v4346 = vsub.f32 1.5, %v4345
        %v4347 = vmul.f32 %v4342, %v4346
        %vm4348 = vweird.f32 %v3294
        %vm4349 = vweird.f32 %v4342
        %vm4350 = vmor %vm4348, %vm4349
        %v4351 = vsel %vm4350, %v4342, %v4347
        %v4352 = vrsqrt.pop %v3295
        %v4353 = vmul.f32 %v4352, %v3295
        %v4354 = vmul.f32 %v4353, %v4352
        %v4355 = vmul.f32 0.5, %v4354
        %v4356 = vsub.f32 1.5, %v4355
        %v4357 = vmul.f32 %v4352, %v4356
        %vm4358 = vweird.f32 %v3295
        %vm4359 = vweird.f32 %v4352
        %vm4360 = vmor %vm4358, %vm4359
        %v4361 = vsel %vm4360, %v4352, %v4357
        %v4362 = vrsqrt.pop %v3296
        %v4363 = vmul.f32 %v4362, %v3296
        %v4364 = vmul.f32 %v4363, %v4362
        %v4365 = vmul.f32 0.5, %v4364
        %v4366 = vsub.f32 1.5, %v4365
        %v4367 = vmul.f32 %v4362, %v4366
        %vm4368 = vweird.f32 %v3296
        %vm4369 = vweird.f32 %v4362
        %vm4370 = vmor %vm4368, %vm4369
        %v4371 = vsel %vm4370, %v4362, %v4367
        %v4372 = vrsqrt.pop %v3297
        %v4373 = vmul.f32 %v4372, %v3297
        %v4374 = vmul.f32 %v4373, %v4372
        %v4375 = vmul.f32 0.5, %v4374
        %v4376 = vsub.f32 1.5, %v4375
        %v4377 = vmul.f32 %v4372, %v4376
        %vm4378 = vweird.f32 %v3297
        %vm4379 = vweird.f32 %v4372
        %vm4380 = vmor %vm4378, %vm4379
        %v4381 = vsel %vm4380, %v4372, %v4377
        %v4382 = vrsqrt.pop %v3298
        %v4383 = vmul.f32 %v4382, %v3298
        %v4384 = vmul.f32 %v4383, %v4382
        %v4385 = vmul.f32 0.5, %v4384
        %v4386 = vsub.f32 1.5, %v4385
        %v4387 = vmul.f32 %v4382, %v4386
        %vm4388 = vweird.f32 %v3298
        %vm4389 = vweird.f32 %v4382
        %vm4390 = vmor %vm4388, %vm4389
        %v4391 = vsel %vm4390, %v4382, %v4387
        %v4392 = vrsqrt.pop %v3299
        %v4393 = vmul.f32 %v4392, %v3299
        %v4394 = vmul.f32 %v4393, %v4392
        %v4395 = vmul.f32 0.5, %v4394
        %v4396 = vsub.f32 1.5, %v4395
        %v4397 = vmul.f32 %v4392, %v4396
        %vm4398 = vweird.f32 %v3299
        %vm4399 = vweird.f32 %v4392
        %vm4400 = vmor %vm4398, %vm4399
        %v4401 = vsel %vm4400, %v4392, %v4397
        %v4402 = vrsqrt.pop %v3300
        %v4403 = vmul.f32 %v4402, %v3300
        %v4404 = vmul.f32 %v4403, %v4402
        %v4405 = vmul.f32 0.5, %v4404
        %v4406 = vsub.f32 1.5, %v4405
        %v4407 = vmul.f32 %v4402, %v4406
        %vm4408 = vweird.f32 %v3300
        %vm4409 = vweird.f32 %v4402
        %vm4410 = vmor %vm4408, %vm4409
        %v4411 = vsel %vm4410, %v4402, %v4407
        %v4412 = vrsqrt.pop %v3301
        %v4413 = vmul.f32 %v4412, %v3301
        %v4414 = vmul.f32 %v4413, %v4412
        %v4415 = vmul.f32 0.5, %v4414
        %v4416 = vsub.f32 1.5, %v4415
        %v4417 = vmul.f32 %v4412, %v4416
        %vm4418 = vweird.f32 %v3301
        %vm4419 = vweird.f32 %v4412
        %vm4420 = vmor %vm4418, %vm4419
        %v4421 = vsel %vm4420, %v4412, %v4417
        %v4422 = vrsqrt.pop %v3302
        %v4423 = vmul.f32 %v4422, %v3302
        %v4424 = vmul.f32 %v4423, %v4422
        %v4425 = vmul.f32 0.5, %v4424
        %v4426 = vsub.f32 1.5, %v4425
        %v4427 = vmul.f32 %v4422, %v4426
        %vm4428 = vweird.f32 %v3302
        %vm4429 = vweird.f32 %v4422
        %vm4430 = vmor %vm4428, %vm4429
        %v4431 = vsel %vm4430, %v4422, %v4427
        %v4432 = vrsqrt.pop %v3303
        %v4433 = vmul.f32 %v4432, %v3303
        %v4434 = vmul.f32 %v4433, %v4432
        %v4435 = vmul.f32 0.5, %v4434
        %v4436 = vsub.f32 1.5, %v4435
        %v4437 = vmul.f32 %v4432, %v4436
        %vm4438 = vweird.f32 %v3303
        %vm4439 = vweird.f32 %v4432
        %vm4440 = vmor %vm4438, %vm4439
        %v4441 = vsel %vm4440, %v4432, %v4437
        %v4442 = vrsqrt.pop %v3304
        %v4443 = vmul.f32 %v4442, %v3304
        %v4444 = vmul.f32 %v4443, %v4442
        %v4445 = vmul.f32 0.5, %v4444
        %v4446 = vsub.f32 1.5, %v4445
        %v4447 = vmul.f32 %v4442, %v4446
        %vm4448 = vweird.f32 %v3304
        %vm4449 = vweird.f32 %v4442
        %vm4450 = vmor %vm4448, %vm4449
        %v4451 = vsel %vm4450, %v4442, %v4447
        %v4452 = vrsqrt.pop %v3305
        %v4453 = vmul.f32 %v4452, %v3305
        %v4454 = vmul.f32 %v4453, %v4452
        %v4455 = vmul.f32 0.5, %v4454
        %v4456 = vsub.f32 1.5, %v4455
        %v4457 = vmul.f32 %v4452, %v4456
        %vm4458 = vweird.f32 %v3305
        %vm4459 = vweird.f32 %v4452
        %vm4460 = vmor %vm4458, %vm4459
        %v4461 = vsel %vm4460, %v4452, %v4457
        %v4462 = vrsqrt.pop %v3306
        %v4463 = vmul.f32 %v4462, %v3306
        %v4464 = vmul.f32 %v4463, %v4462
        %v4465 = vmul.f32 0.5, %v4464
        %v4466 = vsub.f32 1.5, %v4465
        %v4467 = vmul.f32 %v4462, %v4466
        %vm4468 = vweird.f32 %v3306
        %vm4469 = vweird.f32 %v4462
        %vm4470 = vmor %vm4468, %vm4469
        %v4471 = vsel %vm4470, %v4462, %v4467
        %v4472 = vrsqrt.pop %v3307
        %v4473 = vmul.f32 %v4472, %v3307
        %v4474 = vmul.f32 %v4473, %v4472
        %v4475 = vmul.f32 0.5, %v4474
        %v4476 = vsub.f32 1.5, %v4475
        %v4477 = vmul.f32 %v4472, %v4476
        %vm4478 = vweird.f32 %v3307
        %vm4479 = vweird.f32 %v4472
        %vm4480 = vmor %vm4478, %vm4479
        %v4481 = vsel %vm4480, %v4472, %v4477
        %v4482 = vrsqrt.pop %v3308
        %v4483 = vmul.f32 %v4482, %v3308
        %v4484 = vmul.f32 %v4483, %v4482
        %v4485 = vmul.f32 0.5, %v4484
        %v4486 = vsub.f32 1.5, %v4485
        %v4487 = vmul.f32 %v4482, %v4486
        %vm4488 = vweird.f32 %v3308
        %vm4489 = vweird.f32 %v4482
        %vm4490 = vmor %vm4488, %vm4489
        %v4491 = vsel %vm4490, %v4482, %v4487
        %v4492 = vrsqrt.pop %v3309
        %v4493 = vmul.f32 %v4492, %v3309
        %v4494 = vmul.f32 %v4493, %v4492
        %v4495 = vmul.f32 0.5, %v4494
        %v4496 = vsub.f32 1.5, %v4495
        %v4497 = vmul.f32 %v4492, %v4496
        %vm4498 = vweird.f32 %v3309
        %vm4499 = vweird.f32 %v4492
        %vm4500 = vmor %vm4498, %vm4499
        %v4501 = vsel %vm4500, %v4492, %v4497
        %v4502 = vrsqrt.pop %v3310
        %v4503 = vmul.f32 %v4502, %v3310
        %v4504 = vmul.f32 %v4503, %v4502
        %v4505 = vmul.f32 0.5, %v4504
        %v4506 = vsub.f32 1.5, %v4505
        %v4507 = vmul.f32 %v4502, %v4506
        %vm4508 = vweird.f32 %v3310
        %vm4509 = vweird.f32 %v4502
        %vm4510 = vmor %vm4508, %vm4509
        %v4511 = vsel %vm4510, %v4502, %v4507
        %v4512 = vrsqrt.pop %v3311
        %v4513 = vmul.f32 %v4512, %v3311
        %v4514 = vmul.f32 %v4513, %v4512
        %v4515 = vmul.f32 0.5, %v4514
        %v4516 = vsub.f32 1.5, %v4515
        %v4517 = vmul.f32 %v4512, %v4516
        %vm4518 = vweird.f32 %v3311
        %vm4519 = vweird.f32 %v4512
        %vm4520 = vmor %vm4518, %vm4519
        %v4521 = vsel %vm4520, %v4512, %v4517
        %v4522 = vrsqrt.pop %v3312
        %v4523 = vmul.f32 %v4522, %v3312
        %v4524 = vmul.f32 %v4523, %v4522
        %v4525 = vmul.f32 0.5, %v4524
        %v4526 = vsub.f32 1.5, %v4525
        %v4527 = vmul.f32 %v4522, %v4526
        %vm4528 = vweird.f32 %v3312
        %vm4529 = vweird.f32 %v4522
        %vm4530 = vmor %vm4528, %vm4529
        %v4531 = vsel %vm4530, %v4522, %v4527
        %v4532 = vrsqrt.pop %v3313
        %v4533 = vmul.f32 %v4532, %v3313
        %v4534 = vmul.f32 %v4533, %v4532
        %v4535 = vmul.f32 0.5, %v4534
        %v4536 = vsub.f32 1.5, %v4535
        %v4537 = vmul.f32 %v4532, %v4536
        %vm4538 = vweird.f32 %v3313
        %vm4539 = vweird.f32 %v4532
        %vm4540 = vmor %vm4538, %vm4539
        %v4541 = vsel %vm4540, %v4532, %v4537
        %v4542 = vrsqrt.pop %v3314
        %v4543 = vmul.f32 %v4542, %v3314
        %v4544 = vmul.f32 %v4543, %v4542
        %v4545 = vmul.f32 0.5, %v4544
        %v4546 = vsub.f32 1.5, %v4545
        %v4547 = vmul.f32 %v4542, %v4546
        %vm4548 = vweird.f32 %v3314
        %vm4549 = vweird.f32 %v4542
        %vm4550 = vmor %vm4548, %vm4549
        %v4551 = vsel %vm4550, %v4542, %v4547
        %v4552 = vrsqrt.pop %v3315
        %v4553 = vmul.f32 %v4552, %v3315
        %v4554 = vmul.f32 %v4553, %v4552
        %v4555 = vmul.f32 0.5, %v4554
        %v4556 = vsub.f32 1.5, %v4555
        %v4557 = vmul.f32 %v4552, %v4556
        %vm4558 = vweird.f32 %v3315
        %vm4559 = vweird.f32 %v4552
        %vm4560 = vmor %vm4558, %vm4559
        %v4561 = vsel %vm4560, %v4552, %v4557
        %v4562 = vrsqrt.pop %v3316
        %v4563 = vmul.f32 %v4562, %v3316
        %v4564 = vmul.f32 %v4563, %v4562
        %v4565 = vmul.f32 0.5, %v4564
        %v4566 = vsub.f32 1.5, %v4565
        %v4567 = vmul.f32 %v4562, %v4566
        %vm4568 = vweird.f32 %v3316
        %vm4569 = vweird.f32 %v4562
        %vm4570 = vmor %vm4568, %vm4569
        %v4571 = vsel %vm4570, %v4562, %v4567
        %v4572 = vrsqrt.pop %v3317
        %v4573 = vmul.f32 %v4572, %v3317
        %v4574 = vmul.f32 %v4573, %v4572
        %v4575 = vmul.f32 0.5, %v4574
        %v4576 = vsub.f32 1.5, %v4575
        %v4577 = vmul.f32 %v4572, %v4576
        %vm4578 = vweird.f32 %v3317
        %vm4579 = vweird.f32 %v4572
        %vm4580 = vmor %vm4578, %vm4579
        %v4581 = vsel %vm4580, %v4572, %v4577
        %v4582 = vrsqrt.pop %v3318
        %v4583 = vmul.f32 %v4582, %v3318
        %v4584 = vmul.f32 %v4583, %v4582
        %v4585 = vmul.f32 0.5, %v4584
        %v4586 = vsub.f32 1.5, %v4585
        %v4587 = vmul.f32 %v4582, %v4586
        %vm4588 = vweird.f32 %v3318
        %vm4589 = vweird.f32 %v4582
        %vm4590 = vmor %vm4588, %vm4589
        %v4591 = vsel %vm4590, %v4582, %v4587
        %v4592 = vrsqrt.pop %v3319
        %v4593 = vmul.f32 %v4592, %v3319
        %v4594 = vmul.f32 %v4593, %v4592
        %v4595 = vmul.f32 0.5, %v4594
        %v4596 = vsub.f32 1.5, %v4595
        %v4597 = vmul.f32 %v4592, %v4596
        %vm4598 = vweird.f32 %v3319
        %vm4599 = vweird.f32 %v4592
        %vm4600 = vmor %vm4598, %vm4599
        %v4601 = vsel %vm4600, %v4592, %v4597
        %v4602 = vrsqrt.pop %v3320
        %v4603 = vmul.f32 %v4602, %v3320
        %v4604 = vmul.f32 %v4603, %v4602
        %v4605 = vmul.f32 0.5, %v4604
        %v4606 = vsub.f32 1.5, %v4605
        %v4607 = vmul.f32 %v4602, %v4606
        %vm4608 = vweird.f32 %v3320
        %vm4609 = vweird.f32 %v4602
        %vm4610 = vmor %vm4608, %vm4609
        %v4611 = vsel %vm4610, %v4602, %v4607
        %v4612 = vrsqrt.pop %v3321
        %v4613 = vmul.f32 %v4612, %v3321
        %v4614 = vmul.f32 %v4613, %v4612
        %v4615 = vmul.f32 0.5, %v4614
        %v4616 = vsub.f32 1.5, %v4615
        %v4617 = vmul.f32 %v4612, %v4616
        %vm4618 = vweird.f32 %v3321
        %vm4619 = vweird.f32 %v4612
        %vm4620 = vmor %vm4618, %vm4619
        %v4621 = vsel %vm4620, %v4612, %v4617
        %v4622 = vrsqrt.pop %v3322
        %v4623 = vmul.f32 %v4622, %v3322
        %v4624 = vmul.f32 %v4623, %v4622
        %v4625 = vmul.f32 0.5, %v4624
        %v4626 = vsub.f32 1.5, %v4625
        %v4627 = vmul.f32 %v4622, %v4626
        %vm4628 = vweird.f32 %v3322
        %vm4629 = vweird.f32 %v4622
        %vm4630 = vmor %vm4628, %vm4629
        %v4631 = vsel %vm4630, %v4622, %v4627
        %v4632 = vrsqrt.pop %v3323
        %v4633 = vmul.f32 %v4632, %v3323
        %v4634 = vmul.f32 %v4633, %v4632
        %v4635 = vmul.f32 0.5, %v4634
        %v4636 = vsub.f32 1.5, %v4635
        %v4637 = vmul.f32 %v4632, %v4636
        %vm4638 = vweird.f32 %v3323
        %vm4639 = vweird.f32 %v4632
        %vm4640 = vmor %vm4638, %vm4639
        %v4641 = vsel %vm4640, %v4632, %v4637
        %v4642 = vrsqrt.pop %v3324
        %v4643 = vmul.f32 %v4642, %v3324
        %v4644 = vmul.f32 %v4643, %v4642
        %v4645 = vmul.f32 0.5, %v4644
        %v4646 = vsub.f32 1.5, %v4645
        %v4647 = vmul.f32 %v4642, %v4646
        %vm4648 = vweird.f32 %v3324
        %vm4649 = vweird.f32 %v4642
        %vm4650 = vmor %vm4648, %vm4649
        %v4651 = vsel %vm4650, %v4642, %v4647
        %v4652 = vrsqrt.pop %v3325
        %v4653 = vmul.f32 %v4652, %v3325
        %v4654 = vmul.f32 %v4653, %v4652
        %v4655 = vmul.f32 0.5, %v4654
        %v4656 = vsub.f32 1.5, %v4655
        %v4657 = vmul.f32 %v4652, %v4656
        %vm4658 = vweird.f32 %v3325
        %vm4659 = vweird.f32 %v4652
        %vm4660 = vmor %vm4658, %vm4659
        %v4661 = vsel %vm4660, %v4652, %v4657
        %v4662 = vrsqrt.pop %v3326
        %v4663 = vmul.f32 %v4662, %v3326
        %v4664 = vmul.f32 %v4663, %v4662
        %v4665 = vmul.f32 0.5, %v4664
        %v4666 = vsub.f32 1.5, %v4665
        %v4667 = vmul.f32 %v4662, %v4666
        %vm4668 = vweird.f32 %v3326
        %vm4669 = vweird.f32 %v4662
        %vm4670 = vmor %vm4668, %vm4669
        %v4671 = vsel %vm4670, %v4662, %v4667
        %v4672 = vrsqrt.pop %v3327
        %v4673 = vmul.f32 %v4672, %v3327
        %v4674 = vmul.f32 %v4673, %v4672
        %v4675 = vmul.f32 0.5, %v4674
        %v4676 = vsub.f32 1.5, %v4675
        %v4677 = vmul.f32 %v4672, %v4676
        %vm4678 = vweird.f32 %v3327
        %vm4679 = vweird.f32 %v4672
        %vm4680 = vmor %vm4678, %vm4679
        %v4681 = vsel %vm4680, %v4672, %v4677
        %v4682 = vrsqrt.pop %v3328
        %v4683 = vmul.f32 %v4682, %v3328
        %v4684 = vmul.f32 %v4683, %v4682
        %v4685 = vmul.f32 0.5, %v4684
        %v4686 = vsub.f32 1.5, %v4685
        %v4687 = vmul.f32 %v4682, %v4686
        %vm4688 = vweird.f32 %v3328
        %vm4689 = vweird.f32 %v4682
        %vm4690 = vmor %vm4688, %vm4689
        %v4691 = vsel %vm4690, %v4682, %v4687
        %v4692 = vrsqrt.pop %v3329
        %v4693 = vmul.f32 %v4692, %v3329
        %v4694 = vmul.f32 %v4693, %v4692
        %v4695 = vmul.f32 0.5, %v4694
        %v4696 = vsub.f32 1.5, %v4695
        %v4697 = vmul.f32 %v4692, %v4696
        %vm4698 = vweird.f32 %v3329
        %vm4699 = vweird.f32 %v4692
        %vm4700 = vmor %vm4698, %vm4699
        %v4701 = vsel %vm4700, %v4692, %v4697
        %v4702 = vrsqrt.pop %v3330
        %v4703 = vmul.f32 %v4702, %v3330
        %v4704 = vmul.f32 %v4703, %v4702
        %v4705 = vmul.f32 0.5, %v4704
        %v4706 = vsub.f32 1.5, %v4705
        %v4707 = vmul.f32 %v4702, %v4706
        %vm4708 = vweird.f32 %v3330
        %vm4709 = vweird.f32 %v4702
        %vm4710 = vmor %vm4708, %vm4709
        %v4711 = vsel %vm4710, %v4702, %v4707
        %v4712 = vrsqrt.pop %v3331
        %v4713 = vmul.f32 %v4712, %v3331
        %v4714 = vmul.f32 %v4713, %v4712
        %v4715 = vmul.f32 0.5, %v4714
        %v4716 = vsub.f32 1.5, %v4715
        %v4717 = vmul.f32 %v4712, %v4716
        %vm4718 = vweird.f32 %v3331
        %vm4719 = vweird.f32 %v4712
        %vm4720 = vmor %vm4718, %vm4719
        %v4721 = vsel %vm4720, %v4712, %v4717
        %v4722 = vrsqrt.pop %v3332
        %v4723 = vmul.f32 %v4722, %v3332
        %v4724 = vmul.f32 %v4723, %v4722
        %v4725 = vmul.f32 0.5, %v4724
        %v4726 = vsub.f32 1.5, %v4725
        %v4727 = vmul.f32 %v4722, %v4726
        %vm4728 = vweird.f32 %v3332
        %vm4729 = vweird.f32 %v4722
        %vm4730 = vmor %vm4728, %vm4729
        %v4731 = vsel %vm4730, %v4722, %v4727
        %v4732 = vrsqrt.pop %v3333
        %v4733 = vmul.f32 %v4732, %v3333
        %v4734 = vmul.f32 %v4733, %v4732
        %v4735 = vmul.f32 0.5, %v4734
        %v4736 = vsub.f32 1.5, %v4735
        %v4737 = vmul.f32 %v4732, %v4736
        %vm4738 = vweird.f32 %v3333
        %vm4739 = vweird.f32 %v4732
        %vm4740 = vmor %vm4738, %vm4739
        %v4741 = vsel %vm4740, %v4732, %v4737
        %v4742 = vrsqrt.pop %v3334
        %v4743 = vmul.f32 %v4742, %v3334
        %v4744 = vmul.f32 %v4743, %v4742
        %v4745 = vmul.f32 0.5, %v4744
        %v4746 = vsub.f32 1.5, %v4745
        %v4747 = vmul.f32 %v4742, %v4746
        %vm4748 = vweird.f32 %v3334
        %vm4749 = vweird.f32 %v4742
        %vm4750 = vmor %vm4748, %vm4749
        %v4751 = vsel %vm4750, %v4742, %v4747
        %v4752 = vrsqrt.pop %v3335
        %v4753 = vmul.f32 %v4752, %v3335
        %v4754 = vmul.f32 %v4753, %v4752
        %v4755 = vmul.f32 0.5, %v4754
        %v4756 = vsub.f32 1.5, %v4755
        %v4757 = vmul.f32 %v4752, %v4756
        %vm4758 = vweird.f32 %v3335
        %vm4759 = vweird.f32 %v4752
        %vm4760 = vmor %vm4758, %vm4759
        %v4761 = vsel %vm4760, %v4752, %v4757
        %v4762 = vrsqrt.pop %v3336
        %v4763 = vmul.f32 %v4762, %v3336
        %v4764 = vmul.f32 %v4763, %v4762
        %v4765 = vmul.f32 0.5, %v4764
        %v4766 = vsub.f32 1.5, %v4765
        %v4767 = vmul.f32 %v4762, %v4766
        %vm4768 = vweird.f32 %v3336
        %vm4769 = vweird.f32 %v4762
        %vm4770 = vmor %vm4768, %vm4769
        %v4771 = vsel %vm4770, %v4762, %v4767
        %v4772 = vrsqrt.pop %v3337
        %v4773 = vmul.f32 %v4772, %v3337
        %v4774 = vmul.f32 %v4773, %v4772
        %v4775 = vmul.f32 0.5, %v4774
        %v4776 = vsub.f32 1.5, %v4775
        %v4777 = vmul.f32 %v4772, %v4776
        %vm4778 = vweird.f32 %v3337
        %vm4779 = vweird.f32 %v4772
        %vm4780 = vmor %vm4778, %vm4779
        %v4781 = vsel %vm4780, %v4772, %v4777
        %v4782 = vrsqrt.pop %v3338
        %v4783 = vmul.f32 %v4782, %v3338
        %v4784 = vmul.f32 %v4783, %v4782
        %v4785 = vmul.f32 0.5, %v4784
        %v4786 = vsub.f32 1.5, %v4785
        %v4787 = vmul.f32 %v4782, %v4786
        %vm4788 = vweird.f32 %v3338
        %vm4789 = vweird.f32 %v4782
        %vm4790 = vmor %vm4788, %vm4789
        %v4791 = vsel %vm4790, %v4782, %v4787
        %v4792 = vrsqrt.pop %v3339
        %v4793 = vmul.f32 %v4792, %v3339
        %v4794 = vmul.f32 %v4793, %v4792
        %v4795 = vmul.f32 0.5, %v4794
        %v4796 = vsub.f32 1.5, %v4795
        %v4797 = vmul.f32 %v4792, %v4796
        %vm4798 = vweird.f32 %v3339
        %vm4799 = vweird.f32 %v4792
        %vm4800 = vmor %vm4798, %vm4799
        %v4801 = vsel %vm4800, %v4792, %v4797
        %v4802 = vrsqrt.pop %v3340
        %v4803 = vmul.f32 %v4802, %v3340
        %v4804 = vmul.f32 %v4803, %v4802
        %v4805 = vmul.f32 0.5, %v4804
        %v4806 = vsub.f32 1.5, %v4805
        %v4807 = vmul.f32 %v4802, %v4806
        %vm4808 = vweird.f32 %v3340
        %vm4809 = vweird.f32 %v4802
        %vm4810 = vmor %vm4808, %vm4809
        %v4811 = vsel %vm4810, %v4802, %v4807
        %v4812 = vrsqrt.pop %v3341
        %v4813 = vmul.f32 %v4812, %v3341
        %v4814 = vmul.f32 %v4813, %v4812
        %v4815 = vmul.f32 0.5, %v4814
        %v4816 = vsub.f32 1.5, %v4815
        %v4817 = vmul.f32 %v4812, %v4816
        %vm4818 = vweird.f32 %v3341
        %vm4819 = vweird.f32 %v4812
        %vm4820 = vmor %vm4818, %vm4819
        %v4821 = vsel %vm4820, %v4812, %v4817
        %v4822 = vrsqrt.pop %v3342
        %v4823 = vmul.f32 %v4822, %v3342
        %v4824 = vmul.f32 %v4823, %v4822
        %v4825 = vmul.f32 0.5, %v4824
        %v4826 = vsub.f32 1.5, %v4825
        %v4827 = vmul.f32 %v4822, %v4826
        %vm4828 = vweird.f32 %v3342
        %vm4829 = vweird.f32 %v4822
        %vm4830 = vmor %vm4828, %vm4829
        %v4831 = vsel %vm4830, %v4822, %v4827
        %v4832 = vrsqrt.pop %v3343
        %v4833 = vmul.f32 %v4832, %v3343
        %v4834 = vmul.f32 %v4833, %v4832
        %v4835 = vmul.f32 0.5, %v4834
        %v4836 = vsub.f32 1.5, %v4835
        %v4837 = vmul.f32 %v4832, %v4836
        %vm4838 = vweird.f32 %v3343
        %vm4839 = vweird.f32 %v4832
        %vm4840 = vmor %vm4838, %vm4839
        %v4841 = vsel %vm4840, %v4832, %v4837
        %v4842 = vrsqrt.pop %v3344
        %v4843 = vmul.f32 %v4842, %v3344
        %v4844 = vmul.f32 %v4843, %v4842
        %v4845 = vmul.f32 0.5, %v4844
        %v4846 = vsub.f32 1.5, %v4845
        %v4847 = vmul.f32 %v4842, %v4846
        %vm4848 = vweird.f32 %v3344
        %vm4849 = vweird.f32 %v4842
        %vm4850 = vmor %vm4848, %vm4849
        %v4851 = vsel %vm4850, %v4842, %v4847
        %v4852 = vrsqrt.pop %v3345
        %v4853 = vmul.f32 %v4852, %v3345
        %v4854 = vmul.f32 %v4853, %v4852
        %v4855 = vmul.f32 0.5, %v4854
        %v4856 = vsub.f32 1.5, %v4855
        %v4857 = vmul.f32 %v4852, %v4856
        %vm4858 = vweird.f32 %v3345
        %vm4859 = vweird.f32 %v4852
        %vm4860 = vmor %vm4858, %vm4859
        %v4861 = vsel %vm4860, %v4852, %v4857
        %v4862 = vrsqrt.pop %v3346
        %v4863 = vmul.f32 %v4862, %v3346
        %v4864 = vmul.f32 %v4863, %v4862
        %v4865 = vmul.f32 0.5, %v4864
        %v4866 = vsub.f32 1.5, %v4865
        %v4867 = vmul.f32 %v4862, %v4866
        %vm4868 = vweird.f32 %v3346
        %vm4869 = vweird.f32 %v4862
        %vm4870 = vmor %vm4868, %vm4869
        %v4871 = vsel %vm4870, %v4862, %v4867
        %v4872 = vrsqrt.pop %v3347
        %v4873 = vmul.f32 %v4872, %v3347
        %v4874 = vmul.f32 %v4873, %v4872
        %v4875 = vmul.f32 0.5, %v4874
        %v4876 = vsub.f32 1.5, %v4875
        %v4877 = vmul.f32 %v4872, %v4876
        %vm4878 = vweird.f32 %v3347
        %vm4879 = vweird.f32 %v4872
        %vm4880 = vmor %vm4878, %vm4879
        %v4881 = vsel %vm4880, %v4872, %v4877
        %v4882 = vrsqrt.pop %v3348
        %v4883 = vmul.f32 %v4882, %v3348
        %v4884 = vmul.f32 %v4883, %v4882
        %v4885 = vmul.f32 0.5, %v4884
        %v4886 = vsub.f32 1.5, %v4885
        %v4887 = vmul.f32 %v4882, %v4886
        %vm4888 = vweird.f32 %v3348
        %vm4889 = vweird.f32 %v4882
        %vm4890 = vmor %vm4888, %vm4889
        %v4891 = vsel %vm4890, %v4882, %v4887
        %v4892 = vrsqrt.pop %v3349
        %v4893 = vmul.f32 %v4892, %v3349
        %v4894 = vmul.f32 %v4893, %v4892
        %v4895 = vmul.f32 0.5, %v4894
        %v4896 = vsub.f32 1.5, %v4895
        %v4897 = vmul.f32 %v4892, %v4896
        %vm4898 = vweird.f32 %v3349
        %vm4899 = vweird.f32 %v4892
        %vm4900 = vmor %vm4898, %vm4899
        %v4901 = vsel %vm4900, %v4892, %v4897
        %v4902 = vrsqrt.pop %v3350
        %v4903 = vmul.f32 %v4902, %v3350
        %v4904 = vmul.f32 %v4903, %v4902
        %v4905 = vmul.f32 0.5, %v4904
        %v4906 = vsub.f32 1.5, %v4905
        %v4907 = vmul.f32 %v4902, %v4906
        %vm4908 = vweird.f32 %v3350
        %vm4909 = vweird.f32 %v4902
        %vm4910 = vmor %vm4908, %vm4909
        %v4911 = vsel %vm4910, %v4902, %v4907
        %v4912 = vrsqrt.pop %v3351
        %v4913 = vmul.f32 %v4912, %v3351
        %v4914 = vmul.f32 %v4913, %v4912
        %v4915 = vmul.f32 0.5, %v4914
        %v4916 = vsub.f32 1.5, %v4915
        %v4917 = vmul.f32 %v4912, %v4916
        %vm4918 = vweird.f32 %v3351
        %vm4919 = vweird.f32 %v4912
        %vm4920 = vmor %vm4918, %vm4919
        %v4921 = vsel %vm4920, %v4912, %v4917
        %v4922 = vrsqrt.pop %v3352
        %v4923 = vmul.f32 %v4922, %v3352
        %v4924 = vmul.f32 %v4923, %v4922
        %v4925 = vmul.f32 0.5, %v4924
        %v4926 = vsub.f32 1.5, %v4925
        %v4927 = vmul.f32 %v4922, %v4926
        %vm4928 = vweird.f32 %v3352
        %vm4929 = vweird.f32 %v4922
        %vm4930 = vmor %vm4928, %vm4929
        %v4931 = vsel %vm4930, %v4922, %v4927
        %v4932 = vrsqrt.pop %v3353
        %v4933 = vmul.f32 %v4932, %v3353
        %v4934 = vmul.f32 %v4933, %v4932
        %v4935 = vmul.f32 0.5, %v4934
        %v4936 = vsub.f32 1.5, %v4935
        %v4937 = vmul.f32 %v4932, %v4936
        %vm4938 = vweird.f32 %v3353
        %vm4939 = vweird.f32 %v4932
        %vm4940 = vmor %vm4938, %vm4939
        %v4941 = vsel %vm4940, %v4932, %v4937
        %v4942 = vrsqrt.pop %v3354
        %v4943 = vmul.f32 %v4942, %v3354
        %v4944 = vmul.f32 %v4943, %v4942
        %v4945 = vmul.f32 0.5, %v4944
        %v4946 = vsub.f32 1.5, %v4945
        %v4947 = vmul.f32 %v4942, %v4946
        %vm4948 = vweird.f32 %v3354
        %vm4949 = vweird.f32 %v4942
        %vm4950 = vmor %vm4948, %vm4949
        %v4951 = vsel %vm4950, %v4942, %v4947
        %v4952 = vrsqrt.pop %v3355
        %v4953 = vmul.f32 %v4952, %v3355
        %v4954 = vmul.f32 %v4953, %v4952
        %v4955 = vmul.f32 0.5, %v4954
        %v4956 = vsub.f32 1.5, %v4955
        %v4957 = vmul.f32 %v4952, %v4956
        %vm4958 = vweird.f32 %v3355
        %vm4959 = vweird.f32 %v4952
        %vm4960 = vmor %vm4958, %vm4959
        %v4961 = vsel %vm4960, %v4952, %v4957
        %v4962 = vrsqrt.pop %v3356
        %v4963 = vmul.f32 %v4962, %v3356
        %v4964 = vmul.f32 %v4963, %v4962
        %v4965 = vmul.f32 0.5, %v4964
        %v4966 = vsub.f32 1.5, %v4965
        %v4967 = vmul.f32 %v4962, %v4966
        %vm4968 = vweird.f32 %v3356
        %vm4969 = vweird.f32 %v4962
        %vm4970 = vmor %vm4968, %vm4969
        %v4971 = vsel %vm4970, %v4962, %v4967
        %v4972 = vrsqrt.pop %v3357
        %v4973 = vmul.f32 %v4972, %v3357
        %v4974 = vmul.f32 %v4973, %v4972
        %v4975 = vmul.f32 0.5, %v4974
        %v4976 = vsub.f32 1.5, %v4975
        %v4977 = vmul.f32 %v4972, %v4976
        %vm4978 = vweird.f32 %v3357
        %vm4979 = vweird.f32 %v4972
        %vm4980 = vmor %vm4978, %vm4979
        %v4981 = vsel %vm4980, %v4972, %v4977
        %v4982 = vrsqrt.pop %v3358
        %v4983 = vmul.f32 %v4982, %v3358
        %v4984 = vmul.f32 %v4983, %v4982
        %v4985 = vmul.f32 0.5, %v4984
        %v4986 = vsub.f32 1.5, %v4985
        %v4987 = vmul.f32 %v4982, %v4986
        %vm4988 = vweird.f32 %v3358
        %vm4989 = vweird.f32 %v4982
        %vm4990 = vmor %vm4988, %vm4989
        %v4991 = vsel %vm4990, %v4982, %v4987
        %v4992 = vrsqrt.pop %v3359
        %v4993 = vmul.f32 %v4992, %v3359
        %v4994 = vmul.f32 %v4993, %v4992
        %v4995 = vmul.f32 0.5, %v4994
        %v4996 = vsub.f32 1.5, %v4995
        %v4997 = vmul.f32 %v4992, %v4996
        %vm4998 = vweird.f32 %v3359
        %vm4999 = vweird.f32 %v4992
        %vm5000 = vmor %vm4998, %vm4999
        %v5001 = vsel %vm5000, %v4992, %v4997
        %v5002 = vrsqrt.pop %v3360
        %v5003 = vmul.f32 %v5002, %v3360
        %v5004 = vmul.f32 %v5003, %v5002
        %v5005 = vmul.f32 0.5, %v5004
        %v5006 = vsub.f32 1.5, %v5005
        %v5007 = vmul.f32 %v5002, %v5006
        %vm5008 = vweird.f32 %v3360
        %vm5009 = vweird.f32 %v5002
        %vm5010 = vmor %vm5008, %vm5009
        %v5011 = vsel %vm5010, %v5002, %v5007
        %v5012 = vrsqrt.pop %v3361
        %v5013 = vmul.f32 %v5012, %v3361
        %v5014 = vmul.f32 %v5013, %v5012
        %v5015 = vmul.f32 0.5, %v5014
        %v5016 = vsub.f32 1.5, %v5015
        %v5017 = vmul.f32 %v5012, %v5016
        %vm5018 = vweird.f32 %v3361
        %vm5019 = vweird.f32 %v5012
        %vm5020 = vmor %vm5018, %vm5019
        %v5021 = vsel %vm5020, %v5012, %v5017
        %v5022 = vrsqrt.pop %v3362
        %v5023 = vmul.f32 %v5022, %v3362
        %v5024 = vmul.f32 %v5023, %v5022
        %v5025 = vmul.f32 0.5, %v5024
        %v5026 = vsub.f32 1.5, %v5025
        %v5027 = vmul.f32 %v5022, %v5026
        %vm5028 = vweird.f32 %v3362
        %vm5029 = vweird.f32 %v5022
        %vm5030 = vmor %vm5028, %vm5029
        %v5031 = vsel %vm5030, %v5022, %v5027
        %v5032 = vrsqrt.pop %v3363
        %v5033 = vmul.f32 %v5032, %v3363
        %v5034 = vmul.f32 %v5033, %v5032
        %v5035 = vmul.f32 0.5, %v5034
        %v5036 = vsub.f32 1.5, %v5035
        %v5037 = vmul.f32 %v5032, %v5036
        %vm5038 = vweird.f32 %v3363
        %vm5039 = vweird.f32 %v5032
        %vm5040 = vmor %vm5038, %vm5039
        %v5041 = vsel %vm5040, %v5032, %v5037
        %v5042 = vrsqrt.pop %v3364
        %v5043 = vmul.f32 %v5042, %v3364
        %v5044 = vmul.f32 %v5043, %v5042
        %v5045 = vmul.f32 0.5, %v5044
        %v5046 = vsub.f32 1.5, %v5045
        %v5047 = vmul.f32 %v5042, %v5046
        %vm5048 = vweird.f32 %v3364
        %vm5049 = vweird.f32 %v5042
        %vm5050 = vmor %vm5048, %vm5049
        %v5051 = vsel %vm5050, %v5042, %v5047
        %v5052 = vrsqrt.pop %v3365
        %v5053 = vmul.f32 %v5052, %v3365
        %v5054 = vmul.f32 %v5053, %v5052
        %v5055 = vmul.f32 0.5, %v5054
        %v5056 = vsub.f32 1.5, %v5055
        %v5057 = vmul.f32 %v5052, %v5056
        %vm5058 = vweird.f32 %v3365
        %vm5059 = vweird.f32 %v5052
        %vm5060 = vmor %vm5058, %vm5059
        %v5061 = vsel %vm5060, %v5052, %v5057
        %v5062 = vrsqrt.pop %v3366
        %v5063 = vmul.f32 %v5062, %v3366
        %v5064 = vmul.f32 %v5063, %v5062
        %v5065 = vmul.f32 0.5, %v5064
        %v5066 = vsub.f32 1.5, %v5065
        %v5067 = vmul.f32 %v5062, %v5066
        %vm5068 = vweird.f32 %v3366
        %vm5069 = vweird.f32 %v5062
        %vm5070 = vmor %vm5068, %vm5069
        %v5071 = vsel %vm5070, %v5062, %v5067
        %v5072 = vrsqrt.pop %v3367
        %v5073 = vmul.f32 %v5072, %v3367
        %v5074 = vmul.f32 %v5073, %v5072
        %v5075 = vmul.f32 0.5, %v5074
        %v5076 = vsub.f32 1.5, %v5075
        %v5077 = vmul.f32 %v5072, %v5076
        %vm5078 = vweird.f32 %v3367
        %vm5079 = vweird.f32 %v5072
        %vm5080 = vmor %vm5078, %vm5079
        %v5081 = vsel %vm5080, %v5072, %v5077
        %v5082 = vrsqrt.pop %v3368
        %v5083 = vmul.f32 %v5082, %v3368
        %v5084 = vmul.f32 %v5083, %v5082
        %v5085 = vmul.f32 0.5, %v5084
        %v5086 = vsub.f32 1.5, %v5085
        %v5087 = vmul.f32 %v5082, %v5086
        %vm5088 = vweird.f32 %v3368
        %vm5089 = vweird.f32 %v5082
        %vm5090 = vmor %vm5088, %vm5089
        %v5091 = vsel %vm5090, %v5082, %v5087
        %v5092 = vrsqrt.pop %v3369
        %v5093 = vmul.f32 %v5092, %v3369
        %v5094 = vmul.f32 %v5093, %v5092
        %v5095 = vmul.f32 0.5, %v5094
        %v5096 = vsub.f32 1.5, %v5095
        %v5097 = vmul.f32 %v5092, %v5096
        %vm5098 = vweird.f32 %v3369
        %vm5099 = vweird.f32 %v5092
        %vm5100 = vmor %vm5098, %vm5099
        %v5101 = vsel %vm5100, %v5092, %v5097
        %v5102 = vrsqrt.pop %v3370
        %v5103 = vmul.f32 %v5102, %v3370
        %v5104 = vmul.f32 %v5103, %v5102
        %v5105 = vmul.f32 0.5, %v5104
        %v5106 = vsub.f32 1.5, %v5105
        %v5107 = vmul.f32 %v5102, %v5106
        %vm5108 = vweird.f32 %v3370
        %vm5109 = vweird.f32 %v5102
        %vm5110 = vmor %vm5108, %vm5109
        %v5111 = vsel %vm5110, %v5102, %v5107
        %v5112 = vrsqrt.pop %v3371
        %v5113 = vmul.f32 %v5112, %v3371
        %v5114 = vmul.f32 %v5113, %v5112
        %v5115 = vmul.f32 0.5, %v5114
        %v5116 = vsub.f32 1.5, %v5115
        %v5117 = vmul.f32 %v5112, %v5116
        %vm5118 = vweird.f32 %v3371
        %vm5119 = vweird.f32 %v5112
        %vm5120 = vmor %vm5118, %vm5119
        %v5121 = vsel %vm5120, %v5112, %v5117
        %v5122 = vrsqrt.pop %v3372
        %v5123 = vmul.f32 %v5122, %v3372
        %v5124 = vmul.f32 %v5123, %v5122
        %v5125 = vmul.f32 0.5, %v5124
        %v5126 = vsub.f32 1.5, %v5125
        %v5127 = vmul.f32 %v5122, %v5126
        %vm5128 = vweird.f32 %v3372
        %vm5129 = vweird.f32 %v5122
        %vm5130 = vmor %vm5128, %vm5129
        %v5131 = vsel %vm5130, %v5122, %v5127
        %v5132 = vrsqrt.pop %v3373
        %v5133 = vmul.f32 %v5132, %v3373
        %v5134 = vmul.f32 %v5133, %v5132
        %v5135 = vmul.f32 0.5, %v5134
        %v5136 = vsub.f32 1.5, %v5135
        %v5137 = vmul.f32 %v5132, %v5136
        %vm5138 = vweird.f32 %v3373
        %vm5139 = vweird.f32 %v5132
        %vm5140 = vmor %vm5138, %vm5139
        %v5141 = vsel %vm5140, %v5132, %v5137
        %v5142 = vrsqrt.pop %v3374
        %v5143 = vmul.f32 %v5142, %v3374
        %v5144 = vmul.f32 %v5143, %v5142
        %v5145 = vmul.f32 0.5, %v5144
        %v5146 = vsub.f32 1.5, %v5145
        %v5147 = vmul.f32 %v5142, %v5146
        %vm5148 = vweird.f32 %v3374
        %vm5149 = vweird.f32 %v5142
        %vm5150 = vmor %vm5148, %vm5149
        %v5151 = vsel %vm5150, %v5142, %v5147
        %v5152 = vrsqrt.pop %v3375
        %v5153 = vmul.f32 %v5152, %v3375
        %v5154 = vmul.f32 %v5153, %v5152
        %v5155 = vmul.f32 0.5, %v5154
        %v5156 = vsub.f32 1.5, %v5155
        %v5157 = vmul.f32 %v5152, %v5156
        %vm5158 = vweird.f32 %v3375
        %vm5159 = vweird.f32 %v5152
        %vm5160 = vmor %vm5158, %vm5159
        %v5161 = vsel %vm5160, %v5152, %v5157
        %v5162 = vrsqrt.pop %v3376
        %v5163 = vmul.f32 %v5162, %v3376
        %v5164 = vmul.f32 %v5163, %v5162
        %v5165 = vmul.f32 0.5, %v5164
        %v5166 = vsub.f32 1.5, %v5165
        %v5167 = vmul.f32 %v5162, %v5166
        %vm5168 = vweird.f32 %v3376
        %vm5169 = vweird.f32 %v5162
        %vm5170 = vmor %vm5168, %vm5169
        %v5171 = vsel %vm5170, %v5162, %v5167
        %v5172 = vrsqrt.pop %v3377
        %v5173 = vmul.f32 %v5172, %v3377
        %v5174 = vmul.f32 %v5173, %v5172
        %v5175 = vmul.f32 0.5, %v5174
        %v5176 = vsub.f32 1.5, %v5175
        %v5177 = vmul.f32 %v5172, %v5176
        %vm5178 = vweird.f32 %v3377
        %vm5179 = vweird.f32 %v5172
        %vm5180 = vmor %vm5178, %vm5179
        %v5181 = vsel %vm5180, %v5172, %v5177
        %v5182 = vrsqrt.pop %v3378
        %v5183 = vmul.f32 %v5182, %v3378
        %v5184 = vmul.f32 %v5183, %v5182
        %v5185 = vmul.f32 0.5, %v5184
        %v5186 = vsub.f32 1.5, %v5185
        %v5187 = vmul.f32 %v5182, %v5186
        %vm5188 = vweird.f32 %v3378
        %vm5189 = vweird.f32 %v5182
        %vm5190 = vmor %vm5188, %vm5189
        %v5191 = vsel %vm5190, %v5182, %v5187
        %v5192 = vrsqrt.pop %v3379
        %v5193 = vmul.f32 %v5192, %v3379
        %v5194 = vmul.f32 %v5193, %v5192
        %v5195 = vmul.f32 0.5, %v5194
        %v5196 = vsub.f32 1.5, %v5195
        %v5197 = vmul.f32 %v5192, %v5196
        %vm5198 = vweird.f32 %v3379
        %vm5199 = vweird.f32 %v5192
        %vm5200 = vmor %vm5198, %vm5199
        %v5201 = vsel %vm5200, %v5192, %v5197
        %v5202 = vrsqrt.pop %v3380
        %v5203 = vmul.f32 %v5202, %v3380
        %v5204 = vmul.f32 %v5203, %v5202
        %v5205 = vmul.f32 0.5, %v5204
        %v5206 = vsub.f32 1.5, %v5205
        %v5207 = vmul.f32 %v5202, %v5206
        %vm5208 = vweird.f32 %v3380
        %vm5209 = vweird.f32 %v5202
        %vm5210 = vmor %vm5208, %vm5209
        %v5211 = vsel %vm5210, %v5202, %v5207
        %v5212 = vrsqrt.pop %v3381
        %v5213 = vmul.f32 %v5212, %v3381
        %v5214 = vmul.f32 %v5213, %v5212
        %v5215 = vmul.f32 0.5, %v5214
        %v5216 = vsub.f32 1.5, %v5215
        %v5217 = vmul.f32 %v5212, %v5216
        %vm5218 = vweird.f32 %v3381
        %vm5219 = vweird.f32 %v5212
        %vm5220 = vmor %vm5218, %vm5219
        %v5221 = vsel %vm5220, %v5212, %v5217
        %v5222 = vrsqrt.pop %v3382
        %v5223 = vmul.f32 %v5222, %v3382
        %v5224 = vmul.f32 %v5223, %v5222
        %v5225 = vmul.f32 0.5, %v5224
        %v5226 = vsub.f32 1.5, %v5225
        %v5227 = vmul.f32 %v5222, %v5226
        %vm5228 = vweird.f32 %v3382
        %vm5229 = vweird.f32 %v5222
        %vm5230 = vmor %vm5228, %vm5229
        %v5231 = vsel %vm5230, %v5222, %v5227
        %v5232 = vrsqrt.pop %v3383
        %v5233 = vmul.f32 %v5232, %v3383
        %v5234 = vmul.f32 %v5233, %v5232
        %v5235 = vmul.f32 0.5, %v5234
        %v5236 = vsub.f32 1.5, %v5235
        %v5237 = vmul.f32 %v5232, %v5236
        %vm5238 = vweird.f32 %v3383
        %vm5239 = vweird.f32 %v5232
        %vm5240 = vmor %vm5238, %vm5239
        %v5241 = vsel %vm5240, %v5232, %v5237
        %v5242 = vrsqrt.pop %v3384
        %v5243 = vmul.f32 %v5242, %v3384
        %v5244 = vmul.f32 %v5243, %v5242
        %v5245 = vmul.f32 0.5, %v5244
        %v5246 = vsub.f32 1.5, %v5245
        %v5247 = vmul.f32 %v5242, %v5246
        %vm5248 = vweird.f32 %v3384
        %vm5249 = vweird.f32 %v5242
        %vm5250 = vmor %vm5248, %vm5249
        %v5251 = vsel %vm5250, %v5242, %v5247
        %v5252 = vrsqrt.pop %v3385
        %v5253 = vmul.f32 %v5252, %v3385
        %v5254 = vmul.f32 %v5253, %v5252
        %v5255 = vmul.f32 0.5, %v5254
        %v5256 = vsub.f32 1.5, %v5255
        %v5257 = vmul.f32 %v5252, %v5256
        %vm5258 = vweird.f32 %v3385
        %vm5259 = vweird.f32 %v5252
        %vm5260 = vmor %vm5258, %vm5259
        %v5261 = vsel %vm5260, %v5252, %v5257
        %v5262 = vrsqrt.pop %v3386
        %v5263 = vmul.f32 %v5262, %v3386
        %v5264 = vmul.f32 %v5263, %v5262
        %v5265 = vmul.f32 0.5, %v5264
        %v5266 = vsub.f32 1.5, %v5265
        %v5267 = vmul.f32 %v5262, %v5266
        %vm5268 = vweird.f32 %v3386
        %vm5269 = vweird.f32 %v5262
        %vm5270 = vmor %vm5268, %vm5269
        %v5271 = vsel %vm5270, %v5262, %v5267
        %v5272 = vrsqrt.pop %v3387
        %v5273 = vmul.f32 %v5272, %v3387
        %v5274 = vmul.f32 %v5273, %v5272
        %v5275 = vmul.f32 0.5, %v5274
        %v5276 = vsub.f32 1.5, %v5275
        %v5277 = vmul.f32 %v5272, %v5276
        %vm5278 = vweird.f32 %v3387
        %vm5279 = vweird.f32 %v5272
        %vm5280 = vmor %vm5278, %vm5279
        %v5281 = vsel %vm5280, %v5272, %v5277
        %v5282 = vrsqrt.pop %v3388
        %v5283 = vmul.f32 %v5282, %v3388
        %v5284 = vmul.f32 %v5283, %v5282
        %v5285 = vmul.f32 0.5, %v5284
        %v5286 = vsub.f32 1.5, %v5285
        %v5287 = vmul.f32 %v5282, %v5286
        %vm5288 = vweird.f32 %v3388
        %vm5289 = vweird.f32 %v5282
        %vm5290 = vmor %vm5288, %vm5289
        %v5291 = vsel %vm5290, %v5282, %v5287
        %v5292 = vrsqrt.pop %v3389
        %v5293 = vmul.f32 %v5292, %v3389
        %v5294 = vmul.f32 %v5293, %v5292
        %v5295 = vmul.f32 0.5, %v5294
        %v5296 = vsub.f32 1.5, %v5295
        %v5297 = vmul.f32 %v5292, %v5296
        %vm5298 = vweird.f32 %v3389
        %vm5299 = vweird.f32 %v5292
        %vm5300 = vmor %vm5298, %vm5299
        %v5301 = vsel %vm5300, %v5292, %v5297
        %v5302 = vrsqrt.pop %v3390
        %v5303 = vmul.f32 %v5302, %v3390
        %v5304 = vmul.f32 %v5303, %v5302
        %v5305 = vmul.f32 0.5, %v5304
        %v5306 = vsub.f32 1.5, %v5305
        %v5307 = vmul.f32 %v5302, %v5306
        %vm5308 = vweird.f32 %v3390
        %vm5309 = vweird.f32 %v5302
        %vm5310 = vmor %vm5308, %vm5309
        %v5311 = vsel %vm5310, %v5302, %v5307
        %v5312 = vrsqrt.pop %v3391
        %v5313 = vmul.f32 %v5312, %v3391
        %v5314 = vmul.f32 %v5313, %v5312
        %v5315 = vmul.f32 0.5, %v5314
        %v5316 = vsub.f32 1.5, %v5315
        %v5317 = vmul.f32 %v5312, %v5316
        %vm5318 = vweird.f32 %v3391
        %vm5319 = vweird.f32 %v5312
        %vm5320 = vmor %vm5318, %vm5319
        %v5321 = vsel %vm5320, %v5312, %v5317
        %v5322 = vrsqrt.pop %v3392
        %v5323 = vmul.f32 %v5322, %v3392
        %v5324 = vmul.f32 %v5323, %v5322
        %v5325 = vmul.f32 0.5, %v5324
        %v5326 = vsub.f32 1.5, %v5325
        %v5327 = vmul.f32 %v5322, %v5326
        %vm5328 = vweird.f32 %v3392
        %vm5329 = vweird.f32 %v5322
        %vm5330 = vmor %vm5328, %vm5329
        %v5331 = vsel %vm5330, %v5322, %v5327
        %v5332 = vrsqrt.pop %v3393
        %v5333 = vmul.f32 %v5332, %v3393
        %v5334 = vmul.f32 %v5333, %v5332
        %v5335 = vmul.f32 0.5, %v5334
        %v5336 = vsub.f32 1.5, %v5335
        %v5337 = vmul.f32 %v5332, %v5336
        %vm5338 = vweird.f32 %v3393
        %vm5339 = vweird.f32 %v5332
        %vm5340 = vmor %vm5338, %vm5339
        %v5341 = vsel %vm5340, %v5332, %v5337
        %v5342 = vrsqrt.pop %v3394
        %v5343 = vmul.f32 %v5342, %v3394
        %v5344 = vmul.f32 %v5343, %v5342
        %v5345 = vmul.f32 0.5, %v5344
        %v5346 = vsub.f32 1.5, %v5345
        %v5347 = vmul.f32 %v5342, %v5346
        %vm5348 = vweird.f32 %v3394
        %vm5349 = vweird.f32 %v5342
        %vm5350 = vmor %vm5348, %vm5349
        %v5351 = vsel %vm5350, %v5342, %v5347
        %v5352 = vrsqrt.pop %v3395
        %v5353 = vmul.f32 %v5352, %v3395
        %v5354 = vmul.f32 %v5353, %v5352
        %v5355 = vmul.f32 0.5, %v5354
        %v5356 = vsub.f32 1.5, %v5355
        %v5357 = vmul.f32 %v5352, %v5356
        %vm5358 = vweird.f32 %v3395
        %vm5359 = vweird.f32 %v5352
        %vm5360 = vmor %vm5358, %vm5359
        %v5361 = vsel %vm5360, %v5352, %v5357
        %v5362 = vrsqrt.pop %v3396
        %v5363 = vmul.f32 %v5362, %v3396
        %v5364 = vmul.f32 %v5363, %v5362
        %v5365 = vmul.f32 0.5, %v5364
        %v5366 = vsub.f32 1.5, %v5365
        %v5367 = vmul.f32 %v5362, %v5366
        %vm5368 = vweird.f32 %v3396
        %vm5369 = vweird.f32 %v5362
        %vm5370 = vmor %vm5368, %vm5369
        %v5371 = vsel %vm5370, %v5362, %v5367
        %v5372 = vrsqrt.pop %v3397
        %v5373 = vmul.f32 %v5372, %v3397
        %v5374 = vmul.f32 %v5373, %v5372
        %v5375 = vmul.f32 0.5, %v5374
        %v5376 = vsub.f32 1.5, %v5375
        %v5377 = vmul.f32 %v5372, %v5376
        %vm5378 = vweird.f32 %v3397
        %vm5379 = vweird.f32 %v5372
        %vm5380 = vmor %vm5378, %vm5379
        %v5381 = vsel %vm5380, %v5372, %v5377
        %v5382 = vrsqrt.pop %v3398
        %v5383 = vmul.f32 %v5382, %v3398
        %v5384 = vmul.f32 %v5383, %v5382
        %v5385 = vmul.f32 0.5, %v5384
        %v5386 = vsub.f32 1.5, %v5385
        %v5387 = vmul.f32 %v5382, %v5386
        %vm5388 = vweird.f32 %v3398
        %vm5389 = vweird.f32 %v5382
        %vm5390 = vmor %vm5388, %vm5389
        %v5391 = vsel %vm5390, %v5382, %v5387
        %v5392 = vrsqrt.pop %v3399
        %v5393 = vmul.f32 %v5392, %v3399
        %v5394 = vmul.f32 %v5393, %v5392
        %v5395 = vmul.f32 0.5, %v5394
        %v5396 = vsub.f32 1.5, %v5395
        %v5397 = vmul.f32 %v5392, %v5396
        %vm5398 = vweird.f32 %v3399
        %vm5399 = vweird.f32 %v5392
        %vm5400 = vmor %vm5398, %vm5399
        %v5401 = vsel %vm5400, %v5392, %v5397
        %v5402 = vrsqrt.pop %v3400
        %v5403 = vmul.f32 %v5402, %v3400
        %v5404 = vmul.f32 %v5403, %v5402
        %v5405 = vmul.f32 0.5, %v5404
        %v5406 = vsub.f32 1.5, %v5405
        %v5407 = vmul.f32 %v5402, %v5406
        %vm5408 = vweird.f32 %v3400
        %vm5409 = vweird.f32 %v5402
        %vm5410 = vmor %vm5408, %vm5409
        %v5411 = vsel %vm5410, %v5402, %v5407
        %v5412 = vrsqrt.pop %v3401
        %v5413 = vmul.f32 %v5412, %v3401
        %v5414 = vmul.f32 %v5413, %v5412
        %v5415 = vmul.f32 0.5, %v5414
        %v5416 = vsub.f32 1.5, %v5415
        %v5417 = vmul.f32 %v5412, %v5416
        %vm5418 = vweird.f32 %v3401
        %vm5419 = vweird.f32 %v5412
        %vm5420 = vmor %vm5418, %vm5419
        %v5421 = vsel %vm5420, %v5412, %v5417
        %v5422 = vrsqrt.pop %v3402
        %v5423 = vmul.f32 %v5422, %v3402
        %v5424 = vmul.f32 %v5423, %v5422
        %v5425 = vmul.f32 0.5, %v5424
        %v5426 = vsub.f32 1.5, %v5425
        %v5427 = vmul.f32 %v5422, %v5426
        %vm5428 = vweird.f32 %v3402
        %vm5429 = vweird.f32 %v5422
        %vm5430 = vmor %vm5428, %vm5429
        %v5431 = vsel %vm5430, %v5422, %v5427
        %v5432 = vrsqrt.pop %v3403
        %v5433 = vmul.f32 %v5432, %v3403
        %v5434 = vmul.f32 %v5433, %v5432
        %v5435 = vmul.f32 0.5, %v5434
        %v5436 = vsub.f32 1.5, %v5435
        %v5437 = vmul.f32 %v5432, %v5436
        %vm5438 = vweird.f32 %v3403
        %vm5439 = vweird.f32 %v5432
        %vm5440 = vmor %vm5438, %vm5439
        %v5441 = vsel %vm5440, %v5432, %v5437
        %v5442 = vrsqrt.pop %v3404
        %v5443 = vmul.f32 %v5442, %v3404
        %v5444 = vmul.f32 %v5443, %v5442
        %v5445 = vmul.f32 0.5, %v5444
        %v5446 = vsub.f32 1.5, %v5445
        %v5447 = vmul.f32 %v5442, %v5446
        %vm5448 = vweird.f32 %v3404
        %vm5449 = vweird.f32 %v5442
        %vm5450 = vmor %vm5448, %vm5449
        %v5451 = vsel %vm5450, %v5442, %v5447
        %v5452 = vrsqrt.pop %v3405
        %v5453 = vmul.f32 %v5452, %v3405
        %v5454 = vmul.f32 %v5453, %v5452
        %v5455 = vmul.f32 0.5, %v5454
        %v5456 = vsub.f32 1.5, %v5455
        %v5457 = vmul.f32 %v5452, %v5456
        %vm5458 = vweird.f32 %v3405
        %vm5459 = vweird.f32 %v5452
        %vm5460 = vmor %vm5458, %vm5459
        %v5461 = vsel %vm5460, %v5452, %v5457
        %v5462 = vrsqrt.pop %v3406
        %v5463 = vmul.f32 %v5462, %v3406
        %v5464 = vmul.f32 %v5463, %v5462
        %v5465 = vmul.f32 0.5, %v5464
        %v5466 = vsub.f32 1.5, %v5465
        %v5467 = vmul.f32 %v5462, %v5466
        %vm5468 = vweird.f32 %v3406
        %vm5469 = vweird.f32 %v5462
        %vm5470 = vmor %vm5468, %vm5469
        %v5471 = vsel %vm5470, %v5462, %v5467
        %v5472 = vrsqrt.pop %v3407
        %v5473 = vmul.f32 %v5472, %v3407
        %v5474 = vmul.f32 %v5473, %v5472
        %v5475 = vmul.f32 0.5, %v5474
        %v5476 = vsub.f32 1.5, %v5475
        %v5477 = vmul.f32 %v5472, %v5476
        %vm5478 = vweird.f32 %v3407
        %vm5479 = vweird.f32 %v5472
        %vm5480 = vmor %vm5478, %vm5479
        %v5481 = vsel %vm5480, %v5472, %v5477
        %v5482 = vrsqrt.pop %v3408
        %v5483 = vmul.f32 %v5482, %v3408
        %v5484 = vmul.f32 %v5483, %v5482
        %v5485 = vmul.f32 0.5, %v5484
        %v5486 = vsub.f32 1.5, %v5485
        %v5487 = vmul.f32 %v5482, %v5486
        %vm5488 = vweird.f32 %v3408
        %vm5489 = vweird.f32 %v5482
        %vm5490 = vmor %vm5488, %vm5489
        %v5491 = vsel %vm5490, %v5482, %v5487
        %v5492 = vrsqrt.pop %v3409
        %v5493 = vmul.f32 %v5492, %v3409
        %v5494 = vmul.f32 %v5493, %v5492
        %v5495 = vmul.f32 0.5, %v5494
        %v5496 = vsub.f32 1.5, %v5495
        %v5497 = vmul.f32 %v5492, %v5496
        %vm5498 = vweird.f32 %v3409
        %vm5499 = vweird.f32 %v5492
        %vm5500 = vmor %vm5498, %vm5499
        %v5501 = vsel %vm5500, %v5492, %v5497
        %v5502 = vrsqrt.pop %v3410
        %v5503 = vmul.f32 %v5502, %v3410
        %v5504 = vmul.f32 %v5503, %v5502
        %v5505 = vmul.f32 0.5, %v5504
        %v5506 = vsub.f32 1.5, %v5505
        %v5507 = vmul.f32 %v5502, %v5506
        %vm5508 = vweird.f32 %v3410
        %vm5509 = vweird.f32 %v5502
        %vm5510 = vmor %vm5508, %vm5509
        %v5511 = vsel %vm5510, %v5502, %v5507
        %v5512 = vrsqrt.pop %v3411
        %v5513 = vmul.f32 %v5512, %v3411
        %v5514 = vmul.f32 %v5513, %v5512
        %v5515 = vmul.f32 0.5, %v5514
        %v5516 = vsub.f32 1.5, %v5515
        %v5517 = vmul.f32 %v5512, %v5516
        %vm5518 = vweird.f32 %v3411
        %vm5519 = vweird.f32 %v5512
        %vm5520 = vmor %vm5518, %vm5519
        %v5521 = vsel %vm5520, %v5512, %v5517
        %v5522 = vrsqrt.pop %v3412
        %v5523 = vmul.f32 %v5522, %v3412
        %v5524 = vmul.f32 %v5523, %v5522
        %v5525 = vmul.f32 0.5, %v5524
        %v5526 = vsub.f32 1.5, %v5525
        %v5527 = vmul.f32 %v5522, %v5526
        %vm5528 = vweird.f32 %v3412
        %vm5529 = vweird.f32 %v5522
        %vm5530 = vmor %vm5528, %vm5529
        %v5531 = vsel %vm5530, %v5522, %v5527
        %v5532 = vrsqrt.pop %v3413
        %v5533 = vmul.f32 %v5532, %v3413
        %v5534 = vmul.f32 %v5533, %v5532
        %v5535 = vmul.f32 0.5, %v5534
        %v5536 = vsub.f32 1.5, %v5535
        %v5537 = vmul.f32 %v5532, %v5536
        %vm5538 = vweird.f32 %v3413
        %vm5539 = vweird.f32 %v5532
        %vm5540 = vmor %vm5538, %vm5539
        %v5541 = vsel %vm5540, %v5532, %v5537
        %v5542 = vrsqrt.pop %v3414
        %v5543 = vmul.f32 %v5542, %v3414
        %v5544 = vmul.f32 %v5543, %v5542
        %v5545 = vmul.f32 0.5, %v5544
        %v5546 = vsub.f32 1.5, %v5545
        %v5547 = vmul.f32 %v5542, %v5546
        %vm5548 = vweird.f32 %v3414
        %vm5549 = vweird.f32 %v5542
        %vm5550 = vmor %vm5548, %vm5549
        %v5551 = vsel %vm5550, %v5542, %v5547
        %v5552 = vrsqrt.pop %v3415
        %v5553 = vmul.f32 %v5552, %v3415
        %v5554 = vmul.f32 %v5553, %v5552
        %v5555 = vmul.f32 0.5, %v5554
        %v5556 = vsub.f32 1.5, %v5555
        %v5557 = vmul.f32 %v5552, %v5556
        %vm5558 = vweird.f32 %v3415
        %vm5559 = vweird.f32 %v5552
        %vm5560 = vmor %vm5558, %vm5559
        %v5561 = vsel %vm5560, %v5552, %v5557
        %v5562 = vrsqrt.pop %v3416
        %v5563 = vmul.f32 %v5562, %v3416
        %v5564 = vmul.f32 %v5563, %v5562
        %v5565 = vmul.f32 0.5, %v5564
        %v5566 = vsub.f32 1.5, %v5565
        %v5567 = vmul.f32 %v5562, %v5566
        %vm5568 = vweird.f32 %v3416
        %vm5569 = vweird.f32 %v5562
        %vm5570 = vmor %vm5568, %vm5569
        %v5571 = vsel %vm5570, %v5562, %v5567
        %v5572 = vrsqrt.pop %v3417
        %v5573 = vmul.f32 %v5572, %v3417
        %v5574 = vmul.f32 %v5573, %v5572
        %v5575 = vmul.f32 0.5, %v5574
        %v5576 = vsub.f32 1.5, %v5575
        %v5577 = vmul.f32 %v5572, %v5576
        %vm5578 = vweird.f32 %v3417
        %vm5579 = vweird.f32 %v5572
        %vm5580 = vmor %vm5578, %vm5579
        %v5581 = vsel %vm5580, %v5572, %v5577
        %v5582 = vrsqrt.pop %v3418
        %v5583 = vmul.f32 %v5582, %v3418
        %v5584 = vmul.f32 %v5583, %v5582
        %v5585 = vmul.f32 0.5, %v5584
        %v5586 = vsub.f32 1.5, %v5585
        %v5587 = vmul.f32 %v5582, %v5586
        %vm5588 = vweird.f32 %v3418
        %vm5589 = vweird.f32 %v5582
        %vm5590 = vmor %vm5588, %vm5589
        %v5591 = vsel %vm5590, %v5582, %v5587
        %v5592 = vrsqrt.pop %v3419
        %v5593 = vmul.f32 %v5592, %v3419
        %v5594 = vmul.f32 %v5593, %v5592
        %v5595 = vmul.f32 0.5, %v5594
        %v5596 = vsub.f32 1.5, %v5595
        %v5597 = vmul.f32 %v5592, %v5596
        %vm5598 = vweird.f32 %v3419
        %vm5599 = vweird.f32 %v5592
        %vm5600 = vmor %vm5598, %vm5599
        %v5601 = vsel %vm5600, %v5592, %v5597
        %v5602 = vrsqrt.pop %v3420
        %v5603 = vmul.f32 %v5602, %v3420
        %v5604 = vmul.f32 %v5603, %v5602
        %v5605 = vmul.f32 0.5, %v5604
        %v5606 = vsub.f32 1.5, %v5605
        %v5607 = vmul.f32 %v5602, %v5606
        %vm5608 = vweird.f32 %v3420
        %vm5609 = vweird.f32 %v5602
        %vm5610 = vmor %vm5608, %vm5609
        %v5611 = vsel %vm5610, %v5602, %v5607
        %v5612 = vrsqrt.pop %v3421
        %v5613 = vmul.f32 %v5612, %v3421
        %v5614 = vmul.f32 %v5613, %v5612
        %v5615 = vmul.f32 0.5, %v5614
        %v5616 = vsub.f32 1.5, %v5615
        %v5617 = vmul.f32 %v5612, %v5616
        %vm5618 = vweird.f32 %v3421
        %vm5619 = vweird.f32 %v5612
        %vm5620 = vmor %vm5618, %vm5619
        %v5621 = vsel %vm5620, %v5612, %v5617
        %v5622 = vrsqrt.pop %v3422
        %v5623 = vmul.f32 %v5622, %v3422
        %v5624 = vmul.f32 %v5623, %v5622
        %v5625 = vmul.f32 0.5, %v5624
        %v5626 = vsub.f32 1.5, %v5625
        %v5627 = vmul.f32 %v5622, %v5626
        %vm5628 = vweird.f32 %v3422
        %vm5629 = vweird.f32 %v5622
        %vm5630 = vmor %vm5628, %vm5629
        %v5631 = vsel %vm5630, %v5622, %v5627
        %v5632 = vrsqrt.pop %v3423
        %v5633 = vmul.f32 %v5632, %v3423
        %v5634 = vmul.f32 %v5633, %v5632
        %v5635 = vmul.f32 0.5, %v5634
        %v5636 = vsub.f32 1.5, %v5635
        %v5637 = vmul.f32 %v5632, %v5636
        %vm5638 = vweird.f32 %v3423
        %vm5639 = vweird.f32 %v5632
        %vm5640 = vmor %vm5638, %vm5639
        %v5641 = vsel %vm5640, %v5632, %v5637
        %v5642 = vrsqrt.pop %v3424
        %v5643 = vmul.f32 %v5642, %v3424
        %v5644 = vmul.f32 %v5643, %v5642
        %v5645 = vmul.f32 0.5, %v5644
        %v5646 = vsub.f32 1.5, %v5645
        %v5647 = vmul.f32 %v5642, %v5646
        %vm5648 = vweird.f32 %v3424
        %vm5649 = vweird.f32 %v5642
        %vm5650 = vmor %vm5648, %vm5649
        %v5651 = vsel %vm5650, %v5642, %v5647
        %v5652 = vrsqrt.pop %v3425
        %v5653 = vmul.f32 %v5652, %v3425
        %v5654 = vmul.f32 %v5653, %v5652
        %v5655 = vmul.f32 0.5, %v5654
        %v5656 = vsub.f32 1.5, %v5655
        %v5657 = vmul.f32 %v5652, %v5656
        %vm5658 = vweird.f32 %v3425
        %vm5659 = vweird.f32 %v5652
        %vm5660 = vmor %vm5658, %vm5659
        %v5661 = vsel %vm5660, %v5652, %v5657
        %v5662 = vrsqrt.pop %v3426
        %v5663 = vmul.f32 %v5662, %v3426
        %v5664 = vmul.f32 %v5663, %v5662
        %v5665 = vmul.f32 0.5, %v5664
        %v5666 = vsub.f32 1.5, %v5665
        %v5667 = vmul.f32 %v5662, %v5666
        %vm5668 = vweird.f32 %v3426
        %vm5669 = vweird.f32 %v5662
        %vm5670 = vmor %vm5668, %vm5669
        %v5671 = vsel %vm5670, %v5662, %v5667
        %v5672 = vrsqrt.pop %v3427
        %v5673 = vmul.f32 %v5672, %v3427
        %v5674 = vmul.f32 %v5673, %v5672
        %v5675 = vmul.f32 0.5, %v5674
        %v5676 = vsub.f32 1.5, %v5675
        %v5677 = vmul.f32 %v5672, %v5676
        %vm5678 = vweird.f32 %v3427
        %vm5679 = vweird.f32 %v5672
        %vm5680 = vmor %vm5678, %vm5679
        %v5681 = vsel %vm5680, %v5672, %v5677
        %v5682 = vrsqrt.pop %v3428
        %v5683 = vmul.f32 %v5682, %v3428
        %v5684 = vmul.f32 %v5683, %v5682
        %v5685 = vmul.f32 0.5, %v5684
        %v5686 = vsub.f32 1.5, %v5685
        %v5687 = vmul.f32 %v5682, %v5686
        %vm5688 = vweird.f32 %v3428
        %vm5689 = vweird.f32 %v5682
        %vm5690 = vmor %vm5688, %vm5689
        %v5691 = vsel %vm5690, %v5682, %v5687
        %v5692 = vrsqrt.pop %v3429
        %v5693 = vmul.f32 %v5692, %v3429
        %v5694 = vmul.f32 %v5693, %v5692
        %v5695 = vmul.f32 0.5, %v5694
        %v5696 = vsub.f32 1.5, %v5695
        %v5697 = vmul.f32 %v5692, %v5696
        %vm5698 = vweird.f32 %v3429
        %vm5699 = vweird.f32 %v5692
        %vm5700 = vmor %vm5698, %vm5699
        %v5701 = vsel %vm5700, %v5692, %v5697
        %v5702 = vrsqrt.pop %v3430
        %v5703 = vmul.f32 %v5702, %v3430
        %v5704 = vmul.f32 %v5703, %v5702
        %v5705 = vmul.f32 0.5, %v5704
        %v5706 = vsub.f32 1.5, %v5705
        %v5707 = vmul.f32 %v5702, %v5706
        %vm5708 = vweird.f32 %v3430
        %vm5709 = vweird.f32 %v5702
        %vm5710 = vmor %vm5708, %vm5709
        %v5711 = vsel %vm5710, %v5702, %v5707
        %v5712 = vrsqrt.pop %v3431
        %v5713 = vmul.f32 %v5712, %v3431
        %v5714 = vmul.f32 %v5713, %v5712
        %v5715 = vmul.f32 0.5, %v5714
        %v5716 = vsub.f32 1.5, %v5715
        %v5717 = vmul.f32 %v5712, %v5716
        %vm5718 = vweird.f32 %v3431
        %vm5719 = vweird.f32 %v5712
        %vm5720 = vmor %vm5718, %vm5719
        %v5721 = vsel %vm5720, %v5712, %v5717
        %v5722 = vrsqrt.pop %v3432
        %v5723 = vmul.f32 %v5722, %v3432
        %v5724 = vmul.f32 %v5723, %v5722
        %v5725 = vmul.f32 0.5, %v5724
        %v5726 = vsub.f32 1.5, %v5725
        %v5727 = vmul.f32 %v5722, %v5726
        %vm5728 = vweird.f32 %v3432
        %vm5729 = vweird.f32 %v5722
        %vm5730 = vmor %vm5728, %vm5729
        %v5731 = vsel %vm5730, %v5722, %v5727
        %v5732 = vrsqrt.pop %v3433
        %v5733 = vmul.f32 %v5732, %v3433
        %v5734 = vmul.f32 %v5733, %v5732
        %v5735 = vmul.f32 0.5, %v5734
        %v5736 = vsub.f32 1.5, %v5735
        %v5737 = vmul.f32 %v5732, %v5736
        %vm5738 = vweird.f32 %v3433
        %vm5739 = vweird.f32 %v5732
        %vm5740 = vmor %vm5738, %vm5739
        %v5741 = vsel %vm5740, %v5732, %v5737
        %v5742 = vrsqrt.pop %v3434
        %v5743 = vmul.f32 %v5742, %v3434
        %v5744 = vmul.f32 %v5743, %v5742
        %v5745 = vmul.f32 0.5, %v5744
        %v5746 = vsub.f32 1.5, %v5745
        %v5747 = vmul.f32 %v5742, %v5746
        %vm5748 = vweird.f32 %v3434
        %vm5749 = vweird.f32 %v5742
        %vm5750 = vmor %vm5748, %vm5749
        %v5751 = vsel %vm5750, %v5742, %v5747
        %v5752 = vrsqrt.pop %v3435
        %v5753 = vmul.f32 %v5752, %v3435
        %v5754 = vmul.f32 %v5753, %v5752
        %v5755 = vmul.f32 0.5, %v5754
        %v5756 = vsub.f32 1.5, %v5755
        %v5757 = vmul.f32 %v5752, %v5756
        %vm5758 = vweird.f32 %v3435
        %vm5759 = vweird.f32 %v5752
        %vm5760 = vmor %vm5758, %vm5759
        %v5761 = vsel %vm5760, %v5752, %v5757
        %v5762 = vrsqrt.pop %v3436
        %v5763 = vmul.f32 %v5762, %v3436
        %v5764 = vmul.f32 %v5763, %v5762
        %v5765 = vmul.f32 0.5, %v5764
        %v5766 = vsub.f32 1.5, %v5765
        %v5767 = vmul.f32 %v5762, %v5766
        %vm5768 = vweird.f32 %v3436
        %vm5769 = vweird.f32 %v5762
        %vm5770 = vmor %vm5768, %vm5769
        %v5771 = vsel %vm5770, %v5762, %v5767
        %v5772 = vrsqrt.pop %v3437
        %v5773 = vmul.f32 %v5772, %v3437
        %v5774 = vmul.f32 %v5773, %v5772
        %v5775 = vmul.f32 0.5, %v5774
        %v5776 = vsub.f32 1.5, %v5775
        %v5777 = vmul.f32 %v5772, %v5776
        %vm5778 = vweird.f32 %v3437
        %vm5779 = vweird.f32 %v5772
        %vm5780 = vmor %vm5778, %vm5779
        %v5781 = vsel %vm5780, %v5772, %v5777
        %v5782 = vrsqrt.pop %v3438
        %v5783 = vmul.f32 %v5782, %v3438
        %v5784 = vmul.f32 %v5783, %v5782
        %v5785 = vmul.f32 0.5, %v5784
        %v5786 = vsub.f32 1.5, %v5785
        %v5787 = vmul.f32 %v5782, %v5786
        %vm5788 = vweird.f32 %v3438
        %vm5789 = vweird.f32 %v5782
        %vm5790 = vmor %vm5788, %vm5789
        %v5791 = vsel %vm5790, %v5782, %v5787
        %v5792 = vrsqrt.pop %v3439
        %v5793 = vmul.f32 %v5792, %v3439
        %v5794 = vmul.f32 %v5793, %v5792
        %v5795 = vmul.f32 0.5, %v5794
        %v5796 = vsub.f32 1.5, %v5795
        %v5797 = vmul.f32 %v5792, %v5796
        %vm5798 = vweird.f32 %v3439
        %vm5799 = vweird.f32 %v5792
        %vm5800 = vmor %vm5798, %vm5799
        %v5801 = vsel %vm5800, %v5792, %v5797
        %v5802 = vrsqrt.pop %v3440
        %v5803 = vmul.f32 %v5802, %v3440
        %v5804 = vmul.f32 %v5803, %v5802
        %v5805 = vmul.f32 0.5, %v5804
        %v5806 = vsub.f32 1.5, %v5805
        %v5807 = vmul.f32 %v5802, %v5806
        %vm5808 = vweird.f32 %v3440
        %vm5809 = vweird.f32 %v5802
        %vm5810 = vmor %vm5808, %vm5809
        %v5811 = vsel %vm5810, %v5802, %v5807
        %v5812 = vrsqrt.pop %v3441
        %v5813 = vmul.f32 %v5812, %v3441
        %v5814 = vmul.f32 %v5813, %v5812
        %v5815 = vmul.f32 0.5, %v5814
        %v5816 = vsub.f32 1.5, %v5815
        %v5817 = vmul.f32 %v5812, %v5816
        %vm5818 = vweird.f32 %v3441
        %vm5819 = vweird.f32 %v5812
        %vm5820 = vmor %vm5818, %vm5819
        %v5821 = vsel %vm5820, %v5812, %v5817
        %v5822 = vrsqrt.pop %v3442
        %v5823 = vmul.f32 %v5822, %v3442
        %v5824 = vmul.f32 %v5823, %v5822
        %v5825 = vmul.f32 0.5, %v5824
        %v5826 = vsub.f32 1.5, %v5825
        %v5827 = vmul.f32 %v5822, %v5826
        %vm5828 = vweird.f32 %v3442
        %vm5829 = vweird.f32 %v5822
        %vm5830 = vmor %vm5828, %vm5829
        %v5831 = vsel %vm5830, %v5822, %v5827
        %v5832 = vrsqrt.pop %v3443
        %v5833 = vmul.f32 %v5832, %v3443
        %v5834 = vmul.f32 %v5833, %v5832
        %v5835 = vmul.f32 0.5, %v5834
        %v5836 = vsub.f32 1.5, %v5835
        %v5837 = vmul.f32 %v5832, %v5836
        %vm5838 = vweird.f32 %v3443
        %vm5839 = vweird.f32 %v5832
        %vm5840 = vmor %vm5838, %vm5839
        %v5841 = vsel %vm5840, %v5832, %v5837
        %v5842 = vrsqrt.pop %v3444
        %v5843 = vmul.f32 %v5842, %v3444
        %v5844 = vmul.f32 %v5843, %v5842
        %v5845 = vmul.f32 0.5, %v5844
        %v5846 = vsub.f32 1.5, %v5845
        %v5847 = vmul.f32 %v5842, %v5846
        %vm5848 = vweird.f32 %v3444
        %vm5849 = vweird.f32 %v5842
        %vm5850 = vmor %vm5848, %vm5849
        %v5851 = vsel %vm5850, %v5842, %v5847
        %v5852 = vrsqrt.pop %v3445
        %v5853 = vmul.f32 %v5852, %v3445
        %v5854 = vmul.f32 %v5853, %v5852
        %v5855 = vmul.f32 0.5, %v5854
        %v5856 = vsub.f32 1.5, %v5855
        %v5857 = vmul.f32 %v5852, %v5856
        %vm5858 = vweird.f32 %v3445
        %vm5859 = vweird.f32 %v5852
        %vm5860 = vmor %vm5858, %vm5859
        %v5861 = vsel %vm5860, %v5852, %v5857
        %v5862 = vrsqrt.pop %v3446
        %v5863 = vmul.f32 %v5862, %v3446
        %v5864 = vmul.f32 %v5863, %v5862
        %v5865 = vmul.f32 0.5, %v5864
        %v5866 = vsub.f32 1.5, %v5865
        %v5867 = vmul.f32 %v5862, %v5866
        %vm5868 = vweird.f32 %v3446
        %vm5869 = vweird.f32 %v5862
        %vm5870 = vmor %vm5868, %vm5869
        %v5871 = vsel %vm5870, %v5862, %v5867
        %v5872 = vrsqrt.pop %v3447
        %v5873 = vmul.f32 %v5872, %v3447
        %v5874 = vmul.f32 %v5873, %v5872
        %v5875 = vmul.f32 0.5, %v5874
        %v5876 = vsub.f32 1.5, %v5875
        %v5877 = vmul.f32 %v5872, %v5876
        %vm5878 = vweird.f32 %v3447
        %vm5879 = vweird.f32 %v5872
        %vm5880 = vmor %vm5878, %vm5879
        %v5881 = vsel %vm5880, %v5872, %v5877
        %v5882 = vrsqrt.pop %v3448
        %v5883 = vmul.f32 %v5882, %v3448
        %v5884 = vmul.f32 %v5883, %v5882
        %v5885 = vmul.f32 0.5, %v5884
        %v5886 = vsub.f32 1.5, %v5885
        %v5887 = vmul.f32 %v5882, %v5886
        %vm5888 = vweird.f32 %v3448
        %vm5889 = vweird.f32 %v5882
        %vm5890 = vmor %vm5888, %vm5889
        %v5891 = vsel %vm5890, %v5882, %v5887
        %v5892 = vrsqrt.pop %v3449
        %v5893 = vmul.f32 %v5892, %v3449
        %v5894 = vmul.f32 %v5893, %v5892
        %v5895 = vmul.f32 0.5, %v5894
        %v5896 = vsub.f32 1.5, %v5895
        %v5897 = vmul.f32 %v5892, %v5896
        %vm5898 = vweird.f32 %v3449
        %vm5899 = vweird.f32 %v5892
        %vm5900 = vmor %vm5898, %vm5899
        %v5901 = vsel %vm5900, %v5892, %v5897
        %v5902 = vrsqrt.pop %v3450
        %v5903 = vmul.f32 %v5902, %v3450
        %v5904 = vmul.f32 %v5903, %v5902
        %v5905 = vmul.f32 0.5, %v5904
        %v5906 = vsub.f32 1.5, %v5905
        %v5907 = vmul.f32 %v5902, %v5906
        %vm5908 = vweird.f32 %v3450
        %vm5909 = vweird.f32 %v5902
        %vm5910 = vmor %vm5908, %vm5909
        %v5911 = vsel %vm5910, %v5902, %v5907
        %v5912 = vrsqrt.pop %v3451
        %v5913 = vmul.f32 %v5912, %v3451
        %v5914 = vmul.f32 %v5913, %v5912
        %v5915 = vmul.f32 0.5, %v5914
        %v5916 = vsub.f32 1.5, %v5915
        %v5917 = vmul.f32 %v5912, %v5916
        %vm5918 = vweird.f32 %v3451
        %vm5919 = vweird.f32 %v5912
        %vm5920 = vmor %vm5918, %vm5919
        %v5921 = vsel %vm5920, %v5912, %v5917
        %v5922 = vrsqrt.pop %v3452
        %v5923 = vmul.f32 %v5922, %v3452
        %v5924 = vmul.f32 %v5923, %v5922
        %v5925 = vmul.f32 0.5, %v5924
        %v5926 = vsub.f32 1.5, %v5925
        %v5927 = vmul.f32 %v5922, %v5926
        %vm5928 = vweird.f32 %v3452
        %vm5929 = vweird.f32 %v5922
        %vm5930 = vmor %vm5928, %vm5929
        %v5931 = vsel %vm5930, %v5922, %v5927
        %v5932 = vrsqrt.pop %v3453
        %v5933 = vmul.f32 %v5932, %v3453
        %v5934 = vmul.f32 %v5933, %v5932
        %v5935 = vmul.f32 0.5, %v5934
        %v5936 = vsub.f32 1.5, %v5935
        %v5937 = vmul.f32 %v5932, %v5936
        %vm5938 = vweird.f32 %v3453
        %vm5939 = vweird.f32 %v5932
        %vm5940 = vmor %vm5938, %vm5939
        %v5941 = vsel %vm5940, %v5932, %v5937
        %v5942 = vrsqrt.pop %v3454
        %v5943 = vmul.f32 %v5942, %v3454
        %v5944 = vmul.f32 %v5943, %v5942
        %v5945 = vmul.f32 0.5, %v5944
        %v5946 = vsub.f32 1.5, %v5945
        %v5947 = vmul.f32 %v5942, %v5946
        %vm5948 = vweird.f32 %v3454
        %vm5949 = vweird.f32 %v5942
        %vm5950 = vmor %vm5948, %vm5949
        %v5951 = vsel %vm5950, %v5942, %v5947
        %v5952 = vrsqrt.pop %v3455
        %v5953 = vmul.f32 %v5952, %v3455
        %v5954 = vmul.f32 %v5953, %v5952
        %v5955 = vmul.f32 0.5, %v5954
        %v5956 = vsub.f32 1.5, %v5955
        %v5957 = vmul.f32 %v5952, %v5956
        %vm5958 = vweird.f32 %v3455
        %vm5959 = vweird.f32 %v5952
        %vm5960 = vmor %vm5958, %vm5959
        %v5961 = vsel %vm5960, %v5952, %v5957
        %v5962 = vrsqrt.pop %v3456
        %v5963 = vmul.f32 %v5962, %v3456
        %v5964 = vmul.f32 %v5963, %v5962
        %v5965 = vmul.f32 0.5, %v5964
        %v5966 = vsub.f32 1.5, %v5965
        %v5967 = vmul.f32 %v5962, %v5966
        %vm5968 = vweird.f32 %v3456
        %vm5969 = vweird.f32 %v5962
        %vm5970 = vmor %vm5968, %vm5969
        %v5971 = vsel %vm5970, %v5962, %v5967
        %v5972 = vrsqrt.pop %v3457
        %v5973 = vmul.f32 %v5972, %v3457
        %v5974 = vmul.f32 %v5973, %v5972
        %v5975 = vmul.f32 0.5, %v5974
        %v5976 = vsub.f32 1.5, %v5975
        %v5977 = vmul.f32 %v5972, %v5976
        %vm5978 = vweird.f32 %v3457
        %vm5979 = vweird.f32 %v5972
        %vm5980 = vmor %vm5978, %vm5979
        %v5981 = vsel %vm5980, %v5972, %v5977
        %v5982 = vrsqrt.pop %v3458
        %v5983 = vmul.f32 %v5982, %v3458
        %v5984 = vmul.f32 %v5983, %v5982
        %v5985 = vmul.f32 0.5, %v5984
        %v5986 = vsub.f32 1.5, %v5985
        %v5987 = vmul.f32 %v5982, %v5986
        %vm5988 = vweird.f32 %v3458
        %vm5989 = vweird.f32 %v5982
        %vm5990 = vmor %vm5988, %vm5989
        %v5991 = vsel %vm5990, %v5982, %v5987
        %v5992 = vrsqrt.pop %v3459
        %v5993 = vmul.f32 %v5992, %v3459
        %v5994 = vmul.f32 %v5993, %v5992
        %v5995 = vmul.f32 0.5, %v5994
        %v5996 = vsub.f32 1.5, %v5995
        %v5997 = vmul.f32 %v5992, %v5996
        %vm5998 = vweird.f32 %v3459
        %vm5999 = vweird.f32 %v5992
        %vm6000 = vmor %vm5998, %vm5999
        %v6001 = vsel %vm6000, %v5992, %v5997
        %v6002 = vrsqrt.pop %v3460
        %v6003 = vmul.f32 %v6002, %v3460
        %v6004 = vmul.f32 %v6003, %v6002
        %v6005 = vmul.f32 0.5, %v6004
        %v6006 = vsub.f32 1.5, %v6005
        %v6007 = vmul.f32 %v6002, %v6006
        %vm6008 = vweird.f32 %v3460
        %vm6009 = vweird.f32 %v6002
        %vm6010 = vmor %vm6008, %vm6009
        %v6011 = vsel %vm6010, %v6002, %v6007
        %v6012 = vrsqrt.pop %v3461
        %v6013 = vmul.f32 %v6012, %v3461
        %v6014 = vmul.f32 %v6013, %v6012
        %v6015 = vmul.f32 0.5, %v6014
        %v6016 = vsub.f32 1.5, %v6015
        %v6017 = vmul.f32 %v6012, %v6016
        %vm6018 = vweird.f32 %v3461
        %vm6019 = vweird.f32 %v6012
        %vm6020 = vmor %vm6018, %vm6019
        %v6021 = vsel %vm6020, %v6012, %v6017
        %v6022 = vmul.f32 %v1926, %v3471
        %v6023 = vmul.f32 %v1927, %v3481
        %v6024 = vmul.f32 %v1928, %v3491
        %v6025 = vmul.f32 %v1929, %v3501
        %v6026 = vmul.f32 %v1930, %v3511
        %v6027 = vmul.f32 %v1931, %v3521
        %v6028 = vmul.f32 %v1932, %v3531
        %v6029 = vmul.f32 %v1933, %v3541
        %v6030 = vmul.f32 %v1934, %v3551
        %v6031 = vmul.f32 %v1935, %v3561
        %v6032 = vmul.f32 %v1936, %v3571
        %v6033 = vmul.f32 %v1937, %v3581
        %v6034 = vmul.f32 %v1938, %v3591
        %v6035 = vmul.f32 %v1939, %v3601
        %v6036 = vmul.f32 %v1940, %v3611
        %v6037 = vmul.f32 %v1941, %v3621
        %v6038 = vmul.f32 %v1942, %v3631
        %v6039 = vmul.f32 %v1943, %v3641
        %v6040 = vmul.f32 %v1944, %v3651
        %v6041 = vmul.f32 %v1945, %v3661
        %v6042 = vmul.f32 %v1946, %v3671
        %v6043 = vmul.f32 %v1947, %v3681
        %v6044 = vmul.f32 %v1948, %v3691
        %v6045 = vmul.f32 %v1949, %v3701
        %v6046 = vmul.f32 %v1950, %v3711
        %v6047 = vmul.f32 %v1951, %v3721
        %v6048 = vmul.f32 %v1952, %v3731
        %v6049 = vmul.f32 %v1953, %v3741
        %v6050 = vmul.f32 %v1954, %v3751
        %v6051 = vmul.f32 %v1955, %v3761
        %v6052 = vmul.f32 %v1956, %v3771
        %v6053 = vmul.f32 %v1957, %v3781
        %v6054 = vmul.f32 %v1958, %v3791
        %v6055 = vmul.f32 %v1959, %v3801
        %v6056 = vmul.f32 %v1960, %v3811
        %v6057 = vmul.f32 %v1961, %v3821
        %v6058 = vmul.f32 %v1962, %v3831
        %v6059 = vmul.f32 %v1963, %v3841
        %v6060 = vmul.f32 %v1964, %v3851
        %v6061 = vmul.f32 %v1965, %v3861
        %v6062 = vmul.f32 %v1966, %v3871
        %v6063 = vmul.f32 %v1967, %v3881
        %v6064 = vmul.f32 %v1968, %v3891
        %v6065 = vmul.f32 %v1969, %v3901
        %v6066 = vmul.f32 %v1970, %v3911
        %v6067 = vmul.f32 %v1971, %v3921
        %v6068 = vmul.f32 %v1972, %v3931
        %v6069 = vmul.f32 %v1973, %v3941
        %v6070 = vmul.f32 %v1974, %v3951
        %v6071 = vmul.f32 %v1975, %v3961
        %v6072 = vmul.f32 %v1976, %v3971
        %v6073 = vmul.f32 %v1977, %v3981
        %v6074 = vmul.f32 %v1978, %v3991
        %v6075 = vmul.f32 %v1979, %v4001
        %v6076 = vmul.f32 %v1980, %v4011
        %v6077 = vmul.f32 %v1981, %v4021
        %v6078 = vmul.f32 %v1982, %v4031
        %v6079 = vmul.f32 %v1983, %v4041
        %v6080 = vmul.f32 %v1984, %v4051
        %v6081 = vmul.f32 %v1985, %v4061
        %v6082 = vmul.f32 %v1986, %v4071
        %v6083 = vmul.f32 %v1987, %v4081
        %v6084 = vmul.f32 %v1988, %v4091
        %v6085 = vmul.f32 %v1989, %v4101
        %v6086 = vmul.f32 %v1990, %v4111
        %v6087 = vmul.f32 %v1991, %v4121
        %v6088 = vmul.f32 %v1992, %v4131
        %v6089 = vmul.f32 %v1993, %v4141
        %v6090 = vmul.f32 %v1994, %v4151
        %v6091 = vmul.f32 %v1995, %v4161
        %v6092 = vmul.f32 %v1996, %v4171
        %v6093 = vmul.f32 %v1997, %v4181
        %v6094 = vmul.f32 %v1998, %v4191
        %v6095 = vmul.f32 %v1999, %v4201
        %v6096 = vmul.f32 %v2000, %v4211
        %v6097 = vmul.f32 %v2001, %v4221
        %v6098 = vmul.f32 %v2002, %v4231
        %v6099 = vmul.f32 %v2003, %v4241
        %v6100 = vmul.f32 %v2004, %v4251
        %v6101 = vmul.f32 %v2005, %v4261
        %v6102 = vmul.f32 %v2006, %v4271
        %v6103 = vmul.f32 %v2007, %v4281
        %v6104 = vmul.f32 %v2008, %v4291
        %v6105 = vmul.f32 %v2009, %v4301
        %v6106 = vmul.f32 %v2010, %v4311
        %v6107 = vmul.f32 %v2011, %v4321
        %v6108 = vmul.f32 %v2012, %v4331
        %v6109 = vmul.f32 %v2013, %v4341
        %v6110 = vmul.f32 %v2014, %v4351
        %v6111 = vmul.f32 %v2015, %v4361
        %v6112 = vmul.f32 %v2016, %v4371
        %v6113 = vmul.f32 %v2017, %v4381
        %v6114 = vmul.f32 %v2018, %v4391
        %v6115 = vmul.f32 %v2019, %v4401
        %v6116 = vmul.f32 %v2020, %v4411
        %v6117 = vmul.f32 %v2021, %v4421
        %v6118 = vmul.f32 %v2022, %v4431
        %v6119 = vmul.f32 %v2023, %v4441
        %v6120 = vmul.f32 %v2024, %v4451
        %v6121 = vmul.f32 %v2025, %v4461
        %v6122 = vmul.f32 %v2026, %v4471
        %v6123 = vmul.f32 %v2027, %v4481
        %v6124 = vmul.f32 %v2028, %v4491
        %v6125 = vmul.f32 %v2029, %v4501
        %v6126 = vmul.f32 %v2030, %v4511
        %v6127 = vmul.f32 %v2031, %v4521
        %v6128 = vmul.f32 %v2032, %v4531
        %v6129 = vmul.f32 %v2033, %v4541
        %v6130 = vmul.f32 %v2034, %v4551
        %v6131 = vmul.f32 %v2035, %v4561
        %v6132 = vmul.f32 %v2036, %v4571
        %v6133 = vmul.f32 %v2037, %v4581
        %v6134 = vmul.f32 %v2038, %v4591
        %v6135 = vmul.f32 %v2039, %v4601
        %v6136 = vmul.f32 %v2040, %v4611
        %v6137 = vmul.f32 %v2041, %v4621
        %v6138 = vmul.f32 %v2042, %v4631
        %v6139 = vmul.f32 %v2043, %v4641
        %v6140 = vmul.f32 %v2044, %v4651
        %v6141 = vmul.f32 %v2045, %v4661
        %v6142 = vmul.f32 %v2046, %v4671
        %v6143 = vmul.f32 %v2047, %v4681
        %v6144 = vmul.f32 %v2048, %v4691
        %v6145 = vmul.f32 %v2049, %v4701
        %v6146 = vmul.f32 %v2050, %v4711
        %v6147 = vmul.f32 %v2051, %v4721
        %v6148 = vmul.f32 %v2052, %v4731
        %v6149 = vmul.f32 %v2053, %v4741
        %v6150 = vmul.f32 %v2054, %v4751
        %v6151 = vmul.f32 %v2055, %v4761
        %v6152 = vmul.f32 %v2056, %v4771
        %v6153 = vmul.f32 %v2057, %v4781
        %v6154 = vmul.f32 %v2058, %v4791
        %v6155 = vmul.f32 %v2059, %v4801
        %v6156 = vmul.f32 %v2060, %v4811
        %v6157 = vmul.f32 %v2061, %v4821
        %v6158 = vmul.f32 %v2062, %v4831
        %v6159 = vmul.f32 %v2063, %v4841
        %v6160 = vmul.f32 %v2064, %v4851
        %v6161 = vmul.f32 %v2065, %v4861
        %v6162 = vmul.f32 %v2066, %v4871
        %v6163 = vmul.f32 %v2067, %v4881
        %v6164 = vmul.f32 %v2068, %v4891
        %v6165 = vmul.f32 %v2069, %v4901
        %v6166 = vmul.f32 %v2070, %v4911
        %v6167 = vmul.f32 %v2071, %v4921
        %v6168 = vmul.f32 %v2072, %v4931
        %v6169 = vmul.f32 %v2073, %v4941
        %v6170 = vmul.f32 %v2074, %v4951
        %v6171 = vmul.f32 %v2075, %v4961
        %v6172 = vmul.f32 %v2076, %v4971
        %v6173 = vmul.f32 %v2077, %v4981
        %v6174 = vmul.f32 %v2078, %v4991
        %v6175 = vmul.f32 %v2079, %v5001
        %v6176 = vmul.f32 %v2080, %v5011
        %v6177 = vmul.f32 %v2081, %v5021
        %v6178 = vmul.f32 %v2082, %v5031
        %v6179 = vmul.f32 %v2083, %v5041
        %v6180 = vmul.f32 %v2084, %v5051
        %v6181 = vmul.f32 %v2085, %v5061
        %v6182 = vmul.f32 %v2086, %v5071
        %v6183 = vmul.f32 %v2087, %v5081
        %v6184 = vmul.f32 %v2088, %v5091
        %v6185 = vmul.f32 %v2089, %v5101
        %v6186 = vmul.f32 %v2090, %v5111
        %v6187 = vmul.f32 %v2091, %v5121
        %v6188 = vmul.f32 %v2092, %v5131
        %v6189 = vmul.f32 %v2093, %v5141
        %v6190 = vmul.f32 %v2094, %v5151
        %v6191 = vmul.f32 %v2095, %v5161
        %v6192 = vmul.f32 %v2096, %v5171
        %v6193 = vmul.f32 %v2097, %v5181
        %v6194 = vmul.f32 %v2098, %v5191
        %v6195 = vmul.f32 %v2099, %v5201
        %v6196 = vmul.f32 %v2100, %v5211
        %v6197 = vmul.f32 %v2101, %v5221
        %v6198 = vmul.f32 %v2102, %v5231
        %v6199 = vmul.f32 %v2103, %v5241
        %v6200 = vmul.f32 %v2104, %v5251
        %v6201 = vmul.f32 %v2105, %v5261
        %v6202 = vmul.f32 %v2106, %v5271
        %v6203 = vmul.f32 %v2107, %v5281
        %v6204 = vmul.f32 %v2108, %v5291
        %v6205 = vmul.f32 %v2109, %v5301
        %v6206 = vmul.f32 %v2110, %v5311
        %v6207 = vmul.f32 %v2111, %v5321
        %v6208 = vmul.f32 %v2112, %v5331
        %v6209 = vmul.f32 %v2113, %v5341
        %v6210 = vmul.f32 %v2114, %v5351
        %v6211 = vmul.f32 %v2115, %v5361
        %v6212 = vmul.f32 %v2116, %v5371
        %v6213 = vmul.f32 %v2117, %v5381
        %v6214 = vmul.f32 %v2118, %v5391
        %v6215 = vmul.f32 %v2119, %v5401
        %v6216 = vmul.f32 %v2120, %v5411
        %v6217 = vmul.f32 %v2121, %v5421
        %v6218 = vmul.f32 %v2122, %v5431
        %v6219 = vmul.f32 %v2123, %v5441
        %v6220 = vmul.f32 %v2124, %v5451
        %v6221 = vmul.f32 %v2125, %v5461
        %v6222 = vmul.f32 %v2126, %v5471
        %v6223 = vmul.f32 %v2127, %v5481
        %v6224 = vmul.f32 %v2128, %v5491
        %v6225 = vmul.f32 %v2129, %v5501
        %v6226 = vmul.f32 %v2130, %v5511
        %v6227 = vmul.f32 %v2131, %v5521
        %v6228 = vmul.f32 %v2132, %v5531
        %v6229 = vmul.f32 %v2133, %v5541
        %v6230 = vmul.f32 %v2134, %v5551
        %v6231 = vmul.f32 %v2135, %v5561
        %v6232 = vmul.f32 %v2136, %v5571
        %v6233 = vmul.f32 %v2137, %v5581
        %v6234 = vmul.f32 %v2138, %v5591
        %v6235 = vmul.f32 %v2139, %v5601
        %v6236 = vmul.f32 %v2140, %v5611
        %v6237 = vmul.f32 %v2141, %v5621
        %v6238 = vmul.f32 %v2142, %v5631
        %v6239 = vmul.f32 %v2143, %v5641
        %v6240 = vmul.f32 %v2144, %v5651
        %v6241 = vmul.f32 %v2145, %v5661
        %v6242 = vmul.f32 %v2146, %v5671
        %v6243 = vmul.f32 %v2147, %v5681
        %v6244 = vmul.f32 %v2148, %v5691
        %v6245 = vmul.f32 %v2149, %v5701
        %v6246 = vmul.f32 %v2150, %v5711
        %v6247 = vmul.f32 %v2151, %v5721
        %v6248 = vmul.f32 %v2152, %v5731
        %v6249 = vmul.f32 %v2153, %v5741
        %v6250 = vmul.f32 %v2154, %v5751
        %v6251 = vmul.f32 %v2155, %v5761
        %v6252 = vmul.f32 %v2156, %v5771
        %v6253 = vmul.f32 %v2157, %v5781
        %v6254 = vmul.f32 %v2158, %v5791
        %v6255 = vmul.f32 %v2159, %v5801
        %v6256 = vmul.f32 %v2160, %v5811
        %v6257 = vmul.f32 %v2161, %v5821
        %v6258 = vmul.f32 %v2162, %v5831
        %v6259 = vmul.f32 %v2163, %v5841
        %v6260 = vmul.f32 %v2164, %v5851
        %v6261 = vmul.f32 %v2165, %v5861
        %v6262 = vmul.f32 %v2166, %v5871
        %v6263 = vmul.f32 %v2167, %v5881
        %v6264 = vmul.f32 %v2168, %v5891
        %v6265 = vmul.f32 %v2169, %v5901
        %v6266 = vmul.f32 %v2170, %v5911
        %v6267 = vmul.f32 %v2171, %v5921
        %v6268 = vmul.f32 %v2172, %v5931
        %v6269 = vmul.f32 %v2173, %v5941
        %v6270 = vmul.f32 %v2174, %v5951
        %v6271 = vmul.f32 %v2175, %v5961
        %v6272 = vmul.f32 %v2176, %v5971
        %v6273 = vmul.f32 %v2177, %v5981
        %v6274 = vmul.f32 %v2178, %v5991
        %v6275 = vmul.f32 %v2179, %v6001
        %v6276 = vmul.f32 %v2180, %v6011
        %v6277 = vmul.f32 %v2181, %v6021
        %v6278 = vld [vmem:[%s4] sm:$0x1]
        %v6280 = vperm.slane %v6278, 0
        %v6282 = vmul.f32 %v6022, %v6280
        %v6283 = vmul.f32 %v6023, %v6280
        %v6284 = vmul.f32 %v6024, %v6280
        %v6285 = vmul.f32 %v6025, %v6280
        %v6286 = vmul.f32 %v6026, %v6280
        %v6287 = vmul.f32 %v6027, %v6280
        %v6288 = vmul.f32 %v6028, %v6280
        %v6289 = vmul.f32 %v6029, %v6280
        %v6290 = vmul.f32 %v6030, %v6280
        %v6291 = vmul.f32 %v6031, %v6280
        %v6292 = vmul.f32 %v6032, %v6280
        %v6293 = vmul.f32 %v6033, %v6280
        %v6294 = vmul.f32 %v6034, %v6280
        %v6295 = vmul.f32 %v6035, %v6280
        %v6296 = vmul.f32 %v6036, %v6280
        %v6297 = vmul.f32 %v6037, %v6280
        %v6298 = vmul.f32 %v6038, %v6280
        %v6299 = vmul.f32 %v6039, %v6280
        %v6300 = vmul.f32 %v6040, %v6280
        %v6301 = vmul.f32 %v6041, %v6280
        %v6302 = vmul.f32 %v6042, %v6280
        %v6303 = vmul.f32 %v6043, %v6280
        %v6304 = vmul.f32 %v6044, %v6280
        %v6305 = vmul.f32 %v6045, %v6280
        %v6306 = vmul.f32 %v6046, %v6280
        %v6307 = vmul.f32 %v6047, %v6280
        %v6308 = vmul.f32 %v6048, %v6280
        %v6309 = vmul.f32 %v6049, %v6280
        %v6310 = vmul.f32 %v6050, %v6280
        %v6311 = vmul.f32 %v6051, %v6280
        %v6312 = vmul.f32 %v6052, %v6280
        %v6313 = vmul.f32 %v6053, %v6280
        %v6314 = vmul.f32 %v6054, %v6280
        %v6315 = vmul.f32 %v6055, %v6280
        %v6316 = vmul.f32 %v6056, %v6280
        %v6317 = vmul.f32 %v6057, %v6280
        %v6318 = vmul.f32 %v6058, %v6280
        %v6319 = vmul.f32 %v6059, %v6280
        %v6320 = vmul.f32 %v6060, %v6280
        %v6321 = vmul.f32 %v6061, %v6280
        %v6322 = vmul.f32 %v6062, %v6280
        %v6323 = vmul.f32 %v6063, %v6280
        %v6324 = vmul.f32 %v6064, %v6280
        %v6325 = vmul.f32 %v6065, %v6280
        %v6326 = vmul.f32 %v6066, %v6280
        %v6327 = vmul.f32 %v6067, %v6280
        %v6328 = vmul.f32 %v6068, %v6280
        %v6329 = vmul.f32 %v6069, %v6280
        %v6330 = vmul.f32 %v6070, %v6280
        %v6331 = vmul.f32 %v6071, %v6280
        %v6332 = vmul.f32 %v6072, %v6280
        %v6333 = vmul.f32 %v6073, %v6280
        %v6334 = vmul.f32 %v6074, %v6280
        %v6335 = vmul.f32 %v6075, %v6280
        %v6336 = vmul.f32 %v6076, %v6280
        %v6337 = vmul.f32 %v6077, %v6280
        %v6338 = vmul.f32 %v6078, %v6280
        %v6339 = vmul.f32 %v6079, %v6280
        %v6340 = vmul.f32 %v6080, %v6280
        %v6341 = vmul.f32 %v6081, %v6280
        %v6342 = vmul.f32 %v6082, %v6280
        %v6343 = vmul.f32 %v6083, %v6280
        %v6344 = vmul.f32 %v6084, %v6280
        %v6345 = vmul.f32 %v6085, %v6280
        %v6346 = vmul.f32 %v6086, %v6280
        %v6347 = vmul.f32 %v6087, %v6280
        %v6348 = vmul.f32 %v6088, %v6280
        %v6349 = vmul.f32 %v6089, %v6280
        %v6350 = vmul.f32 %v6090, %v6280
        %v6351 = vmul.f32 %v6091, %v6280
        %v6352 = vmul.f32 %v6092, %v6280
        %v6353 = vmul.f32 %v6093, %v6280
        %v6354 = vmul.f32 %v6094, %v6280
        %v6355 = vmul.f32 %v6095, %v6280
        %v6356 = vmul.f32 %v6096, %v6280
        %v6357 = vmul.f32 %v6097, %v6280
        %v6358 = vmul.f32 %v6098, %v6280
        %v6359 = vmul.f32 %v6099, %v6280
        %v6360 = vmul.f32 %v6100, %v6280
        %v6361 = vmul.f32 %v6101, %v6280
        %v6362 = vmul.f32 %v6102, %v6280
        %v6363 = vmul.f32 %v6103, %v6280
        %v6364 = vmul.f32 %v6104, %v6280
        %v6365 = vmul.f32 %v6105, %v6280
        %v6366 = vmul.f32 %v6106, %v6280
        %v6367 = vmul.f32 %v6107, %v6280
        %v6368 = vmul.f32 %v6108, %v6280
        %v6369 = vmul.f32 %v6109, %v6280
        %v6370 = vmul.f32 %v6110, %v6280
        %v6371 = vmul.f32 %v6111, %v6280
        %v6372 = vmul.f32 %v6112, %v6280
        %v6373 = vmul.f32 %v6113, %v6280
        %v6374 = vmul.f32 %v6114, %v6280
        %v6375 = vmul.f32 %v6115, %v6280
        %v6376 = vmul.f32 %v6116, %v6280
        %v6377 = vmul.f32 %v6117, %v6280
        %v6378 = vmul.f32 %v6118, %v6280
        %v6379 = vmul.f32 %v6119, %v6280
        %v6380 = vmul.f32 %v6120, %v6280
        %v6381 = vmul.f32 %v6121, %v6280
        %v6382 = vmul.f32 %v6122, %v6280
        %v6383 = vmul.f32 %v6123, %v6280
        %v6384 = vmul.f32 %v6124, %v6280
        %v6385 = vmul.f32 %v6125, %v6280
        %v6386 = vmul.f32 %v6126, %v6280
        %v6387 = vmul.f32 %v6127, %v6280
        %v6388 = vmul.f32 %v6128, %v6280
        %v6389 = vmul.f32 %v6129, %v6280
        %v6390 = vmul.f32 %v6130, %v6280
        %v6391 = vmul.f32 %v6131, %v6280
        %v6392 = vmul.f32 %v6132, %v6280
        %v6393 = vmul.f32 %v6133, %v6280
        %v6394 = vmul.f32 %v6134, %v6280
        %v6395 = vmul.f32 %v6135, %v6280
        %v6396 = vmul.f32 %v6136, %v6280
        %v6397 = vmul.f32 %v6137, %v6280
        %v6398 = vmul.f32 %v6138, %v6280
        %v6399 = vmul.f32 %v6139, %v6280
        %v6400 = vmul.f32 %v6140, %v6280
        %v6401 = vmul.f32 %v6141, %v6280
        %v6402 = vmul.f32 %v6142, %v6280
        %v6403 = vmul.f32 %v6143, %v6280
        %v6404 = vmul.f32 %v6144, %v6280
        %v6405 = vmul.f32 %v6145, %v6280
        %v6406 = vmul.f32 %v6146, %v6280
        %v6407 = vmul.f32 %v6147, %v6280
        %v6408 = vmul.f32 %v6148, %v6280
        %v6409 = vmul.f32 %v6149, %v6280
        %v6410 = vmul.f32 %v6150, %v6280
        %v6411 = vmul.f32 %v6151, %v6280
        %v6412 = vmul.f32 %v6152, %v6280
        %v6413 = vmul.f32 %v6153, %v6280
        %v6414 = vmul.f32 %v6154, %v6280
        %v6415 = vmul.f32 %v6155, %v6280
        %v6416 = vmul.f32 %v6156, %v6280
        %v6417 = vmul.f32 %v6157, %v6280
        %v6418 = vmul.f32 %v6158, %v6280
        %v6419 = vmul.f32 %v6159, %v6280
        %v6420 = vmul.f32 %v6160, %v6280
        %v6421 = vmul.f32 %v6161, %v6280
        %v6422 = vmul.f32 %v6162, %v6280
        %v6423 = vmul.f32 %v6163, %v6280
        %v6424 = vmul.f32 %v6164, %v6280
        %v6425 = vmul.f32 %v6165, %v6280
        %v6426 = vmul.f32 %v6166, %v6280
        %v6427 = vmul.f32 %v6167, %v6280
        %v6428 = vmul.f32 %v6168, %v6280
        %v6429 = vmul.f32 %v6169, %v6280
        %v6430 = vmul.f32 %v6170, %v6280
        %v6431 = vmul.f32 %v6171, %v6280
        %v6432 = vmul.f32 %v6172, %v6280
        %v6433 = vmul.f32 %v6173, %v6280
        %v6434 = vmul.f32 %v6174, %v6280
        %v6435 = vmul.f32 %v6175, %v6280
        %v6436 = vmul.f32 %v6176, %v6280
        %v6437 = vmul.f32 %v6177, %v6280
        %v6438 = vmul.f32 %v6178, %v6280
        %v6439 = vmul.f32 %v6179, %v6280
        %v6440 = vmul.f32 %v6180, %v6280
        %v6441 = vmul.f32 %v6181, %v6280
        %v6442 = vmul.f32 %v6182, %v6280
        %v6443 = vmul.f32 %v6183, %v6280
        %v6444 = vmul.f32 %v6184, %v6280
        %v6445 = vmul.f32 %v6185, %v6280
        %v6446 = vmul.f32 %v6186, %v6280
        %v6447 = vmul.f32 %v6187, %v6280
        %v6448 = vmul.f32 %v6188, %v6280
        %v6449 = vmul.f32 %v6189, %v6280
        %v6450 = vmul.f32 %v6190, %v6280
        %v6451 = vmul.f32 %v6191, %v6280
        %v6452 = vmul.f32 %v6192, %v6280
        %v6453 = vmul.f32 %v6193, %v6280
        %v6454 = vmul.f32 %v6194, %v6280
        %v6455 = vmul.f32 %v6195, %v6280
        %v6456 = vmul.f32 %v6196, %v6280
        %v6457 = vmul.f32 %v6197, %v6280
        %v6458 = vmul.f32 %v6198, %v6280
        %v6459 = vmul.f32 %v6199, %v6280
        %v6460 = vmul.f32 %v6200, %v6280
        %v6461 = vmul.f32 %v6201, %v6280
        %v6462 = vmul.f32 %v6202, %v6280
        %v6463 = vmul.f32 %v6203, %v6280
        %v6464 = vmul.f32 %v6204, %v6280
        %v6465 = vmul.f32 %v6205, %v6280
        %v6466 = vmul.f32 %v6206, %v6280
        %v6467 = vmul.f32 %v6207, %v6280
        %v6468 = vmul.f32 %v6208, %v6280
        %v6469 = vmul.f32 %v6209, %v6280
        %v6470 = vmul.f32 %v6210, %v6280
        %v6471 = vmul.f32 %v6211, %v6280
        %v6472 = vmul.f32 %v6212, %v6280
        %v6473 = vmul.f32 %v6213, %v6280
        %v6474 = vmul.f32 %v6214, %v6280
        %v6475 = vmul.f32 %v6215, %v6280
        %v6476 = vmul.f32 %v6216, %v6280
        %v6477 = vmul.f32 %v6217, %v6280
        %v6478 = vmul.f32 %v6218, %v6280
        %v6479 = vmul.f32 %v6219, %v6280
        %v6480 = vmul.f32 %v6220, %v6280
        %v6481 = vmul.f32 %v6221, %v6280
        %v6482 = vmul.f32 %v6222, %v6280
        %v6483 = vmul.f32 %v6223, %v6280
        %v6484 = vmul.f32 %v6224, %v6280
        %v6485 = vmul.f32 %v6225, %v6280
        %v6486 = vmul.f32 %v6226, %v6280
        %v6487 = vmul.f32 %v6227, %v6280
        %v6488 = vmul.f32 %v6228, %v6280
        %v6489 = vmul.f32 %v6229, %v6280
        %v6490 = vmul.f32 %v6230, %v6280
        %v6491 = vmul.f32 %v6231, %v6280
        %v6492 = vmul.f32 %v6232, %v6280
        %v6493 = vmul.f32 %v6233, %v6280
        %v6494 = vmul.f32 %v6234, %v6280
        %v6495 = vmul.f32 %v6235, %v6280
        %v6496 = vmul.f32 %v6236, %v6280
        %v6497 = vmul.f32 %v6237, %v6280
        %v6498 = vmul.f32 %v6238, %v6280
        %v6499 = vmul.f32 %v6239, %v6280
        %v6500 = vmul.f32 %v6240, %v6280
        %v6501 = vmul.f32 %v6241, %v6280
        %v6502 = vmul.f32 %v6242, %v6280
        %v6503 = vmul.f32 %v6243, %v6280
        %v6504 = vmul.f32 %v6244, %v6280
        %v6505 = vmul.f32 %v6245, %v6280
        %v6506 = vmul.f32 %v6246, %v6280
        %v6507 = vmul.f32 %v6247, %v6280
        %v6508 = vmul.f32 %v6248, %v6280
        %v6509 = vmul.f32 %v6249, %v6280
        %v6510 = vmul.f32 %v6250, %v6280
        %v6511 = vmul.f32 %v6251, %v6280
        %v6512 = vmul.f32 %v6252, %v6280
        %v6513 = vmul.f32 %v6253, %v6280
        %v6514 = vmul.f32 %v6254, %v6280
        %v6515 = vmul.f32 %v6255, %v6280
        %v6516 = vmul.f32 %v6256, %v6280
        %v6517 = vmul.f32 %v6257, %v6280
        %v6518 = vmul.f32 %v6258, %v6280
        %v6519 = vmul.f32 %v6259, %v6280
        %v6520 = vmul.f32 %v6260, %v6280
        %v6521 = vmul.f32 %v6261, %v6280
        %v6522 = vmul.f32 %v6262, %v6280
        %v6523 = vmul.f32 %v6263, %v6280
        %v6524 = vmul.f32 %v6264, %v6280
        %v6525 = vmul.f32 %v6265, %v6280
        %v6526 = vmul.f32 %v6266, %v6280
        %v6527 = vmul.f32 %v6267, %v6280
        %v6528 = vmul.f32 %v6268, %v6280
        %v6529 = vmul.f32 %v6269, %v6280
        %v6530 = vmul.f32 %v6270, %v6280
        %v6531 = vmul.f32 %v6271, %v6280
        %v6532 = vmul.f32 %v6272, %v6280
        %v6533 = vmul.f32 %v6273, %v6280
        %v6534 = vmul.f32 %v6274, %v6280
        %v6535 = vmul.f32 %v6275, %v6280
        %v6536 = vmul.f32 %v6276, %v6280
        %v6537 = vmul.f32 %v6277, %v6280
        %v6538 = vld [vmem:[%s5] sm:$0x1]
        %v6540 = vperm.slane %v6538, 0
        %v6542 = vadd.f32 %v6282, %v6540
        %v6543 = vadd.f32 %v6283, %v6540
        %v6544 = vadd.f32 %v6284, %v6540
        %v6545 = vadd.f32 %v6285, %v6540
        %v6546 = vadd.f32 %v6286, %v6540
        %v6547 = vadd.f32 %v6287, %v6540
        %v6548 = vadd.f32 %v6288, %v6540
        %v6549 = vadd.f32 %v6289, %v6540
        %v6550 = vadd.f32 %v6290, %v6540
        %v6551 = vadd.f32 %v6291, %v6540
        %v6552 = vadd.f32 %v6292, %v6540
        %v6553 = vadd.f32 %v6293, %v6540
        %v6554 = vadd.f32 %v6294, %v6540
        %v6555 = vadd.f32 %v6295, %v6540
        %v6556 = vadd.f32 %v6296, %v6540
        %v6557 = vadd.f32 %v6297, %v6540
        %v6558 = vadd.f32 %v6298, %v6540
        %v6559 = vadd.f32 %v6299, %v6540
        %v6560 = vadd.f32 %v6300, %v6540
        %v6561 = vadd.f32 %v6301, %v6540
        %v6562 = vadd.f32 %v6302, %v6540
        %v6563 = vadd.f32 %v6303, %v6540
        %v6564 = vadd.f32 %v6304, %v6540
        %v6565 = vadd.f32 %v6305, %v6540
        %v6566 = vadd.f32 %v6306, %v6540
        %v6567 = vadd.f32 %v6307, %v6540
        %v6568 = vadd.f32 %v6308, %v6540
        %v6569 = vadd.f32 %v6309, %v6540
        %v6570 = vadd.f32 %v6310, %v6540
        %v6571 = vadd.f32 %v6311, %v6540
        %v6572 = vadd.f32 %v6312, %v6540
        %v6573 = vadd.f32 %v6313, %v6540
        %v6574 = vadd.f32 %v6314, %v6540
        %v6575 = vadd.f32 %v6315, %v6540
        %v6576 = vadd.f32 %v6316, %v6540
        %v6577 = vadd.f32 %v6317, %v6540
        %v6578 = vadd.f32 %v6318, %v6540
        %v6579 = vadd.f32 %v6319, %v6540
        %v6580 = vadd.f32 %v6320, %v6540
        %v6581 = vadd.f32 %v6321, %v6540
        %v6582 = vadd.f32 %v6322, %v6540
        %v6583 = vadd.f32 %v6323, %v6540
        %v6584 = vadd.f32 %v6324, %v6540
        %v6585 = vadd.f32 %v6325, %v6540
        %v6586 = vadd.f32 %v6326, %v6540
        %v6587 = vadd.f32 %v6327, %v6540
        %v6588 = vadd.f32 %v6328, %v6540
        %v6589 = vadd.f32 %v6329, %v6540
        %v6590 = vadd.f32 %v6330, %v6540
        %v6591 = vadd.f32 %v6331, %v6540
        %v6592 = vadd.f32 %v6332, %v6540
        %v6593 = vadd.f32 %v6333, %v6540
        %v6594 = vadd.f32 %v6334, %v6540
        %v6595 = vadd.f32 %v6335, %v6540
        %v6596 = vadd.f32 %v6336, %v6540
        %v6597 = vadd.f32 %v6337, %v6540
        %v6598 = vadd.f32 %v6338, %v6540
        %v6599 = vadd.f32 %v6339, %v6540
        %v6600 = vadd.f32 %v6340, %v6540
        %v6601 = vadd.f32 %v6341, %v6540
        %v6602 = vadd.f32 %v6342, %v6540
        %v6603 = vadd.f32 %v6343, %v6540
        %v6604 = vadd.f32 %v6344, %v6540
        %v6605 = vadd.f32 %v6345, %v6540
        %v6606 = vadd.f32 %v6346, %v6540
        %v6607 = vadd.f32 %v6347, %v6540
        %v6608 = vadd.f32 %v6348, %v6540
        %v6609 = vadd.f32 %v6349, %v6540
        %v6610 = vadd.f32 %v6350, %v6540
        %v6611 = vadd.f32 %v6351, %v6540
        %v6612 = vadd.f32 %v6352, %v6540
        %v6613 = vadd.f32 %v6353, %v6540
        %v6614 = vadd.f32 %v6354, %v6540
        %v6615 = vadd.f32 %v6355, %v6540
        %v6616 = vadd.f32 %v6356, %v6540
        %v6617 = vadd.f32 %v6357, %v6540
        %v6618 = vadd.f32 %v6358, %v6540
        %v6619 = vadd.f32 %v6359, %v6540
        %v6620 = vadd.f32 %v6360, %v6540
        %v6621 = vadd.f32 %v6361, %v6540
        %v6622 = vadd.f32 %v6362, %v6540
        %v6623 = vadd.f32 %v6363, %v6540
        %v6624 = vadd.f32 %v6364, %v6540
        %v6625 = vadd.f32 %v6365, %v6540
        %v6626 = vadd.f32 %v6366, %v6540
        %v6627 = vadd.f32 %v6367, %v6540
        %v6628 = vadd.f32 %v6368, %v6540
        %v6629 = vadd.f32 %v6369, %v6540
        %v6630 = vadd.f32 %v6370, %v6540
        %v6631 = vadd.f32 %v6371, %v6540
        %v6632 = vadd.f32 %v6372, %v6540
        %v6633 = vadd.f32 %v6373, %v6540
        %v6634 = vadd.f32 %v6374, %v6540
        %v6635 = vadd.f32 %v6375, %v6540
        %v6636 = vadd.f32 %v6376, %v6540
        %v6637 = vadd.f32 %v6377, %v6540
        %v6638 = vadd.f32 %v6378, %v6540
        %v6639 = vadd.f32 %v6379, %v6540
        %v6640 = vadd.f32 %v6380, %v6540
        %v6641 = vadd.f32 %v6381, %v6540
        %v6642 = vadd.f32 %v6382, %v6540
        %v6643 = vadd.f32 %v6383, %v6540
        %v6644 = vadd.f32 %v6384, %v6540
        %v6645 = vadd.f32 %v6385, %v6540
        %v6646 = vadd.f32 %v6386, %v6540
        %v6647 = vadd.f32 %v6387, %v6540
        %v6648 = vadd.f32 %v6388, %v6540
        %v6649 = vadd.f32 %v6389, %v6540
        %v6650 = vadd.f32 %v6390, %v6540
        %v6651 = vadd.f32 %v6391, %v6540
        %v6652 = vadd.f32 %v6392, %v6540
        %v6653 = vadd.f32 %v6393, %v6540
        %v6654 = vadd.f32 %v6394, %v6540
        %v6655 = vadd.f32 %v6395, %v6540
        %v6656 = vadd.f32 %v6396, %v6540
        %v6657 = vadd.f32 %v6397, %v6540
        %v6658 = vadd.f32 %v6398, %v6540
        %v6659 = vadd.f32 %v6399, %v6540
        %v6660 = vadd.f32 %v6400, %v6540
        %v6661 = vadd.f32 %v6401, %v6540
        %v6662 = vadd.f32 %v6402, %v6540
        %v6663 = vadd.f32 %v6403, %v6540
        %v6664 = vadd.f32 %v6404, %v6540
        %v6665 = vadd.f32 %v6405, %v6540
        %v6666 = vadd.f32 %v6406, %v6540
        %v6667 = vadd.f32 %v6407, %v6540
        %v6668 = vadd.f32 %v6408, %v6540
        %v6669 = vadd.f32 %v6409, %v6540
        %v6670 = vadd.f32 %v6410, %v6540
        %v6671 = vadd.f32 %v6411, %v6540
        %v6672 = vadd.f32 %v6412, %v6540
        %v6673 = vadd.f32 %v6413, %v6540
        %v6674 = vadd.f32 %v6414, %v6540
        %v6675 = vadd.f32 %v6415, %v6540
        %v6676 = vadd.f32 %v6416, %v6540
        %v6677 = vadd.f32 %v6417, %v6540
        %v6678 = vadd.f32 %v6418, %v6540
        %v6679 = vadd.f32 %v6419, %v6540
        %v6680 = vadd.f32 %v6420, %v6540
        %v6681 = vadd.f32 %v6421, %v6540
        %v6682 = vadd.f32 %v6422, %v6540
        %v6683 = vadd.f32 %v6423, %v6540
        %v6684 = vadd.f32 %v6424, %v6540
        %v6685 = vadd.f32 %v6425, %v6540
        %v6686 = vadd.f32 %v6426, %v6540
        %v6687 = vadd.f32 %v6427, %v6540
        %v6688 = vadd.f32 %v6428, %v6540
        %v6689 = vadd.f32 %v6429, %v6540
        %v6690 = vadd.f32 %v6430, %v6540
        %v6691 = vadd.f32 %v6431, %v6540
        %v6692 = vadd.f32 %v6432, %v6540
        %v6693 = vadd.f32 %v6433, %v6540
        %v6694 = vadd.f32 %v6434, %v6540
        %v6695 = vadd.f32 %v6435, %v6540
        %v6696 = vadd.f32 %v6436, %v6540
        %v6697 = vadd.f32 %v6437, %v6540
        %v6698 = vadd.f32 %v6438, %v6540
        %v6699 = vadd.f32 %v6439, %v6540
        %v6700 = vadd.f32 %v6440, %v6540
        %v6701 = vadd.f32 %v6441, %v6540
        %v6702 = vadd.f32 %v6442, %v6540
        %v6703 = vadd.f32 %v6443, %v6540
        %v6704 = vadd.f32 %v6444, %v6540
        %v6705 = vadd.f32 %v6445, %v6540
        %v6706 = vadd.f32 %v6446, %v6540
        %v6707 = vadd.f32 %v6447, %v6540
        %v6708 = vadd.f32 %v6448, %v6540
        %v6709 = vadd.f32 %v6449, %v6540
        %v6710 = vadd.f32 %v6450, %v6540
        %v6711 = vadd.f32 %v6451, %v6540
        %v6712 = vadd.f32 %v6452, %v6540
        %v6713 = vadd.f32 %v6453, %v6540
        %v6714 = vadd.f32 %v6454, %v6540
        %v6715 = vadd.f32 %v6455, %v6540
        %v6716 = vadd.f32 %v6456, %v6540
        %v6717 = vadd.f32 %v6457, %v6540
        %v6718 = vadd.f32 %v6458, %v6540
        %v6719 = vadd.f32 %v6459, %v6540
        %v6720 = vadd.f32 %v6460, %v6540
        %v6721 = vadd.f32 %v6461, %v6540
        %v6722 = vadd.f32 %v6462, %v6540
        %v6723 = vadd.f32 %v6463, %v6540
        %v6724 = vadd.f32 %v6464, %v6540
        %v6725 = vadd.f32 %v6465, %v6540
        %v6726 = vadd.f32 %v6466, %v6540
        %v6727 = vadd.f32 %v6467, %v6540
        %v6728 = vadd.f32 %v6468, %v6540
        %v6729 = vadd.f32 %v6469, %v6540
        %v6730 = vadd.f32 %v6470, %v6540
        %v6731 = vadd.f32 %v6471, %v6540
        %v6732 = vadd.f32 %v6472, %v6540
        %v6733 = vadd.f32 %v6473, %v6540
        %v6734 = vadd.f32 %v6474, %v6540
        %v6735 = vadd.f32 %v6475, %v6540
        %v6736 = vadd.f32 %v6476, %v6540
        %v6737 = vadd.f32 %v6477, %v6540
        %v6738 = vadd.f32 %v6478, %v6540
        %v6739 = vadd.f32 %v6479, %v6540
        %v6740 = vadd.f32 %v6480, %v6540
        %v6741 = vadd.f32 %v6481, %v6540
        %v6742 = vadd.f32 %v6482, %v6540
        %v6743 = vadd.f32 %v6483, %v6540
        %v6744 = vadd.f32 %v6484, %v6540
        %v6745 = vadd.f32 %v6485, %v6540
        %v6746 = vadd.f32 %v6486, %v6540
        %v6747 = vadd.f32 %v6487, %v6540
        %v6748 = vadd.f32 %v6488, %v6540
        %v6749 = vadd.f32 %v6489, %v6540
        %v6750 = vadd.f32 %v6490, %v6540
        %v6751 = vadd.f32 %v6491, %v6540
        %v6752 = vadd.f32 %v6492, %v6540
        %v6753 = vadd.f32 %v6493, %v6540
        %v6754 = vadd.f32 %v6494, %v6540
        %v6755 = vadd.f32 %v6495, %v6540
        %v6756 = vadd.f32 %v6496, %v6540
        %v6757 = vadd.f32 %v6497, %v6540
        %v6758 = vadd.f32 %v6498, %v6540
        %v6759 = vadd.f32 %v6499, %v6540
        %v6760 = vadd.f32 %v6500, %v6540
        %v6761 = vadd.f32 %v6501, %v6540
        %v6762 = vadd.f32 %v6502, %v6540
        %v6763 = vadd.f32 %v6503, %v6540
        %v6764 = vadd.f32 %v6504, %v6540
        %v6765 = vadd.f32 %v6505, %v6540
        %v6766 = vadd.f32 %v6506, %v6540
        %v6767 = vadd.f32 %v6507, %v6540
        %v6768 = vadd.f32 %v6508, %v6540
        %v6769 = vadd.f32 %v6509, %v6540
        %v6770 = vadd.f32 %v6510, %v6540
        %v6771 = vadd.f32 %v6511, %v6540
        %v6772 = vadd.f32 %v6512, %v6540
        %v6773 = vadd.f32 %v6513, %v6540
        %v6774 = vadd.f32 %v6514, %v6540
        %v6775 = vadd.f32 %v6515, %v6540
        %v6776 = vadd.f32 %v6516, %v6540
        %v6777 = vadd.f32 %v6517, %v6540
        %v6778 = vadd.f32 %v6518, %v6540
        %v6779 = vadd.f32 %v6519, %v6540
        %v6780 = vadd.f32 %v6520, %v6540
        %v6781 = vadd.f32 %v6521, %v6540
        %v6782 = vadd.f32 %v6522, %v6540
        %v6783 = vadd.f32 %v6523, %v6540
        %v6784 = vadd.f32 %v6524, %v6540
        %v6785 = vadd.f32 %v6525, %v6540
        %v6786 = vadd.f32 %v6526, %v6540
        %v6787 = vadd.f32 %v6527, %v6540
        %v6788 = vadd.f32 %v6528, %v6540
        %v6789 = vadd.f32 %v6529, %v6540
        %v6790 = vadd.f32 %v6530, %v6540
        %v6791 = vadd.f32 %v6531, %v6540
        %v6792 = vadd.f32 %v6532, %v6540
        %v6793 = vadd.f32 %v6533, %v6540
        %v6794 = vadd.f32 %v6534, %v6540
        %v6795 = vadd.f32 %v6535, %v6540
        %v6796 = vadd.f32 %v6536, %v6540
        %v6797 = vadd.f32 %v6537, %v6540
        %v6798 = vld [vmem:[#allocation2] sm:$0xff]
        %v6799 = vld [vmem:[#allocation2 + $0x8] sm:$0xff]
        %v6800 = vld [vmem:[#allocation2 + $0x10] sm:$0xff]
        %v6801 = vld [vmem:[#allocation2 + $0x18] sm:$0xff]
        %v6802 = vld [vmem:[#allocation2 + $0x20] sm:$0xff]
        %v6803 = vld [vmem:[#allocation2 + $0x28] sm:$0xff]
        %v6804 = vld [vmem:[#allocation2 + $0x30] sm:$0xff]
        %v6805 = vld [vmem:[#allocation2 + $0x38] sm:$0xff]
        %v6806 = vld [vmem:[#allocation2 + $0x40] sm:$0xff]
        %v6807 = vld [vmem:[#allocation2 + $0x48] sm:$0xff]
        %v6808 = vld [vmem:[#allocation2 + $0x50] sm:$0xff]
        %v6809 = vld [vmem:[#allocation2 + $0x58] sm:$0xff]
        %v6810 = vld [vmem:[#allocation2 + $0x60] sm:$0xff]
        %v6811 = vld [vmem:[#allocation2 + $0x68] sm:$0xff]
        %v6812 = vld [vmem:[#allocation2 + $0x70] sm:$0xff]
        %v6813 = vld [vmem:[#allocation2 + $0x78] sm:$0xff]
        %v6814 = vld [vmem:[%s7] sm:$0x1]
        %v6816 = vperm.slane %v6814, 0
        %6818 = vmatpush.msra.mxu0 %v6813
        %6819 = vmatpush.msra.mxu0 %v6812
        %6820 = vmatpush.msra.mxu0 %v6811
        %6821 = vmatpush.msra.mxu0 %v6810
        %6822 = vmatpush.msra.mxu0 %v6809
        %6823 = vmatpush.msra.mxu0 %v6808
        %6824 = vmatpush.msra.mxu0 %v6807
        %6825 = vmatpush.msra.mxu0 %v6806
        %6826 = vmatpush.msra.mxu0 %v6805
        %6827 = vmatpush.msra.mxu0 %v6804
        %6828 = vmatpush.msra.mxu0 %v6803
        %6829 = vmatpush.msra.mxu0 %v6802
        %6830 = vmatpush.msra.mxu0 %v6801
        %6831 = vmatpush.msra.mxu0 %v6800
        %6832 = vmatpush.msra.mxu0 %v6799
        %6833 = vmatpush.msra.mxu0 %v6798
        %6834 = vmatmul.f32.gmra.mxu0 %v6542
        %v6835 = vpop.f32.mrf.mxu0
        %v6836 = vadd.f32 %v6816, %v6835
        %6837 = vmatmul.f32.gmra.mxu0 %v6543
        %v6838 = vpop.f32.mrf.mxu0
        %v6839 = vadd.f32 %v6816, %v6838
        %6840 = vmatmul.f32.gmra.mxu0 %v6544
        %v6841 = vpop.f32.mrf.mxu0
        %v6842 = vadd.f32 %v6816, %v6841
        %6843 = vmatmul.f32.gmra.mxu0 %v6545
        %v6844 = vpop.f32.mrf.mxu0
        %v6845 = vadd.f32 %v6816, %v6844
        %6846 = vmatmul.f32.gmra.mxu0 %v6546
        %v6847 = vpop.f32.mrf.mxu0
        %v6848 = vadd.f32 %v6816, %v6847
        %6849 = vmatmul.f32.gmra.mxu0 %v6547
        %v6850 = vpop.f32.mrf.mxu0
        %v6851 = vadd.f32 %v6816, %v6850
        %6852 = vmatmul.f32.gmra.mxu0 %v6548
        %v6853 = vpop.f32.mrf.mxu0
        %v6854 = vadd.f32 %v6816, %v6853
        %6855 = vmatmul.f32.gmra.mxu0 %v6549
        %v6856 = vpop.f32.mrf.mxu0
        %v6857 = vadd.f32 %v6816, %v6856
        %6858 = vmatmul.f32.gmra.mxu0 %v6550
        %v6859 = vpop.f32.mrf.mxu0
        %v6860 = vadd.f32 %v6816, %v6859
        %6861 = vmatmul.f32.gmra.mxu0 %v6551
        %v6862 = vpop.f32.mrf.mxu0
        %v6863 = vadd.f32 %v6816, %v6862
        %6864 = vmatmul.f32.gmra.mxu0 %v6552
        %v6865 = vpop.f32.mrf.mxu0
        %v6866 = vadd.f32 %v6816, %v6865
        %6867 = vmatmul.f32.gmra.mxu0 %v6553
        %v6868 = vpop.f32.mrf.mxu0
        %v6869 = vadd.f32 %v6816, %v6868
        %6870 = vmatmul.f32.gmra.mxu0 %v6554
        %v6871 = vpop.f32.mrf.mxu0
        %v6872 = vadd.f32 %v6816, %v6871
        %6873 = vmatmul.f32.gmra.mxu0 %v6555
        %v6874 = vpop.f32.mrf.mxu0
        %v6875 = vadd.f32 %v6816, %v6874
        %6876 = vmatmul.f32.gmra.mxu0 %v6556
        %v6877 = vpop.f32.mrf.mxu0
        %v6878 = vadd.f32 %v6816, %v6877
        %6879 = vmatmul.f32.gmra.mxu0 %v6557
        %v6880 = vpop.f32.mrf.mxu0
        %v6881 = vadd.f32 %v6816, %v6880
        %6882 = vmatmul.f32.gmra.mxu0 %v6558
        %v6883 = vpop.f32.mrf.mxu0
        %v6884 = vadd.f32 %v6816, %v6883
        %6885 = vmatmul.f32.gmra.mxu0 %v6559
        %v6886 = vpop.f32.mrf.mxu0
        %v6887 = vadd.f32 %v6816, %v6886
        %6888 = vmatmul.f32.gmra.mxu0 %v6560
        %v6889 = vpop.f32.mrf.mxu0
        %v6890 = vadd.f32 %v6816, %v6889
        %6891 = vmatmul.f32.gmra.mxu0 %v6561
        %v6892 = vpop.f32.mrf.mxu0
        %v6893 = vadd.f32 %v6816, %v6892
        %6894 = vmatmul.f32.gmra.mxu0 %v6562
        %v6895 = vpop.f32.mrf.mxu0
        %v6896 = vadd.f32 %v6816, %v6895
        %6897 = vmatmul.f32.gmra.mxu0 %v6563
        %v6898 = vpop.f32.mrf.mxu0
        %v6899 = vadd.f32 %v6816, %v6898
        %6900 = vmatmul.f32.gmra.mxu0 %v6564
        %v6901 = vpop.f32.mrf.mxu0
        %v6902 = vadd.f32 %v6816, %v6901
        %6903 = vmatmul.f32.gmra.mxu0 %v6565
        %v6904 = vpop.f32.mrf.mxu0
        %v6905 = vadd.f32 %v6816, %v6904
        %6906 = vmatmul.f32.gmra.mxu0 %v6566
        %v6907 = vpop.f32.mrf.mxu0
        %v6908 = vadd.f32 %v6816, %v6907
        %6909 = vmatmul.f32.gmra.mxu0 %v6567
        %v6910 = vpop.f32.mrf.mxu0
        %v6911 = vadd.f32 %v6816, %v6910
        %6912 = vmatmul.f32.gmra.mxu0 %v6568
        %v6913 = vpop.f32.mrf.mxu0
        %v6914 = vadd.f32 %v6816, %v6913
        %6915 = vmatmul.f32.gmra.mxu0 %v6569
        %v6916 = vpop.f32.mrf.mxu0
        %v6917 = vadd.f32 %v6816, %v6916
        %6918 = vmatmul.f32.gmra.mxu0 %v6570
        %v6919 = vpop.f32.mrf.mxu0
        %v6920 = vadd.f32 %v6816, %v6919
        %6921 = vmatmul.f32.gmra.mxu0 %v6571
        %v6922 = vpop.f32.mrf.mxu0
        %v6923 = vadd.f32 %v6816, %v6922
        %6924 = vmatmul.f32.gmra.mxu0 %v6572
        %v6925 = vpop.f32.mrf.mxu0
        %v6926 = vadd.f32 %v6816, %v6925
        %6927 = vmatmul.f32.gmra.mxu0 %v6573
        %v6928 = vpop.f32.mrf.mxu0
        %v6929 = vadd.f32 %v6816, %v6928
        %6930 = vmatmul.f32.gmra.mxu0 %v6574
        %v6931 = vpop.f32.mrf.mxu0
        %v6932 = vadd.f32 %v6816, %v6931
        %6933 = vmatmul.f32.gmra.mxu0 %v6575
        %v6934 = vpop.f32.mrf.mxu0
        %v6935 = vadd.f32 %v6816, %v6934
        %6936 = vmatmul.f32.gmra.mxu0 %v6576
        %v6937 = vpop.f32.mrf.mxu0
        %v6938 = vadd.f32 %v6816, %v6937
        %6939 = vmatmul.f32.gmra.mxu0 %v6577
        %v6940 = vpop.f32.mrf.mxu0
        %v6941 = vadd.f32 %v6816, %v6940
        %6942 = vmatmul.f32.gmra.mxu0 %v6578
        %v6943 = vpop.f32.mrf.mxu0
        %v6944 = vadd.f32 %v6816, %v6943
        %6945 = vmatmul.f32.gmra.mxu0 %v6579
        %v6946 = vpop.f32.mrf.mxu0
        %v6947 = vadd.f32 %v6816, %v6946
        %6948 = vmatmul.f32.gmra.mxu0 %v6580
        %v6949 = vpop.f32.mrf.mxu0
        %v6950 = vadd.f32 %v6816, %v6949
        %6951 = vmatmul.f32.gmra.mxu0 %v6581
        %v6952 = vpop.f32.mrf.mxu0
        %v6953 = vadd.f32 %v6816, %v6952
        %6954 = vmatmul.f32.gmra.mxu0 %v6582
        %v6955 = vpop.f32.mrf.mxu0
        %v6956 = vadd.f32 %v6816, %v6955
        %6957 = vmatmul.f32.gmra.mxu0 %v6583
        %v6958 = vpop.f32.mrf.mxu0
        %v6959 = vadd.f32 %v6816, %v6958
        %6960 = vmatmul.f32.gmra.mxu0 %v6584
        %v6961 = vpop.f32.mrf.mxu0
        %v6962 = vadd.f32 %v6816, %v6961
        %6963 = vmatmul.f32.gmra.mxu0 %v6585
        %v6964 = vpop.f32.mrf.mxu0
        %v6965 = vadd.f32 %v6816, %v6964
        %6966 = vmatmul.f32.gmra.mxu0 %v6586
        %v6967 = vpop.f32.mrf.mxu0
        %v6968 = vadd.f32 %v6816, %v6967
        %6969 = vmatmul.f32.gmra.mxu0 %v6587
        %v6970 = vpop.f32.mrf.mxu0
        %v6971 = vadd.f32 %v6816, %v6970
        %6972 = vmatmul.f32.gmra.mxu0 %v6588
        %v6973 = vpop.f32.mrf.mxu0
        %v6974 = vadd.f32 %v6816, %v6973
        %6975 = vmatmul.f32.gmra.mxu0 %v6589
        %v6976 = vpop.f32.mrf.mxu0
        %v6977 = vadd.f32 %v6816, %v6976
        %6978 = vmatmul.f32.gmra.mxu0 %v6590
        %v6979 = vpop.f32.mrf.mxu0
        %v6980 = vadd.f32 %v6816, %v6979
        %6981 = vmatmul.f32.gmra.mxu0 %v6591
        %v6982 = vpop.f32.mrf.mxu0
        %v6983 = vadd.f32 %v6816, %v6982
        %6984 = vmatmul.f32.gmra.mxu0 %v6592
        %v6985 = vpop.f32.mrf.mxu0
        %v6986 = vadd.f32 %v6816, %v6985
        %6987 = vmatmul.f32.gmra.mxu0 %v6593
        %v6988 = vpop.f32.mrf.mxu0
        %v6989 = vadd.f32 %v6816, %v6988
        %6990 = vmatmul.f32.gmra.mxu0 %v6594
        %v6991 = vpop.f32.mrf.mxu0
        %v6992 = vadd.f32 %v6816, %v6991
        %6993 = vmatmul.f32.gmra.mxu0 %v6595
        %v6994 = vpop.f32.mrf.mxu0
        %v6995 = vadd.f32 %v6816, %v6994
        %6996 = vmatmul.f32.gmra.mxu0 %v6596
        %v6997 = vpop.f32.mrf.mxu0
        %v6998 = vadd.f32 %v6816, %v6997
        %6999 = vmatmul.f32.gmra.mxu0 %v6597
        %v7000 = vpop.f32.mrf.mxu0
        %v7001 = vadd.f32 %v6816, %v7000
        %7002 = vmatmul.f32.gmra.mxu0 %v6598
        %v7003 = vpop.f32.mrf.mxu0
        %v7004 = vadd.f32 %v6816, %v7003
        %7005 = vmatmul.f32.gmra.mxu0 %v6599
        %v7006 = vpop.f32.mrf.mxu0
        %v7007 = vadd.f32 %v6816, %v7006
        %7008 = vmatmul.f32.gmra.mxu0 %v6600
        %v7009 = vpop.f32.mrf.mxu0
        %v7010 = vadd.f32 %v6816, %v7009
        %7011 = vmatmul.f32.gmra.mxu0 %v6601
        %v7012 = vpop.f32.mrf.mxu0
        %v7013 = vadd.f32 %v6816, %v7012
        %7014 = vmatmul.f32.gmra.mxu0 %v6602
        %v7015 = vpop.f32.mrf.mxu0
        %v7016 = vadd.f32 %v6816, %v7015
        %7017 = vmatmul.f32.gmra.mxu0 %v6603
        %v7018 = vpop.f32.mrf.mxu0
        %v7019 = vadd.f32 %v6816, %v7018
        %7020 = vmatmul.f32.gmra.mxu0 %v6604
        %v7021 = vpop.f32.mrf.mxu0
        %v7022 = vadd.f32 %v6816, %v7021
        %7023 = vmatmul.f32.gmra.mxu0 %v6605
        %v7024 = vpop.f32.mrf.mxu0
        %v7025 = vadd.f32 %v6816, %v7024
        %7026 = vmatmul.f32.gmra.mxu0 %v6606
        %v7027 = vpop.f32.mrf.mxu0
        %v7028 = vadd.f32 %v6816, %v7027
        %7029 = vmatmul.f32.gmra.mxu0 %v6607
        %v7030 = vpop.f32.mrf.mxu0
        %v7031 = vadd.f32 %v6816, %v7030
        %7032 = vmatmul.f32.gmra.mxu0 %v6608
        %v7033 = vpop.f32.mrf.mxu0
        %v7034 = vadd.f32 %v6816, %v7033
        %7035 = vmatmul.f32.gmra.mxu0 %v6609
        %v7036 = vpop.f32.mrf.mxu0
        %v7037 = vadd.f32 %v6816, %v7036
        %7038 = vmatmul.f32.gmra.mxu0 %v6610
        %v7039 = vpop.f32.mrf.mxu0
        %v7040 = vadd.f32 %v6816, %v7039
        %7041 = vmatmul.f32.gmra.mxu0 %v6611
        %v7042 = vpop.f32.mrf.mxu0
        %v7043 = vadd.f32 %v6816, %v7042
        %7044 = vmatmul.f32.gmra.mxu0 %v6612
        %v7045 = vpop.f32.mrf.mxu0
        %v7046 = vadd.f32 %v6816, %v7045
        %7047 = vmatmul.f32.gmra.mxu0 %v6613
        %v7048 = vpop.f32.mrf.mxu0
        %v7049 = vadd.f32 %v6816, %v7048
        %7050 = vmatmul.f32.gmra.mxu0 %v6614
        %v7051 = vpop.f32.mrf.mxu0
        %v7052 = vadd.f32 %v6816, %v7051
        %7053 = vmatmul.f32.gmra.mxu0 %v6615
        %v7054 = vpop.f32.mrf.mxu0
        %v7055 = vadd.f32 %v6816, %v7054
        %7056 = vmatmul.f32.gmra.mxu0 %v6616
        %v7057 = vpop.f32.mrf.mxu0
        %v7058 = vadd.f32 %v6816, %v7057
        %7059 = vmatmul.f32.gmra.mxu0 %v6617
        %v7060 = vpop.f32.mrf.mxu0
        %v7061 = vadd.f32 %v6816, %v7060
        %7062 = vmatmul.f32.gmra.mxu0 %v6618
        %v7063 = vpop.f32.mrf.mxu0
        %v7064 = vadd.f32 %v6816, %v7063
        %7065 = vmatmul.f32.gmra.mxu0 %v6619
        %v7066 = vpop.f32.mrf.mxu0
        %v7067 = vadd.f32 %v6816, %v7066
        %7068 = vmatmul.f32.gmra.mxu0 %v6620
        %v7069 = vpop.f32.mrf.mxu0
        %v7070 = vadd.f32 %v6816, %v7069
        %7071 = vmatmul.f32.gmra.mxu0 %v6621
        %v7072 = vpop.f32.mrf.mxu0
        %v7073 = vadd.f32 %v6816, %v7072
        %7074 = vmatmul.f32.gmra.mxu0 %v6622
        %v7075 = vpop.f32.mrf.mxu0
        %v7076 = vadd.f32 %v6816, %v7075
        %7077 = vmatmul.f32.gmra.mxu0 %v6623
        %v7078 = vpop.f32.mrf.mxu0
        %v7079 = vadd.f32 %v6816, %v7078
        %7080 = vmatmul.f32.gmra.mxu0 %v6624
        %v7081 = vpop.f32.mrf.mxu0
        %v7082 = vadd.f32 %v6816, %v7081
        %7083 = vmatmul.f32.gmra.mxu0 %v6625
        %v7084 = vpop.f32.mrf.mxu0
        %v7085 = vadd.f32 %v6816, %v7084
        %7086 = vmatmul.f32.gmra.mxu0 %v6626
        %v7087 = vpop.f32.mrf.mxu0
        %v7088 = vadd.f32 %v6816, %v7087
        %7089 = vmatmul.f32.gmra.mxu0 %v6627
        %v7090 = vpop.f32.mrf.mxu0
        %v7091 = vadd.f32 %v6816, %v7090
        %7092 = vmatmul.f32.gmra.mxu0 %v6628
        %v7093 = vpop.f32.mrf.mxu0
        %v7094 = vadd.f32 %v6816, %v7093
        %7095 = vmatmul.f32.gmra.mxu0 %v6629
        %v7096 = vpop.f32.mrf.mxu0
        %v7097 = vadd.f32 %v6816, %v7096
        %7098 = vmatmul.f32.gmra.mxu0 %v6630
        %v7099 = vpop.f32.mrf.mxu0
        %v7100 = vadd.f32 %v6816, %v7099
        %7101 = vmatmul.f32.gmra.mxu0 %v6631
        %v7102 = vpop.f32.mrf.mxu0
        %v7103 = vadd.f32 %v6816, %v7102
        %7104 = vmatmul.f32.gmra.mxu0 %v6632
        %v7105 = vpop.f32.mrf.mxu0
        %v7106 = vadd.f32 %v6816, %v7105
        %7107 = vmatmul.f32.gmra.mxu0 %v6633
        %v7108 = vpop.f32.mrf.mxu0
        %v7109 = vadd.f32 %v6816, %v7108
        %7110 = vmatmul.f32.gmra.mxu0 %v6634
        %v7111 = vpop.f32.mrf.mxu0
        %v7112 = vadd.f32 %v6816, %v7111
        %7113 = vmatmul.f32.gmra.mxu0 %v6635
        %v7114 = vpop.f32.mrf.mxu0
        %v7115 = vadd.f32 %v6816, %v7114
        %7116 = vmatmul.f32.gmra.mxu0 %v6636
        %v7117 = vpop.f32.mrf.mxu0
        %v7118 = vadd.f32 %v6816, %v7117
        %7119 = vmatmul.f32.gmra.mxu0 %v6637
        %v7120 = vpop.f32.mrf.mxu0
        %v7121 = vadd.f32 %v6816, %v7120
        %7122 = vmatmul.f32.gmra.mxu0 %v6638
        %v7123 = vpop.f32.mrf.mxu0
        %v7124 = vadd.f32 %v6816, %v7123
        %7125 = vmatmul.f32.gmra.mxu0 %v6639
        %v7126 = vpop.f32.mrf.mxu0
        %v7127 = vadd.f32 %v6816, %v7126
        %7128 = vmatmul.f32.gmra.mxu0 %v6640
        %v7129 = vpop.f32.mrf.mxu0
        %v7130 = vadd.f32 %v6816, %v7129
        %7131 = vmatmul.f32.gmra.mxu0 %v6641
        %v7132 = vpop.f32.mrf.mxu0
        %v7133 = vadd.f32 %v6816, %v7132
        %7134 = vmatmul.f32.gmra.mxu0 %v6642
        %v7135 = vpop.f32.mrf.mxu0
        %v7136 = vadd.f32 %v6816, %v7135
        %7137 = vmatmul.f32.gmra.mxu0 %v6643
        %v7138 = vpop.f32.mrf.mxu0
        %v7139 = vadd.f32 %v6816, %v7138
        %7140 = vmatmul.f32.gmra.mxu0 %v6644
        %v7141 = vpop.f32.mrf.mxu0
        %v7142 = vadd.f32 %v6816, %v7141
        %7143 = vmatmul.f32.gmra.mxu0 %v6645
        %v7144 = vpop.f32.mrf.mxu0
        %v7145 = vadd.f32 %v6816, %v7144
        %7146 = vmatmul.f32.gmra.mxu0 %v6646
        %v7147 = vpop.f32.mrf.mxu0
        %v7148 = vadd.f32 %v6816, %v7147
        %7149 = vmatmul.f32.gmra.mxu0 %v6647
        %v7150 = vpop.f32.mrf.mxu0
        %v7151 = vadd.f32 %v6816, %v7150
        %7152 = vmatmul.f32.gmra.mxu0 %v6648
        %v7153 = vpop.f32.mrf.mxu0
        %v7154 = vadd.f32 %v6816, %v7153
        %7155 = vmatmul.f32.gmra.mxu0 %v6649
        %v7156 = vpop.f32.mrf.mxu0
        %v7157 = vadd.f32 %v6816, %v7156
        %7158 = vmatmul.f32.gmra.mxu0 %v6650
        %v7159 = vpop.f32.mrf.mxu0
        %v7160 = vadd.f32 %v6816, %v7159
        %7161 = vmatmul.f32.gmra.mxu0 %v6651
        %v7162 = vpop.f32.mrf.mxu0
        %v7163 = vadd.f32 %v6816, %v7162
        %7164 = vmatmul.f32.gmra.mxu0 %v6652
        %v7165 = vpop.f32.mrf.mxu0
        %v7166 = vadd.f32 %v6816, %v7165
        %7167 = vmatmul.f32.gmra.mxu0 %v6653
        %v7168 = vpop.f32.mrf.mxu0
        %v7169 = vadd.f32 %v6816, %v7168
        %7170 = vmatmul.f32.gmra.mxu0 %v6654
        %v7171 = vpop.f32.mrf.mxu0
        %v7172 = vadd.f32 %v6816, %v7171
        %7173 = vmatmul.f32.gmra.mxu0 %v6655
        %v7174 = vpop.f32.mrf.mxu0
        %v7175 = vadd.f32 %v6816, %v7174
        %7176 = vmatmul.f32.gmra.mxu0 %v6656
        %v7177 = vpop.f32.mrf.mxu0
        %v7178 = vadd.f32 %v6816, %v7177
        %7179 = vmatmul.f32.gmra.mxu0 %v6657
        %v7180 = vpop.f32.mrf.mxu0
        %v7181 = vadd.f32 %v6816, %v7180
        %7182 = vmatmul.f32.gmra.mxu0 %v6658
        %v7183 = vpop.f32.mrf.mxu0
        %v7184 = vadd.f32 %v6816, %v7183
        %7185 = vmatmul.f32.gmra.mxu0 %v6659
        %v7186 = vpop.f32.mrf.mxu0
        %v7187 = vadd.f32 %v6816, %v7186
        %7188 = vmatmul.f32.gmra.mxu0 %v6660
        %v7189 = vpop.f32.mrf.mxu0
        %v7190 = vadd.f32 %v6816, %v7189
        %7191 = vmatmul.f32.gmra.mxu0 %v6661
        %v7192 = vpop.f32.mrf.mxu0
        %v7193 = vadd.f32 %v6816, %v7192
        %7194 = vmatmul.f32.gmra.mxu0 %v6662
        %v7195 = vpop.f32.mrf.mxu0
        %v7196 = vadd.f32 %v6816, %v7195
        %7197 = vmatmul.f32.gmra.mxu0 %v6663
        %v7198 = vpop.f32.mrf.mxu0
        %v7199 = vadd.f32 %v6816, %v7198
        %7200 = vmatmul.f32.gmra.mxu0 %v6664
        %v7201 = vpop.f32.mrf.mxu0
        %v7202 = vadd.f32 %v6816, %v7201
        %7203 = vmatmul.f32.gmra.mxu0 %v6665
        %v7204 = vpop.f32.mrf.mxu0
        %v7205 = vadd.f32 %v6816, %v7204
        %7206 = vmatmul.f32.gmra.mxu0 %v6666
        %v7207 = vpop.f32.mrf.mxu0
        %v7208 = vadd.f32 %v6816, %v7207
        %7209 = vmatmul.f32.gmra.mxu0 %v6667
        %v7210 = vpop.f32.mrf.mxu0
        %v7211 = vadd.f32 %v6816, %v7210
        %7212 = vmatmul.f32.gmra.mxu0 %v6668
        %v7213 = vpop.f32.mrf.mxu0
        %v7214 = vadd.f32 %v6816, %v7213
        %7215 = vmatmul.f32.gmra.mxu0 %v6669
        %v7216 = vpop.f32.mrf.mxu0
        %v7217 = vadd.f32 %v6816, %v7216
        %7218 = vmatmul.f32.gmra.mxu0 %v6670
        %v7219 = vpop.f32.mrf.mxu0
        %v7220 = vadd.f32 %v6816, %v7219
        %7221 = vmatmul.f32.gmra.mxu0 %v6671
        %v7222 = vpop.f32.mrf.mxu0
        %v7223 = vadd.f32 %v6816, %v7222
        %7224 = vmatmul.f32.gmra.mxu0 %v6672
        %v7225 = vpop.f32.mrf.mxu0
        %v7226 = vadd.f32 %v6816, %v7225
        %7227 = vmatmul.f32.gmra.mxu0 %v6673
        %v7228 = vpop.f32.mrf.mxu0
        %v7229 = vadd.f32 %v6816, %v7228
        %7230 = vmatmul.f32.gmra.mxu0 %v6674
        %v7231 = vpop.f32.mrf.mxu0
        %v7232 = vadd.f32 %v6816, %v7231
        %7233 = vmatmul.f32.gmra.mxu0 %v6675
        %v7234 = vpop.f32.mrf.mxu0
        %v7235 = vadd.f32 %v6816, %v7234
        %7236 = vmatmul.f32.gmra.mxu0 %v6676
        %v7237 = vpop.f32.mrf.mxu0
        %v7238 = vadd.f32 %v6816, %v7237
        %7239 = vmatmul.f32.gmra.mxu0 %v6677
        %v7240 = vpop.f32.mrf.mxu0
        %v7241 = vadd.f32 %v6816, %v7240
        %7242 = vmatmul.f32.gmra.mxu0 %v6678
        %v7243 = vpop.f32.mrf.mxu0
        %v7244 = vadd.f32 %v6816, %v7243
        %7245 = vmatmul.f32.gmra.mxu0 %v6679
        %v7246 = vpop.f32.mrf.mxu0
        %v7247 = vadd.f32 %v6816, %v7246
        %7248 = vmatmul.f32.gmra.mxu0 %v6680
        %v7249 = vpop.f32.mrf.mxu0
        %v7250 = vadd.f32 %v6816, %v7249
        %7251 = vmatmul.f32.gmra.mxu0 %v6681
        %v7252 = vpop.f32.mrf.mxu0
        %v7253 = vadd.f32 %v6816, %v7252
        %7254 = vmatmul.f32.gmra.mxu0 %v6682
        %v7255 = vpop.f32.mrf.mxu0
        %v7256 = vadd.f32 %v6816, %v7255
        %7257 = vmatmul.f32.gmra.mxu0 %v6683
        %v7258 = vpop.f32.mrf.mxu0
        %v7259 = vadd.f32 %v6816, %v7258
        %7260 = vmatmul.f32.gmra.mxu0 %v6684
        %v7261 = vpop.f32.mrf.mxu0
        %v7262 = vadd.f32 %v6816, %v7261
        %7263 = vmatmul.f32.gmra.mxu0 %v6685
        %v7264 = vpop.f32.mrf.mxu0
        %v7265 = vadd.f32 %v6816, %v7264
        %7266 = vmatmul.f32.gmra.mxu0 %v6686
        %v7267 = vpop.f32.mrf.mxu0
        %v7268 = vadd.f32 %v6816, %v7267
        %7269 = vmatmul.f32.gmra.mxu0 %v6687
        %v7270 = vpop.f32.mrf.mxu0
        %v7271 = vadd.f32 %v6816, %v7270
        %7272 = vmatmul.f32.gmra.mxu0 %v6688
        %v7273 = vpop.f32.mrf.mxu0
        %v7274 = vadd.f32 %v6816, %v7273
        %7275 = vmatmul.f32.gmra.mxu0 %v6689
        %v7276 = vpop.f32.mrf.mxu0
        %v7277 = vadd.f32 %v6816, %v7276
        %7278 = vmatmul.f32.gmra.mxu0 %v6690
        %v7279 = vpop.f32.mrf.mxu0
        %v7280 = vadd.f32 %v6816, %v7279
        %7281 = vmatmul.f32.gmra.mxu0 %v6691
        %v7282 = vpop.f32.mrf.mxu0
        %v7283 = vadd.f32 %v6816, %v7282
        %7284 = vmatmul.f32.gmra.mxu0 %v6692
        %v7285 = vpop.f32.mrf.mxu0
        %v7286 = vadd.f32 %v6816, %v7285
        %7287 = vmatmul.f32.gmra.mxu0 %v6693
        %v7288 = vpop.f32.mrf.mxu0
        %v7289 = vadd.f32 %v6816, %v7288
        %7290 = vmatmul.f32.gmra.mxu0 %v6694
        %v7291 = vpop.f32.mrf.mxu0
        %v7292 = vadd.f32 %v6816, %v7291
        %7293 = vmatmul.f32.gmra.mxu0 %v6695
        %v7294 = vpop.f32.mrf.mxu0
        %v7295 = vadd.f32 %v6816, %v7294
        %7296 = vmatmul.f32.gmra.mxu0 %v6696
        %v7297 = vpop.f32.mrf.mxu0
        %v7298 = vadd.f32 %v6816, %v7297
        %7299 = vmatmul.f32.gmra.mxu0 %v6697
        %v7300 = vpop.f32.mrf.mxu0
        %v7301 = vadd.f32 %v6816, %v7300
        %7302 = vmatmul.f32.gmra.mxu0 %v6698
        %v7303 = vpop.f32.mrf.mxu0
        %v7304 = vadd.f32 %v6816, %v7303
        %7305 = vmatmul.f32.gmra.mxu0 %v6699
        %v7306 = vpop.f32.mrf.mxu0
        %v7307 = vadd.f32 %v6816, %v7306
        %7308 = vmatmul.f32.gmra.mxu0 %v6700
        %v7309 = vpop.f32.mrf.mxu0
        %v7310 = vadd.f32 %v6816, %v7309
        %7311 = vmatmul.f32.gmra.mxu0 %v6701
        %v7312 = vpop.f32.mrf.mxu0
        %v7313 = vadd.f32 %v6816, %v7312
        %7314 = vmatmul.f32.gmra.mxu0 %v6702
        %v7315 = vpop.f32.mrf.mxu0
        %v7316 = vadd.f32 %v6816, %v7315
        %7317 = vmatmul.f32.gmra.mxu0 %v6703
        %v7318 = vpop.f32.mrf.mxu0
        %v7319 = vadd.f32 %v6816, %v7318
        %7320 = vmatmul.f32.gmra.mxu0 %v6704
        %v7321 = vpop.f32.mrf.mxu0
        %v7322 = vadd.f32 %v6816, %v7321
        %7323 = vmatmul.f32.gmra.mxu0 %v6705
        %v7324 = vpop.f32.mrf.mxu0
        %v7325 = vadd.f32 %v6816, %v7324
        %7326 = vmatmul.f32.gmra.mxu0 %v6706
        %v7327 = vpop.f32.mrf.mxu0
        %v7328 = vadd.f32 %v6816, %v7327
        %7329 = vmatmul.f32.gmra.mxu0 %v6707
        %v7330 = vpop.f32.mrf.mxu0
        %v7331 = vadd.f32 %v6816, %v7330
        %7332 = vmatmul.f32.gmra.mxu0 %v6708
        %v7333 = vpop.f32.mrf.mxu0
        %v7334 = vadd.f32 %v6816, %v7333
        %7335 = vmatmul.f32.gmra.mxu0 %v6709
        %v7336 = vpop.f32.mrf.mxu0
        %v7337 = vadd.f32 %v6816, %v7336
        %7338 = vmatmul.f32.gmra.mxu0 %v6710
        %v7339 = vpop.f32.mrf.mxu0
        %v7340 = vadd.f32 %v6816, %v7339
        %7341 = vmatmul.f32.gmra.mxu0 %v6711
        %v7342 = vpop.f32.mrf.mxu0
        %v7343 = vadd.f32 %v6816, %v7342
        %7344 = vmatmul.f32.gmra.mxu0 %v6712
        %v7345 = vpop.f32.mrf.mxu0
        %v7346 = vadd.f32 %v6816, %v7345
        %7347 = vmatmul.f32.gmra.mxu0 %v6713
        %v7348 = vpop.f32.mrf.mxu0
        %v7349 = vadd.f32 %v6816, %v7348
        %7350 = vmatmul.f32.gmra.mxu0 %v6714
        %v7351 = vpop.f32.mrf.mxu0
        %v7352 = vadd.f32 %v6816, %v7351
        %7353 = vmatmul.f32.gmra.mxu0 %v6715
        %v7354 = vpop.f32.mrf.mxu0
        %v7355 = vadd.f32 %v6816, %v7354
        %7356 = vmatmul.f32.gmra.mxu0 %v6716
        %v7357 = vpop.f32.mrf.mxu0
        %v7358 = vadd.f32 %v6816, %v7357
        %7359 = vmatmul.f32.gmra.mxu0 %v6717
        %v7360 = vpop.f32.mrf.mxu0
        %v7361 = vadd.f32 %v6816, %v7360
        %7362 = vmatmul.f32.gmra.mxu0 %v6718
        %v7363 = vpop.f32.mrf.mxu0
        %v7364 = vadd.f32 %v6816, %v7363
        %7365 = vmatmul.f32.gmra.mxu0 %v6719
        %v7366 = vpop.f32.mrf.mxu0
        %v7367 = vadd.f32 %v6816, %v7366
        %7368 = vmatmul.f32.gmra.mxu0 %v6720
        %v7369 = vpop.f32.mrf.mxu0
        %v7370 = vadd.f32 %v6816, %v7369
        %7371 = vmatmul.f32.gmra.mxu0 %v6721
        %v7372 = vpop.f32.mrf.mxu0
        %v7373 = vadd.f32 %v6816, %v7372
        %7374 = vmatmul.f32.gmra.mxu0 %v6722
        %v7375 = vpop.f32.mrf.mxu0
        %v7376 = vadd.f32 %v6816, %v7375
        %7377 = vmatmul.f32.gmra.mxu0 %v6723
        %v7378 = vpop.f32.mrf.mxu0
        %v7379 = vadd.f32 %v6816, %v7378
        %7380 = vmatmul.f32.gmra.mxu0 %v6724
        %v7381 = vpop.f32.mrf.mxu0
        %v7382 = vadd.f32 %v6816, %v7381
        %7383 = vmatmul.f32.gmra.mxu0 %v6725
        %v7384 = vpop.f32.mrf.mxu0
        %v7385 = vadd.f32 %v6816, %v7384
        %7386 = vmatmul.f32.gmra.mxu0 %v6726
        %v7387 = vpop.f32.mrf.mxu0
        %v7388 = vadd.f32 %v6816, %v7387
        %7389 = vmatmul.f32.gmra.mxu0 %v6727
        %v7390 = vpop.f32.mrf.mxu0
        %v7391 = vadd.f32 %v6816, %v7390
        %7392 = vmatmul.f32.gmra.mxu0 %v6728
        %v7393 = vpop.f32.mrf.mxu0
        %v7394 = vadd.f32 %v6816, %v7393
        %7395 = vmatmul.f32.gmra.mxu0 %v6729
        %v7396 = vpop.f32.mrf.mxu0
        %v7397 = vadd.f32 %v6816, %v7396
        %7398 = vmatmul.f32.gmra.mxu0 %v6730
        %v7399 = vpop.f32.mrf.mxu0
        %v7400 = vadd.f32 %v6816, %v7399
        %7401 = vmatmul.f32.gmra.mxu0 %v6731
        %v7402 = vpop.f32.mrf.mxu0
        %v7403 = vadd.f32 %v6816, %v7402
        %7404 = vmatmul.f32.gmra.mxu0 %v6732
        %v7405 = vpop.f32.mrf.mxu0
        %v7406 = vadd.f32 %v6816, %v7405
        %7407 = vmatmul.f32.gmra.mxu0 %v6733
        %v7408 = vpop.f32.mrf.mxu0
        %v7409 = vadd.f32 %v6816, %v7408
        %7410 = vmatmul.f32.gmra.mxu0 %v6734
        %v7411 = vpop.f32.mrf.mxu0
        %v7412 = vadd.f32 %v6816, %v7411
        %7413 = vmatmul.f32.gmra.mxu0 %v6735
        %v7414 = vpop.f32.mrf.mxu0
        %v7415 = vadd.f32 %v6816, %v7414
        %7416 = vmatmul.f32.gmra.mxu0 %v6736
        %v7417 = vpop.f32.mrf.mxu0
        %v7418 = vadd.f32 %v6816, %v7417
        %7419 = vmatmul.f32.gmra.mxu0 %v6737
        %v7420 = vpop.f32.mrf.mxu0
        %v7421 = vadd.f32 %v6816, %v7420
        %7422 = vmatmul.f32.gmra.mxu0 %v6738
        %v7423 = vpop.f32.mrf.mxu0
        %v7424 = vadd.f32 %v6816, %v7423
        %7425 = vmatmul.f32.gmra.mxu0 %v6739
        %v7426 = vpop.f32.mrf.mxu0
        %v7427 = vadd.f32 %v6816, %v7426
        %7428 = vmatmul.f32.gmra.mxu0 %v6740
        %v7429 = vpop.f32.mrf.mxu0
        %v7430 = vadd.f32 %v6816, %v7429
        %7431 = vmatmul.f32.gmra.mxu0 %v6741
        %v7432 = vpop.f32.mrf.mxu0
        %v7433 = vadd.f32 %v6816, %v7432
        %7434 = vmatmul.f32.gmra.mxu0 %v6742
        %v7435 = vpop.f32.mrf.mxu0
        %v7436 = vadd.f32 %v6816, %v7435
        %7437 = vmatmul.f32.gmra.mxu0 %v6743
        %v7438 = vpop.f32.mrf.mxu0
        %v7439 = vadd.f32 %v6816, %v7438
        %7440 = vmatmul.f32.gmra.mxu0 %v6744
        %v7441 = vpop.f32.mrf.mxu0
        %v7442 = vadd.f32 %v6816, %v7441
        %7443 = vmatmul.f32.gmra.mxu0 %v6745
        %v7444 = vpop.f32.mrf.mxu0
        %v7445 = vadd.f32 %v6816, %v7444
        %7446 = vmatmul.f32.gmra.mxu0 %v6746
        %v7447 = vpop.f32.mrf.mxu0
        %v7448 = vadd.f32 %v6816, %v7447
        %7449 = vmatmul.f32.gmra.mxu0 %v6747
        %v7450 = vpop.f32.mrf.mxu0
        %v7451 = vadd.f32 %v6816, %v7450
        %7452 = vmatmul.f32.gmra.mxu0 %v6748
        %v7453 = vpop.f32.mrf.mxu0
        %v7454 = vadd.f32 %v6816, %v7453
        %7455 = vmatmul.f32.gmra.mxu0 %v6749
        %v7456 = vpop.f32.mrf.mxu0
        %v7457 = vadd.f32 %v6816, %v7456
        %7458 = vmatmul.f32.gmra.mxu0 %v6750
        %v7459 = vpop.f32.mrf.mxu0
        %v7460 = vadd.f32 %v6816, %v7459
        %7461 = vmatmul.f32.gmra.mxu0 %v6751
        %v7462 = vpop.f32.mrf.mxu0
        %v7463 = vadd.f32 %v6816, %v7462
        %7464 = vmatmul.f32.gmra.mxu0 %v6752
        %v7465 = vpop.f32.mrf.mxu0
        %v7466 = vadd.f32 %v6816, %v7465
        %7467 = vmatmul.f32.gmra.mxu0 %v6753
        %v7468 = vpop.f32.mrf.mxu0
        %v7469 = vadd.f32 %v6816, %v7468
        %7470 = vmatmul.f32.gmra.mxu0 %v6754
        %v7471 = vpop.f32.mrf.mxu0
        %v7472 = vadd.f32 %v6816, %v7471
        %7473 = vmatmul.f32.gmra.mxu0 %v6755
        %v7474 = vpop.f32.mrf.mxu0
        %v7475 = vadd.f32 %v6816, %v7474
        %7476 = vmatmul.f32.gmra.mxu0 %v6756
        %v7477 = vpop.f32.mrf.mxu0
        %v7478 = vadd.f32 %v6816, %v7477
        %7479 = vmatmul.f32.gmra.mxu0 %v6757
        %v7480 = vpop.f32.mrf.mxu0
        %v7481 = vadd.f32 %v6816, %v7480
        %7482 = vmatmul.f32.gmra.mxu0 %v6758
        %v7483 = vpop.f32.mrf.mxu0
        %v7484 = vadd.f32 %v6816, %v7483
        %7485 = vmatmul.f32.gmra.mxu0 %v6759
        %v7486 = vpop.f32.mrf.mxu0
        %v7487 = vadd.f32 %v6816, %v7486
        %7488 = vmatmul.f32.gmra.mxu0 %v6760
        %v7489 = vpop.f32.mrf.mxu0
        %v7490 = vadd.f32 %v6816, %v7489
        %7491 = vmatmul.f32.gmra.mxu0 %v6761
        %v7492 = vpop.f32.mrf.mxu0
        %v7493 = vadd.f32 %v6816, %v7492
        %7494 = vmatmul.f32.gmra.mxu0 %v6762
        %v7495 = vpop.f32.mrf.mxu0
        %v7496 = vadd.f32 %v6816, %v7495
        %7497 = vmatmul.f32.gmra.mxu0 %v6763
        %v7498 = vpop.f32.mrf.mxu0
        %v7499 = vadd.f32 %v6816, %v7498
        %7500 = vmatmul.f32.gmra.mxu0 %v6764
        %v7501 = vpop.f32.mrf.mxu0
        %v7502 = vadd.f32 %v6816, %v7501
        %7503 = vmatmul.f32.gmra.mxu0 %v6765
        %v7504 = vpop.f32.mrf.mxu0
        %v7505 = vadd.f32 %v6816, %v7504
        %7506 = vmatmul.f32.gmra.mxu0 %v6766
        %v7507 = vpop.f32.mrf.mxu0
        %v7508 = vadd.f32 %v6816, %v7507
        %7509 = vmatmul.f32.gmra.mxu0 %v6767
        %v7510 = vpop.f32.mrf.mxu0
        %v7511 = vadd.f32 %v6816, %v7510
        %7512 = vmatmul.f32.gmra.mxu0 %v6768
        %v7513 = vpop.f32.mrf.mxu0
        %v7514 = vadd.f32 %v6816, %v7513
        %7515 = vmatmul.f32.gmra.mxu0 %v6769
        %v7516 = vpop.f32.mrf.mxu0
        %v7517 = vadd.f32 %v6816, %v7516
        %7518 = vmatmul.f32.gmra.mxu0 %v6770
        %v7519 = vpop.f32.mrf.mxu0
        %v7520 = vadd.f32 %v6816, %v7519
        %7521 = vmatmul.f32.gmra.mxu0 %v6771
        %v7522 = vpop.f32.mrf.mxu0
        %v7523 = vadd.f32 %v6816, %v7522
        %7524 = vmatmul.f32.gmra.mxu0 %v6772
        %v7525 = vpop.f32.mrf.mxu0
        %v7526 = vadd.f32 %v6816, %v7525
        %7527 = vmatmul.f32.gmra.mxu0 %v6773
        %v7528 = vpop.f32.mrf.mxu0
        %v7529 = vadd.f32 %v6816, %v7528
        %7530 = vmatmul.f32.gmra.mxu0 %v6774
        %v7531 = vpop.f32.mrf.mxu0
        %v7532 = vadd.f32 %v6816, %v7531
        %7533 = vmatmul.f32.gmra.mxu0 %v6775
        %v7534 = vpop.f32.mrf.mxu0
        %v7535 = vadd.f32 %v6816, %v7534
        %7536 = vmatmul.f32.gmra.mxu0 %v6776
        %v7537 = vpop.f32.mrf.mxu0
        %v7538 = vadd.f32 %v6816, %v7537
        %7539 = vmatmul.f32.gmra.mxu0 %v6777
        %v7540 = vpop.f32.mrf.mxu0
        %v7541 = vadd.f32 %v6816, %v7540
        %7542 = vmatmul.f32.gmra.mxu0 %v6778
        %v7543 = vpop.f32.mrf.mxu0
        %v7544 = vadd.f32 %v6816, %v7543
        %7545 = vmatmul.f32.gmra.mxu0 %v6779
        %v7546 = vpop.f32.mrf.mxu0
        %v7547 = vadd.f32 %v6816, %v7546
        %7548 = vmatmul.f32.gmra.mxu0 %v6780
        %v7549 = vpop.f32.mrf.mxu0
        %v7550 = vadd.f32 %v6816, %v7549
        %7551 = vmatmul.f32.gmra.mxu0 %v6781
        %v7552 = vpop.f32.mrf.mxu0
        %v7553 = vadd.f32 %v6816, %v7552
        %7554 = vmatmul.f32.gmra.mxu0 %v6782
        %v7555 = vpop.f32.mrf.mxu0
        %v7556 = vadd.f32 %v6816, %v7555
        %7557 = vmatmul.f32.gmra.mxu0 %v6783
        %v7558 = vpop.f32.mrf.mxu0
        %v7559 = vadd.f32 %v6816, %v7558
        %7560 = vmatmul.f32.gmra.mxu0 %v6784
        %v7561 = vpop.f32.mrf.mxu0
        %v7562 = vadd.f32 %v6816, %v7561
        %7563 = vmatmul.f32.gmra.mxu0 %v6785
        %v7564 = vpop.f32.mrf.mxu0
        %v7565 = vadd.f32 %v6816, %v7564
        %7566 = vmatmul.f32.gmra.mxu0 %v6786
        %v7567 = vpop.f32.mrf.mxu0
        %v7568 = vadd.f32 %v6816, %v7567
        %7569 = vmatmul.f32.gmra.mxu0 %v6787
        %v7570 = vpop.f32.mrf.mxu0
        %v7571 = vadd.f32 %v6816, %v7570
        %7572 = vmatmul.f32.gmra.mxu0 %v6788
        %v7573 = vpop.f32.mrf.mxu0
        %v7574 = vadd.f32 %v6816, %v7573
        %7575 = vmatmul.f32.gmra.mxu0 %v6789
        %v7576 = vpop.f32.mrf.mxu0
        %v7577 = vadd.f32 %v6816, %v7576
        %7578 = vmatmul.f32.gmra.mxu0 %v6790
        %v7579 = vpop.f32.mrf.mxu0
        %v7580 = vadd.f32 %v6816, %v7579
        %7581 = vmatmul.f32.gmra.mxu0 %v6791
        %v7582 = vpop.f32.mrf.mxu0
        %v7583 = vadd.f32 %v6816, %v7582
        %7584 = vmatmul.f32.gmra.mxu0 %v6792
        %v7585 = vpop.f32.mrf.mxu0
        %v7586 = vadd.f32 %v6816, %v7585
        %7587 = vmatmul.f32.gmra.mxu0 %v6793
        %v7588 = vpop.f32.mrf.mxu0
        %v7589 = vadd.f32 %v6816, %v7588
        %7590 = vmatmul.f32.gmra.mxu0 %v6794
        %v7591 = vpop.f32.mrf.mxu0
        %v7592 = vadd.f32 %v6816, %v7591
        %7593 = vmatmul.f32.gmra.mxu0 %v6795
        %v7594 = vpop.f32.mrf.mxu0
        %v7595 = vadd.f32 %v6816, %v7594
        %7596 = vmatmul.f32.gmra.mxu0 %v6796
        %v7597 = vpop.f32.mrf.mxu0
        %v7598 = vadd.f32 %v6816, %v7597
        %7599 = vmatmul.f32.gmra.mxu0 %v6797
        %v7600 = vpop.f32.mrf.mxu0
        %v7601 = vadd.f32 %v6816, %v7600
        %7602 = vdwg.mxu0
        %7603 = vst [vmem:[%s402] sm:$0xff] %v6836
        %7604 = vst [vmem:[%s402 + $0x8] sm:$0xff] %v6839
        %7605 = vst [vmem:[%s402 + $0x10] sm:$0xff] %v6842
        %7606 = vst [vmem:[%s402 + $0x18] sm:$0xff] %v6845
        %7607 = vst [vmem:[%s402 + $0x20] sm:$0xff] %v6848
        %7608 = vst [vmem:[%s402 + $0x28] sm:$0xff] %v6851
        %7609 = vst [vmem:[%s402 + $0x30] sm:$0xff] %v6854
        %7610 = vst [vmem:[%s402 + $0x38] sm:$0xff] %v6857
        %7611 = vst [vmem:[%s402 + $0x40] sm:$0xff] %v6860
        %7612 = vst [vmem:[%s402 + $0x48] sm:$0xff] %v6863
        %7613 = vst [vmem:[%s402 + $0x50] sm:$0xff] %v6866
        %7614 = vst [vmem:[%s402 + $0x58] sm:$0xff] %v6869
        %7615 = vst [vmem:[%s402 + $0x60] sm:$0xff] %v6872
        %7616 = vst [vmem:[%s402 + $0x68] sm:$0xff] %v6875
        %7617 = vst [vmem:[%s402 + $0x70] sm:$0xff] %v6878
        %7618 = vst [vmem:[%s402 + $0x78] sm:$0xff] %v6881
        %7619 = vst [vmem:[%s402 + $0x80] sm:$0xff] %v6884
        %7620 = vst [vmem:[%s402 + $0x88] sm:$0xff] %v6887
        %7621 = vst [vmem:[%s402 + $0x90] sm:$0xff] %v6890
        %7622 = vst [vmem:[%s402 + $0x98] sm:$0xff] %v6893
        %7623 = vst [vmem:[%s402 + $0xa0] sm:$0xff] %v6896
        %7624 = vst [vmem:[%s402 + $0xa8] sm:$0xff] %v6899
        %7625 = vst [vmem:[%s402 + $0xb0] sm:$0xff] %v6902
        %7626 = vst [vmem:[%s402 + $0xb8] sm:$0xff] %v6905
        %7627 = vst [vmem:[%s402 + $0xc0] sm:$0xff] %v6908
        %7628 = vst [vmem:[%s402 + $0xc8] sm:$0xff] %v6911
        %7629 = vst [vmem:[%s402 + $0xd0] sm:$0xff] %v6914
        %7630 = vst [vmem:[%s402 + $0xd8] sm:$0xff] %v6917
        %7631 = vst [vmem:[%s402 + $0xe0] sm:$0xff] %v6920
        %7632 = vst [vmem:[%s402 + $0xe8] sm:$0xff] %v6923
        %7633 = vst [vmem:[%s402 + $0xf0] sm:$0xff] %v6926
        %7634 = vst [vmem:[%s402 + $0xf8] sm:$0xff] %v6929
        %7635 = vst [vmem:[%s402 + $0x100] sm:$0xff] %v6932
        %7636 = vst [vmem:[%s402 + $0x108] sm:$0xff] %v6935
        %7637 = vst [vmem:[%s402 + $0x110] sm:$0xff] %v6938
        %7638 = vst [vmem:[%s402 + $0x118] sm:$0xff] %v6941
        %7639 = vst [vmem:[%s402 + $0x120] sm:$0xff] %v6944
        %7640 = vst [vmem:[%s402 + $0x128] sm:$0xff] %v6947
        %7641 = vst [vmem:[%s402 + $0x130] sm:$0xff] %v6950
        %7642 = vst [vmem:[%s402 + $0x138] sm:$0xff] %v6953
        %7643 = vst [vmem:[%s402 + $0x140] sm:$0xff] %v6956
        %7644 = vst [vmem:[%s402 + $0x148] sm:$0xff] %v6959
        %7645 = vst [vmem:[%s402 + $0x150] sm:$0xff] %v6962
        %7646 = vst [vmem:[%s402 + $0x158] sm:$0xff] %v6965
        %7647 = vst [vmem:[%s402 + $0x160] sm:$0xff] %v6968
        %7648 = vst [vmem:[%s402 + $0x168] sm:$0xff] %v6971
        %7649 = vst [vmem:[%s402 + $0x170] sm:$0xff] %v6974
        %7650 = vst [vmem:[%s402 + $0x178] sm:$0xff] %v6977
        %7651 = vst [vmem:[%s402 + $0x180] sm:$0xff] %v6980
        %7652 = vst [vmem:[%s402 + $0x188] sm:$0xff] %v6983
        %7653 = vst [vmem:[%s402 + $0x190] sm:$0xff] %v6986
        %7654 = vst [vmem:[%s402 + $0x198] sm:$0xff] %v6989
        %7655 = vst [vmem:[%s402 + $0x1a0] sm:$0xff] %v6992
        %7656 = vst [vmem:[%s402 + $0x1a8] sm:$0xff] %v6995
        %7657 = vst [vmem:[%s402 + $0x1b0] sm:$0xff] %v6998
        %7658 = vst [vmem:[%s402 + $0x1b8] sm:$0xff] %v7001
        %7659 = vst [vmem:[%s402 + $0x1c0] sm:$0xff] %v7004
        %7660 = vst [vmem:[%s402 + $0x1c8] sm:$0xff] %v7007
        %7661 = vst [vmem:[%s402 + $0x1d0] sm:$0xff] %v7010
        %7662 = vst [vmem:[%s402 + $0x1d8] sm:$0xff] %v7013
        %7663 = vst [vmem:[%s402 + $0x1e0] sm:$0xff] %v7016
        %7664 = vst [vmem:[%s402 + $0x1e8] sm:$0xff] %v7019
        %7665 = vst [vmem:[%s402 + $0x1f0] sm:$0xff] %v7022
        %7666 = vst [vmem:[%s402 + $0x1f8] sm:$0xff] %v7025
        %7667 = vst [vmem:[%s402 + $0x200] sm:$0xff] %v7028
        %7668 = vst [vmem:[%s402 + $0x208] sm:$0xff] %v7031
        %7669 = vst [vmem:[%s402 + $0x210] sm:$0xff] %v7034
        %7670 = vst [vmem:[%s402 + $0x218] sm:$0xff] %v7037
        %7671 = vst [vmem:[%s402 + $0x220] sm:$0xff] %v7040
        %7672 = vst [vmem:[%s402 + $0x228] sm:$0xff] %v7043
        %7673 = vst [vmem:[%s402 + $0x230] sm:$0xff] %v7046
        %7674 = vst [vmem:[%s402 + $0x238] sm:$0xff] %v7049
        %7675 = vst [vmem:[%s402 + $0x240] sm:$0xff] %v7052
        %7676 = vst [vmem:[%s402 + $0x248] sm:$0xff] %v7055
        %7677 = vst [vmem:[%s402 + $0x250] sm:$0xff] %v7058
        %7678 = vst [vmem:[%s402 + $0x258] sm:$0xff] %v7061
        %7679 = vst [vmem:[%s402 + $0x260] sm:$0xff] %v7064
        %7680 = vst [vmem:[%s402 + $0x268] sm:$0xff] %v7067
        %7681 = vst [vmem:[%s402 + $0x270] sm:$0xff] %v7070
        %7682 = vst [vmem:[%s402 + $0x278] sm:$0xff] %v7073
        %7683 = vst [vmem:[%s402 + $0x280] sm:$0xff] %v7076
        %7684 = vst [vmem:[%s402 + $0x288] sm:$0xff] %v7079
        %7685 = vst [vmem:[%s402 + $0x290] sm:$0xff] %v7082
        %7686 = vst [vmem:[%s402 + $0x298] sm:$0xff] %v7085
        %7687 = vst [vmem:[%s402 + $0x2a0] sm:$0xff] %v7088
        %7688 = vst [vmem:[%s402 + $0x2a8] sm:$0xff] %v7091
        %7689 = vst [vmem:[%s402 + $0x2b0] sm:$0xff] %v7094
        %7690 = vst [vmem:[%s402 + $0x2b8] sm:$0xff] %v7097
        %7691 = vst [vmem:[%s402 + $0x2c0] sm:$0xff] %v7100
        %7692 = vst [vmem:[%s402 + $0x2c8] sm:$0xff] %v7103
        %7693 = vst [vmem:[%s402 + $0x2d0] sm:$0xff] %v7106
        %7694 = vst [vmem:[%s402 + $0x2d8] sm:$0xff] %v7109
        %7695 = vst [vmem:[%s402 + $0x2e0] sm:$0xff] %v7112
        %7696 = vst [vmem:[%s402 + $0x2e8] sm:$0xff] %v7115
        %7697 = vst [vmem:[%s402 + $0x2f0] sm:$0xff] %v7118
        %7698 = vst [vmem:[%s402 + $0x2f8] sm:$0xff] %v7121
        %7699 = vst [vmem:[%s402 + $0x300] sm:$0xff] %v7124
        %7700 = vst [vmem:[%s402 + $0x308] sm:$0xff] %v7127
        %7701 = vst [vmem:[%s402 + $0x310] sm:$0xff] %v7130
        %7702 = vst [vmem:[%s402 + $0x318] sm:$0xff] %v7133
        %7703 = vst [vmem:[%s402 + $0x320] sm:$0xff] %v7136
        %7704 = vst [vmem:[%s402 + $0x328] sm:$0xff] %v7139
        %7705 = vst [vmem:[%s402 + $0x330] sm:$0xff] %v7142
        %7706 = vst [vmem:[%s402 + $0x338] sm:$0xff] %v7145
        %7707 = vst [vmem:[%s402 + $0x340] sm:$0xff] %v7148
        %7708 = vst [vmem:[%s402 + $0x348] sm:$0xff] %v7151
        %7709 = vst [vmem:[%s402 + $0x350] sm:$0xff] %v7154
        %7710 = vst [vmem:[%s402 + $0x358] sm:$0xff] %v7157
        %7711 = vst [vmem:[%s402 + $0x360] sm:$0xff] %v7160
        %7712 = vst [vmem:[%s402 + $0x368] sm:$0xff] %v7163
        %7713 = vst [vmem:[%s402 + $0x370] sm:$0xff] %v7166
        %7714 = vst [vmem:[%s402 + $0x378] sm:$0xff] %v7169
        %7715 = vst [vmem:[%s402 + $0x380] sm:$0xff] %v7172
        %7716 = vst [vmem:[%s402 + $0x388] sm:$0xff] %v7175
        %7717 = vst [vmem:[%s402 + $0x390] sm:$0xff] %v7178
        %7718 = vst [vmem:[%s402 + $0x398] sm:$0xff] %v7181
        %7719 = vst [vmem:[%s402 + $0x3a0] sm:$0xff] %v7184
        %7720 = vst [vmem:[%s402 + $0x3a8] sm:$0xff] %v7187
        %7721 = vst [vmem:[%s402 + $0x3b0] sm:$0xff] %v7190
        %7722 = vst [vmem:[%s402 + $0x3b8] sm:$0xff] %v7193
        %7723 = vst [vmem:[%s402 + $0x3c0] sm:$0xff] %v7196
        %7724 = vst [vmem:[%s402 + $0x3c8] sm:$0xff] %v7199
        %7725 = vst [vmem:[%s402 + $0x3d0] sm:$0xff] %v7202
        %7726 = vst [vmem:[%s402 + $0x3d8] sm:$0xff] %v7205
        %7727 = vst [vmem:[%s402 + $0x3e0] sm:$0xff] %v7208
        %7728 = vst [vmem:[%s402 + $0x3e8] sm:$0xff] %v7211
        %7729 = vst [vmem:[%s402 + $0x3f0] sm:$0xff] %v7214
        %7730 = vst [vmem:[%s402 + $0x3f8] sm:$0xff] %v7217
        %7731 = vst [vmem:[%s409] sm:$0xff] %v7220
        %7732 = vst [vmem:[%s409 + $0x8] sm:$0xff] %v7223
        %7733 = vst [vmem:[%s409 + $0x10] sm:$0xff] %v7226
        %7734 = vst [vmem:[%s409 + $0x18] sm:$0xff] %v7229
        %7735 = vst [vmem:[%s409 + $0x20] sm:$0xff] %v7232
        %7736 = vst [vmem:[%s409 + $0x28] sm:$0xff] %v7235
        %7737 = vst [vmem:[%s409 + $0x30] sm:$0xff] %v7238
        %7738 = vst [vmem:[%s409 + $0x38] sm:$0xff] %v7241
        %7739 = vst [vmem:[%s409 + $0x40] sm:$0xff] %v7244
        %7740 = vst [vmem:[%s409 + $0x48] sm:$0xff] %v7247
        %7741 = vst [vmem:[%s409 + $0x50] sm:$0xff] %v7250
        %7742 = vst [vmem:[%s409 + $0x58] sm:$0xff] %v7253
        %7743 = vst [vmem:[%s409 + $0x60] sm:$0xff] %v7256
        %7744 = vst [vmem:[%s409 + $0x68] sm:$0xff] %v7259
        %7745 = vst [vmem:[%s409 + $0x70] sm:$0xff] %v7262
        %7746 = vst [vmem:[%s409 + $0x78] sm:$0xff] %v7265
        %7747 = vst [vmem:[%s409 + $0x80] sm:$0xff] %v7268
        %7748 = vst [vmem:[%s409 + $0x88] sm:$0xff] %v7271
        %7749 = vst [vmem:[%s409 + $0x90] sm:$0xff] %v7274
        %7750 = vst [vmem:[%s409 + $0x98] sm:$0xff] %v7277
        %7751 = vst [vmem:[%s409 + $0xa0] sm:$0xff] %v7280
        %7752 = vst [vmem:[%s409 + $0xa8] sm:$0xff] %v7283
        %7753 = vst [vmem:[%s409 + $0xb0] sm:$0xff] %v7286
        %7754 = vst [vmem:[%s409 + $0xb8] sm:$0xff] %v7289
        %7755 = vst [vmem:[%s409 + $0xc0] sm:$0xff] %v7292
        %7756 = vst [vmem:[%s409 + $0xc8] sm:$0xff] %v7295
        %7757 = vst [vmem:[%s409 + $0xd0] sm:$0xff] %v7298
        %7758 = vst [vmem:[%s409 + $0xd8] sm:$0xff] %v7301
        %7759 = vst [vmem:[%s409 + $0xe0] sm:$0xff] %v7304
        %7760 = vst [vmem:[%s409 + $0xe8] sm:$0xff] %v7307
        %7761 = vst [vmem:[%s409 + $0xf0] sm:$0xff] %v7310
        %7762 = vst [vmem:[%s409 + $0xf8] sm:$0xff] %v7313
        %7763 = vst [vmem:[%s409 + $0x100] sm:$0xff] %v7316
        %7764 = vst [vmem:[%s409 + $0x108] sm:$0xff] %v7319
        %7765 = vst [vmem:[%s409 + $0x110] sm:$0xff] %v7322
        %7766 = vst [vmem:[%s409 + $0x118] sm:$0xff] %v7325
        %7767 = vst [vmem:[%s409 + $0x120] sm:$0xff] %v7328
        %7768 = vst [vmem:[%s409 + $0x128] sm:$0xff] %v7331
        %7769 = vst [vmem:[%s409 + $0x130] sm:$0xff] %v7334
        %7770 = vst [vmem:[%s409 + $0x138] sm:$0xff] %v7337
        %7771 = vst [vmem:[%s409 + $0x140] sm:$0xff] %v7340
        %7772 = vst [vmem:[%s409 + $0x148] sm:$0xff] %v7343
        %7773 = vst [vmem:[%s409 + $0x150] sm:$0xff] %v7346
        %7774 = vst [vmem:[%s409 + $0x158] sm:$0xff] %v7349
        %7775 = vst [vmem:[%s409 + $0x160] sm:$0xff] %v7352
        %7776 = vst [vmem:[%s409 + $0x168] sm:$0xff] %v7355
        %7777 = vst [vmem:[%s409 + $0x170] sm:$0xff] %v7358
        %7778 = vst [vmem:[%s409 + $0x178] sm:$0xff] %v7361
        %7779 = vst [vmem:[%s409 + $0x180] sm:$0xff] %v7364
        %7780 = vst [vmem:[%s409 + $0x188] sm:$0xff] %v7367
        %7781 = vst [vmem:[%s409 + $0x190] sm:$0xff] %v7370
        %7782 = vst [vmem:[%s409 + $0x198] sm:$0xff] %v7373
        %7783 = vst [vmem:[%s409 + $0x1a0] sm:$0xff] %v7376
        %7784 = vst [vmem:[%s409 + $0x1a8] sm:$0xff] %v7379
        %7785 = vst [vmem:[%s409 + $0x1b0] sm:$0xff] %v7382
        %7786 = vst [vmem:[%s409 + $0x1b8] sm:$0xff] %v7385
        %7787 = vst [vmem:[%s409 + $0x1c0] sm:$0xff] %v7388
        %7788 = vst [vmem:[%s409 + $0x1c8] sm:$0xff] %v7391
        %7789 = vst [vmem:[%s409 + $0x1d0] sm:$0xff] %v7394
        %7790 = vst [vmem:[%s409 + $0x1d8] sm:$0xff] %v7397
        %7791 = vst [vmem:[%s409 + $0x1e0] sm:$0xff] %v7400
        %7792 = vst [vmem:[%s409 + $0x1e8] sm:$0xff] %v7403
        %7793 = vst [vmem:[%s409 + $0x1f0] sm:$0xff] %v7406
        %7794 = vst [vmem:[%s409 + $0x1f8] sm:$0xff] %v7409
        %7795 = vst [vmem:[%s409 + $0x200] sm:$0xff] %v7412
        %7796 = vst [vmem:[%s409 + $0x208] sm:$0xff] %v7415
        %7797 = vst [vmem:[%s409 + $0x210] sm:$0xff] %v7418
        %7798 = vst [vmem:[%s409 + $0x218] sm:$0xff] %v7421
        %7799 = vst [vmem:[%s409 + $0x220] sm:$0xff] %v7424
        %7800 = vst [vmem:[%s409 + $0x228] sm:$0xff] %v7427
        %7801 = vst [vmem:[%s409 + $0x230] sm:$0xff] %v7430
        %7802 = vst [vmem:[%s409 + $0x238] sm:$0xff] %v7433
        %7803 = vst [vmem:[%s409 + $0x240] sm:$0xff] %v7436
        %7804 = vst [vmem:[%s409 + $0x248] sm:$0xff] %v7439
        %7805 = vst [vmem:[%s409 + $0x250] sm:$0xff] %v7442
        %7806 = vst [vmem:[%s409 + $0x258] sm:$0xff] %v7445
        %7807 = vst [vmem:[%s409 + $0x260] sm:$0xff] %v7448
        %7808 = vst [vmem:[%s409 + $0x268] sm:$0xff] %v7451
        %7809 = vst [vmem:[%s409 + $0x270] sm:$0xff] %v7454
        %7810 = vst [vmem:[%s409 + $0x278] sm:$0xff] %v7457
        %7811 = vst [vmem:[%s409 + $0x280] sm:$0xff] %v7460
        %7812 = vst [vmem:[%s409 + $0x288] sm:$0xff] %v7463
        %7813 = vst [vmem:[%s409 + $0x290] sm:$0xff] %v7466
        %7814 = vst [vmem:[%s409 + $0x298] sm:$0xff] %v7469
        %7815 = vst [vmem:[%s409 + $0x2a0] sm:$0xff] %v7472
        %7816 = vst [vmem:[%s409 + $0x2a8] sm:$0xff] %v7475
        %7817 = vst [vmem:[%s409 + $0x2b0] sm:$0xff] %v7478
        %7818 = vst [vmem:[%s409 + $0x2b8] sm:$0xff] %v7481
        %7819 = vst [vmem:[%s409 + $0x2c0] sm:$0xff] %v7484
        %7820 = vst [vmem:[%s409 + $0x2c8] sm:$0xff] %v7487
        %7821 = vst [vmem:[%s409 + $0x2d0] sm:$0xff] %v7490
        %7822 = vst [vmem:[%s409 + $0x2d8] sm:$0xff] %v7493
        %7823 = vst [vmem:[%s409 + $0x2e0] sm:$0xff] %v7496
        %7824 = vst [vmem:[%s409 + $0x2e8] sm:$0xff] %v7499
        %7825 = vst [vmem:[%s409 + $0x2f0] sm:$0xff] %v7502
        %7826 = vst [vmem:[%s409 + $0x2f8] sm:$0xff] %v7505
        %7827 = vst [vmem:[%s409 + $0x300] sm:$0xff] %v7508
        %7828 = vst [vmem:[%s409 + $0x308] sm:$0xff] %v7511
        %7829 = vst [vmem:[%s409 + $0x310] sm:$0xff] %v7514
        %7830 = vst [vmem:[%s409 + $0x318] sm:$0xff] %v7517
        %7831 = vst [vmem:[%s409 + $0x320] sm:$0xff] %v7520
        %7832 = vst [vmem:[%s409 + $0x328] sm:$0xff] %v7523
        %7833 = vst [vmem:[%s409 + $0x330] sm:$0xff] %v7526
        %7834 = vst [vmem:[%s409 + $0x338] sm:$0xff] %v7529
        %7835 = vst [vmem:[%s409 + $0x340] sm:$0xff] %v7532
        %7836 = vst [vmem:[%s409 + $0x348] sm:$0xff] %v7535
        %7837 = vst [vmem:[%s409 + $0x350] sm:$0xff] %v7538
        %7838 = vst [vmem:[%s409 + $0x358] sm:$0xff] %v7541
        %7839 = vst [vmem:[%s409 + $0x360] sm:$0xff] %v7544
        %7840 = vst [vmem:[%s409 + $0x368] sm:$0xff] %v7547
        %7841 = vst [vmem:[%s409 + $0x370] sm:$0xff] %v7550
        %7842 = vst [vmem:[%s409 + $0x378] sm:$0xff] %v7553
        %7843 = vst [vmem:[%s409 + $0x380] sm:$0xff] %v7556
        %7844 = vst [vmem:[%s409 + $0x388] sm:$0xff] %v7559
        %7845 = vst [vmem:[%s409 + $0x390] sm:$0xff] %v7562
        %7846 = vst [vmem:[%s409 + $0x398] sm:$0xff] %v7565
        %7847 = vst [vmem:[%s409 + $0x3a0] sm:$0xff] %v7568
        %7848 = vst [vmem:[%s409 + $0x3a8] sm:$0xff] %v7571
        %7849 = vst [vmem:[%s409 + $0x3b0] sm:$0xff] %v7574
        %7850 = vst [vmem:[%s409 + $0x3b8] sm:$0xff] %v7577
        %7851 = vst [vmem:[%s409 + $0x3c0] sm:$0xff] %v7580
        %7852 = vst [vmem:[%s409 + $0x3c8] sm:$0xff] %v7583
        %7853 = vst [vmem:[%s409 + $0x3d0] sm:$0xff] %v7586
        %7854 = vst [vmem:[%s409 + $0x3d8] sm:$0xff] %v7589
        %7855 = vst [vmem:[%s409 + $0x3e0] sm:$0xff] %v7592
        %7856 = vst [vmem:[%s409 + $0x3e8] sm:$0xff] %v7595
        %7857 = vst [vmem:[%s409 + $0x3f0] sm:$0xff] %v7598
        %7858 = vst [vmem:[%s409 + $0x3f8] sm:$0xff] %v7601
        %s7859 = sand.u32 %s235, 1
        %s7860 = scalar_lea.sflag [#allocation4], %s7859
        %s7861 = sand.u32 %s235, 1
        %s7862 = smul.addr %s7861, 1024
        %s7863 = scalar_lea.vmem [#allocation5], %s7862
        %s7864 = sand.u32 %s263, 1
        %s7865 = scalar_lea.sflag [#allocation7], %s7864
        %s7866 = sand.u32 %s263, 1
        %s7867 = smul.addr %s7866, 1024
        %s7868 = scalar_lea.vmem [#allocation6], %s7867
        // Predicated region
        $region57: #{_lambda_.1} parent=51 // pred_check
          %p7869 = pneg %p245
        $region58: #{_lambda_.1} parent=51 // pred_check_branch
          %7871 = sbr.rel (%p7869) target = $region60
        $region59: #{_lambda_.1} parent=51 // pred_region
          %s7872 = smul.u32 32, %s33
          %7874 = vsyncadd %s7860, 0
          %s7875 = smul.addr %s32, 128
          %s7876 = sadd.s32 %s7872, %s7875
          %s7877 = smul.addr %s7876, 8
          %s7878 = scalar_lea.hbm %s8, %s7877
          %s7879 = sshll.u32 %s7863, 4
          %s7880 = int_to_ptr.vmem [resolvable:$true] %s7879
          %s7881 = sshll.u32 %s7878, 4
          %s7882 = int_to_ptr.hbm [resolvable:$true] %s7881
          %7887 = dma.vmem_to_hbm [thread:$0]  %s7880, 16384, %s7882, %s7860, 128, 128, 8
        $region60: #{_lambda_.1} parent=51 // pred_fallthru
          _
        // Predicated region
        $region61: #{_lambda_.1} parent=51 // pred_check
          %p7888 = pneg %p273
        $region62: #{_lambda_.1} parent=51 // pred_check_branch
          %7890 = sbr.rel (%p7888) target = $region64
        $region63: #{_lambda_.1} parent=51 // pred_region
          %s7891 = smul.u32 32, %s33
          %7893 = vsyncadd %s7865, 0
          %s7894 = smul.addr %s32, 128
          %s7895 = sadd.s32 %s7891, %s7894
          %s7896 = smul.addr %s7895, 8
          %s7897 = scalar_lea.hbm %s9, %s7896
          %s7898 = sshll.u32 %s7868, 4
          %s7899 = int_to_ptr.vmem [resolvable:$true] %s7898
          %s7900 = sshll.u32 %s7897, 4
          %s7901 = int_to_ptr.hbm [resolvable:$true] %s7900
          %7906 = dma.vmem_to_hbm [thread:$0]  %s7899, 16384, %s7901, %s7865, 128, 128, 8
        $region64: #{_lambda_.1} parent=51 // pred_fallthru
          _
      $region52: #{_lambda_.1} parent=5 // pred_fallthru
        _
      %p7907 = scmp.le.s32.totalorder 2, %s23
      // Predicated region
      $region65: #{_lambda_.1} parent=5 // pred_check
        %p7908 = pneg %p7907
      $region66: #{_lambda_.1} parent=5 // pred_check_branch
        %7910 = sbr.rel (%p7908) target = $region68
      $region67: #{_lambda_.1} parent=5 // pred_region
        %s7911 = ssub.s32 %s23, 2
        // Predicated region
        $region69: #{_lambda_.1} parent=67 // pred_check
          %p7912 = pneg %p251
        $region70: #{_lambda_.1} parent=67 // pred_check_branch
          %7914 = sbr.rel (%p7912) target = $region72
        $region71: #{_lambda_.1} parent=67 // pred_region
          %s7915 = sand.u32 %s236, 1
          %s7916 = scalar_lea.sflag [#allocation4], %s7915
          %s7917 = sand.u32 %s236, 1
          %s7918 = smul.addr %s7917, 1024
          %s7919 = scalar_lea.vmem [#allocation5], %s7918
          %7921 = dma.done %s7916, 16384
        $region72: #{_lambda_.1} parent=67 // pred_fallthru
          _
        // Predicated region
        $region73: #{_lambda_.1} parent=67 // pred_check
          %p7922 = pneg %p279
        $region74: #{_lambda_.1} parent=67 // pred_check_branch
          %7924 = sbr.rel (%p7922) target = $region76
        $region75: #{_lambda_.1} parent=67 // pred_region
          %s7925 = sand.u32 %s264, 1
          %s7926 = scalar_lea.sflag [#allocation7], %s7925
          %s7927 = sand.u32 %s264, 1
          %s7928 = smul.addr %s7927, 1024
          %s7929 = scalar_lea.vmem [#allocation6], %s7928
          %7931 = dma.done %s7926, 16384
        $region76: #{_lambda_.1} parent=67 // pred_fallthru
          _
      $region68: #{_lambda_.1} parent=5 // pred_fallthru
        _
    $region6: #{_lambda_.1} parent=1 // loop_footer
      %s27 = sadd.s32 1, %s23
    $region7: #{_lambda_.1} parent=1 // loop_footer_branch
      %22 = sbr.rel target = $region3
    $region8: #{_lambda_.1} parent=1 // loop_exit
      _
    %7932 = vsyncpa [#allocation3], 1
    %s7933 = scalar_lea.sflag [#allocation3], 1
    %7934 = vsyncpa %s7933, 1
    %7935 = vsyncpa [#allocation4], 1
    %s7936 = scalar_lea.sflag [#allocation4], 1
    %7937 = vsyncpa %s7936, 1
    %7938 = vsyncpa [#allocation7], 1
    %s7939 = scalar_lea.sflag [#allocation7], 1
    %7940 = vsyncpa %s7939, 1

</llo_original>
